<compile_context>
chip_gen: v6e
topology: v6e:2x2x1
jax: 0.10.0
libtpu: 0.0.40
codegen_flags: <defaults>
</compile_context>

<pallas_src>
import functools
import numpy as np
import jax
import jax.numpy as jnp
from jax.experimental import pallas as pl
from jax.experimental.pallas import tpu as pltpu

# ---------------- configuration (static) ----------------
CFG = dict(in_channels=2, dim_hidden=16, num_layers=1, num_heads=2, dim_head=8,
           proj_shape=2, patch_shape=2, switch_position=True)

NEG = -1e30  # stand-in for float('-inf'); exp(NEG - m) == 0.0 exactly in f32


# ---------------- in-kernel math helpers ----------------

def _layernorm(x, g, b, eps=1e-5):
    mu = jnp.mean(x, axis=-1, keepdims=True)
    xc = x - mu
    var = jnp.mean(xc * xc, axis=-1, keepdims=True)
    return xc * jax.lax.rsqrt(var + eps) * g + b


def _erf_f32(x):
    # Abramowitz & Stegun 7.1.26 (max abs error ~1.5e-7, i.e. f32-exact for GELU).
    a1, a2, a3, a4, a5 = (0.254829592, -0.284496736, 1.421413741,
                          -1.453152027, 1.061405429)
    p = 0.3275911
    ax = jnp.abs(x)
    t = 1.0 / (1.0 + p * ax)
    poly = ((((a5 * t + a4) * t + a3) * t + a2) * t + a1) * t
    y = 1.0 - poly * jnp.exp(-ax * ax)
    return jnp.where(x < 0, -y, y)


def _gelu_exact(x):
    # TODO(synk): swap for jax.lax.erf once its Mosaic lowering is confirmed on the
    # target jaxlib; this polynomial matches exact erf-GELU to ~1.5e-7.
    return 0.5 * x * (1.0 + _erf_f32(x * 0.7071067811865476))


# ---------------- the fused forward kernel ----------------
# refs layout:
#   [x_tokens, P_win, proj_w, proj_b,  (15 refs per block)*,  out]
# per-block refs:
#   g1, b1, wq(H,C,D), wk(H,C,D), wv(H,C,D), wo(H,D,C), bo, bias(N,N), pout(N,N),
#   g2, b2, w1, b1_mlp, w2, b2_mlp

def _fused_forward_kernel(nblocks, num_heads, *refs):
    x_ref, pin_ref, pw_ref, pb_ref = refs[0], refs[1], refs[2], refs[3]
    o_ref = refs[-1]
    blk_refs = refs[4:-1]
    assert len(blk_refs) == 15 * nblocks

    # patch projection linear (tokens are already rearranged outside)
    x = x_ref[0].astype(jnp.float32)                                   # (N, din)
    x = jnp.dot(x, pw_ref[...].astype(jnp.float32),
                preferred_element_type=jnp.float32) + pb_ref[...]      # (N, C)
    pin = pin_ref[...]                                                 # (N, N) window perm

    for bi in range(nblocks):
        (g1, b1, wq3, wk3, wv3, wo3, bo, bias, pout,
         g2, b2, w1, bb1, w2, bb2) = blk_refs[bi * 15:(bi + 1) * 15]

        # ---------- windowed multi-head self attention + residual ----------
        xn = _layernorm(x, g1[...], b1[...])
        xw = jnp.dot(pin, xn, preferred_element_type=jnp.float32)      # window-ordered tokens
        bmat = bias[...]                                               # pos bias + masks (+NEG off-window)
        attn_out = None
        for h in range(num_heads):
            qh = jnp.dot(xw, wq3[h], preferred_element_type=jnp.float32)   # scale pre-folded
            kh = jnp.dot(xw, wk3[h], preferred_element_type=jnp.float32)
            vh = jnp.dot(xw, wv3[h], preferred_element_type=jnp.float32)
            s = jnp.einsum('td,sd->ts', qh, kh,
                           preferred_element_type=jnp.float32) + bmat      # (N, N)
            m = jnp.max(s, axis=-1, keepdims=True)
            e = jnp.exp(s - m)
            inv = pl.reciprocal(jnp.sum(e, axis=-1, keepdims=True), approx=True)
            oh = jnp.dot(e * inv, vh, preferred_element_type=jnp.float32)  # (N, dh)
            yh = jnp.dot(oh, wo3[h], preferred_element_type=jnp.float32)   # (N, C)
            attn_out = yh if attn_out is None else attn_out + yh
        # un-window (+ roll for the shifted block), then output bias + residual
        o = jnp.dot(pout[...], attn_out, preferred_element_type=jnp.float32) + bo[...]
        x = x + o

        # ---------- MLP + residual ----------
        xn2 = _layernorm(x, g2[...], b2[...])
        hmid = jnp.dot(xn2, w1[...], preferred_element_type=jnp.float32) + bb1[...]
        hmid = _gelu_exact(hmid)
        x = x + jnp.dot(hmid, w2[...], preferred_element_type=jnp.float32) + bb2[...]

    o_ref[0] = x.astype(o_ref.dtype)


def fused_forward(tok, pin, proj_w, proj_b, per_block, num_heads):
    nb, N, din = tok.shape
    C = proj_w.shape[1]
    nblocks = len(per_block)

    flat = [pin, proj_w, proj_b]
    for blk in per_block:
        flat.extend(blk)

    def const_spec(a):
        zeros = (0,) * a.ndim
        return pl.BlockSpec(a.shape, lambda i, z=zeros: z)

    in_specs = ([pl.BlockSpec((1, N, din), lambda i: (i, 0, 0))]
                + [const_spec(a) for a in flat])

    kern = functools.partial(_fused_forward_kernel, nblocks, num_heads)
    return pl.pallas_call(
        kern,
        out_shape=jax.ShapeDtypeStruct((nb, N, C), tok.dtype),
        grid=(nb,),
        in_specs=in_specs,
        out_specs=pl.BlockSpec((1, N, C), lambda i: (i, 0, 0)),
        compiler_params=pltpu.CompilerParams(dimension_semantics=("parallel",)),
    )(tok, *flat)


# ---------------- static (numpy) masks / permutations ----------------

def create_mask_np(ws, disp, direction):
    m = np.zeros((ws ** 3, ws ** 3), np.float32)
    if direction[0] == 1:
        m[-disp * ws * ws:, :-disp * ws * ws] = NEG
        m[:-disp * ws * ws, -disp * ws * ws:] = NEG
    elif direction[1] == 1:
        m = m.reshape(ws, ws * ws, ws, ws * ws)
        m[:, -disp * ws:, :, :-disp * ws] = NEG
        m[:, :-disp * ws, :, -disp * ws:] = NEG
        m = m.reshape(ws ** 3, ws ** 3)
    else:
        m = m.reshape(ws * ws, ws, ws * ws, ws)
        m[-disp:, :-disp] = NEG
        m[:-disp, -disp:] = NEG
        m = m.reshape(ws ** 3, ws ** 3)
    return m


def shift_mask_add_np(ws, nw_l, nw_h, nw_w):
    """Per-window additive mask reproducing the in-place mask additions in MSA_Block
    (including the reference's double addition of the front mask)."""
    disp = ws // 2
    T = ws ** 3
    Wn = nw_l * nw_h * nw_w
    upper = create_mask_np(ws, disp, (1, 0, 0))
    left = create_mask_np(ws, disp, (0, 1, 0))
    front = create_mask_np(ws, disp, (0, 0, 1))
    add = np.zeros((Wn, T, T), np.float32)
    add[-nw_w:] += upper
    add[nw_w - 1::nw_w] += left
    tmp = (add.reshape(nw_l, nw_h, nw_w, T, T)
              .transpose(0, 2, 1, 3, 4)
              .reshape(nw_l * nw_w, nw_h, T, T).copy())
    tmp[:, nw_w - 1] += front
    add = (tmp.reshape(nw_l, nw_w, nw_h, T, T)
              .transpose(0, 2, 1, 3, 4)
              .reshape(Wn, T, T).copy())
    add[nw_w - 1::nw_w] += front
    return add


def window_perm_np(L, H, W, ps):
    """window-ordered tokens = P @ spatial-ordered tokens."""
    N = L * H * W
    idx = np.arange(N).reshape(L, H, W)
    nl, nh, nw = L // ps, H // ps, W // ps
    order = (idx.reshape(nl, ps, nh, ps, nw, ps)
                .transpose(0, 2, 4, 1, 3, 5).reshape(N))
    P = np.zeros((N, N), np.float32)
    P[np.arange(N), order] = 1.0
    return P


def roll_perm_np(L, H, W, d):
    """rolled tokens = R @ spatial tokens (torch.roll shifts=(d,d,d))."""
    N = L * H * W
    src = np.roll(np.arange(N).reshape(L, H, W), (d, d, d), axis=(0, 1, 2)).reshape(N)
    R = np.zeros((N, N), np.float32)
    R[np.arange(N), src] = 1.0
    return R


def block_diag_bias_np(mask_add, Wn, T):
    """(N,N) additive bias: shift masks on diagonal window blocks, NEG elsewhere."""
    sb = np.full((Wn, T, Wn, T), NEG, np.float32)
    for w in range(Wn):
        sb[w, :, w, :] = 0.0 if mask_add is None else mask_add[w]
    return sb.reshape(Wn * T, Wn * T)


def relative_position_bias(pos_emb, ws):
    idx = np.array([[x, y, z] for x in range(ws) for y in range(ws) for z in range(ws)])
    rel = idx[None, :, :] - idx[:, None, :] + ws - 1          # (T, T, 3)
    return pos_emb[rel[:, :, 0], rel[:, :, 1], rel[:, :, 2]]  # (T, T)


# ---------------- host-side glue (pure data movement) ----------------

def patch_projection_tokens(x, proj_shape, patch_shape):
    """Data-movement part of Patch_Projection (incl. the reference `.view` channel
    scramble); the linear itself runs inside the fused Pallas kernel."""
    b_, l, c, nl, nh, nw = x.shape
    p = proj_shape
    if nw % p:
        pad = p - nw % p
        lo, hi = pad // 2, (pad + 1) // 2
        x = jnp.pad(x, ((0, 0), (0, 0), (0, 0), (lo, hi), (lo, hi), (lo, hi)))
        nl, nh, nw = x.shape[3], x.shape[4], x.shape[5]
    x = x.reshape(b_ * l, c, nl, nh, nw)
    new_l, new_h, new_w = nl // p, nh // p, nw // p
    x = x.reshape(b_ * l, c, new_l, p, new_h, p, new_w, p)
    x = x.transpose(0, 2, 4, 6, 1, 3, 5, 7).reshape(b_ * l, new_l, new_h, new_w, c * p ** 3)
    # reproduce the reference `.view(b*l, -1, new_l, new_h, new_w)` reinterpretation
    x = x.reshape(b_ * l, c * p ** 3, new_l, new_h, new_w)
    if new_w % patch_shape:  # switch_padding=True in the reference
        pad = patch_shape - new_w % patch_shape
        lo, hi = pad // 2, (pad + 1) // 2
        x = jnp.pad(x, ((0, 0), (0, 0), (lo, hi), (lo, hi), (lo, hi)))
        new_l, new_h, new_w = x.shape[2], x.shape[3], x.shape[4]
    x = x.transpose(0, 2, 3, 4, 1)                            # (n_b, L, H, W, c*p^3)
    return x, (b_, l, new_l, new_h, new_w)


def local_transformer_forward(params, x):
    p, ps = CFG['proj_shape'], CFG['patch_shape']
    C = CFG['dim_hidden']
    NH, DH = CFG['num_heads'], CFG['dim_head']
    inner = NH * DH
    scale = DH ** -0.5

    tok, (b_, l, L, H, W_) = patch_projection_tokens(x, p, ps)
    nb = b_ * l
    N = L * H * W_
    din = tok.shape[-1]
    tok = tok.reshape(nb, N, din)

    # static geometry (numpy, baked at trace time)
    T = ps ** 3
    nw_l, nw_h, nw_w = L // ps, H // ps, W_ // ps
    Wn = nw_l * nw_h * nw_w
    P_win = window_perm_np(L, H, W_, ps)
    R = roll_perm_np(L, H, W_, ps // 2)
    mask_add = shift_mask_add_np(ps, nw_l, nw_h, nw_w)
    sb_patch = block_diag_bias_np(None, Wn, T)
    sb_shift = block_diag_bias_np(mask_add, Wn, T)
    pin = jnp.asarray(P_win)
    pout_patch = jnp.asarray(np.ascontiguousarray(P_win.T))
    pout_shift = jnp.asarray(np.ascontiguousarray(R @ P_win.T))   # roll folded in

    def to_heads(w):                       # (C, inner) -> (NH, C, DH)
        return jnp.transpose(w.reshape(C, NH, DH), (1, 0, 2))

    def prep_block(prm, shift):
        wqkv = prm['wqkv']
        wq3 = to_heads(wqkv[:, :inner] * scale)        # fold 1/sqrt(d) into Wq
        wk3 = to_heads(wqkv[:, inner:2 * inner])
        wv3 = to_heads(wqkv[:, 2 * inner:])
        wo3 = prm['wo'].reshape(NH, DH, C)
        pos = relative_position_bias(prm['pos_emb'], ps)          # (T, T)
        static_bias = sb_shift if shift else sb_patch
        bias = jnp.asarray(static_bias) + jnp.tile(pos, (Wn, Wn)) # (N, N)
        pout = pout_shift if shift else pout_patch
        return [prm['ln1_g'].reshape(1, C), prm['ln1_b'].reshape(1, C),
                wq3, wk3, wv3, wo3, prm['bo'].reshape(1, C),
                bias, pout,
                prm['ln2_g'].reshape(1, C), prm['ln2_b'].reshape(1, C),
                prm['w1'], prm['b1'].reshape(1, -1),
                prm['w2'], prm['b2'].reshape(1, C)]

    per_block = []
    for layer in params['layers']:
        per_block.append(prep_block(layer['patch'], False))
        per_block.append(prep_block(layer['shift'], True))

    out_tok = fused_forward(tok, pin, params['proj_w'],
                            params['proj_b'].reshape(1, C), per_block, NH)
    out = out_tok.reshape(b_, l, L, H, W_, C)
    return jnp.transpose(out, (0, 1, 5, 2, 3, 4))                 # (b, l, C, L, H, W)


# ---------------- deterministic parameter init ----------------

def init_params(key):
    kit = iter(jax.random.split(key, 64))

    def dense(shape, std=0.02):
        return jax.random.normal(next(kit), shape, jnp.float32) * std

    D = CFG['dim_hidden']
    ps = CFG['patch_shape']
    inner = CFG['num_heads'] * CFG['dim_head']
    din_proj = CFG['in_channels'] * CFG['proj_shape'] ** 3

    def block():
        return dict(
            ln1_g=jnp.ones((D,), jnp.float32), ln1_b=jnp.zeros((D,), jnp.float32),
            wqkv=dense((D, inner * 3)),
            wo=dense((inner, D)), bo=jnp.zeros((D,), jnp.float32),
            pos_emb=dense((2 * ps - 1, 2 * ps - 1, 2 * ps - 1), std=1.0),
            ln2_g=jnp.ones((D,), jnp.float32), ln2_b=jnp.zeros((D,), jnp.float32),
            w1=dense((D, 2 * D)), b1=jnp.zeros((2 * D,), jnp.float32),
            w2=dense((2 * D, D)), b2=jnp.zeros((D,), jnp.float32),
        )

    params = dict(
        proj_w=dense((din_proj, D)), proj_b=jnp.zeros((D,), jnp.float32),
        layers=[dict(patch=block(), shift=block()) for _ in range(CFG['num_layers'])],
    )
    return params


if __name__ == "__main__":
    key = jax.random.PRNGKey(0)
    kp, kx = jax.random.split(key)
    params = init_params(kp)
    # input: (batch=1, l=2, in_channels=2, n_l=8, n_h=8, n_w=8)
    x = jax.random.normal(kx, (1, 2, CFG['in_channels'], 8, 8, 8), jnp.float32)
    out = jax.jit(local_transformer_forward)(params, x)
    jax.block_until_ready(out)
    assert out.shape == (1, 2, CFG['dim_hidden'], 4, 4, 4), out.shape
    assert bool(jnp.all(jnp.isfinite(out)))
    print("KERNEL_OK")
</pallas_src>

<mosaic_0001>
module attributes {stable_mosaic.version = 11 : i64} {
  func.func @_fused_forward_kernel(%arg0: i32, %arg1: memref<1x64x16xf32, #tpu.memory_space<vmem>>, %arg2: memref<64x64xf32, #tpu.memory_space<vmem>>, %arg3: memref<16x16xf32, #tpu.memory_space<vmem>>, %arg4: memref<1x16xf32, #tpu.memory_space<vmem>>, %arg5: memref<1x16xf32, #tpu.memory_space<vmem>>, %arg6: memref<1x16xf32, #tpu.memory_space<vmem>>, %arg7: memref<2x16x8xf32, #tpu.memory_space<vmem>>, %arg8: memref<2x16x8xf32, #tpu.memory_space<vmem>>, %arg9: memref<2x16x8xf32, #tpu.memory_space<vmem>>, %arg10: memref<2x8x16xf32, #tpu.memory_space<vmem>>, %arg11: memref<1x16xf32, #tpu.memory_space<vmem>>, %arg12: memref<64x64xf32, #tpu.memory_space<vmem>>, %arg13: memref<64x64xf32, #tpu.memory_space<vmem>>, %arg14: memref<1x16xf32, #tpu.memory_space<vmem>>, %arg15: memref<1x16xf32, #tpu.memory_space<vmem>>, %arg16: memref<16x32xf32, #tpu.memory_space<vmem>>, %arg17: memref<1x32xf32, #tpu.memory_space<vmem>>, %arg18: memref<32x16xf32, #tpu.memory_space<vmem>>, %arg19: memref<1x16xf32, #tpu.memory_space<vmem>>, %arg20: memref<1x16xf32, #tpu.memory_space<vmem>>, %arg21: memref<1x16xf32, #tpu.memory_space<vmem>>, %arg22: memref<2x16x8xf32, #tpu.memory_space<vmem>>, %arg23: memref<2x16x8xf32, #tpu.memory_space<vmem>>, %arg24: memref<2x16x8xf32, #tpu.memory_space<vmem>>, %arg25: memref<2x8x16xf32, #tpu.memory_space<vmem>>, %arg26: memref<1x16xf32, #tpu.memory_space<vmem>>, %arg27: memref<64x64xf32, #tpu.memory_space<vmem>>, %arg28: memref<64x64xf32, #tpu.memory_space<vmem>>, %arg29: memref<1x16xf32, #tpu.memory_space<vmem>>, %arg30: memref<1x16xf32, #tpu.memory_space<vmem>>, %arg31: memref<16x32xf32, #tpu.memory_space<vmem>>, %arg32: memref<1x32xf32, #tpu.memory_space<vmem>>, %arg33: memref<32x16xf32, #tpu.memory_space<vmem>>, %arg34: memref<1x16xf32, #tpu.memory_space<vmem>>, %arg35: memref<1x64x16xf32, #tpu.memory_space<vmem>>) attributes {dimension_semantics = [#tpu.dimension_semantics<parallel>], iteration_bounds = array<i64: 2>, scalar_prefetch = 0 : i64, scratch_operands = 0 : i64, tpu.core_type = #tpu.core_type<tc>, window_params = [{transform_indices = @transform_0, window_bounds = array<i64: 1, 64, 16>}, {pipeline_mode = #tpu.pipeline_mode<synchronous>, transform_indices = @transform_1, window_bounds = array<i64: 64, 64>}, {pipeline_mode = #tpu.pipeline_mode<synchronous>, transform_indices = @transform_2, window_bounds = array<i64: 16, 16>}, {pipeline_mode = #tpu.pipeline_mode<synchronous>, transform_indices = @transform_3, window_bounds = array<i64: 1, 16>}, {pipeline_mode = #tpu.pipeline_mode<synchronous>, transform_indices = @transform_4, window_bounds = array<i64: 1, 16>}, {pipeline_mode = #tpu.pipeline_mode<synchronous>, transform_indices = @transform_5, window_bounds = array<i64: 1, 16>}, {pipeline_mode = #tpu.pipeline_mode<synchronous>, transform_indices = @transform_6, window_bounds = array<i64: 2, 16, 8>}, {pipeline_mode = #tpu.pipeline_mode<synchronous>, transform_indices = @transform_7, window_bounds = array<i64: 2, 16, 8>}, {pipeline_mode = #tpu.pipeline_mode<synchronous>, transform_indices = @transform_8, window_bounds = array<i64: 2, 16, 8>}, {pipeline_mode = #tpu.pipeline_mode<synchronous>, transform_indices = @transform_9, window_bounds = array<i64: 2, 8, 16>}, {pipeline_mode = #tpu.pipeline_mode<synchronous>, transform_indices = @transform_10, window_bounds = array<i64: 1, 16>}, {pipeline_mode = #tpu.pipeline_mode<synchronous>, transform_indices = @transform_11, window_bounds = array<i64: 64, 64>}, {pipeline_mode = #tpu.pipeline_mode<synchronous>, transform_indices = @transform_12, window_bounds = array<i64: 64, 64>}, {pipeline_mode = #tpu.pipeline_mode<synchronous>, transform_indices = @transform_13, window_bounds = array<i64: 1, 16>}, {pipeline_mode = #tpu.pipeline_mode<synchronous>, transform_indices = @transform_14, window_bounds = array<i64: 1, 16>}, {pipeline_mode = #tpu.pipeline_mode<synchronous>, transform_indices = @transform_15, window_bounds = array<i64: 16, 32>}, {pipeline_mode = #tpu.pipeline_mode<synchronous>, transform_indices = @transform_16, window_bounds = array<i64: 1, 32>}, {pipeline_mode = #tpu.pipeline_mode<synchronous>, transform_indices = @transform_17, window_bounds = array<i64: 32, 16>}, {pipeline_mode = #tpu.pipeline_mode<synchronous>, transform_indices = @transform_18, window_bounds = array<i64: 1, 16>}, {pipeline_mode = #tpu.pipeline_mode<synchronous>, transform_indices = @transform_19, window_bounds = array<i64: 1, 16>}, {pipeline_mode = #tpu.pipeline_mode<synchronous>, transform_indices = @transform_20, window_bounds = array<i64: 1, 16>}, {pipeline_mode = #tpu.pipeline_mode<synchronous>, transform_indices = @transform_21, window_bounds = array<i64: 2, 16, 8>}, {pipeline_mode = #tpu.pipeline_mode<synchronous>, transform_indices = @transform_22, window_bounds = array<i64: 2, 16, 8>}, {pipeline_mode = #tpu.pipeline_mode<synchronous>, transform_indices = @transform_23, window_bounds = array<i64: 2, 16, 8>}, {pipeline_mode = #tpu.pipeline_mode<synchronous>, transform_indices = @transform_24, window_bounds = array<i64: 2, 8, 16>}, {pipeline_mode = #tpu.pipeline_mode<synchronous>, transform_indices = @transform_25, window_bounds = array<i64: 1, 16>}, {pipeline_mode = #tpu.pipeline_mode<synchronous>, transform_indices = @transform_26, window_bounds = array<i64: 64, 64>}, {pipeline_mode = #tpu.pipeline_mode<synchronous>, transform_indices = @transform_27, window_bounds = array<i64: 64, 64>}, {pipeline_mode = #tpu.pipeline_mode<synchronous>, transform_indices = @transform_28, window_bounds = array<i64: 1, 16>}, {pipeline_mode = #tpu.pipeline_mode<synchronous>, transform_indices = @transform_29, window_bounds = array<i64: 1, 16>}, {pipeline_mode = #tpu.pipeline_mode<synchronous>, transform_indices = @transform_30, window_bounds = array<i64: 16, 32>}, {pipeline_mode = #tpu.pipeline_mode<synchronous>, transform_indices = @transform_31, window_bounds = array<i64: 1, 32>}, {pipeline_mode = #tpu.pipeline_mode<synchronous>, transform_indices = @transform_32, window_bounds = array<i64: 32, 16>}, {pipeline_mode = #tpu.pipeline_mode<synchronous>, transform_indices = @transform_33, window_bounds = array<i64: 1, 16>}, {transform_indices = @transform_34, window_bounds = array<i64: 1, 64, 16>}]} {
    %c0 = arith.constant 0 : index
    %c0_0 = arith.constant 0 : index
    %c0_1 = arith.constant 0 : index
    %0 = vector.load %arg1[%c0, %c0_0, %c0_1] : memref<1x64x16xf32, #tpu.memory_space<vmem>>, vector<1x64x16xf32>
    %1 = vector.shape_cast %0 : vector<1x64x16xf32> to vector<64x16xf32>
    %c0_2 = arith.constant 0 : index
    %c0_3 = arith.constant 0 : index
    %2 = vector.load %arg3[%c0_2, %c0_3] : memref<16x16xf32, #tpu.memory_space<vmem>>, vector<16x16xf32>
    %cst = arith.constant dense<0.000000e+00> : vector<64x16xf32>
    %3 = tpu.matmul %1, %2, %cst {dimension_numbers = #tpu.dot_dimension_numbers<[1], [0], [0], [1], [0, 0, 1, 1], [], []>} : vector<64x16xf32>, vector<16x16xf32>, vector<64x16xf32> -> vector<64x16xf32>
    %c0_4 = arith.constant 0 : index
    %c0_5 = arith.constant 0 : index
    %4 = vector.load %arg4[%c0_4, %c0_5] : memref<1x16xf32, #tpu.memory_space<vmem>>, vector<1x16xf32>
    %5 = vector.broadcast %4 : vector<1x16xf32> to vector<64x16xf32>
    %6 = arith.addf %3, %5 : vector<64x16xf32>
    %c0_6 = arith.constant 0 : index
    %c0_7 = arith.constant 0 : index
    %7 = vector.load %arg2[%c0_6, %c0_7] : memref<64x64xf32, #tpu.memory_space<vmem>>, vector<64x64xf32>
    %c0_8 = arith.constant 0 : index
    %c0_9 = arith.constant 0 : index
    %8 = vector.load %arg5[%c0_8, %c0_9] : memref<1x16xf32, #tpu.memory_space<vmem>>, vector<1x16xf32>
    %c0_10 = arith.constant 0 : index
    %c0_11 = arith.constant 0 : index
    %9 = vector.load %arg6[%c0_10, %c0_11] : memref<1x16xf32, #tpu.memory_space<vmem>>, vector<1x16xf32>
    %cst_12 = arith.constant dense<0.000000e+00> : vector<64xf32>
    %10 = vector.multi_reduction <add>, %6, %cst_12 [1] : vector<64x16xf32> to vector<64xf32>
    %11 = vector.shape_cast %10 : vector<64xf32> to vector<64x1xf32>
    %cst_13 = arith.constant 1.600000e+01 : f32
    %12 = vector.broadcast %cst_13 : f32 to vector<64x1xf32>
    %13 = arith.divf %11, %12 : vector<64x1xf32>
    %14 = vector.broadcast %13 : vector<64x1xf32> to vector<64x16xf32>
    %15 = arith.subf %6, %14 : vector<64x16xf32>
    %16 = arith.mulf %15, %15 : vector<64x16xf32>
    %cst_14 = arith.constant dense<0.000000e+00> : vector<64xf32>
    %17 = vector.multi_reduction <add>, %16, %cst_14 [1] : vector<64x16xf32> to vector<64xf32>
    %18 = vector.shape_cast %17 : vector<64xf32> to vector<64x1xf32>
    %cst_15 = arith.constant 1.600000e+01 : f32
    %19 = vector.broadcast %cst_15 : f32 to vector<64x1xf32>
    %20 = arith.divf %18, %19 : vector<64x1xf32>
    %cst_16 = arith.constant 9.99999974E-6 : f32
    %21 = vector.broadcast %cst_16 : f32 to vector<64x1xf32>
    %22 = arith.addf %20, %21 : vector<64x1xf32>
    %23 = math.rsqrt %22 : vector<64x1xf32>
    %24 = vector.broadcast %23 : vector<64x1xf32> to vector<64x16xf32>
    %25 = arith.mulf %15, %24 : vector<64x16xf32>
    %26 = vector.broadcast %8 : vector<1x16xf32> to vector<64x16xf32>
    %27 = arith.mulf %25, %26 : vector<64x16xf32>
    %28 = vector.broadcast %9 : vector<1x16xf32> to vector<64x16xf32>
    %29 = arith.addf %27, %28 : vector<64x16xf32>
    %cst_17 = arith.constant dense<0.000000e+00> : vector<64x16xf32>
    %30 = tpu.matmul %7, %29, %cst_17 {dimension_numbers = #tpu.dot_dimension_numbers<[1], [0], [0], [1], [0, 0, 1, 1], [], []>} : vector<64x64xf32>, vector<64x16xf32>, vector<64x16xf32> -> vector<64x16xf32>
    %c0_18 = arith.constant 0 : index
    %c0_19 = arith.constant 0 : index
    %31 = vector.load %arg12[%c0_18, %c0_19] : memref<64x64xf32, #tpu.memory_space<vmem>>, vector<64x64xf32>
    %c0_20 = arith.constant 0 : index
    %c0_21 = arith.constant 0 : index
    %c0_22 = arith.constant 0 : index
    %32 = vector.load %arg7[%c0_20, %c0_21, %c0_22] : memref<2x16x8xf32, #tpu.memory_space<vmem>>, vector<1x16x8xf32>
    %33 = vector.shape_cast %32 : vector<1x16x8xf32> to vector<16x8xf32>
    %cst_23 = arith.constant dense<0.000000e+00> : vector<64x8xf32>
    %34 = tpu.matmul %30, %33, %cst_23 {dimension_numbers = #tpu.dot_dimension_numbers<[1], [0], [0], [1], [0, 0, 1, 1], [], []>} : vector<64x16xf32>, vector<16x8xf32>, vector<64x8xf32> -> vector<64x8xf32>
    %c0_24 = arith.constant 0 : index
    %c0_25 = arith.constant 0 : index
    %c0_26 = arith.constant 0 : index
    %35 = vector.load %arg8[%c0_24, %c0_25, %c0_26] : memref<2x16x8xf32, #tpu.memory_space<vmem>>, vector<1x16x8xf32>
    %36 = vector.shape_cast %35 : vector<1x16x8xf32> to vector<16x8xf32>
    %cst_27 = arith.constant dense<0.000000e+00> : vector<64x8xf32>
    %37 = tpu.matmul %30, %36, %cst_27 {dimension_numbers = #tpu.dot_dimension_numbers<[1], [0], [0], [1], [0, 0, 1, 1], [], []>} : vector<64x16xf32>, vector<16x8xf32>, vector<64x8xf32> -> vector<64x8xf32>
    %c0_28 = arith.constant 0 : index
    %c0_29 = arith.constant 0 : index
    %c0_30 = arith.constant 0 : index
    %38 = vector.load %arg9[%c0_28, %c0_29, %c0_30] : memref<2x16x8xf32, #tpu.memory_space<vmem>>, vector<1x16x8xf32>
    %39 = vector.shape_cast %38 : vector<1x16x8xf32> to vector<16x8xf32>
    %cst_31 = arith.constant dense<0.000000e+00> : vector<64x8xf32>
    %40 = tpu.matmul %30, %39, %cst_31 {dimension_numbers = #tpu.dot_dimension_numbers<[1], [0], [0], [1], [0, 0, 1, 1], [], []>} : vector<64x16xf32>, vector<16x8xf32>, vector<64x8xf32> -> vector<64x8xf32>
    "tpu.trace_start"() <{level = 10 : i32, message = "td,sd->ts"}> : () -> ()
    %cst_32 = arith.constant dense<0.000000e+00> : vector<64x64xf32>
    %41 = tpu.matmul %34, %37, %cst_32 {dimension_numbers = #tpu.dot_dimension_numbers<[1], [1], [0], [0], [0, 0, 1, 0], [], []>} : vector<64x8xf32>, vector<64x8xf32>, vector<64x64xf32> -> vector<64x64xf32>
    "tpu.trace_stop"() : () -> ()
    %42 = arith.addf %41, %31 : vector<64x64xf32>
    %cst_33 = arith.constant dense<0xFF800000> : vector<64xf32>
    %43 = vector.multi_reduction <maximumf>, %42, %cst_33 [1] : vector<64x64xf32> to vector<64xf32>
    %44 = vector.shape_cast %43 : vector<64xf32> to vector<64x1xf32>
    %45 = vector.broadcast %44 : vector<64x1xf32> to vector<64x64xf32>
    %46 = arith.subf %42, %45 : vector<64x64xf32>
    %47 = math.exp %46 : vector<64x64xf32>
    %cst_34 = arith.constant dense<0.000000e+00> : vector<64xf32>
    %48 = vector.multi_reduction <add>, %47, %cst_34 [1] : vector<64x64xf32> to vector<64xf32>
    %49 = vector.shape_cast %48 : vector<64xf32> to vector<64x1xf32>
    %50 = tpu.reciprocal %49 {approx = true} : vector<64x1xf32> -> vector<64x1xf32>
    %51 = vector.broadcast %50 : vector<64x1xf32> to vector<64x64xf32>
    %52 = arith.mulf %47, %51 : vector<64x64xf32>
    %cst_35 = arith.constant dense<0.000000e+00> : vector<64x8xf32>
    %53 = tpu.matmul %52, %40, %cst_35 {dimension_numbers = #tpu.dot_dimension_numbers<[1], [0], [0], [1], [0, 0, 1, 1], [], []>} : vector<64x64xf32>, vector<64x8xf32>, vector<64x8xf32> -> vector<64x8xf32>
    %c0_36 = arith.constant 0 : index
    %c0_37 = arith.constant 0 : index
    %c0_38 = arith.constant 0 : index
    %54 = vector.load %arg10[%c0_36, %c0_37, %c0_38] : memref<2x8x16xf32, #tpu.memory_space<vmem>>, vector<1x8x16xf32>
    %55 = vector.shape_cast %54 : vector<1x8x16xf32> to vector<8x16xf32>
    %cst_39 = arith.constant dense<0.000000e+00> : vector<64x16xf32>
    %56 = tpu.matmul %53, %55, %cst_39 {dimension_numbers = #tpu.dot_dimension_numbers<[1], [0], [0], [1], [0, 0, 1, 1], [], []>} : vector<64x8xf32>, vector<8x16xf32>, vector<64x16xf32> -> vector<64x16xf32>
    %c1 = arith.constant 1 : index
    %c0_40 = arith.constant 0 : index
    %c0_41 = arith.constant 0 : index
    %57 = vector.load %arg7[%c1, %c0_40, %c0_41] : memref<2x16x8xf32, #tpu.memory_space<vmem>>, vector<1x16x8xf32>
    %58 = vector.shape_cast %57 : vector<1x16x8xf32> to vector<16x8xf32>
    %cst_42 = arith.constant dense<0.000000e+00> : vector<64x8xf32>
    %59 = tpu.matmul %30, %58, %cst_42 {dimension_numbers = #tpu.dot_dimension_numbers<[1], [0], [0], [1], [0, 0, 1, 1], [], []>} : vector<64x16xf32>, vector<16x8xf32>, vector<64x8xf32> -> vector<64x8xf32>
    %c1_43 = arith.constant 1 : index
    %c0_44 = arith.constant 0 : index
    %c0_45 = arith.constant 0 : index
    %60 = vector.load %arg8[%c1_43, %c0_44, %c0_45] : memref<2x16x8xf32, #tpu.memory_space<vmem>>, vector<1x16x8xf32>
    %61 = vector.shape_cast %60 : vector<1x16x8xf32> to vector<16x8xf32>
    %cst_46 = arith.constant dense<0.000000e+00> : vector<64x8xf32>
    %62 = tpu.matmul %30, %61, %cst_46 {dimension_numbers = #tpu.dot_dimension_numbers<[1], [0], [0], [1], [0, 0, 1, 1], [], []>} : vector<64x16xf32>, vector<16x8xf32>, vector<64x8xf32> -> vector<64x8xf32>
    %c1_47 = arith.constant 1 : index
    %c0_48 = arith.constant 0 : index
    %c0_49 = arith.constant 0 : index
    %63 = vector.load %arg9[%c1_47, %c0_48, %c0_49] : memref<2x16x8xf32, #tpu.memory_space<vmem>>, vector<1x16x8xf32>
    %64 = vector.shape_cast %63 : vector<1x16x8xf32> to vector<16x8xf32>
    %cst_50 = arith.constant dense<0.000000e+00> : vector<64x8xf32>
    %65 = tpu.matmul %30, %64, %cst_50 {dimension_numbers = #tpu.dot_dimension_numbers<[1], [0], [0], [1], [0, 0, 1, 1], [], []>} : vector<64x16xf32>, vector<16x8xf32>, vector<64x8xf32> -> vector<64x8xf32>
    "tpu.trace_start"() <{level = 10 : i32, message = "td,sd->ts"}> : () -> ()
    %cst_51 = arith.constant dense<0.000000e+00> : vector<64x64xf32>
    %66 = tpu.matmul %59, %62, %cst_51 {dimension_numbers = #tpu.dot_dimension_numbers<[1], [1], [0], [0], [0, 0, 1, 0], [], []>} : vector<64x8xf32>, vector<64x8xf32>, vector<64x64xf32> -> vector<64x64xf32>
    "tpu.trace_stop"() : () -> ()
    %67 = arith.addf %66, %31 : vector<64x64xf32>
    %cst_52 = arith.constant dense<0xFF800000> : vector<64xf32>
    %68 = vector.multi_reduction <maximumf>, %67, %cst_52 [1] : vector<64x64xf32> to vector<64xf32>
    %69 = vector.shape_cast %68 : vector<64xf32> to vector<64x1xf32>
    %70 = vector.broadcast %69 : vector<64x1xf32> to vector<64x64xf32>
    %71 = arith.subf %67, %70 : vector<64x64xf32>
    %72 = math.exp %71 : vector<64x64xf32>
    %cst_53 = arith.constant dense<0.000000e+00> : vector<64xf32>
    %73 = vector.multi_reduction <add>, %72, %cst_53 [1] : vector<64x64xf32> to vector<64xf32>
    %74 = vector.shape_cast %73 : vector<64xf32> to vector<64x1xf32>
    %75 = tpu.reciprocal %74 {approx = true} : vector<64x1xf32> -> vector<64x1xf32>
    %76 = vector.broadcast %75 : vector<64x1xf32> to vector<64x64xf32>
    %77 = arith.mulf %72, %76 : vector<64x64xf32>
    %cst_54 = arith.constant dense<0.000000e+00> : vector<64x8xf32>
    %78 = tpu.matmul %77, %65, %cst_54 {dimension_numbers = #tpu.dot_dimension_numbers<[1], [0], [0], [1], [0, 0, 1, 1], [], []>} : vector<64x64xf32>, vector<64x8xf32>, vector<64x8xf32> -> vector<64x8xf32>
    %c1_55 = arith.constant 1 : index
    %c0_56 = arith.constant 0 : index
    %c0_57 = arith.constant 0 : index
    %79 = vector.load %arg10[%c1_55, %c0_56, %c0_57] : memref<2x8x16xf32, #tpu.memory_space<vmem>>, vector<1x8x16xf32>
    %80 = vector.shape_cast %79 : vector<1x8x16xf32> to vector<8x16xf32>
    %cst_58 = arith.constant dense<0.000000e+00> : vector<64x16xf32>
    %81 = tpu.matmul %78, %80, %cst_58 {dimension_numbers = #tpu.dot_dimension_numbers<[1], [0], [0], [1], [0, 0, 1, 1], [], []>} : vector<64x8xf32>, vector<8x16xf32>, vector<64x16xf32> -> vector<64x16xf32>
    %82 = arith.addf %56, %81 : vector<64x16xf32>
    %c0_59 = arith.constant 0 : index
    %c0_60 = arith.constant 0 : index
    %83 = vector.load %arg13[%c0_59, %c0_60] : memref<64x64xf32, #tpu.memory_space<vmem>>, vector<64x64xf32>
    %cst_61 = arith.constant dense<0.000000e+00> : vector<64x16xf32>
    %84 = tpu.matmul %83, %82, %cst_61 {dimension_numbers = #tpu.dot_dimension_numbers<[1], [0], [0], [1], [0, 0, 1, 1], [], []>} : vector<64x64xf32>, vector<64x16xf32>, vector<64x16xf32> -> vector<64x16xf32>
    %c0_62 = arith.constant 0 : index
    %c0_63 = arith.constant 0 : index
    %85 = vector.load %arg11[%c0_62, %c0_63] : memref<1x16xf32, #tpu.memory_space<vmem>>, vector<1x16xf32>
    %86 = vector.broadcast %85 : vector<1x16xf32> to vector<64x16xf32>
    %87 = arith.addf %84, %86 : vector<64x16xf32>
    %88 = arith.addf %6, %87 : vector<64x16xf32>
    %c0_64 = arith.constant 0 : index
    %c0_65 = arith.constant 0 : index
    %89 = vector.load %arg14[%c0_64, %c0_65] : memref<1x16xf32, #tpu.memory_space<vmem>>, vector<1x16xf32>
    %c0_66 = arith.constant 0 : index
    %c0_67 = arith.constant 0 : index
    %90 = vector.load %arg15[%c0_66, %c0_67] : memref<1x16xf32, #tpu.memory_space<vmem>>, vector<1x16xf32>
    %cst_68 = arith.constant dense<0.000000e+00> : vector<64xf32>
    %91 = vector.multi_reduction <add>, %88, %cst_68 [1] : vector<64x16xf32> to vector<64xf32>
    %92 = vector.shape_cast %91 : vector<64xf32> to vector<64x1xf32>
    %cst_69 = arith.constant 1.600000e+01 : f32
    %93 = vector.broadcast %cst_69 : f32 to vector<64x1xf32>
    %94 = arith.divf %92, %93 : vector<64x1xf32>
    %95 = vector.broadcast %94 : vector<64x1xf32> to vector<64x16xf32>
    %96 = arith.subf %88, %95 : vector<64x16xf32>
    %97 = arith.mulf %96, %96 : vector<64x16xf32>
    %cst_70 = arith.constant dense<0.000000e+00> : vector<64xf32>
    %98 = vector.multi_reduction <add>, %97, %cst_70 [1] : vector<64x16xf32> to vector<64xf32>
    %99 = vector.shape_cast %98 : vector<64xf32> to vector<64x1xf32>
    %cst_71 = arith.constant 1.600000e+01 : f32
    %100 = vector.broadcast %cst_71 : f32 to vector<64x1xf32>
    %101 = arith.divf %99, %100 : vector<64x1xf32>
    %cst_72 = arith.constant 9.99999974E-6 : f32
    %102 = vector.broadcast %cst_72 : f32 to vector<64x1xf32>
    %103 = arith.addf %101, %102 : vector<64x1xf32>
    %104 = math.rsqrt %103 : vector<64x1xf32>
    %105 = vector.broadcast %104 : vector<64x1xf32> to vector<64x16xf32>
    %106 = arith.mulf %96, %105 : vector<64x16xf32>
    %107 = vector.broadcast %89 : vector<1x16xf32> to vector<64x16xf32>
    %108 = arith.mulf %106, %107 : vector<64x16xf32>
    %109 = vector.broadcast %90 : vector<1x16xf32> to vector<64x16xf32>
    %110 = arith.addf %108, %109 : vector<64x16xf32>
    %c0_73 = arith.constant 0 : index
    %c0_74 = arith.constant 0 : index
    %111 = vector.load %arg16[%c0_73, %c0_74] : memref<16x32xf32, #tpu.memory_space<vmem>>, vector<16x32xf32>
    %cst_75 = arith.constant dense<0.000000e+00> : vector<64x32xf32>
    %112 = tpu.matmul %110, %111, %cst_75 {dimension_numbers = #tpu.dot_dimension_numbers<[1], [0], [0], [1], [0, 0, 1, 1], [], []>} : vector<64x16xf32>, vector<16x32xf32>, vector<64x32xf32> -> vector<64x32xf32>
    %c0_76 = arith.constant 0 : index
    %c0_77 = arith.constant 0 : index
    %113 = vector.load %arg17[%c0_76, %c0_77] : memref<1x32xf32, #tpu.memory_space<vmem>>, vector<1x32xf32>
    %114 = vector.broadcast %113 : vector<1x32xf32> to vector<64x32xf32>
    %115 = arith.addf %112, %114 : vector<64x32xf32>
    %cst_78 = arith.constant 5.000000e-01 : f32
    %116 = vector.broadcast %cst_78 : f32 to vector<64x32xf32>
    %117 = arith.mulf %116, %115 : vector<64x32xf32>
    %cst_79 = arith.constant 0.707106769 : f32
    %118 = vector.broadcast %cst_79 : f32 to vector<64x32xf32>
    %119 = arith.mulf %115, %118 : vector<64x32xf32>
    %120 = math.absf %119 : vector<64x32xf32>
    %cst_80 = arith.constant 0.327591091 : f32
    %121 = vector.broadcast %cst_80 : f32 to vector<64x32xf32>
    %122 = arith.mulf %121, %120 : vector<64x32xf32>
    %cst_81 = arith.constant 1.000000e+00 : f32
    %123 = vector.broadcast %cst_81 : f32 to vector<64x32xf32>
    %124 = arith.addf %123, %122 : vector<64x32xf32>
    %cst_82 = arith.constant 1.000000e+00 : f32
    %125 = vector.broadcast %cst_82 : f32 to vector<64x32xf32>
    %126 = arith.divf %125, %124 : vector<64x32xf32>
    %cst_83 = arith.constant 1.06140542 : f32
    %127 = vector.broadcast %cst_83 : f32 to vector<64x32xf32>
    %128 = arith.mulf %127, %126 : vector<64x32xf32>
    %cst_84 = arith.constant -1.45315206 : f32
    %129 = vector.broadcast %cst_84 : f32 to vector<64x32xf32>
    %130 = arith.addf %128, %129 : vector<64x32xf32>
    %131 = arith.mulf %130, %126 : vector<64x32xf32>
    %cst_85 = arith.constant 1.42141378 : f32
    %132 = vector.broadcast %cst_85 : f32 to vector<64x32xf32>
    %133 = arith.addf %131, %132 : vector<64x32xf32>
    %134 = arith.mulf %133, %126 : vector<64x32xf32>
    %cst_86 = arith.constant -0.284496725 : f32
    %135 = vector.broadcast %cst_86 : f32 to vector<64x32xf32>
    %136 = arith.addf %134, %135 : vector<64x32xf32>
    %137 = arith.mulf %136, %126 : vector<64x32xf32>
    %cst_87 = arith.constant 0.254829586 : f32
    %138 = vector.broadcast %cst_87 : f32 to vector<64x32xf32>
    %139 = arith.addf %137, %138 : vector<64x32xf32>
    %140 = arith.mulf %139, %126 : vector<64x32xf32>
    %cst_88 = arith.constant 0.000000e+00 : f32
    %141 = vector.broadcast %cst_88 : f32 to vector<64x32xf32>
    %142 = arith.subf %141, %120 : vector<64x32xf32>
    %143 = arith.mulf %142, %120 : vector<64x32xf32>
    %144 = math.exp %143 : vector<64x32xf32>
    %145 = arith.mulf %140, %144 : vector<64x32xf32>
    %cst_89 = arith.constant 1.000000e+00 : f32
    %146 = vector.broadcast %cst_89 : f32 to vector<64x32xf32>
    %147 = arith.subf %146, %145 : vector<64x32xf32>
    %cst_90 = arith.constant 0.000000e+00 : f32
    %148 = vector.broadcast %cst_90 : f32 to vector<64x32xf32>
    %149 = arith.cmpf olt, %119, %148 : vector<64x32xf32>
    %cst_91 = arith.constant 0.000000e+00 : f32
    %150 = vector.broadcast %cst_91 : f32 to vector<64x32xf32>
    %151 = arith.subf %150, %147 : vector<64x32xf32>
    %152 = arith.select %149, %151, %147 : vector<64x32xi1>, vector<64x32xf32>
    %cst_92 = arith.constant 1.000000e+00 : f32
    %153 = vector.broadcast %cst_92 : f32 to vector<64x32xf32>
    %154 = arith.addf %153, %152 : vector<64x32xf32>
    %155 = arith.mulf %117, %154 : vector<64x32xf32>
    %c0_93 = arith.constant 0 : index
    %c0_94 = arith.constant 0 : index
    %156 = vector.load %arg18[%c0_93, %c0_94] : memref<32x16xf32, #tpu.memory_space<vmem>>, vector<32x16xf32>
    %cst_95 = arith.constant dense<0.000000e+00> : vector<64x16xf32>
    %157 = tpu.matmul %155, %156, %cst_95 {dimension_numbers = #tpu.dot_dimension_numbers<[1], [0], [0], [1], [0, 0, 1, 1], [], []>} : vector<64x32xf32>, vector<32x16xf32>, vector<64x16xf32> -> vector<64x16xf32>
    %158 = arith.addf %88, %157 : vector<64x16xf32>
    %c0_96 = arith.constant 0 : index
    %c0_97 = arith.constant 0 : index
    %159 = vector.load %arg19[%c0_96, %c0_97] : memref<1x16xf32, #tpu.memory_space<vmem>>, vector<1x16xf32>
    %160 = vector.broadcast %159 : vector<1x16xf32> to vector<64x16xf32>
    %161 = arith.addf %158, %160 : vector<64x16xf32>
    %c0_98 = arith.constant 0 : index
    %c0_99 = arith.constant 0 : index
    %162 = vector.load %arg20[%c0_98, %c0_99] : memref<1x16xf32, #tpu.memory_space<vmem>>, vector<1x16xf32>
    %c0_100 = arith.constant 0 : index
    %c0_101 = arith.constant 0 : index
    %163 = vector.load %arg21[%c0_100, %c0_101] : memref<1x16xf32, #tpu.memory_space<vmem>>, vector<1x16xf32>
    %cst_102 = arith.constant dense<0.000000e+00> : vector<64xf32>
    %164 = vector.multi_reduction <add>, %161, %cst_102 [1] : vector<64x16xf32> to vector<64xf32>
    %165 = vector.shape_cast %164 : vector<64xf32> to vector<64x1xf32>
    %cst_103 = arith.constant 1.600000e+01 : f32
    %166 = vector.broadcast %cst_103 : f32 to vector<64x1xf32>
    %167 = arith.divf %165, %166 : vector<64x1xf32>
    %168 = vector.broadcast %167 : vector<64x1xf32> to vector<64x16xf32>
    %169 = arith.subf %161, %168 : vector<64x16xf32>
    %170 = arith.mulf %169, %169 : vector<64x16xf32>
    %cst_104 = arith.constant dense<0.000000e+00> : vector<64xf32>
    %171 = vector.multi_reduction <add>, %170, %cst_104 [1] : vector<64x16xf32> to vector<64xf32>
    %172 = vector.shape_cast %171 : vector<64xf32> to vector<64x1xf32>
    %cst_105 = arith.constant 1.600000e+01 : f32
    %173 = vector.broadcast %cst_105 : f32 to vector<64x1xf32>
    %174 = arith.divf %172, %173 : vector<64x1xf32>
    %cst_106 = arith.constant 9.99999974E-6 : f32
    %175 = vector.broadcast %cst_106 : f32 to vector<64x1xf32>
    %176 = arith.addf %174, %175 : vector<64x1xf32>
    %177 = math.rsqrt %176 : vector<64x1xf32>
    %178 = vector.broadcast %177 : vector<64x1xf32> to vector<64x16xf32>
    %179 = arith.mulf %169, %178 : vector<64x16xf32>
    %180 = vector.broadcast %162 : vector<1x16xf32> to vector<64x16xf32>
    %181 = arith.mulf %179, %180 : vector<64x16xf32>
    %182 = vector.broadcast %163 : vector<1x16xf32> to vector<64x16xf32>
    %183 = arith.addf %181, %182 : vector<64x16xf32>
    %cst_107 = arith.constant dense<0.000000e+00> : vector<64x16xf32>
    %184 = tpu.matmul %7, %183, %cst_107 {dimension_numbers = #tpu.dot_dimension_numbers<[1], [0], [0], [1], [0, 0, 1, 1], [], []>} : vector<64x64xf32>, vector<64x16xf32>, vector<64x16xf32> -> vector<64x16xf32>
    %c0_108 = arith.constant 0 : index
    %c0_109 = arith.constant 0 : index
    %185 = vector.load %arg27[%c0_108, %c0_109] : memref<64x64xf32, #tpu.memory_space<vmem>>, vector<64x64xf32>
    %c0_110 = arith.constant 0 : index
    %c0_111 = arith.constant 0 : index
    %c0_112 = arith.constant 0 : index
    %186 = vector.load %arg22[%c0_110, %c0_111, %c0_112] : memref<2x16x8xf32, #tpu.memory_space<vmem>>, vector<1x16x8xf32>
    %187 = vector.shape_cast %186 : vector<1x16x8xf32> to vector<16x8xf32>
    %cst_113 = arith.constant dense<0.000000e+00> : vector<64x8xf32>
    %188 = tpu.matmul %184, %187, %cst_113 {dimension_numbers = #tpu.dot_dimension_numbers<[1], [0], [0], [1], [0, 0, 1, 1], [], []>} : vector<64x16xf32>, vector<16x8xf32>, vector<64x8xf32> -> vector<64x8xf32>
    %c0_114 = arith.constant 0 : index
    %c0_115 = arith.constant 0 : index
    %c0_116 = arith.constant 0 : index
    %189 = vector.load %arg23[%c0_114, %c0_115, %c0_116] : memref<2x16x8xf32, #tpu.memory_space<vmem>>, vector<1x16x8xf32>
    %190 = vector.shape_cast %189 : vector<1x16x8xf32> to vector<16x8xf32>
    %cst_117 = arith.constant dense<0.000000e+00> : vector<64x8xf32>
    %191 = tpu.matmul %184, %190, %cst_117 {dimension_numbers = #tpu.dot_dimension_numbers<[1], [0], [0], [1], [0, 0, 1, 1], [], []>} : vector<64x16xf32>, vector<16x8xf32>, vector<64x8xf32> -> vector<64x8xf32>
    %c0_118 = arith.constant 0 : index
    %c0_119 = arith.constant 0 : index
    %c0_120 = arith.constant 0 : index
    %192 = vector.load %arg24[%c0_118, %c0_119, %c0_120] : memref<2x16x8xf32, #tpu.memory_space<vmem>>, vector<1x16x8xf32>
    %193 = vector.shape_cast %192 : vector<1x16x8xf32> to vector<16x8xf32>
    %cst_121 = arith.constant dense<0.000000e+00> : vector<64x8xf32>
    %194 = tpu.matmul %184, %193, %cst_121 {dimension_numbers = #tpu.dot_dimension_numbers<[1], [0], [0], [1], [0, 0, 1, 1], [], []>} : vector<64x16xf32>, vector<16x8xf32>, vector<64x8xf32> -> vector<64x8xf32>
    "tpu.trace_start"() <{level = 10 : i32, message = "td,sd->ts"}> : () -> ()
    %cst_122 = arith.constant dense<0.000000e+00> : vector<64x64xf32>
    %195 = tpu.matmul %188, %191, %cst_122 {dimension_numbers = #tpu.dot_dimension_numbers<[1], [1], [0], [0], [0, 0, 1, 0], [], []>} : vector<64x8xf32>, vector<64x8xf32>, vector<64x64xf32> -> vector<64x64xf32>
    "tpu.trace_stop"() : () -> ()
    %196 = arith.addf %195, %185 : vector<64x64xf32>
    %cst_123 = arith.constant dense<0xFF800000> : vector<64xf32>
    %197 = vector.multi_reduction <maximumf>, %196, %cst_123 [1] : vector<64x64xf32> to vector<64xf32>
    %198 = vector.shape_cast %197 : vector<64xf32> to vector<64x1xf32>
    %199 = vector.broadcast %198 : vector<64x1xf32> to vector<64x64xf32>
    %200 = arith.subf %196, %199 : vector<64x64xf32>
    %201 = math.exp %200 : vector<64x64xf32>
    %cst_124 = arith.constant dense<0.000000e+00> : vector<64xf32>
    %202 = vector.multi_reduction <add>, %201, %cst_124 [1] : vector<64x64xf32> to vector<64xf32>
    %203 = vector.shape_cast %202 : vector<64xf32> to vector<64x1xf32>
    %204 = tpu.reciprocal %203 {approx = true} : vector<64x1xf32> -> vector<64x1xf32>
    %205 = vector.broadcast %204 : vector<64x1xf32> to vector<64x64xf32>
    %206 = arith.mulf %201, %205 : vector<64x64xf32>
    %cst_125 = arith.constant dense<0.000000e+00> : vector<64x8xf32>
    %207 = tpu.matmul %206, %194, %cst_125 {dimension_numbers = #tpu.dot_dimension_numbers<[1], [0], [0], [1], [0, 0, 1, 1], [], []>} : vector<64x64xf32>, vector<64x8xf32>, vector<64x8xf32> -> vector<64x8xf32>
    %c0_126 = arith.constant 0 : index
    %c0_127 = arith.constant 0 : index
    %c0_128 = arith.constant 0 : index
    %208 = vector.load %arg25[%c0_126, %c0_127, %c0_128] : memref<2x8x16xf32, #tpu.memory_space<vmem>>, vector<1x8x16xf32>
    %209 = vector.shape_cast %208 : vector<1x8x16xf32> to vector<8x16xf32>
    %cst_129 = arith.constant dense<0.000000e+00> : vector<64x16xf32>
    %210 = tpu.matmul %207, %209, %cst_129 {dimension_numbers = #tpu.dot_dimension_numbers<[1], [0], [0], [1], [0, 0, 1, 1], [], []>} : vector<64x8xf32>, vector<8x16xf32>, vector<64x16xf32> -> vector<64x16xf32>
    %c1_130 = arith.constant 1 : index
    %c0_131 = arith.constant 0 : index
    %c0_132 = arith.constant 0 : index
    %211 = vector.load %arg22[%c1_130, %c0_131, %c0_132] : memref<2x16x8xf32, #tpu.memory_space<vmem>>, vector<1x16x8xf32>
    %212 = vector.shape_cast %211 : vector<1x16x8xf32> to vector<16x8xf32>
    %cst_133 = arith.constant dense<0.000000e+00> : vector<64x8xf32>
    %213 = tpu.matmul %184, %212, %cst_133 {dimension_numbers = #tpu.dot_dimension_numbers<[1], [0], [0], [1], [0, 0, 1, 1], [], []>} : vector<64x16xf32>, vector<16x8xf32>, vector<64x8xf32> -> vector<64x8xf32>
    %c1_134 = arith.constant 1 : index
    %c0_135 = arith.constant 0 : index
    %c0_136 = arith.constant 0 : index
    %214 = vector.load %arg23[%c1_134, %c0_135, %c0_136] : memref<2x16x8xf32, #tpu.memory_space<vmem>>, vector<1x16x8xf32>
    %215 = vector.shape_cast %214 : vector<1x16x8xf32> to vector<16x8xf32>
    %cst_137 = arith.constant dense<0.000000e+00> : vector<64x8xf32>
    %216 = tpu.matmul %184, %215, %cst_137 {dimension_numbers = #tpu.dot_dimension_numbers<[1], [0], [0], [1], [0, 0, 1, 1], [], []>} : vector<64x16xf32>, vector<16x8xf32>, vector<64x8xf32> -> vector<64x8xf32>
    %c1_138 = arith.constant 1 : index
    %c0_139 = arith.constant 0 : index
    %c0_140 = arith.constant 0 : index
    %217 = vector.load %arg24[%c1_138, %c0_139, %c0_140] : memref<2x16x8xf32, #tpu.memory_space<vmem>>, vector<1x16x8xf32>
    %218 = vector.shape_cast %217 : vector<1x16x8xf32> to vector<16x8xf32>
    %cst_141 = arith.constant dense<0.000000e+00> : vector<64x8xf32>
    %219 = tpu.matmul %184, %218, %cst_141 {dimension_numbers = #tpu.dot_dimension_numbers<[1], [0], [0], [1], [0, 0, 1, 1], [], []>} : vector<64x16xf32>, vector<16x8xf32>, vector<64x8xf32> -> vector<64x8xf32>
    "tpu.trace_start"() <{level = 10 : i32, message = "td,sd->ts"}> : () -> ()
    %cst_142 = arith.constant dense<0.000000e+00> : vector<64x64xf32>
    %220 = tpu.matmul %213, %216, %cst_142 {dimension_numbers = #tpu.dot_dimension_numbers<[1], [1], [0], [0], [0, 0, 1, 0], [], []>} : vector<64x8xf32>, vector<64x8xf32>, vector<64x64xf32> -> vector<64x64xf32>
    "tpu.trace_stop"() : () -> ()
    %221 = arith.addf %220, %185 : vector<64x64xf32>
    %cst_143 = arith.constant dense<0xFF800000> : vector<64xf32>
    %222 = vector.multi_reduction <maximumf>, %221, %cst_143 [1] : vector<64x64xf32> to vector<64xf32>
    %223 = vector.shape_cast %222 : vector<64xf32> to vector<64x1xf32>
    %224 = vector.broadcast %223 : vector<64x1xf32> to vector<64x64xf32>
    %225 = arith.subf %221, %224 : vector<64x64xf32>
    %226 = math.exp %225 : vector<64x64xf32>
    %cst_144 = arith.constant dense<0.000000e+00> : vector<64xf32>
    %227 = vector.multi_reduction <add>, %226, %cst_144 [1] : vector<64x64xf32> to vector<64xf32>
    %228 = vector.shape_cast %227 : vector<64xf32> to vector<64x1xf32>
    %229 = tpu.reciprocal %228 {approx = true} : vector<64x1xf32> -> vector<64x1xf32>
    %230 = vector.broadcast %229 : vector<64x1xf32> to vector<64x64xf32>
    %231 = arith.mulf %226, %230 : vector<64x64xf32>
    %cst_145 = arith.constant dense<0.000000e+00> : vector<64x8xf32>
    %232 = tpu.matmul %231, %219, %cst_145 {dimension_numbers = #tpu.dot_dimension_numbers<[1], [0], [0], [1], [0, 0, 1, 1], [], []>} : vector<64x64xf32>, vector<64x8xf32>, vector<64x8xf32> -> vector<64x8xf32>
    %c1_146 = arith.constant 1 : index
    %c0_147 = arith.constant 0 : index
    %c0_148 = arith.constant 0 : index
    %233 = vector.load %arg25[%c1_146, %c0_147, %c0_148] : memref<2x8x16xf32, #tpu.memory_space<vmem>>, vector<1x8x16xf32>
    %234 = vector.shape_cast %233 : vector<1x8x16xf32> to vector<8x16xf32>
    %cst_149 = arith.constant dense<0.000000e+00> : vector<64x16xf32>
    %235 = tpu.matmul %232, %234, %cst_149 {dimension_numbers = #tpu.dot_dimension_numbers<[1], [0], [0], [1], [0, 0, 1, 1], [], []>} : vector<64x8xf32>, vector<8x16xf32>, vector<64x16xf32> -> vector<64x16xf32>
    %236 = arith.addf %210, %235 : vector<64x16xf32>
    %c0_150 = arith.constant 0 : index
    %c0_151 = arith.constant 0 : index
    %237 = vector.load %arg28[%c0_150, %c0_151] : memref<64x64xf32, #tpu.memory_space<vmem>>, vector<64x64xf32>
    %cst_152 = arith.constant dense<0.000000e+00> : vector<64x16xf32>
    %238 = tpu.matmul %237, %236, %cst_152 {dimension_numbers = #tpu.dot_dimension_numbers<[1], [0], [0], [1], [0, 0, 1, 1], [], []>} : vector<64x64xf32>, vector<64x16xf32>, vector<64x16xf32> -> vector<64x16xf32>
    %c0_153 = arith.constant 0 : index
    %c0_154 = arith.constant 0 : index
    %239 = vector.load %arg26[%c0_153, %c0_154] : memref<1x16xf32, #tpu.memory_space<vmem>>, vector<1x16xf32>
    %240 = vector.broadcast %239 : vector<1x16xf32> to vector<64x16xf32>
    %241 = arith.addf %238, %240 : vector<64x16xf32>
    %242 = arith.addf %161, %241 : vector<64x16xf32>
    %c0_155 = arith.constant 0 : index
    %c0_156 = arith.constant 0 : index
    %243 = vector.load %arg29[%c0_155, %c0_156] : memref<1x16xf32, #tpu.memory_space<vmem>>, vector<1x16xf32>
    %c0_157 = arith.constant 0 : index
    %c0_158 = arith.constant 0 : index
    %244 = vector.load %arg30[%c0_157, %c0_158] : memref<1x16xf32, #tpu.memory_space<vmem>>, vector<1x16xf32>
    %cst_159 = arith.constant dense<0.000000e+00> : vector<64xf32>
    %245 = vector.multi_reduction <add>, %242, %cst_159 [1] : vector<64x16xf32> to vector<64xf32>
    %246 = vector.shape_cast %245 : vector<64xf32> to vector<64x1xf32>
    %cst_160 = arith.constant 1.600000e+01 : f32
    %247 = vector.broadcast %cst_160 : f32 to vector<64x1xf32>
    %248 = arith.divf %246, %247 : vector<64x1xf32>
    %249 = vector.broadcast %248 : vector<64x1xf32> to vector<64x16xf32>
    %250 = arith.subf %242, %249 : vector<64x16xf32>
    %251 = arith.mulf %250, %250 : vector<64x16xf32>
    %cst_161 = arith.constant dense<0.000000e+00> : vector<64xf32>
    %252 = vector.multi_reduction <add>, %251, %cst_161 [1] : vector<64x16xf32> to vector<64xf32>
    %253 = vector.shape_cast %252 : vector<64xf32> to vector<64x1xf32>
    %cst_162 = arith.constant 1.600000e+01 : f32
    %254 = vector.broadcast %cst_162 : f32 to vector<64x1xf32>
    %255 = arith.divf %253, %254 : vector<64x1xf32>
    %cst_163 = arith.constant 9.99999974E-6 : f32
    %256 = vector.broadcast %cst_163 : f32 to vector<64x1xf32>
    %257 = arith.addf %255, %256 : vector<64x1xf32>
    %258 = math.rsqrt %257 : vector<64x1xf32>
    %259 = vector.broadcast %258 : vector<64x1xf32> to vector<64x16xf32>
    %260 = arith.mulf %250, %259 : vector<64x16xf32>
    %261 = vector.broadcast %243 : vector<1x16xf32> to vector<64x16xf32>
    %262 = arith.mulf %260, %261 : vector<64x16xf32>
    %263 = vector.broadcast %244 : vector<1x16xf32> to vector<64x16xf32>
    %264 = arith.addf %262, %263 : vector<64x16xf32>
    %c0_164 = arith.constant 0 : index
    %c0_165 = arith.constant 0 : index
    %265 = vector.load %arg31[%c0_164, %c0_165] : memref<16x32xf32, #tpu.memory_space<vmem>>, vector<16x32xf32>
    %cst_166 = arith.constant dense<0.000000e+00> : vector<64x32xf32>
    %266 = tpu.matmul %264, %265, %cst_166 {dimension_numbers = #tpu.dot_dimension_numbers<[1], [0], [0], [1], [0, 0, 1, 1], [], []>} : vector<64x16xf32>, vector<16x32xf32>, vector<64x32xf32> -> vector<64x32xf32>
    %c0_167 = arith.constant 0 : index
    %c0_168 = arith.constant 0 : index
    %267 = vector.load %arg32[%c0_167, %c0_168] : memref<1x32xf32, #tpu.memory_space<vmem>>, vector<1x32xf32>
    %268 = vector.broadcast %267 : vector<1x32xf32> to vector<64x32xf32>
    %269 = arith.addf %266, %268 : vector<64x32xf32>
    %cst_169 = arith.constant 5.000000e-01 : f32
    %270 = vector.broadcast %cst_169 : f32 to vector<64x32xf32>
    %271 = arith.mulf %270, %269 : vector<64x32xf32>
    %cst_170 = arith.constant 0.707106769 : f32
    %272 = vector.broadcast %cst_170 : f32 to vector<64x32xf32>
    %273 = arith.mulf %269, %272 : vector<64x32xf32>
    %274 = math.absf %273 : vector<64x32xf32>
    %cst_171 = arith.constant 0.327591091 : f32
    %275 = vector.broadcast %cst_171 : f32 to vector<64x32xf32>
    %276 = arith.mulf %275, %274 : vector<64x32xf32>
    %cst_172 = arith.constant 1.000000e+00 : f32
    %277 = vector.broadcast %cst_172 : f32 to vector<64x32xf32>
    %278 = arith.addf %277, %276 : vector<64x32xf32>
    %cst_173 = arith.constant 1.000000e+00 : f32
    %279 = vector.broadcast %cst_173 : f32 to vector<64x32xf32>
    %280 = arith.divf %279, %278 : vector<64x32xf32>
    %cst_174 = arith.constant 1.06140542 : f32
    %281 = vector.broadcast %cst_174 : f32 to vector<64x32xf32>
    %282 = arith.mulf %281, %280 : vector<64x32xf32>
    %cst_175 = arith.constant -1.45315206 : f32
    %283 = vector.broadcast %cst_175 : f32 to vector<64x32xf32>
    %284 = arith.addf %282, %283 : vector<64x32xf32>
    %285 = arith.mulf %284, %280 : vector<64x32xf32>
    %cst_176 = arith.constant 1.42141378 : f32
    %286 = vector.broadcast %cst_176 : f32 to vector<64x32xf32>
    %287 = arith.addf %285, %286 : vector<64x32xf32>
    %288 = arith.mulf %287, %280 : vector<64x32xf32>
    %cst_177 = arith.constant -0.284496725 : f32
    %289 = vector.broadcast %cst_177 : f32 to vector<64x32xf32>
    %290 = arith.addf %288, %289 : vector<64x32xf32>
    %291 = arith.mulf %290, %280 : vector<64x32xf32>
    %cst_178 = arith.constant 0.254829586 : f32
    %292 = vector.broadcast %cst_178 : f32 to vector<64x32xf32>
    %293 = arith.addf %291, %292 : vector<64x32xf32>
    %294 = arith.mulf %293, %280 : vector<64x32xf32>
    %cst_179 = arith.constant 0.000000e+00 : f32
    %295 = vector.broadcast %cst_179 : f32 to vector<64x32xf32>
    %296 = arith.subf %295, %274 : vector<64x32xf32>
    %297 = arith.mulf %296, %274 : vector<64x32xf32>
    %298 = math.exp %297 : vector<64x32xf32>
    %299 = arith.mulf %294, %298 : vector<64x32xf32>
    %cst_180 = arith.constant 1.000000e+00 : f32
    %300 = vector.broadcast %cst_180 : f32 to vector<64x32xf32>
    %301 = arith.subf %300, %299 : vector<64x32xf32>
    %cst_181 = arith.constant 0.000000e+00 : f32
    %302 = vector.broadcast %cst_181 : f32 to vector<64x32xf32>
    %303 = arith.cmpf olt, %273, %302 : vector<64x32xf32>
    %cst_182 = arith.constant 0.000000e+00 : f32
    %304 = vector.broadcast %cst_182 : f32 to vector<64x32xf32>
    %305 = arith.subf %304, %301 : vector<64x32xf32>
    %306 = arith.select %303, %305, %301 : vector<64x32xi1>, vector<64x32xf32>
    %cst_183 = arith.constant 1.000000e+00 : f32
    %307 = vector.broadcast %cst_183 : f32 to vector<64x32xf32>
    %308 = arith.addf %307, %306 : vector<64x32xf32>
    %309 = arith.mulf %271, %308 : vector<64x32xf32>
    %c0_184 = arith.constant 0 : index
    %c0_185 = arith.constant 0 : index
    %310 = vector.load %arg33[%c0_184, %c0_185] : memref<32x16xf32, #tpu.memory_space<vmem>>, vector<32x16xf32>
    %cst_186 = arith.constant dense<0.000000e+00> : vector<64x16xf32>
    %311 = tpu.matmul %309, %310, %cst_186 {dimension_numbers = #tpu.dot_dimension_numbers<[1], [0], [0], [1], [0, 0, 1, 1], [], []>} : vector<64x32xf32>, vector<32x16xf32>, vector<64x16xf32> -> vector<64x16xf32>
    %312 = arith.addf %242, %311 : vector<64x16xf32>
    %c0_187 = arith.constant 0 : index
    %c0_188 = arith.constant 0 : index
    %313 = vector.load %arg34[%c0_187, %c0_188] : memref<1x16xf32, #tpu.memory_space<vmem>>, vector<1x16xf32>
    %314 = vector.broadcast %313 : vector<1x16xf32> to vector<64x16xf32>
    %315 = arith.addf %312, %314 : vector<64x16xf32>
    %c0_189 = arith.constant 0 : index
    %c0_190 = arith.constant 0 : index
    %c0_191 = arith.constant 0 : index
    %316 = vector.load %arg35[%c0_189, %c0_190, %c0_191] : memref<1x64x16xf32, #tpu.memory_space<vmem>>, vector<1x64x16xf32>
    %317 = vector.shape_cast %316 : vector<1x64x16xf32> to vector<64x16xf32>
    %318 = vector.shape_cast %315 : vector<64x16xf32> to vector<1x64x16xf32>
    tpu.vector_store %arg35[%c0_189, %c0_190, %c0_191], %318 {strides = array<i32>} : memref<1x64x16xf32, #tpu.memory_space<vmem>>, vector<1x64x16xf32>,
    return
  }
  func.func @transform_0(%arg0: i32) -> (i32, i32, i32) {
    %c0_i32 = arith.constant 0 : i32
    %c0_i32_0 = arith.constant 0 : i32
    %c0_i32_1 = arith.constant 0 : i32
    return %arg0, %c0_i32, %c0_i32_0 : i32, i32, i32
  }
  func.func @transform_1(%arg0: i32) -> (i32, i32) {
    %c0_i32 = arith.constant 0 : i32
    %c0_i32_0 = arith.constant 0 : i32
    %c0_i32_1 = arith.constant 0 : i32
    return %c0_i32, %c0_i32_0 : i32, i32
  }
  func.func @transform_2(%arg0: i32) -> (i32, i32) {
    %c0_i32 = arith.constant 0 : i32
    %c0_i32_0 = arith.constant 0 : i32
    %c0_i32_1 = arith.constant 0 : i32
    return %c0_i32, %c0_i32_0 : i32, i32
  }
  func.func @transform_3(%arg0: i32) -> (i32, i32) {
    %c0_i32 = arith.constant 0 : i32
    %c0_i32_0 = arith.constant 0 : i32
    %c0_i32_1 = arith.constant 0 : i32
    return %c0_i32, %c0_i32_0 : i32, i32
  }
  func.func @transform_4(%arg0: i32) -> (i32, i32) {
    %c0_i32 = arith.constant 0 : i32
    %c0_i32_0 = arith.constant 0 : i32
    %c0_i32_1 = arith.constant 0 : i32
    return %c0_i32, %c0_i32_0 : i32, i32
  }
  func.func @transform_5(%arg0: i32) -> (i32, i32) {
    %c0_i32 = arith.constant 0 : i32
    %c0_i32_0 = arith.constant 0 : i32
    %c0_i32_1 = arith.constant 0 : i32
    return %c0_i32, %c0_i32_0 : i32, i32
  }
  func.func @transform_6(%arg0: i32) -> (i32, i32, i32) {
    %c0_i32 = arith.constant 0 : i32
    %c0_i32_0 = arith.constant 0 : i32
    %c0_i32_1 = arith.constant 0 : i32
    %c0_i32_2 = arith.constant 0 : i32
    return %c0_i32, %c0_i32_0, %c0_i32_1 : i32, i32, i32
  }
  func.func @transform_7(%arg0: i32) -> (i32, i32, i32) {
    %c0_i32 = arith.constant 0 : i32
    %c0_i32_0 = arith.constant 0 : i32
    %c0_i32_1 = arith.constant 0 : i32
    %c0_i32_2 = arith.constant 0 : i32
    return %c0_i32, %c0_i32_0, %c0_i32_1 : i32, i32, i32
  }
  func.func @transform_8(%arg0: i32) -> (i32, i32, i32) {
    %c0_i32 = arith.constant 0 : i32
    %c0_i32_0 = arith.constant 0 : i32
    %c0_i32_1 = arith.constant 0 : i32
    %c0_i32_2 = arith.constant 0 : i32
    return %c0_i32, %c0_i32_0, %c0_i32_1 : i32, i32, i32
  }
  func.func @transform_9(%arg0: i32) -> (i32, i32, i32) {
    %c0_i32 = arith.constant 0 : i32
    %c0_i32_0 = arith.constant 0 : i32
    %c0_i32_1 = arith.constant 0 : i32
    %c0_i32_2 = arith.constant 0 : i32
    return %c0_i32, %c0_i32_0, %c0_i32_1 : i32, i32, i32
  }
  func.func @transform_10(%arg0: i32) -> (i32, i32) {
    %c0_i32 = arith.constant 0 : i32
    %c0_i32_0 = arith.constant 0 : i32
    %c0_i32_1 = arith.constant 0 : i32
    return %c0_i32, %c0_i32_0 : i32, i32
  }
  func.func @transform_11(%arg0: i32) -> (i32, i32) {
    %c0_i32 = arith.constant 0 : i32
    %c0_i32_0 = arith.constant 0 : i32
    %c0_i32_1 = arith.constant 0 : i32
    return %c0_i32, %c0_i32_0 : i32, i32
  }
  func.func @transform_12(%arg0: i32) -> (i32, i32) {
    %c0_i32 = arith.constant 0 : i32
    %c0_i32_0 = arith.constant 0 : i32
    %c0_i32_1 = arith.constant 0 : i32
    return %c0_i32, %c0_i32_0 : i32, i32
  }
  func.func @transform_13(%arg0: i32) -> (i32, i32) {
    %c0_i32 = arith.constant 0 : i32
    %c0_i32_0 = arith.constant 0 : i32
    %c0_i32_1 = arith.constant 0 : i32
    return %c0_i32, %c0_i32_0 : i32, i32
  }
  func.func @transform_14(%arg0: i32) -> (i32, i32) {
    %c0_i32 = arith.constant 0 : i32
    %c0_i32_0 = arith.constant 0 : i32
    %c0_i32_1 = arith.constant 0 : i32
    return %c0_i32, %c0_i32_0 : i32, i32
  }
  func.func @transform_15(%arg0: i32) -> (i32, i32) {
    %c0_i32 = arith.constant 0 : i32
    %c0_i32_0 = arith.constant 0 : i32
    %c0_i32_1 = arith.constant 0 : i32
    return %c0_i32, %c0_i32_0 : i32, i32
  }
  func.func @transform_16(%arg0: i32) -> (i32, i32) {
    %c0_i32 = arith.constant 0 : i32
    %c0_i32_0 = arith.constant 0 : i32
    %c0_i32_1 = arith.constant 0 : i32
    return %c0_i32, %c0_i32_0 : i32, i32
  }
  func.func @transform_17(%arg0: i32) -> (i32, i32) {
    %c0_i32 = arith.constant 0 : i32
    %c0_i32_0 = arith.constant 0 : i32
    %c0_i32_1 = arith.constant 0 : i32
    return %c0_i32, %c0_i32_0 : i32, i32
  }
  func.func @transform_18(%arg0: i32) -> (i32, i32) {
    %c0_i32 = arith.constant 0 : i32
    %c0_i32_0 = arith.constant 0 : i32
    %c0_i32_1 = arith.constant 0 : i32
    return %c0_i32, %c0_i32_0 : i32, i32
  }
  func.func @transform_19(%arg0: i32) -> (i32, i32) {
    %c0_i32 = arith.constant 0 : i32
    %c0_i32_0 = arith.constant 0 : i32
    %c0_i32_1 = arith.constant 0 : i32
    return %c0_i32, %c0_i32_0 : i32, i32
  }
  func.func @transform_20(%arg0: i32) -> (i32, i32) {
    %c0_i32 = arith.constant 0 : i32
    %c0_i32_0 = arith.constant 0 : i32
    %c0_i32_1 = arith.constant 0 : i32
    return %c0_i32, %c0_i32_0 : i32, i32
  }
  func.func @transform_21(%arg0: i32) -> (i32, i32, i32) {
    %c0_i32 = arith.constant 0 : i32
    %c0_i32_0 = arith.constant 0 : i32
    %c0_i32_1 = arith.constant 0 : i32
    %c0_i32_2 = arith.constant 0 : i32
    return %c0_i32, %c0_i32_0, %c0_i32_1 : i32, i32, i32
  }
  func.func @transform_22(%arg0: i32) -> (i32, i32, i32) {
    %c0_i32 = arith.constant 0 : i32
    %c0_i32_0 = arith.constant 0 : i32
    %c0_i32_1 = arith.constant 0 : i32
    %c0_i32_2 = arith.constant 0 : i32
    return %c0_i32, %c0_i32_0, %c0_i32_1 : i32, i32, i32
  }
  func.func @transform_23(%arg0: i32) -> (i32, i32, i32) {
    %c0_i32 = arith.constant 0 : i32
    %c0_i32_0 = arith.constant 0 : i32
    %c0_i32_1 = arith.constant 0 : i32
    %c0_i32_2 = arith.constant 0 : i32
    return %c0_i32, %c0_i32_0, %c0_i32_1 : i32, i32, i32
  }
  func.func @transform_24(%arg0: i32) -> (i32, i32, i32) {
    %c0_i32 = arith.constant 0 : i32
    %c0_i32_0 = arith.constant 0 : i32
    %c0_i32_1 = arith.constant 0 : i32
    %c0_i32_2 = arith.constant 0 : i32
    return %c0_i32, %c0_i32_0, %c0_i32_1 : i32, i32, i32
  }
  func.func @transform_25(%arg0: i32) -> (i32, i32) {
    %c0_i32 = arith.constant 0 : i32
    %c0_i32_0 = arith.constant 0 : i32
    %c0_i32_1 = arith.constant 0 : i32
    return %c0_i32, %c0_i32_0 : i32, i32
  }
  func.func @transform_26(%arg0: i32) -> (i32, i32) {
    %c0_i32 = arith.constant 0 : i32
    %c0_i32_0 = arith.constant 0 : i32
    %c0_i32_1 = arith.constant 0 : i32
    return %c0_i32, %c0_i32_0 : i32, i32
  }
  func.func @transform_27(%arg0: i32) -> (i32, i32) {
    %c0_i32 = arith.constant 0 : i32
    %c0_i32_0 = arith.constant 0 : i32
    %c0_i32_1 = arith.constant 0 : i32
    return %c0_i32, %c0_i32_0 : i32, i32
  }
  func.func @transform_28(%arg0: i32) -> (i32, i32) {
    %c0_i32 = arith.constant 0 : i32
    %c0_i32_0 = arith.constant 0 : i32
    %c0_i32_1 = arith.constant 0 : i32
    return %c0_i32, %c0_i32_0 : i32, i32
  }
  func.func @transform_29(%arg0: i32) -> (i32, i32) {
    %c0_i32 = arith.constant 0 : i32
    %c0_i32_0 = arith.constant 0 : i32
    %c0_i32_1 = arith.constant 0 : i32
    return %c0_i32, %c0_i32_0 : i32, i32
  }
  func.func @transform_30(%arg0: i32) -> (i32, i32) {
    %c0_i32 = arith.constant 0 : i32
    %c0_i32_0 = arith.constant 0 : i32
    %c0_i32_1 = arith.constant 0 : i32
    return %c0_i32, %c0_i32_0 : i32, i32
  }
  func.func @transform_31(%arg0: i32) -> (i32, i32) {
    %c0_i32 = arith.constant 0 : i32
    %c0_i32_0 = arith.constant 0 : i32
    %c0_i32_1 = arith.constant 0 : i32
    return %c0_i32, %c0_i32_0 : i32, i32
  }
  func.func @transform_32(%arg0: i32) -> (i32, i32) {
    %c0_i32 = arith.constant 0 : i32
    %c0_i32_0 = arith.constant 0 : i32
    %c0_i32_1 = arith.constant 0 : i32
    return %c0_i32, %c0_i32_0 : i32, i32
  }
  func.func @transform_33(%arg0: i32) -> (i32, i32) {
    %c0_i32 = arith.constant 0 : i32
    %c0_i32_0 = arith.constant 0 : i32
    %c0_i32_1 = arith.constant 0 : i32
    return %c0_i32, %c0_i32_0 : i32, i32
  }
  func.func @transform_34(%arg0: i32) -> (i32, i32, i32) {
    %c0_i32 = arith.constant 0 : i32
    %c0_i32_0 = arith.constant 0 : i32
    %c0_i32_1 = arith.constant 0 : i32
    return %arg0, %c0_i32, %c0_i32_0 : i32, i32, i32
  }
}

</mosaic_0001>

<llo_original>
// kernel: local_transformer_forward.1
$region0: #{local_transformer_forward.1}
  #allocation0 [shape = 'u32[]', space=smem, size = 0x4, offset = 0x4, fixed_abs, tag = 'smem constant byte address 0x4 - core index']
  #allocation1 [shape = 'u32[144,128]{1,0:T(1,128)}', space=vmem, size = 0x12000, scoped, tag = 'internal scratch']
  %s0 = inlined_call_operand.smem [shape: u32[35], index: -1, kind: input, shape index: {}]
  %s1 = sld [smem:[%s0]]
  %s2 = scalar_lea.smem %s0, 1
  %s3 = sld [smem:[%s2]]
  %s4 = scalar_lea.smem %s0, 2
  %s5 = sld [smem:[%s4]]
  %s6 = scalar_lea.smem %s0, 3
  %s7 = sld [smem:[%s6]]
  %s8 = scalar_lea.smem %s0, 4
  %s9 = sld [smem:[%s8]]
  %s10 = scalar_lea.smem %s0, 5
  %s11 = sld [smem:[%s10]]
  %s12 = scalar_lea.smem %s0, 6
  %s13 = sld [smem:[%s12]]
  %s14 = scalar_lea.smem %s0, 7
  %s15 = sld [smem:[%s14]]
  %s16 = scalar_lea.smem %s0, 8
  %s17 = sld [smem:[%s16]]
  %s18 = scalar_lea.smem %s0, 9
  %s19 = sld [smem:[%s18]]
  %s20 = scalar_lea.smem %s0, 10
  %s21 = sld [smem:[%s20]]
  %s22 = scalar_lea.smem %s0, 11
  %s23 = sld [smem:[%s22]]
  %s24 = scalar_lea.smem %s0, 12
  %s25 = sld [smem:[%s24]]
  %s26 = scalar_lea.smem %s0, 13
  %s27 = sld [smem:[%s26]]
  %s28 = scalar_lea.smem %s0, 14
  %s29 = sld [smem:[%s28]]
  %s30 = scalar_lea.smem %s0, 15
  %s31 = sld [smem:[%s30]]
  %s32 = scalar_lea.smem %s0, 16
  %s33 = sld [smem:[%s32]]
  %s34 = scalar_lea.smem %s0, 17
  %s35 = sld [smem:[%s34]]
  %s36 = scalar_lea.smem %s0, 18
  %s37 = sld [smem:[%s36]]
  %s38 = scalar_lea.smem %s0, 19
  %s39 = sld [smem:[%s38]]
  %s40 = scalar_lea.smem %s0, 20
  %s41 = sld [smem:[%s40]]
  %s42 = scalar_lea.smem %s0, 21
  %s43 = sld [smem:[%s42]]
  %s44 = scalar_lea.smem %s0, 22
  %s45 = sld [smem:[%s44]]
  %s46 = scalar_lea.smem %s0, 23
  %s47 = sld [smem:[%s46]]
  %s48 = scalar_lea.smem %s0, 24
  %s49 = sld [smem:[%s48]]
  %s50 = scalar_lea.smem %s0, 25
  %s51 = sld [smem:[%s50]]
  %s52 = scalar_lea.smem %s0, 26
  %s53 = sld [smem:[%s52]]
  %s54 = scalar_lea.smem %s0, 27
  %s55 = sld [smem:[%s54]]
  %s56 = scalar_lea.smem %s0, 28
  %s57 = sld [smem:[%s56]]
  %s58 = scalar_lea.smem %s0, 29
  %s59 = sld [smem:[%s58]]
  %s60 = scalar_lea.smem %s0, 30
  %s61 = sld [smem:[%s60]]
  %s62 = scalar_lea.smem %s0, 31
  %s63 = sld [smem:[%s62]]
  %s64 = scalar_lea.smem %s0, 32
  %s65 = sld [smem:[%s64]]
  %s66 = scalar_lea.smem %s0, 33
  %s67 = sld [smem:[%s66]]
  %s68 = scalar_lea.smem %s0, 34
  %s69 = sld [smem:[%s68]]
  %s70 = sld [smem:[#allocation0]]
  $region169: #{local_transformer_forward.1} parent=0
    _
  %s72 = ssub.s32 1, %s70
  %s73 = scalar_select 0, %s72, %s70
  $region1: #{local_transformer_forward.1} parent=0
    #allocation2 [shape = 'u8[65536]{0}', space=vmem, size = 0x10000, scoped, tag = 'output window, operand 0']
    #allocation3 [shape = 's32[2]{0}', space=sflag, size = 0x8, scoped, tag = 'scoped memory for local_transformer_forward.1']
    %74 = vsyncpa [#allocation3], 0
    %s75 = scalar_lea.sflag [#allocation3], 1
    %76 = vsyncpa %s75, 0
    loop: start=0, step=1, limit=4
    $region2: #{local_transformer_forward.1} parent=1 // loop_pre_header
      _
    $region3: #{local_transformer_forward.1} parent=1 // loop_header
      %s78 = sphi 0, %s82
      %p79 = scmp.ge.s32.totalorder %s78, 4
      %s88 = sphi 0, %s90
      %s91 = sphi 0, %s88
      %s92 = sphi 0, %s91
      %s108 = sphi 0, %s92
      %s112 = sphi 0, %s112
      %s114 = sphi 0, %s112
      %s115 = sphi 0, %s114
      %s129 = sphi 0, %s115
      %s133 = sphi 0, %s133
      %s135 = sphi 0, %s133
      %s136 = sphi 0, %s135
      %s150 = sphi 0, %s136
      %s154 = sphi 0, %s154
      %s156 = sphi 0, %s154
      %s157 = sphi 0, %s156
      %s171 = sphi 0, %s157
      %s175 = sphi 0, %s175
      %s177 = sphi 0, %s175
      %s178 = sphi 0, %s177
      %s192 = sphi 0, %s178
      %s196 = sphi 0, %s196
      %s198 = sphi 0, %s196
      %s199 = sphi 0, %s198
      %s213 = sphi 0, %s199
      %s217 = sphi 0, %s217
      %s219 = sphi 0, %s217
      %s220 = sphi 0, %s219
      %s234 = sphi 0, %s220
      %s238 = sphi 0, %s238
      %s240 = sphi 0, %s238
      %s241 = sphi 0, %s240
      %s255 = sphi 0, %s241
      %s259 = sphi 0, %s259
      %s261 = sphi 0, %s259
      %s262 = sphi 0, %s261
      %s276 = sphi 0, %s262
      %s280 = sphi 0, %s280
      %s282 = sphi 0, %s280
      %s283 = sphi 0, %s282
      %s297 = sphi 0, %s283
      %s301 = sphi 0, %s301
      %s303 = sphi 0, %s301
      %s304 = sphi 0, %s303
      %s318 = sphi 0, %s304
      %s322 = sphi 0, %s322
      %s324 = sphi 0, %s322
      %s325 = sphi 0, %s324
      %s339 = sphi 0, %s325
      %s343 = sphi 0, %s343
      %s345 = sphi 0, %s343
      %s346 = sphi 0, %s345
      %s360 = sphi 0, %s346
      %s364 = sphi 0, %s364
      %s366 = sphi 0, %s364
      %s367 = sphi 0, %s366
      %s381 = sphi 0, %s367
      %s385 = sphi 0, %s385
      %s387 = sphi 0, %s385
      %s388 = sphi 0, %s387
      %s402 = sphi 0, %s388
      %s406 = sphi 0, %s406
      %s408 = sphi 0, %s406
      %s409 = sphi 0, %s408
      %s423 = sphi 0, %s409
      %s427 = sphi 0, %s427
      %s429 = sphi 0, %s427
      %s430 = sphi 0, %s429
      %s444 = sphi 0, %s430
      %s448 = sphi 0, %s448
      %s450 = sphi 0, %s448
      %s451 = sphi 0, %s450
      %s465 = sphi 0, %s451
      %s469 = sphi 0, %s469
      %s471 = sphi 0, %s469
      %s472 = sphi 0, %s471
      %s486 = sphi 0, %s472
      %s490 = sphi 0, %s490
      %s492 = sphi 0, %s490
      %s493 = sphi 0, %s492
      %s507 = sphi 0, %s493
      %s511 = sphi 0, %s511
      %s513 = sphi 0, %s511
      %s514 = sphi 0, %s513
      %s528 = sphi 0, %s514
      %s532 = sphi 0, %s532
      %s534 = sphi 0, %s532
      %s535 = sphi 0, %s534
      %s549 = sphi 0, %s535
      %s553 = sphi 0, %s553
      %s555 = sphi 0, %s553
      %s556 = sphi 0, %s555
      %s570 = sphi 0, %s556
      %s574 = sphi 0, %s574
      %s576 = sphi 0, %s574
      %s577 = sphi 0, %s576
      %s591 = sphi 0, %s577
      %s595 = sphi 0, %s595
      %s597 = sphi 0, %s595
      %s598 = sphi 0, %s597
      %s612 = sphi 0, %s598
      %s616 = sphi 0, %s616
      %s618 = sphi 0, %s616
      %s619 = sphi 0, %s618
      %s633 = sphi 0, %s619
      %s637 = sphi 0, %s637
      %s639 = sphi 0, %s637
      %s640 = sphi 0, %s639
      %s654 = sphi 0, %s640
      %s658 = sphi 0, %s658
      %s660 = sphi 0, %s658
      %s661 = sphi 0, %s660
      %s675 = sphi 0, %s661
      %s679 = sphi 0, %s679
      %s681 = sphi 0, %s679
      %s682 = sphi 0, %s681
      %s696 = sphi 0, %s682
      %s700 = sphi 0, %s700
      %s702 = sphi 0, %s700
      %s703 = sphi 0, %s702
      %s717 = sphi 0, %s703
      %s721 = sphi 0, %s721
      %s723 = sphi 0, %s721
      %s724 = sphi 0, %s723
      %s738 = sphi 0, %s724
      %s742 = sphi 0, %s742
      %s744 = sphi 0, %s742
      %s745 = sphi 0, %s744
      %s759 = sphi 0, %s745
      %s763 = sphi 0, %s763
      %s765 = sphi 0, %s763
      %s766 = sphi 0, %s765
      %s780 = sphi 0, %s766
      %s784 = sphi 0, %s784
      %s786 = sphi 0, %s784
      %s787 = sphi 0, %s786
      %s801 = sphi 0, %s787
      %s807 = sphi 0, %s809
      %s810 = sphi 0, %s807
      %s811 = sphi 0, %s810
      %s827 = sphi 0, %s811
    $region4: #{local_transformer_forward.1} parent=1 // loop_header_branch
      %81 = sbr.rel (%p79) target = $region8
    $region5: #{local_transformer_forward.1} parent=1 // loop_body
      %s83 = ssub.s32 %s78, 1
      %s84 = ssub.s32 %s78, 2
      %s85 = sadd.s32 %s78, 1
      %s86 = ssub.s32 %s78, %s85
      %p87 = scmp.eq.s32.totalorder %s86, 0
      %s89 = sadd.s32 %s88, 1
      %s90 = scalar_select %p87, %s88, %s89
      %p93 = pneg %p87
      %p94 = scmp.eq.s32.totalorder %s78, 1
      %p95 = por %p93, %p94
      %p96 = scmp.ne.s32.totalorder %s88, %s91
      %p97 = scmp.eq.s32.totalorder %s78, 0
      %p98 = por %p96, %p97
      %p99 = scmp.ne.s32.totalorder %s88, %s91
      %p100 = scmp.eq.s32.totalorder %s83, 1
      %p101 = por %p99, %p100
      %p102 = scmp.ne.s32.totalorder %s91, %s92
      %p103 = scmp.eq.s32.totalorder %s83, 0
      %p104 = por %p102, %p103
      %p105 = scmp.ne.s32.totalorder %s91, %s92
      %p106 = scmp.eq.s32.totalorder %s84, 1
      %p107 = por %p105, %p106
      %p109 = scmp.ne.s32.totalorder %s92, %s108
      %p110 = scmp.eq.s32.totalorder %s84, 0
      %p111 = por %p109, %p110
      %s113 = sadd.s32 %s112, 1
      %p116 = scmp.eq.s32.totalorder %s78, 1
      %p117 = scmp.ne.s32.totalorder %s112, %s114
      %p118 = scmp.eq.s32.totalorder %s78, 0
      %p119 = por %p117, %p118
      %p120 = scmp.ne.s32.totalorder %s112, %s114
      %p121 = scmp.eq.s32.totalorder %s83, 1
      %p122 = por %p120, %p121
      %p123 = scmp.ne.s32.totalorder %s114, %s115
      %p124 = scmp.eq.s32.totalorder %s83, 0
      %p125 = por %p123, %p124
      %p126 = scmp.ne.s32.totalorder %s114, %s115
      %p127 = scmp.eq.s32.totalorder %s84, 1
      %p128 = por %p126, %p127
      %p130 = scmp.ne.s32.totalorder %s115, %s129
      %p131 = scmp.eq.s32.totalorder %s84, 0
      %p132 = por %p130, %p131
      %s134 = sadd.s32 %s133, 1
      %p137 = scmp.eq.s32.totalorder %s78, 1
      %p138 = scmp.ne.s32.totalorder %s133, %s135
      %p139 = scmp.eq.s32.totalorder %s78, 0
      %p140 = por %p138, %p139
      %p141 = scmp.ne.s32.totalorder %s133, %s135
      %p142 = scmp.eq.s32.totalorder %s83, 1
      %p143 = por %p141, %p142
      %p144 = scmp.ne.s32.totalorder %s135, %s136
      %p145 = scmp.eq.s32.totalorder %s83, 0
      %p146 = por %p144, %p145
      %p147 = scmp.ne.s32.totalorder %s135, %s136
      %p148 = scmp.eq.s32.totalorder %s84, 1
      %p149 = por %p147, %p148
      %p151 = scmp.ne.s32.totalorder %s136, %s150
      %p152 = scmp.eq.s32.totalorder %s84, 0
      %p153 = por %p151, %p152
      %s155 = sadd.s32 %s154, 1
      %p158 = scmp.eq.s32.totalorder %s78, 1
      %p159 = scmp.ne.s32.totalorder %s154, %s156
      %p160 = scmp.eq.s32.totalorder %s78, 0
      %p161 = por %p159, %p160
      %p162 = scmp.ne.s32.totalorder %s154, %s156
      %p163 = scmp.eq.s32.totalorder %s83, 1
      %p164 = por %p162, %p163
      %p165 = scmp.ne.s32.totalorder %s156, %s157
      %p166 = scmp.eq.s32.totalorder %s83, 0
      %p167 = por %p165, %p166
      %p168 = scmp.ne.s32.totalorder %s156, %s157
      %p169 = scmp.eq.s32.totalorder %s84, 1
      %p170 = por %p168, %p169
      %p172 = scmp.ne.s32.totalorder %s157, %s171
      %p173 = scmp.eq.s32.totalorder %s84, 0
      %p174 = por %p172, %p173
      %s176 = sadd.s32 %s175, 1
      %p179 = scmp.eq.s32.totalorder %s78, 1
      %p180 = scmp.ne.s32.totalorder %s175, %s177
      %p181 = scmp.eq.s32.totalorder %s78, 0
      %p182 = por %p180, %p181
      %p183 = scmp.ne.s32.totalorder %s175, %s177
      %p184 = scmp.eq.s32.totalorder %s83, 1
      %p185 = por %p183, %p184
      %p186 = scmp.ne.s32.totalorder %s177, %s178
      %p187 = scmp.eq.s32.totalorder %s83, 0
      %p188 = por %p186, %p187
      %p189 = scmp.ne.s32.totalorder %s177, %s178
      %p190 = scmp.eq.s32.totalorder %s84, 1
      %p191 = por %p189, %p190
      %p193 = scmp.ne.s32.totalorder %s178, %s192
      %p194 = scmp.eq.s32.totalorder %s84, 0
      %p195 = por %p193, %p194
      %s197 = sadd.s32 %s196, 1
      %p200 = scmp.eq.s32.totalorder %s78, 1
      %p201 = scmp.ne.s32.totalorder %s196, %s198
      %p202 = scmp.eq.s32.totalorder %s78, 0
      %p203 = por %p201, %p202
      %p204 = scmp.ne.s32.totalorder %s196, %s198
      %p205 = scmp.eq.s32.totalorder %s83, 1
      %p206 = por %p204, %p205
      %p207 = scmp.ne.s32.totalorder %s198, %s199
      %p208 = scmp.eq.s32.totalorder %s83, 0
      %p209 = por %p207, %p208
      %p210 = scmp.ne.s32.totalorder %s198, %s199
      %p211 = scmp.eq.s32.totalorder %s84, 1
      %p212 = por %p210, %p211
      %p214 = scmp.ne.s32.totalorder %s199, %s213
      %p215 = scmp.eq.s32.totalorder %s84, 0
      %p216 = por %p214, %p215
      %s218 = sadd.s32 %s217, 1
      %p221 = scmp.eq.s32.totalorder %s78, 1
      %p222 = scmp.ne.s32.totalorder %s217, %s219
      %p223 = scmp.eq.s32.totalorder %s78, 0
      %p224 = por %p222, %p223
      %p225 = scmp.ne.s32.totalorder %s217, %s219
      %p226 = scmp.eq.s32.totalorder %s83, 1
      %p227 = por %p225, %p226
      %p228 = scmp.ne.s32.totalorder %s219, %s220
      %p229 = scmp.eq.s32.totalorder %s83, 0
      %p230 = por %p228, %p229
      %p231 = scmp.ne.s32.totalorder %s219, %s220
      %p232 = scmp.eq.s32.totalorder %s84, 1
      %p233 = por %p231, %p232
      %p235 = scmp.ne.s32.totalorder %s220, %s234
      %p236 = scmp.eq.s32.totalorder %s84, 0
      %p237 = por %p235, %p236
      %s239 = sadd.s32 %s238, 1
      %p242 = scmp.eq.s32.totalorder %s78, 1
      %p243 = scmp.ne.s32.totalorder %s238, %s240
      %p244 = scmp.eq.s32.totalorder %s78, 0
      %p245 = por %p243, %p244
      %p246 = scmp.ne.s32.totalorder %s238, %s240
      %p247 = scmp.eq.s32.totalorder %s83, 1
      %p248 = por %p246, %p247
      %p249 = scmp.ne.s32.totalorder %s240, %s241
      %p250 = scmp.eq.s32.totalorder %s83, 0
      %p251 = por %p249, %p250
      %p252 = scmp.ne.s32.totalorder %s240, %s241
      %p253 = scmp.eq.s32.totalorder %s84, 1
      %p254 = por %p252, %p253
      %p256 = scmp.ne.s32.totalorder %s241, %s255
      %p257 = scmp.eq.s32.totalorder %s84, 0
      %p258 = por %p256, %p257
      %s260 = sadd.s32 %s259, 1
      %p263 = scmp.eq.s32.totalorder %s78, 1
      %p264 = scmp.ne.s32.totalorder %s259, %s261
      %p265 = scmp.eq.s32.totalorder %s78, 0
      %p266 = por %p264, %p265
      %p267 = scmp.ne.s32.totalorder %s259, %s261
      %p268 = scmp.eq.s32.totalorder %s83, 1
      %p269 = por %p267, %p268
      %p270 = scmp.ne.s32.totalorder %s261, %s262
      %p271 = scmp.eq.s32.totalorder %s83, 0
      %p272 = por %p270, %p271
      %p273 = scmp.ne.s32.totalorder %s261, %s262
      %p274 = scmp.eq.s32.totalorder %s84, 1
      %p275 = por %p273, %p274
      %p277 = scmp.ne.s32.totalorder %s262, %s276
      %p278 = scmp.eq.s32.totalorder %s84, 0
      %p279 = por %p277, %p278
      %s281 = sadd.s32 %s280, 1
      %p284 = scmp.eq.s32.totalorder %s78, 1
      %p285 = scmp.ne.s32.totalorder %s280, %s282
      %p286 = scmp.eq.s32.totalorder %s78, 0
      %p287 = por %p285, %p286
      %p288 = scmp.ne.s32.totalorder %s280, %s282
      %p289 = scmp.eq.s32.totalorder %s83, 1
      %p290 = por %p288, %p289
      %p291 = scmp.ne.s32.totalorder %s282, %s283
      %p292 = scmp.eq.s32.totalorder %s83, 0
      %p293 = por %p291, %p292
      %p294 = scmp.ne.s32.totalorder %s282, %s283
      %p295 = scmp.eq.s32.totalorder %s84, 1
      %p296 = por %p294, %p295
      %p298 = scmp.ne.s32.totalorder %s283, %s297
      %p299 = scmp.eq.s32.totalorder %s84, 0
      %p300 = por %p298, %p299
      %s302 = sadd.s32 %s301, 1
      %p305 = scmp.eq.s32.totalorder %s78, 1
      %p306 = scmp.ne.s32.totalorder %s301, %s303
      %p307 = scmp.eq.s32.totalorder %s78, 0
      %p308 = por %p306, %p307
      %p309 = scmp.ne.s32.totalorder %s301, %s303
      %p310 = scmp.eq.s32.totalorder %s83, 1
      %p311 = por %p309, %p310
      %p312 = scmp.ne.s32.totalorder %s303, %s304
      %p313 = scmp.eq.s32.totalorder %s83, 0
      %p314 = por %p312, %p313
      %p315 = scmp.ne.s32.totalorder %s303, %s304
      %p316 = scmp.eq.s32.totalorder %s84, 1
      %p317 = por %p315, %p316
      %p319 = scmp.ne.s32.totalorder %s304, %s318
      %p320 = scmp.eq.s32.totalorder %s84, 0
      %p321 = por %p319, %p320
      %s323 = sadd.s32 %s322, 1
      %p326 = scmp.eq.s32.totalorder %s78, 1
      %p327 = scmp.ne.s32.totalorder %s322, %s324
      %p328 = scmp.eq.s32.totalorder %s78, 0
      %p329 = por %p327, %p328
      %p330 = scmp.ne.s32.totalorder %s322, %s324
      %p331 = scmp.eq.s32.totalorder %s83, 1
      %p332 = por %p330, %p331
      %p333 = scmp.ne.s32.totalorder %s324, %s325
      %p334 = scmp.eq.s32.totalorder %s83, 0
      %p335 = por %p333, %p334
      %p336 = scmp.ne.s32.totalorder %s324, %s325
      %p337 = scmp.eq.s32.totalorder %s84, 1
      %p338 = por %p336, %p337
      %p340 = scmp.ne.s32.totalorder %s325, %s339
      %p341 = scmp.eq.s32.totalorder %s84, 0
      %p342 = por %p340, %p341
      %s344 = sadd.s32 %s343, 1
      %p347 = scmp.eq.s32.totalorder %s78, 1
      %p348 = scmp.ne.s32.totalorder %s343, %s345
      %p349 = scmp.eq.s32.totalorder %s78, 0
      %p350 = por %p348, %p349
      %p351 = scmp.ne.s32.totalorder %s343, %s345
      %p352 = scmp.eq.s32.totalorder %s83, 1
      %p353 = por %p351, %p352
      %p354 = scmp.ne.s32.totalorder %s345, %s346
      %p355 = scmp.eq.s32.totalorder %s83, 0
      %p356 = por %p354, %p355
      %p357 = scmp.ne.s32.totalorder %s345, %s346
      %p358 = scmp.eq.s32.totalorder %s84, 1
      %p359 = por %p357, %p358
      %p361 = scmp.ne.s32.totalorder %s346, %s360
      %p362 = scmp.eq.s32.totalorder %s84, 0
      %p363 = por %p361, %p362
      %s365 = sadd.s32 %s364, 1
      %p368 = scmp.eq.s32.totalorder %s78, 1
      %p369 = scmp.ne.s32.totalorder %s364, %s366
      %p370 = scmp.eq.s32.totalorder %s78, 0
      %p371 = por %p369, %p370
      %p372 = scmp.ne.s32.totalorder %s364, %s366
      %p373 = scmp.eq.s32.totalorder %s83, 1
      %p374 = por %p372, %p373
      %p375 = scmp.ne.s32.totalorder %s366, %s367
      %p376 = scmp.eq.s32.totalorder %s83, 0
      %p377 = por %p375, %p376
      %p378 = scmp.ne.s32.totalorder %s366, %s367
      %p379 = scmp.eq.s32.totalorder %s84, 1
      %p380 = por %p378, %p379
      %p382 = scmp.ne.s32.totalorder %s367, %s381
      %p383 = scmp.eq.s32.totalorder %s84, 0
      %p384 = por %p382, %p383
      %s386 = sadd.s32 %s385, 1
      %p389 = scmp.eq.s32.totalorder %s78, 1
      %p390 = scmp.ne.s32.totalorder %s385, %s387
      %p391 = scmp.eq.s32.totalorder %s78, 0
      %p392 = por %p390, %p391
      %p393 = scmp.ne.s32.totalorder %s385, %s387
      %p394 = scmp.eq.s32.totalorder %s83, 1
      %p395 = por %p393, %p394
      %p396 = scmp.ne.s32.totalorder %s387, %s388
      %p397 = scmp.eq.s32.totalorder %s83, 0
      %p398 = por %p396, %p397
      %p399 = scmp.ne.s32.totalorder %s387, %s388
      %p400 = scmp.eq.s32.totalorder %s84, 1
      %p401 = por %p399, %p400
      %p403 = scmp.ne.s32.totalorder %s388, %s402
      %p404 = scmp.eq.s32.totalorder %s84, 0
      %p405 = por %p403, %p404
      %s407 = sadd.s32 %s406, 1
      %p410 = scmp.eq.s32.totalorder %s78, 1
      %p411 = scmp.ne.s32.totalorder %s406, %s408
      %p412 = scmp.eq.s32.totalorder %s78, 0
      %p413 = por %p411, %p412
      %p414 = scmp.ne.s32.totalorder %s406, %s408
      %p415 = scmp.eq.s32.totalorder %s83, 1
      %p416 = por %p414, %p415
      %p417 = scmp.ne.s32.totalorder %s408, %s409
      %p418 = scmp.eq.s32.totalorder %s83, 0
      %p419 = por %p417, %p418
      %p420 = scmp.ne.s32.totalorder %s408, %s409
      %p421 = scmp.eq.s32.totalorder %s84, 1
      %p422 = por %p420, %p421
      %p424 = scmp.ne.s32.totalorder %s409, %s423
      %p425 = scmp.eq.s32.totalorder %s84, 0
      %p426 = por %p424, %p425
      %s428 = sadd.s32 %s427, 1
      %p431 = scmp.eq.s32.totalorder %s78, 1
      %p432 = scmp.ne.s32.totalorder %s427, %s429
      %p433 = scmp.eq.s32.totalorder %s78, 0
      %p434 = por %p432, %p433
      %p435 = scmp.ne.s32.totalorder %s427, %s429
      %p436 = scmp.eq.s32.totalorder %s83, 1
      %p437 = por %p435, %p436
      %p438 = scmp.ne.s32.totalorder %s429, %s430
      %p439 = scmp.eq.s32.totalorder %s83, 0
      %p440 = por %p438, %p439
      %p441 = scmp.ne.s32.totalorder %s429, %s430
      %p442 = scmp.eq.s32.totalorder %s84, 1
      %p443 = por %p441, %p442
      %p445 = scmp.ne.s32.totalorder %s430, %s444
      %p446 = scmp.eq.s32.totalorder %s84, 0
      %p447 = por %p445, %p446
      %s449 = sadd.s32 %s448, 1
      %p452 = scmp.eq.s32.totalorder %s78, 1
      %p453 = scmp.ne.s32.totalorder %s448, %s450
      %p454 = scmp.eq.s32.totalorder %s78, 0
      %p455 = por %p453, %p454
      %p456 = scmp.ne.s32.totalorder %s448, %s450
      %p457 = scmp.eq.s32.totalorder %s83, 1
      %p458 = por %p456, %p457
      %p459 = scmp.ne.s32.totalorder %s450, %s451
      %p460 = scmp.eq.s32.totalorder %s83, 0
      %p461 = por %p459, %p460
      %p462 = scmp.ne.s32.totalorder %s450, %s451
      %p463 = scmp.eq.s32.totalorder %s84, 1
      %p464 = por %p462, %p463
      %p466 = scmp.ne.s32.totalorder %s451, %s465
      %p467 = scmp.eq.s32.totalorder %s84, 0
      %p468 = por %p466, %p467
      %s470 = sadd.s32 %s469, 1
      %p473 = scmp.eq.s32.totalorder %s78, 1
      %p474 = scmp.ne.s32.totalorder %s469, %s471
      %p475 = scmp.eq.s32.totalorder %s78, 0
      %p476 = por %p474, %p475
      %p477 = scmp.ne.s32.totalorder %s469, %s471
      %p478 = scmp.eq.s32.totalorder %s83, 1
      %p479 = por %p477, %p478
      %p480 = scmp.ne.s32.totalorder %s471, %s472
      %p481 = scmp.eq.s32.totalorder %s83, 0
      %p482 = por %p480, %p481
      %p483 = scmp.ne.s32.totalorder %s471, %s472
      %p484 = scmp.eq.s32.totalorder %s84, 1
      %p485 = por %p483, %p484
      %p487 = scmp.ne.s32.totalorder %s472, %s486
      %p488 = scmp.eq.s32.totalorder %s84, 0
      %p489 = por %p487, %p488
      %s491 = sadd.s32 %s490, 1
      %p494 = scmp.eq.s32.totalorder %s78, 1
      %p495 = scmp.ne.s32.totalorder %s490, %s492
      %p496 = scmp.eq.s32.totalorder %s78, 0
      %p497 = por %p495, %p496
      %p498 = scmp.ne.s32.totalorder %s490, %s492
      %p499 = scmp.eq.s32.totalorder %s83, 1
      %p500 = por %p498, %p499
      %p501 = scmp.ne.s32.totalorder %s492, %s493
      %p502 = scmp.eq.s32.totalorder %s83, 0
      %p503 = por %p501, %p502
      %p504 = scmp.ne.s32.totalorder %s492, %s493
      %p505 = scmp.eq.s32.totalorder %s84, 1
      %p506 = por %p504, %p505
      %p508 = scmp.ne.s32.totalorder %s493, %s507
      %p509 = scmp.eq.s32.totalorder %s84, 0
      %p510 = por %p508, %p509
      %s512 = sadd.s32 %s511, 1
      %p515 = scmp.eq.s32.totalorder %s78, 1
      %p516 = scmp.ne.s32.totalorder %s511, %s513
      %p517 = scmp.eq.s32.totalorder %s78, 0
      %p518 = por %p516, %p517
      %p519 = scmp.ne.s32.totalorder %s511, %s513
      %p520 = scmp.eq.s32.totalorder %s83, 1
      %p521 = por %p519, %p520
      %p522 = scmp.ne.s32.totalorder %s513, %s514
      %p523 = scmp.eq.s32.totalorder %s83, 0
      %p524 = por %p522, %p523
      %p525 = scmp.ne.s32.totalorder %s513, %s514
      %p526 = scmp.eq.s32.totalorder %s84, 1
      %p527 = por %p525, %p526
      %p529 = scmp.ne.s32.totalorder %s514, %s528
      %p530 = scmp.eq.s32.totalorder %s84, 0
      %p531 = por %p529, %p530
      %s533 = sadd.s32 %s532, 1
      %p536 = scmp.eq.s32.totalorder %s78, 1
      %p537 = scmp.ne.s32.totalorder %s532, %s534
      %p538 = scmp.eq.s32.totalorder %s78, 0
      %p539 = por %p537, %p538
      %p540 = scmp.ne.s32.totalorder %s532, %s534
      %p541 = scmp.eq.s32.totalorder %s83, 1
      %p542 = por %p540, %p541
      %p543 = scmp.ne.s32.totalorder %s534, %s535
      %p544 = scmp.eq.s32.totalorder %s83, 0
      %p545 = por %p543, %p544
      %p546 = scmp.ne.s32.totalorder %s534, %s535
      %p547 = scmp.eq.s32.totalorder %s84, 1
      %p548 = por %p546, %p547
      %p550 = scmp.ne.s32.totalorder %s535, %s549
      %p551 = scmp.eq.s32.totalorder %s84, 0
      %p552 = por %p550, %p551
      %s554 = sadd.s32 %s553, 1
      %p557 = scmp.eq.s32.totalorder %s78, 1
      %p558 = scmp.ne.s32.totalorder %s553, %s555
      %p559 = scmp.eq.s32.totalorder %s78, 0
      %p560 = por %p558, %p559
      %p561 = scmp.ne.s32.totalorder %s553, %s555
      %p562 = scmp.eq.s32.totalorder %s83, 1
      %p563 = por %p561, %p562
      %p564 = scmp.ne.s32.totalorder %s555, %s556
      %p565 = scmp.eq.s32.totalorder %s83, 0
      %p566 = por %p564, %p565
      %p567 = scmp.ne.s32.totalorder %s555, %s556
      %p568 = scmp.eq.s32.totalorder %s84, 1
      %p569 = por %p567, %p568
      %p571 = scmp.ne.s32.totalorder %s556, %s570
      %p572 = scmp.eq.s32.totalorder %s84, 0
      %p573 = por %p571, %p572
      %s575 = sadd.s32 %s574, 1
      %p578 = scmp.eq.s32.totalorder %s78, 1
      %p579 = scmp.ne.s32.totalorder %s574, %s576
      %p580 = scmp.eq.s32.totalorder %s78, 0
      %p581 = por %p579, %p580
      %p582 = scmp.ne.s32.totalorder %s574, %s576
      %p583 = scmp.eq.s32.totalorder %s83, 1
      %p584 = por %p582, %p583
      %p585 = scmp.ne.s32.totalorder %s576, %s577
      %p586 = scmp.eq.s32.totalorder %s83, 0
      %p587 = por %p585, %p586
      %p588 = scmp.ne.s32.totalorder %s576, %s577
      %p589 = scmp.eq.s32.totalorder %s84, 1
      %p590 = por %p588, %p589
      %p592 = scmp.ne.s32.totalorder %s577, %s591
      %p593 = scmp.eq.s32.totalorder %s84, 0
      %p594 = por %p592, %p593
      %s596 = sadd.s32 %s595, 1
      %p599 = scmp.eq.s32.totalorder %s78, 1
      %p600 = scmp.ne.s32.totalorder %s595, %s597
      %p601 = scmp.eq.s32.totalorder %s78, 0
      %p602 = por %p600, %p601
      %p603 = scmp.ne.s32.totalorder %s595, %s597
      %p604 = scmp.eq.s32.totalorder %s83, 1
      %p605 = por %p603, %p604
      %p606 = scmp.ne.s32.totalorder %s597, %s598
      %p607 = scmp.eq.s32.totalorder %s83, 0
      %p608 = por %p606, %p607
      %p609 = scmp.ne.s32.totalorder %s597, %s598
      %p610 = scmp.eq.s32.totalorder %s84, 1
      %p611 = por %p609, %p610
      %p613 = scmp.ne.s32.totalorder %s598, %s612
      %p614 = scmp.eq.s32.totalorder %s84, 0
      %p615 = por %p613, %p614
      %s617 = sadd.s32 %s616, 1
      %p620 = scmp.eq.s32.totalorder %s78, 1
      %p621 = scmp.ne.s32.totalorder %s616, %s618
      %p622 = scmp.eq.s32.totalorder %s78, 0
      %p623 = por %p621, %p622
      %p624 = scmp.ne.s32.totalorder %s616, %s618
      %p625 = scmp.eq.s32.totalorder %s83, 1
      %p626 = por %p624, %p625
      %p627 = scmp.ne.s32.totalorder %s618, %s619
      %p628 = scmp.eq.s32.totalorder %s83, 0
      %p629 = por %p627, %p628
      %p630 = scmp.ne.s32.totalorder %s618, %s619
      %p631 = scmp.eq.s32.totalorder %s84, 1
      %p632 = por %p630, %p631
      %p634 = scmp.ne.s32.totalorder %s619, %s633
      %p635 = scmp.eq.s32.totalorder %s84, 0
      %p636 = por %p634, %p635
      %s638 = sadd.s32 %s637, 1
      %p641 = scmp.eq.s32.totalorder %s78, 1
      %p642 = scmp.ne.s32.totalorder %s637, %s639
      %p643 = scmp.eq.s32.totalorder %s78, 0
      %p644 = por %p642, %p643
      %p645 = scmp.ne.s32.totalorder %s637, %s639
      %p646 = scmp.eq.s32.totalorder %s83, 1
      %p647 = por %p645, %p646
      %p648 = scmp.ne.s32.totalorder %s639, %s640
      %p649 = scmp.eq.s32.totalorder %s83, 0
      %p650 = por %p648, %p649
      %p651 = scmp.ne.s32.totalorder %s639, %s640
      %p652 = scmp.eq.s32.totalorder %s84, 1
      %p653 = por %p651, %p652
      %p655 = scmp.ne.s32.totalorder %s640, %s654
      %p656 = scmp.eq.s32.totalorder %s84, 0
      %p657 = por %p655, %p656
      %s659 = sadd.s32 %s658, 1
      %p662 = scmp.eq.s32.totalorder %s78, 1
      %p663 = scmp.ne.s32.totalorder %s658, %s660
      %p664 = scmp.eq.s32.totalorder %s78, 0
      %p665 = por %p663, %p664
      %p666 = scmp.ne.s32.totalorder %s658, %s660
      %p667 = scmp.eq.s32.totalorder %s83, 1
      %p668 = por %p666, %p667
      %p669 = scmp.ne.s32.totalorder %s660, %s661
      %p670 = scmp.eq.s32.totalorder %s83, 0
      %p671 = por %p669, %p670
      %p672 = scmp.ne.s32.totalorder %s660, %s661
      %p673 = scmp.eq.s32.totalorder %s84, 1
      %p674 = por %p672, %p673
      %p676 = scmp.ne.s32.totalorder %s661, %s675
      %p677 = scmp.eq.s32.totalorder %s84, 0
      %p678 = por %p676, %p677
      %s680 = sadd.s32 %s679, 1
      %p683 = scmp.eq.s32.totalorder %s78, 1
      %p684 = scmp.ne.s32.totalorder %s679, %s681
      %p685 = scmp.eq.s32.totalorder %s78, 0
      %p686 = por %p684, %p685
      %p687 = scmp.ne.s32.totalorder %s679, %s681
      %p688 = scmp.eq.s32.totalorder %s83, 1
      %p689 = por %p687, %p688
      %p690 = scmp.ne.s32.totalorder %s681, %s682
      %p691 = scmp.eq.s32.totalorder %s83, 0
      %p692 = por %p690, %p691
      %p693 = scmp.ne.s32.totalorder %s681, %s682
      %p694 = scmp.eq.s32.totalorder %s84, 1
      %p695 = por %p693, %p694
      %p697 = scmp.ne.s32.totalorder %s682, %s696
      %p698 = scmp.eq.s32.totalorder %s84, 0
      %p699 = por %p697, %p698
      %s701 = sadd.s32 %s700, 1
      %p704 = scmp.eq.s32.totalorder %s78, 1
      %p705 = scmp.ne.s32.totalorder %s700, %s702
      %p706 = scmp.eq.s32.totalorder %s78, 0
      %p707 = por %p705, %p706
      %p708 = scmp.ne.s32.totalorder %s700, %s702
      %p709 = scmp.eq.s32.totalorder %s83, 1
      %p710 = por %p708, %p709
      %p711 = scmp.ne.s32.totalorder %s702, %s703
      %p712 = scmp.eq.s32.totalorder %s83, 0
      %p713 = por %p711, %p712
      %p714 = scmp.ne.s32.totalorder %s702, %s703
      %p715 = scmp.eq.s32.totalorder %s84, 1
      %p716 = por %p714, %p715
      %p718 = scmp.ne.s32.totalorder %s703, %s717
      %p719 = scmp.eq.s32.totalorder %s84, 0
      %p720 = por %p718, %p719
      %s722 = sadd.s32 %s721, 1
      %p725 = scmp.eq.s32.totalorder %s78, 1
      %p726 = scmp.ne.s32.totalorder %s721, %s723
      %p727 = scmp.eq.s32.totalorder %s78, 0
      %p728 = por %p726, %p727
      %p729 = scmp.ne.s32.totalorder %s721, %s723
      %p730 = scmp.eq.s32.totalorder %s83, 1
      %p731 = por %p729, %p730
      %p732 = scmp.ne.s32.totalorder %s723, %s724
      %p733 = scmp.eq.s32.totalorder %s83, 0
      %p734 = por %p732, %p733
      %p735 = scmp.ne.s32.totalorder %s723, %s724
      %p736 = scmp.eq.s32.totalorder %s84, 1
      %p737 = por %p735, %p736
      %p739 = scmp.ne.s32.totalorder %s724, %s738
      %p740 = scmp.eq.s32.totalorder %s84, 0
      %p741 = por %p739, %p740
      %s743 = sadd.s32 %s742, 1
      %p746 = scmp.eq.s32.totalorder %s78, 1
      %p747 = scmp.ne.s32.totalorder %s742, %s744
      %p748 = scmp.eq.s32.totalorder %s78, 0
      %p749 = por %p747, %p748
      %p750 = scmp.ne.s32.totalorder %s742, %s744
      %p751 = scmp.eq.s32.totalorder %s83, 1
      %p752 = por %p750, %p751
      %p753 = scmp.ne.s32.totalorder %s744, %s745
      %p754 = scmp.eq.s32.totalorder %s83, 0
      %p755 = por %p753, %p754
      %p756 = scmp.ne.s32.totalorder %s744, %s745
      %p757 = scmp.eq.s32.totalorder %s84, 1
      %p758 = por %p756, %p757
      %p760 = scmp.ne.s32.totalorder %s745, %s759
      %p761 = scmp.eq.s32.totalorder %s84, 0
      %p762 = por %p760, %p761
      %s764 = sadd.s32 %s763, 1
      %p767 = scmp.eq.s32.totalorder %s78, 1
      %p768 = scmp.ne.s32.totalorder %s763, %s765
      %p769 = scmp.eq.s32.totalorder %s78, 0
      %p770 = por %p768, %p769
      %p771 = scmp.ne.s32.totalorder %s763, %s765
      %p772 = scmp.eq.s32.totalorder %s83, 1
      %p773 = por %p771, %p772
      %p774 = scmp.ne.s32.totalorder %s765, %s766
      %p775 = scmp.eq.s32.totalorder %s83, 0
      %p776 = por %p774, %p775
      %p777 = scmp.ne.s32.totalorder %s765, %s766
      %p778 = scmp.eq.s32.totalorder %s84, 1
      %p779 = por %p777, %p778
      %p781 = scmp.ne.s32.totalorder %s766, %s780
      %p782 = scmp.eq.s32.totalorder %s84, 0
      %p783 = por %p781, %p782
      %s785 = sadd.s32 %s784, 1
      %p788 = scmp.eq.s32.totalorder %s78, 1
      %p789 = scmp.ne.s32.totalorder %s784, %s786
      %p790 = scmp.eq.s32.totalorder %s78, 0
      %p791 = por %p789, %p790
      %p792 = scmp.ne.s32.totalorder %s784, %s786
      %p793 = scmp.eq.s32.totalorder %s83, 1
      %p794 = por %p792, %p793
      %p795 = scmp.ne.s32.totalorder %s786, %s787
      %p796 = scmp.eq.s32.totalorder %s83, 0
      %p797 = por %p795, %p796
      %p798 = scmp.ne.s32.totalorder %s786, %s787
      %p799 = scmp.eq.s32.totalorder %s84, 1
      %p800 = por %p798, %p799
      %p802 = scmp.ne.s32.totalorder %s787, %s801
      %p803 = scmp.eq.s32.totalorder %s84, 0
      %p804 = por %p802, %p803
      %s805 = ssub.s32 %s78, %s85
      %p806 = scmp.eq.s32.totalorder %s805, 0
      %s808 = sadd.s32 %s807, 1
      %s809 = scalar_select %p806, %s807, %s808
      %p812 = pneg %p806
      %p813 = scmp.eq.s32.totalorder %s78, 1
      %p814 = por %p812, %p813
      %p815 = scmp.ne.s32.totalorder %s807, %s810
      %p816 = scmp.eq.s32.totalorder %s78, 0
      %p817 = por %p815, %p816
      %p818 = scmp.ne.s32.totalorder %s807, %s810
      %p819 = scmp.eq.s32.totalorder %s83, 1
      %p820 = por %p818, %p819
      %p821 = scmp.ne.s32.totalorder %s810, %s811
      %p822 = scmp.eq.s32.totalorder %s83, 0
      %p823 = por %p821, %p822
      %p824 = scmp.ne.s32.totalorder %s810, %s811
      %p825 = scmp.eq.s32.totalorder %s84, 1
      %p826 = por %p824, %p825
      %p828 = scmp.ne.s32.totalorder %s811, %s827
      %p829 = scmp.eq.s32.totalorder %s84, 0
      %p830 = por %p828, %p829
      %p831 = scmp.le.s32.totalorder 1, %s78
      %p832 = scmp.lt.s32.totalorder %s78, 3
      %p833 = pnand %p831, %p832
      %p834 = pneg %p833
      // Predicated region
      $region9: #{local_transformer_forward.1} parent=5 // pred_check
        _
      $region10: #{local_transformer_forward.1} parent=5 // pred_check_branch
        %836 = sbr.rel (%p833) target = $region12
      $region11: #{local_transformer_forward.1} parent=5 // pred_region
        %s837 = ssub.s32 %s78, 1
        // Predicated region
        $region13: #{local_transformer_forward.1} parent=11 // pred_check
          %p838 = pneg %p125
        $region14: #{local_transformer_forward.1} parent=11 // pred_check_branch
          %840 = sbr.rel (%p838) target = $region16
        $region15: #{local_transformer_forward.1} parent=11 // pred_region
          _
        $region16: #{local_transformer_forward.1} parent=11 // pred_fallthru
          _
        // Predicated region
        $region17: #{local_transformer_forward.1} parent=11 // pred_check
          %p841 = pneg %p146
        $region18: #{local_transformer_forward.1} parent=11 // pred_check_branch
          %843 = sbr.rel (%p841) target = $region20
        $region19: #{local_transformer_forward.1} parent=11 // pred_region
          _
        $region20: #{local_transformer_forward.1} parent=11 // pred_fallthru
          _
        // Predicated region
        $region21: #{local_transformer_forward.1} parent=11 // pred_check
          %p844 = pneg %p167
        $region22: #{local_transformer_forward.1} parent=11 // pred_check_branch
          %846 = sbr.rel (%p844) target = $region24
        $region23: #{local_transformer_forward.1} parent=11 // pred_region
          _
        $region24: #{local_transformer_forward.1} parent=11 // pred_fallthru
          _
        // Predicated region
        $region25: #{local_transformer_forward.1} parent=11 // pred_check
          %p847 = pneg %p188
        $region26: #{local_transformer_forward.1} parent=11 // pred_check_branch
          %849 = sbr.rel (%p847) target = $region28
        $region27: #{local_transformer_forward.1} parent=11 // pred_region
          _
        $region28: #{local_transformer_forward.1} parent=11 // pred_fallthru
          _
        // Predicated region
        $region29: #{local_transformer_forward.1} parent=11 // pred_check
          %p850 = pneg %p209
        $region30: #{local_transformer_forward.1} parent=11 // pred_check_branch
          %852 = sbr.rel (%p850) target = $region32
        $region31: #{local_transformer_forward.1} parent=11 // pred_region
          _
        $region32: #{local_transformer_forward.1} parent=11 // pred_fallthru
          _
        // Predicated region
        $region33: #{local_transformer_forward.1} parent=11 // pred_check
          %p853 = pneg %p230
        $region34: #{local_transformer_forward.1} parent=11 // pred_check_branch
          %855 = sbr.rel (%p853) target = $region36
        $region35: #{local_transformer_forward.1} parent=11 // pred_region
          _
        $region36: #{local_transformer_forward.1} parent=11 // pred_fallthru
          _
        // Predicated region
        $region37: #{local_transformer_forward.1} parent=11 // pred_check
          %p856 = pneg %p251
        $region38: #{local_transformer_forward.1} parent=11 // pred_check_branch
          %858 = sbr.rel (%p856) target = $region40
        $region39: #{local_transformer_forward.1} parent=11 // pred_region
          _
        $region40: #{local_transformer_forward.1} parent=11 // pred_fallthru
          _
        // Predicated region
        $region41: #{local_transformer_forward.1} parent=11 // pred_check
          %p859 = pneg %p272
        $region42: #{local_transformer_forward.1} parent=11 // pred_check_branch
          %861 = sbr.rel (%p859) target = $region44
        $region43: #{local_transformer_forward.1} parent=11 // pred_region
          _
        $region44: #{local_transformer_forward.1} parent=11 // pred_fallthru
          _
        // Predicated region
        $region45: #{local_transformer_forward.1} parent=11 // pred_check
          %p862 = pneg %p293
        $region46: #{local_transformer_forward.1} parent=11 // pred_check_branch
          %864 = sbr.rel (%p862) target = $region48
        $region47: #{local_transformer_forward.1} parent=11 // pred_region
          _
        $region48: #{local_transformer_forward.1} parent=11 // pred_fallthru
          _
        // Predicated region
        $region49: #{local_transformer_forward.1} parent=11 // pred_check
          %p865 = pneg %p314
        $region50: #{local_transformer_forward.1} parent=11 // pred_check_branch
          %867 = sbr.rel (%p865) target = $region52
        $region51: #{local_transformer_forward.1} parent=11 // pred_region
          _
        $region52: #{local_transformer_forward.1} parent=11 // pred_fallthru
          _
        // Predicated region
        $region53: #{local_transformer_forward.1} parent=11 // pred_check
          %p868 = pneg %p335
        $region54: #{local_transformer_forward.1} parent=11 // pred_check_branch
          %870 = sbr.rel (%p868) target = $region56
        $region55: #{local_transformer_forward.1} parent=11 // pred_region
          _
        $region56: #{local_transformer_forward.1} parent=11 // pred_fallthru
          _
        // Predicated region
        $region57: #{local_transformer_forward.1} parent=11 // pred_check
          %p871 = pneg %p356
        $region58: #{local_transformer_forward.1} parent=11 // pred_check_branch
          %873 = sbr.rel (%p871) target = $region60
        $region59: #{local_transformer_forward.1} parent=11 // pred_region
          _
        $region60: #{local_transformer_forward.1} parent=11 // pred_fallthru
          _
        // Predicated region
        $region61: #{local_transformer_forward.1} parent=11 // pred_check
          %p874 = pneg %p377
        $region62: #{local_transformer_forward.1} parent=11 // pred_check_branch
          %876 = sbr.rel (%p874) target = $region64
        $region63: #{local_transformer_forward.1} parent=11 // pred_region
          _
        $region64: #{local_transformer_forward.1} parent=11 // pred_fallthru
          _
        // Predicated region
        $region65: #{local_transformer_forward.1} parent=11 // pred_check
          %p877 = pneg %p398
        $region66: #{local_transformer_forward.1} parent=11 // pred_check_branch
          %879 = sbr.rel (%p877) target = $region68
        $region67: #{local_transformer_forward.1} parent=11 // pred_region
          _
        $region68: #{local_transformer_forward.1} parent=11 // pred_fallthru
          _
        // Predicated region
        $region69: #{local_transformer_forward.1} parent=11 // pred_check
          %p880 = pneg %p419
        $region70: #{local_transformer_forward.1} parent=11 // pred_check_branch
          %882 = sbr.rel (%p880) target = $region72
        $region71: #{local_transformer_forward.1} parent=11 // pred_region
          _
        $region72: #{local_transformer_forward.1} parent=11 // pred_fallthru
          _
        // Predicated region
        $region73: #{local_transformer_forward.1} parent=11 // pred_check
          %p883 = pneg %p440
        $region74: #{local_transformer_forward.1} parent=11 // pred_check_branch
          %885 = sbr.rel (%p883) target = $region76
        $region75: #{local_transformer_forward.1} parent=11 // pred_region
          _
        $region76: #{local_transformer_forward.1} parent=11 // pred_fallthru
          _
        // Predicated region
        $region77: #{local_transformer_forward.1} parent=11 // pred_check
          %p886 = pneg %p461
        $region78: #{local_transformer_forward.1} parent=11 // pred_check_branch
          %888 = sbr.rel (%p886) target = $region80
        $region79: #{local_transformer_forward.1} parent=11 // pred_region
          _
        $region80: #{local_transformer_forward.1} parent=11 // pred_fallthru
          _
        // Predicated region
        $region81: #{local_transformer_forward.1} parent=11 // pred_check
          %p889 = pneg %p482
        $region82: #{local_transformer_forward.1} parent=11 // pred_check_branch
          %891 = sbr.rel (%p889) target = $region84
        $region83: #{local_transformer_forward.1} parent=11 // pred_region
          _
        $region84: #{local_transformer_forward.1} parent=11 // pred_fallthru
          _
        // Predicated region
        $region85: #{local_transformer_forward.1} parent=11 // pred_check
          %p892 = pneg %p503
        $region86: #{local_transformer_forward.1} parent=11 // pred_check_branch
          %894 = sbr.rel (%p892) target = $region88
        $region87: #{local_transformer_forward.1} parent=11 // pred_region
          _
        $region88: #{local_transformer_forward.1} parent=11 // pred_fallthru
          _
        // Predicated region
        $region89: #{local_transformer_forward.1} parent=11 // pred_check
          %p895 = pneg %p524
        $region90: #{local_transformer_forward.1} parent=11 // pred_check_branch
          %897 = sbr.rel (%p895) target = $region92
        $region91: #{local_transformer_forward.1} parent=11 // pred_region
          _
        $region92: #{local_transformer_forward.1} parent=11 // pred_fallthru
          _
        // Predicated region
        $region93: #{local_transformer_forward.1} parent=11 // pred_check
          %p898 = pneg %p545
        $region94: #{local_transformer_forward.1} parent=11 // pred_check_branch
          %900 = sbr.rel (%p898) target = $region96
        $region95: #{local_transformer_forward.1} parent=11 // pred_region
          _
        $region96: #{local_transformer_forward.1} parent=11 // pred_fallthru
          _
        // Predicated region
        $region97: #{local_transformer_forward.1} parent=11 // pred_check
          %p901 = pneg %p566
        $region98: #{local_transformer_forward.1} parent=11 // pred_check_branch
          %903 = sbr.rel (%p901) target = $region100
        $region99: #{local_transformer_forward.1} parent=11 // pred_region
          _
        $region100: #{local_transformer_forward.1} parent=11 // pred_fallthru
          _
        // Predicated region
        $region101: #{local_transformer_forward.1} parent=11 // pred_check
          %p904 = pneg %p587
        $region102: #{local_transformer_forward.1} parent=11 // pred_check_branch
          %906 = sbr.rel (%p904) target = $region104
        $region103: #{local_transformer_forward.1} parent=11 // pred_region
          _
        $region104: #{local_transformer_forward.1} parent=11 // pred_fallthru
          _
        // Predicated region
        $region105: #{local_transformer_forward.1} parent=11 // pred_check
          %p907 = pneg %p608
        $region106: #{local_transformer_forward.1} parent=11 // pred_check_branch
          %909 = sbr.rel (%p907) target = $region108
        $region107: #{local_transformer_forward.1} parent=11 // pred_region
          _
        $region108: #{local_transformer_forward.1} parent=11 // pred_fallthru
          _
        // Predicated region
        $region109: #{local_transformer_forward.1} parent=11 // pred_check
          %p910 = pneg %p629
        $region110: #{local_transformer_forward.1} parent=11 // pred_check_branch
          %912 = sbr.rel (%p910) target = $region112
        $region111: #{local_transformer_forward.1} parent=11 // pred_region
          _
        $region112: #{local_transformer_forward.1} parent=11 // pred_fallthru
          _
        // Predicated region
        $region113: #{local_transformer_forward.1} parent=11 // pred_check
          %p913 = pneg %p650
        $region114: #{local_transformer_forward.1} parent=11 // pred_check_branch
          %915 = sbr.rel (%p913) target = $region116
        $region115: #{local_transformer_forward.1} parent=11 // pred_region
          _
        $region116: #{local_transformer_forward.1} parent=11 // pred_fallthru
          _
        // Predicated region
        $region117: #{local_transformer_forward.1} parent=11 // pred_check
          %p916 = pneg %p671
        $region118: #{local_transformer_forward.1} parent=11 // pred_check_branch
          %918 = sbr.rel (%p916) target = $region120
        $region119: #{local_transformer_forward.1} parent=11 // pred_region
          _
        $region120: #{local_transformer_forward.1} parent=11 // pred_fallthru
          _
        // Predicated region
        $region121: #{local_transformer_forward.1} parent=11 // pred_check
          %p919 = pneg %p692
        $region122: #{local_transformer_forward.1} parent=11 // pred_check_branch
          %921 = sbr.rel (%p919) target = $region124
        $region123: #{local_transformer_forward.1} parent=11 // pred_region
          _
        $region124: #{local_transformer_forward.1} parent=11 // pred_fallthru
          _
        // Predicated region
        $region125: #{local_transformer_forward.1} parent=11 // pred_check
          %p922 = pneg %p713
        $region126: #{local_transformer_forward.1} parent=11 // pred_check_branch
          %924 = sbr.rel (%p922) target = $region128
        $region127: #{local_transformer_forward.1} parent=11 // pred_region
          _
        $region128: #{local_transformer_forward.1} parent=11 // pred_fallthru
          _
        // Predicated region
        $region129: #{local_transformer_forward.1} parent=11 // pred_check
          %p925 = pneg %p734
        $region130: #{local_transformer_forward.1} parent=11 // pred_check_branch
          %927 = sbr.rel (%p925) target = $region132
        $region131: #{local_transformer_forward.1} parent=11 // pred_region
          _
        $region132: #{local_transformer_forward.1} parent=11 // pred_fallthru
          _
        // Predicated region
        $region133: #{local_transformer_forward.1} parent=11 // pred_check
          %p928 = pneg %p755
        $region134: #{local_transformer_forward.1} parent=11 // pred_check_branch
          %930 = sbr.rel (%p928) target = $region136
        $region135: #{local_transformer_forward.1} parent=11 // pred_region
          _
        $region136: #{local_transformer_forward.1} parent=11 // pred_fallthru
          _
        // Predicated region
        $region137: #{local_transformer_forward.1} parent=11 // pred_check
          %p931 = pneg %p776
        $region138: #{local_transformer_forward.1} parent=11 // pred_check_branch
          %933 = sbr.rel (%p931) target = $region140
        $region139: #{local_transformer_forward.1} parent=11 // pred_region
          _
        $region140: #{local_transformer_forward.1} parent=11 // pred_fallthru
          _
        // Predicated region
        $region141: #{local_transformer_forward.1} parent=11 // pred_check
          %p934 = pneg %p797
        $region142: #{local_transformer_forward.1} parent=11 // pred_check_branch
          %936 = sbr.rel (%p934) target = $region144
        $region143: #{local_transformer_forward.1} parent=11 // pred_region
          _
        $region144: #{local_transformer_forward.1} parent=11 // pred_fallthru
          _
      $region12: #{local_transformer_forward.1} parent=5 // pred_fallthru
        _
      %p937 = scmp.lt.s32.totalorder %s78, 2
      // Predicated region
      $region145: #{local_transformer_forward.1} parent=5 // pred_check
        %p938 = pneg %p937
      $region146: #{local_transformer_forward.1} parent=5 // pred_check_branch
        %940 = sbr.rel (%p938) target = $region148
      $region147: #{local_transformer_forward.1} parent=5 // pred_region
        // Predicated region
        $region149: #{local_transformer_forward.1} parent=147 // pred_check
          %p941 = pneg %p98
        $region150: #{local_transformer_forward.1} parent=147 // pred_check_branch
          %943 = sbr.rel (%p941) target = $region152
        $region151: #{local_transformer_forward.1} parent=147 // pred_region
          %p944 = scmp.lt.s32.totalorder %s78, 1
          %s945 = scalar_select %p944, %s78, 1
          %s946 = smul.addr %s945, 8
          %s947 = smul.addr %s946, 8
          %s948 = scalar_lea.vmem %s1, %s947
        $region152: #{local_transformer_forward.1} parent=147 // pred_fallthru
          _
      $region148: #{local_transformer_forward.1} parent=5 // pred_fallthru
        _
      %p949 = scmp.le.s32.totalorder 1, %s78
      %p950 = scmp.lt.s32.totalorder %s78, 3
      %p951 = pnand %p949, %p950
      %p952 = pneg %p951
      // Predicated region
      $region153: #{local_transformer_forward.1} parent=5 // pred_check
        _
      $region154: #{local_transformer_forward.1} parent=5 // pred_check_branch
        %954 = sbr.rel (%p951) target = $region156
      $region155: #{local_transformer_forward.1} parent=5 // pred_region
        %s955 = ssub.s32 %s78, 1
        %p956 = scmp.lt.s32.totalorder %s83, 1
        %s957 = scalar_select %p956, %s83, 1
        %s958 = smul.addr %s957, 8
        %s959 = smul.addr %s958, 8
        %s960 = scalar_lea.vmem %s1, %s959
        %p961 = pneg %p104
        %p962 = pneg %p101
        %p963 = pneg %p125
        %p964 = pneg %p122
        %p965 = pneg %p146
        %p966 = pneg %p143
        %p967 = pneg %p167
        %p968 = pneg %p164
        %p969 = pneg %p188
        %p970 = pneg %p185
        %p971 = pneg %p209
        %p972 = pneg %p206
        %p973 = pneg %p230
        %p974 = pneg %p227
        %p975 = pneg %p251
        %p976 = pneg %p248
        %p977 = pneg %p272
        %p978 = pneg %p269
        %p979 = pneg %p293
        %p980 = pneg %p290
        %p981 = pneg %p314
        %p982 = pneg %p311
        %p983 = pneg %p335
        %p984 = pneg %p332
        %p985 = pneg %p356
        %p986 = pneg %p353
        %p987 = pneg %p377
        %p988 = pneg %p374
        %p989 = pneg %p398
        %p990 = pneg %p395
        %p991 = pneg %p419
        %p992 = pneg %p416
        %p993 = pneg %p440
        %p994 = pneg %p437
        %p995 = pneg %p461
        %p996 = pneg %p458
        %p997 = pneg %p482
        %p998 = pneg %p479
        %p999 = pneg %p503
        %p1000 = pneg %p500
        %p1001 = pneg %p524
        %p1002 = pneg %p521
        %p1003 = pneg %p545
        %p1004 = pneg %p542
        %p1005 = pneg %p566
        %p1006 = pneg %p563
        %p1007 = pneg %p587
        %p1008 = pneg %p584
        %p1009 = pneg %p608
        %p1010 = pneg %p605
        %p1011 = pneg %p629
        %p1012 = pneg %p626
        %p1013 = pneg %p650
        %p1014 = pneg %p647
        %p1015 = pneg %p671
        %p1016 = pneg %p668
        %p1017 = pneg %p692
        %p1018 = pneg %p689
        %p1019 = pneg %p713
        %p1020 = pneg %p710
        %p1021 = pneg %p734
        %p1022 = pneg %p731
        %p1023 = pneg %p755
        %p1024 = pneg %p752
        %p1025 = pneg %p776
        %p1026 = pneg %p773
        %p1027 = pneg %p797
        %p1028 = pneg %p794
        %p1029 = pneg %p823
        %p1030 = pneg %p820
        %s1031 = sand.u32 %s810, 1
        %s1032 = scalar_lea.sflag [#allocation3], %s1031
        %s1033 = sand.u32 %s810, 1
        %s1034 = smul.addr %s1033, 64
        %s1035 = scalar_lea.vmem [#allocation2], %s1034
        %p1036 = scmp.lt.s32.totalorder %s83, 1
        %s1037 = scalar_select %p1036, %s83, 1
        %s1038 = smul.addr %s1037, 8
        %s1039 = smul.addr %s1038, 8
        %s1040 = scalar_lea.vmem %s1, %s1039
        %v1041 = vld [vmem:[%s1040] sm:$0xff]
        %v1042 = vld [vmem:[%s1040 + $0x8] sm:$0xff]
        %v1043 = vld [vmem:[%s1040 + $0x10] sm:$0xff]
        %v1044 = vld [vmem:[%s1040 + $0x18] sm:$0xff]
        %v1045 = vld [vmem:[%s1040 + $0x20] sm:$0xff]
        %v1046 = vld [vmem:[%s1040 + $0x28] sm:$0xff]
        %v1047 = vld [vmem:[%s1040 + $0x30] sm:$0xff]
        %v1048 = vld [vmem:[%s1040 + $0x38] sm:$0xff]
        %v1049 = vld [vmem:[%s5] sm:$0xff]
        %v1050 = vld [vmem:[%s5 + $0x8] sm:$0xff]
        %v1051 = vld [vmem:[%s7] sm:$0x1]
        %v1053 = vlaneseq
        %v1054 = vshrl.u32 %v1053, 7
        %v1055 = vsub.s32 0, %v1054
        %v1056 = vrot.slane %v1051, %v1055
        %vm1058 = vcmask 130048
        %v1060 = vsel %vm1058, %v1041, 0
        %v1063 = vsel %vm1058, %v1042, 0
        %v1066 = vsel %vm1058, %v1043, 0
        %v1069 = vsel %vm1058, %v1044, 0
        %v1072 = vsel %vm1058, %v1045, 0
        %v1075 = vsel %vm1058, %v1046, 0
        %v1078 = vsel %vm1058, %v1047, 0
        %v1081 = vsel %vm1058, %v1048, 0
        %1083 = vmatprep.subr.mxu0 0.0
        %1084 = vmatpush1.msra.mxu0 0.0
        %1085 = vmatprep.subr.mxu0 0.0
        %1086 = vmatpush1.msra.mxu0 0.0
        %1087 = vmatprep.subr.mxu0 0.0
        %1088 = vmatpush1.msra.mxu0 0.0
        %1089 = vmatprep.subr.mxu0 0.0
        %1090 = vmatpush1.msra.mxu0 0.0
        %1091 = vmatprep.subr.mxu0 0.0
        %1092 = vmatpush1.msra.mxu0 0.0
        %1093 = vmatprep.subr.mxu0 0.0
        %1094 = vmatpush1.msra.mxu0 0.0
        %1095 = vmatprep.subr.mxu0 0.0
        %1096 = vmatpush1.msra.mxu0 0.0
        %1097 = vmatprep.subr.mxu0 0.0
        %1098 = vmatpush1.msra.mxu0 0.0
        %1099 = vmatprep.subr.mxu0 0.0
        %1100 = vmatpush1.msra.mxu0 0.0
        %1101 = vmatprep.subr.mxu0 0.0
        %1102 = vmatpush1.msra.mxu0 0.0
        %1103 = vmatprep.subr.mxu0 0.0
        %1104 = vmatpush1.msra.mxu0 0.0
        %1105 = vmatprep.subr.mxu0 0.0
        %1106 = vmatpush1.msra.mxu0 0.0
        %1107 = vmatprep.subr.mxu0 0.0
        %1108 = vmatpush1.msra.mxu0 0.0
        %1109 = vmatprep.subr.mxu0 0.0
        %1110 = vmatpush1.msra.mxu0 0.0
        %1111 = vmatprep.subr.mxu0 0.0
        %1112 = vmatpush1.msra.mxu0 %v1050
        %1113 = vmatprep.subr.mxu0 0.0
        %1114 = vmatpush1.msra.mxu0 %v1049
        %1115 = vmatprep.subr.mxu0 0.0
        %1116 = vmatpush2.msra.mxu0 0.0
        %1117 = vmatprep.subr.mxu0 0.0
        %1118 = vmatpush2.msra.mxu0 0.0
        %1119 = vmatprep.subr.mxu0 0.0
        %1120 = vmatpush2.msra.mxu0 0.0
        %1121 = vmatprep.subr.mxu0 0.0
        %1122 = vmatpush2.msra.mxu0 0.0
        %1123 = vmatprep.subr.mxu0 0.0
        %1124 = vmatpush2.msra.mxu0 0.0
        %1125 = vmatprep.subr.mxu0 0.0
        %1126 = vmatpush2.msra.mxu0 0.0
        %1127 = vmatprep.subr.mxu0 0.0
        %1128 = vmatpush2.msra.mxu0 0.0
        %1129 = vmatprep.subr.mxu0 0.0
        %1130 = vmatpush2.msra.mxu0 0.0
        %1131 = vmatprep.subr.mxu0 0.0
        %1132 = vmatpush2.msra.mxu0 0.0
        %1133 = vmatprep.subr.mxu0 0.0
        %1134 = vmatpush2.msra.mxu0 0.0
        %1135 = vmatprep.subr.mxu0 0.0
        %1136 = vmatpush2.msra.mxu0 0.0
        %1137 = vmatprep.subr.mxu0 0.0
        %1138 = vmatpush2.msra.mxu0 0.0
        %1139 = vmatprep.subr.mxu0 0.0
        %1140 = vmatpush2.msra.mxu0 0.0
        %1141 = vmatprep.subr.mxu0 0.0
        %1142 = vmatpush2.msra.mxu0 0.0
        %1143 = vmatprep.subr.mxu0 0.0
        %1144 = vmatpush2.msra.mxu0 0.0
        %1145 = vmatprep.subr.mxu0 0.0
        %1146 = vmatpush2.msra.mxu0 0.0
        %1147 = vmatprep.mubr.f32.mxu0 0.0
        %1148 = vmatmul.mubr.f32.gmra.mxu0 %v1060
        %v1149 = vpop.f32.mrf.mxu0
        %v1150 = vadd.f32 %v1056, %v1149
        %v1151 = vpop.f32.mrf.mxu0
        %1152 = vmatprep.mubr.f32.mxu0 0.0
        %1153 = vmatmul.mubr.f32.gmra.mxu0 %v1063
        %v1154 = vpop.f32.mrf.mxu0
        %v1155 = vadd.f32 %v1056, %v1154
        %v1156 = vpop.f32.mrf.mxu0
        %1157 = vmatprep.mubr.f32.mxu0 0.0
        %1158 = vmatmul.mubr.f32.gmra.mxu0 %v1066
        %v1159 = vpop.f32.mrf.mxu0
        %v1160 = vadd.f32 %v1056, %v1159
        %v1161 = vpop.f32.mrf.mxu0
        %1162 = vmatprep.mubr.f32.mxu0 0.0
        %1163 = vmatmul.mubr.f32.gmra.mxu0 %v1069
        %v1164 = vpop.f32.mrf.mxu0
        %v1165 = vadd.f32 %v1056, %v1164
        %v1166 = vpop.f32.mrf.mxu0
        %1167 = vmatprep.mubr.f32.mxu0 0.0
        %1168 = vmatmul.mubr.f32.gmra.mxu0 %v1072
        %v1169 = vpop.f32.mrf.mxu0
        %v1170 = vadd.f32 %v1056, %v1169
        %v1171 = vpop.f32.mrf.mxu0
        %1172 = vmatprep.mubr.f32.mxu0 0.0
        %1173 = vmatmul.mubr.f32.gmra.mxu0 %v1075
        %v1174 = vpop.f32.mrf.mxu0
        %v1175 = vadd.f32 %v1056, %v1174
        %v1176 = vpop.f32.mrf.mxu0
        %1177 = vmatprep.mubr.f32.mxu0 0.0
        %1178 = vmatmul.mubr.f32.gmra.mxu0 %v1078
        %v1179 = vpop.f32.mrf.mxu0
        %v1180 = vadd.f32 %v1056, %v1179
        %v1181 = vpop.f32.mrf.mxu0
        %1182 = vmatprep.mubr.f32.mxu0 0.0
        %1183 = vmatmul.mubr.f32.gmra.mxu0 %v1081
        %v1184 = vpop.f32.mrf.mxu0
        %v1185 = vadd.f32 %v1056, %v1184
        %v1186 = vpop.f32.mrf.mxu0
        %1187 = vdwg.mxu0
        %v1188 = vld [vmem:[%s3] sm:$0xff]
        %v1189 = vld [vmem:[%s3 + $0x8] sm:$0xff]
        %v1190 = vld [vmem:[%s3 + $0x10] sm:$0xff]
        %v1191 = vld [vmem:[%s3 + $0x18] sm:$0xff]
        %v1192 = vld [vmem:[%s3 + $0x20] sm:$0xff]
        %v1193 = vld [vmem:[%s3 + $0x28] sm:$0xff]
        %v1194 = vld [vmem:[%s3 + $0x30] sm:$0xff]
        %v1195 = vld [vmem:[%s3 + $0x38] sm:$0xff]
        %v1196 = vld [vmem:[%s9] sm:$0x1]
        %v1197 = vld [vmem:[%s11] sm:$0x1]
        %v1198 = vsel %vm1058, %v1150, 0.0
        %1199 = vadd.xlane.f32.xlu0 %v1198
        %v1200 = vpop.xlane.xlu0 %1199
        %v1201 = vsel %vm1058, %v1155, 0.0
        %1202 = vadd.xlane.f32.xlu0 %v1201
        %v1203 = vpop.xlane.xlu0 %1202
        %v1204 = vsel %vm1058, %v1160, 0.0
        %1205 = vadd.xlane.f32.xlu0 %v1204
        %v1206 = vpop.xlane.xlu0 %1205
        %v1207 = vsel %vm1058, %v1165, 0.0
        %1208 = vadd.xlane.f32.xlu0 %v1207
        %v1209 = vpop.xlane.xlu0 %1208
        %v1210 = vsel %vm1058, %v1170, 0.0
        %1211 = vadd.xlane.f32.xlu0 %v1210
        %v1212 = vpop.xlane.xlu0 %1211
        %v1213 = vsel %vm1058, %v1175, 0.0
        %1214 = vadd.xlane.f32.xlu0 %v1213
        %v1215 = vpop.xlane.xlu0 %1214
        %v1216 = vsel %vm1058, %v1180, 0.0
        %1217 = vadd.xlane.f32.xlu0 %v1216
        %v1218 = vpop.xlane.xlu0 %1217
        %v1219 = vsel %vm1058, %v1185, 0.0
        %1220 = vadd.xlane.f32.xlu0 %v1219
        %v1221 = vpop.xlane.xlu0 %1220
        %v1222 = vrcp.pop 16.0
        %v1223 = vmul.f32 %v1200, %v1222
        %v1224 = vmul.f32 %v1203, %v1222
        %v1225 = vmul.f32 %v1206, %v1222
        %v1226 = vmul.f32 %v1209, %v1222
        %v1227 = vmul.f32 %v1212, %v1222
        %v1228 = vmul.f32 %v1215, %v1222
        %v1229 = vmul.f32 %v1218, %v1222
        %v1230 = vmul.f32 %v1221, %v1222
        %v1231 = vsub.f32 %v1150, %v1223
        %v1232 = vsub.f32 %v1155, %v1224
        %v1233 = vsub.f32 %v1160, %v1225
        %v1234 = vsub.f32 %v1165, %v1226
        %v1235 = vsub.f32 %v1170, %v1227
        %v1236 = vsub.f32 %v1175, %v1228
        %v1237 = vsub.f32 %v1180, %v1229
        %v1238 = vsub.f32 %v1185, %v1230
        %v1239 = vmul.f32 %v1231, %v1231
        %v1240 = vmul.f32 %v1232, %v1232
        %v1241 = vmul.f32 %v1233, %v1233
        %v1242 = vmul.f32 %v1234, %v1234
        %v1243 = vmul.f32 %v1235, %v1235
        %v1244 = vmul.f32 %v1236, %v1236
        %v1245 = vmul.f32 %v1237, %v1237
        %v1246 = vmul.f32 %v1238, %v1238
        %v1247 = vsel %vm1058, %v1239, 0.0
        %1248 = vadd.xlane.f32.xlu0 %v1247
        %v1249 = vpop.xlane.xlu0 %1248
        %v1250 = vsel %vm1058, %v1240, 0.0
        %1251 = vadd.xlane.f32.xlu0 %v1250
        %v1252 = vpop.xlane.xlu0 %1251
        %v1253 = vsel %vm1058, %v1241, 0.0
        %1254 = vadd.xlane.f32.xlu0 %v1253
        %v1255 = vpop.xlane.xlu0 %1254
        %v1256 = vsel %vm1058, %v1242, 0.0
        %1257 = vadd.xlane.f32.xlu0 %v1256
        %v1258 = vpop.xlane.xlu0 %1257
        %v1259 = vsel %vm1058, %v1243, 0.0
        %1260 = vadd.xlane.f32.xlu0 %v1259
        %v1261 = vpop.xlane.xlu0 %1260
        %v1262 = vsel %vm1058, %v1244, 0.0
        %1263 = vadd.xlane.f32.xlu0 %v1262
        %v1264 = vpop.xlane.xlu0 %1263
        %v1265 = vsel %vm1058, %v1245, 0.0
        %1266 = vadd.xlane.f32.xlu0 %v1265
        %v1267 = vpop.xlane.xlu0 %1266
        %v1268 = vsel %vm1058, %v1246, 0.0
        %1269 = vadd.xlane.f32.xlu0 %v1268
        %v1270 = vpop.xlane.xlu0 %1269
        %v1271 = vmul.f32 %v1249, %v1222
        %v1272 = vmul.f32 %v1252, %v1222
        %v1273 = vmul.f32 %v1255, %v1222
        %v1274 = vmul.f32 %v1258, %v1222
        %v1275 = vmul.f32 %v1261, %v1222
        %v1276 = vmul.f32 %v1264, %v1222
        %v1277 = vmul.f32 %v1267, %v1222
        %v1278 = vmul.f32 %v1270, %v1222
        %v1279 = vadd.f32 %v1271, 1e-05
        %v1280 = vadd.f32 %v1272, 1e-05
        %v1281 = vadd.f32 %v1273, 1e-05
        %v1282 = vadd.f32 %v1274, 1e-05
        %v1283 = vadd.f32 %v1275, 1e-05
        %v1284 = vadd.f32 %v1276, 1e-05
        %v1285 = vadd.f32 %v1277, 1e-05
        %v1286 = vadd.f32 %v1278, 1e-05
        %v1287 = vrsqrt.pop %v1279
        %v1288 = vrsqrt.pop %v1280
        %v1289 = vrsqrt.pop %v1281
        %v1290 = vrsqrt.pop %v1282
        %v1291 = vrsqrt.pop %v1283
        %v1292 = vrsqrt.pop %v1284
        %v1293 = vrsqrt.pop %v1285
        %v1294 = vrsqrt.pop %v1286
        %v1295 = vmul.f32 %v1231, %v1287
        %v1296 = vmul.f32 %v1232, %v1288
        %v1297 = vmul.f32 %v1233, %v1289
        %v1298 = vmul.f32 %v1234, %v1290
        %v1299 = vmul.f32 %v1235, %v1291
        %v1300 = vmul.f32 %v1236, %v1292
        %v1301 = vmul.f32 %v1237, %v1293
        %v1302 = vmul.f32 %v1238, %v1294
        %v1304 = vlaneseq
        %v1305 = vshrl.u32 %v1304, 7
        %v1306 = vsub.s32 0, %v1305
        %v1307 = vrot.slane %v1196, %v1306
        %v1309 = vmul.f32 %v1295, %v1307
        %v1310 = vmul.f32 %v1296, %v1307
        %v1311 = vmul.f32 %v1297, %v1307
        %v1312 = vmul.f32 %v1298, %v1307
        %v1313 = vmul.f32 %v1299, %v1307
        %v1314 = vmul.f32 %v1300, %v1307
        %v1315 = vmul.f32 %v1301, %v1307
        %v1316 = vmul.f32 %v1302, %v1307
        %v1318 = vlaneseq
        %v1319 = vshrl.u32 %v1318, 7
        %v1320 = vsub.s32 0, %v1319
        %v1321 = vrot.slane %v1197, %v1320
        %v1323 = vadd.f32 %v1309, %v1321
        %v1324 = vadd.f32 %v1310, %v1321
        %v1325 = vadd.f32 %v1311, %v1321
        %v1326 = vadd.f32 %v1312, %v1321
        %v1327 = vadd.f32 %v1313, %v1321
        %v1328 = vadd.f32 %v1314, %v1321
        %v1329 = vadd.f32 %v1315, %v1321
        %v1330 = vadd.f32 %v1316, %v1321
        %vm1331 = vcmask 523264
        %v1333 = vsel %vm1331, %v1188, 0
        %v1336 = vsel %vm1331, %v1189, 0
        %v1339 = vsel %vm1331, %v1190, 0
        %v1342 = vsel %vm1331, %v1191, 0
        %v1345 = vsel %vm1331, %v1192, 0
        %v1348 = vsel %vm1331, %v1193, 0
        %v1351 = vsel %vm1331, %v1194, 0
        %v1354 = vsel %vm1331, %v1195, 0
        %1356 = vmatprep.subr.mxu0 0.0
        %1357 = vmatpush1.msra.mxu0 0.0
        %1358 = vmatprep.subr.mxu0 0.0
        %1359 = vmatpush1.msra.mxu0 0.0
        %1360 = vmatprep.subr.mxu0 0.0
        %1361 = vmatpush1.msra.mxu0 0.0
        %1362 = vmatprep.subr.mxu0 0.0
        %1363 = vmatpush1.msra.mxu0 0.0
        %1364 = vmatprep.subr.mxu0 0.0
        %1365 = vmatpush1.msra.mxu0 0.0
        %1366 = vmatprep.subr.mxu0 0.0
        %1367 = vmatpush1.msra.mxu0 0.0
        %1368 = vmatprep.subr.mxu0 0.0
        %1369 = vmatpush1.msra.mxu0 0.0
        %1370 = vmatprep.subr.mxu0 0.0
        %1371 = vmatpush1.msra.mxu0 0.0
        %1372 = vmatprep.subr.mxu0 0.0
        %1373 = vmatpush1.msra.mxu0 %v1330
        %1374 = vmatprep.subr.mxu0 0.0
        %1375 = vmatpush1.msra.mxu0 %v1329
        %1376 = vmatprep.subr.mxu0 0.0
        %1377 = vmatpush1.msra.mxu0 %v1328
        %1378 = vmatprep.subr.mxu0 0.0
        %1379 = vmatpush1.msra.mxu0 %v1327
        %1380 = vmatprep.subr.mxu0 0.0
        %1381 = vmatpush1.msra.mxu0 %v1326
        %1382 = vmatprep.subr.mxu0 0.0
        %1383 = vmatpush1.msra.mxu0 %v1325
        %1384 = vmatprep.subr.mxu0 0.0
        %1385 = vmatpush1.msra.mxu0 %v1324
        %1386 = vmatprep.subr.mxu0 0.0
        %1387 = vmatpush1.msra.mxu0 %v1323
        %1388 = vmatprep.subr.mxu0 0.0
        %1389 = vmatpush2.msra.mxu0 0.0
        %1390 = vmatprep.subr.mxu0 0.0
        %1391 = vmatpush2.msra.mxu0 0.0
        %1392 = vmatprep.subr.mxu0 0.0
        %1393 = vmatpush2.msra.mxu0 0.0
        %1394 = vmatprep.subr.mxu0 0.0
        %1395 = vmatpush2.msra.mxu0 0.0
        %1396 = vmatprep.subr.mxu0 0.0
        %1397 = vmatpush2.msra.mxu0 0.0
        %1398 = vmatprep.subr.mxu0 0.0
        %1399 = vmatpush2.msra.mxu0 0.0
        %1400 = vmatprep.subr.mxu0 0.0
        %1401 = vmatpush2.msra.mxu0 0.0
        %1402 = vmatprep.subr.mxu0 0.0
        %1403 = vmatpush2.msra.mxu0 0.0
        %1404 = vmatprep.subr.mxu0 0.0
        %1405 = vmatpush2.msra.mxu0 0.0
        %1406 = vmatprep.subr.mxu0 0.0
        %1407 = vmatpush2.msra.mxu0 0.0
        %1408 = vmatprep.subr.mxu0 0.0
        %1409 = vmatpush2.msra.mxu0 0.0
        %1410 = vmatprep.subr.mxu0 0.0
        %1411 = vmatpush2.msra.mxu0 0.0
        %1412 = vmatprep.subr.mxu0 0.0
        %1413 = vmatpush2.msra.mxu0 0.0
        %1414 = vmatprep.subr.mxu0 0.0
        %1415 = vmatpush2.msra.mxu0 0.0
        %1416 = vmatprep.subr.mxu0 0.0
        %1417 = vmatpush2.msra.mxu0 0.0
        %1418 = vmatprep.subr.mxu0 0.0
        %1419 = vmatpush2.msra.mxu0 0.0
        %1420 = vmatprep.mubr.f32.mxu0 0.0
        %1421 = vmatmul.mubr.f32.gmra.mxu0 %v1333
        %v1422 = vpop.f32.mrf.mxu0
        %v1423 = vadd.f32 0.0, %v1422
        %v1424 = vpop.f32.mrf.mxu0
        %1425 = vmatprep.mubr.f32.mxu0 0.0
        %1426 = vmatmul.mubr.f32.gmra.mxu0 %v1336
        %v1427 = vpop.f32.mrf.mxu0
        %v1428 = vadd.f32 0.0, %v1427
        %v1429 = vpop.f32.mrf.mxu0
        %1430 = vmatprep.mubr.f32.mxu0 0.0
        %1431 = vmatmul.mubr.f32.gmra.mxu0 %v1339
        %v1432 = vpop.f32.mrf.mxu0
        %v1433 = vadd.f32 0.0, %v1432
        %v1434 = vpop.f32.mrf.mxu0
        %1435 = vmatprep.mubr.f32.mxu0 0.0
        %1436 = vmatmul.mubr.f32.gmra.mxu0 %v1342
        %v1437 = vpop.f32.mrf.mxu0
        %v1438 = vadd.f32 0.0, %v1437
        %v1439 = vpop.f32.mrf.mxu0
        %1440 = vmatprep.mubr.f32.mxu0 0.0
        %1441 = vmatmul.mubr.f32.gmra.mxu0 %v1345
        %v1442 = vpop.f32.mrf.mxu0
        %v1443 = vadd.f32 0.0, %v1442
        %v1444 = vpop.f32.mrf.mxu0
        %1445 = vmatprep.mubr.f32.mxu0 0.0
        %1446 = vmatmul.mubr.f32.gmra.mxu0 %v1348
        %v1447 = vpop.f32.mrf.mxu0
        %v1448 = vadd.f32 0.0, %v1447
        %v1449 = vpop.f32.mrf.mxu0
        %1450 = vmatprep.mubr.f32.mxu0 0.0
        %1451 = vmatmul.mubr.f32.gmra.mxu0 %v1351
        %v1452 = vpop.f32.mrf.mxu0
        %v1453 = vadd.f32 0.0, %v1452
        %v1454 = vpop.f32.mrf.mxu0
        %1455 = vmatprep.mubr.f32.mxu0 0.0
        %1456 = vmatmul.mubr.f32.gmra.mxu0 %v1354
        %v1457 = vpop.f32.mrf.mxu0
        %v1458 = vadd.f32 0.0, %v1457
        %v1459 = vpop.f32.mrf.mxu0
        %1460 = vdwg.mxu0
        %v1461 = vld [vmem:[%s23] sm:$0xff]
        %v1462 = vld [vmem:[%s23 + $0x8] sm:$0xff]
        %v1463 = vld [vmem:[%s23 + $0x10] sm:$0xff]
        %v1464 = vld [vmem:[%s23 + $0x18] sm:$0xff]
        %v1465 = vld [vmem:[%s23 + $0x20] sm:$0xff]
        %v1466 = vld [vmem:[%s23 + $0x28] sm:$0xff]
        %v1467 = vld [vmem:[%s23 + $0x30] sm:$0xff]
        %v1468 = vld [vmem:[%s23 + $0x38] sm:$0xff]
        %v1469 = vld [vmem:[%s13] sm:$0xff]
        %v1470 = vld [vmem:[%s13 + $0x8] sm:$0xff]
        %v1472 = vsel %vm1058, %v1423, 0
        %v1475 = vsel %vm1058, %v1428, 0
        %v1478 = vsel %vm1058, %v1433, 0
        %v1481 = vsel %vm1058, %v1438, 0
        %v1484 = vsel %vm1058, %v1443, 0
        %v1487 = vsel %vm1058, %v1448, 0
        %v1490 = vsel %vm1058, %v1453, 0
        %v1493 = vsel %vm1058, %v1458, 0
        %1495 = vmatprep.subr.mxu0 0.0
        %1496 = vmatpush1.msra.mxu0 0.0
        %1497 = vmatprep.subr.mxu0 0.0
        %1498 = vmatpush1.msra.mxu0 0.0
        %1499 = vmatprep.subr.mxu0 0.0
        %1500 = vmatpush1.msra.mxu0 0.0
        %1501 = vmatprep.subr.mxu0 0.0
        %1502 = vmatpush1.msra.mxu0 0.0
        %1503 = vmatprep.subr.mxu0 0.0
        %1504 = vmatpush1.msra.mxu0 0.0
        %1505 = vmatprep.subr.mxu0 0.0
        %1506 = vmatpush1.msra.mxu0 0.0
        %1507 = vmatprep.subr.mxu0 0.0
        %1508 = vmatpush1.msra.mxu0 0.0
        %1509 = vmatprep.subr.mxu0 0.0
        %1510 = vmatpush1.msra.mxu0 0.0
        %1511 = vmatprep.subr.mxu0 0.0
        %1512 = vmatpush1.msra.mxu0 0.0
        %1513 = vmatprep.subr.mxu0 0.0
        %1514 = vmatpush1.msra.mxu0 0.0
        %1515 = vmatprep.subr.mxu0 0.0
        %1516 = vmatpush1.msra.mxu0 0.0
        %1517 = vmatprep.subr.mxu0 0.0
        %1518 = vmatpush1.msra.mxu0 0.0
        %1519 = vmatprep.subr.mxu0 0.0
        %1520 = vmatpush1.msra.mxu0 0.0
        %1521 = vmatprep.subr.mxu0 0.0
        %1522 = vmatpush1.msra.mxu0 0.0
        %1523 = vmatprep.subr.mxu0 0.0
        %1524 = vmatpush1.msra.mxu0 %v1470
        %1525 = vmatprep.subr.mxu0 0.0
        %1526 = vmatpush1.msra.mxu0 %v1469
        %1527 = vmatprep.subr.mxu0 0.0
        %1528 = vmatpush2.msra.mxu0 0.0
        %1529 = vmatprep.subr.mxu0 0.0
        %1530 = vmatpush2.msra.mxu0 0.0
        %1531 = vmatprep.subr.mxu0 0.0
        %1532 = vmatpush2.msra.mxu0 0.0
        %1533 = vmatprep.subr.mxu0 0.0
        %1534 = vmatpush2.msra.mxu0 0.0
        %1535 = vmatprep.subr.mxu0 0.0
        %1536 = vmatpush2.msra.mxu0 0.0
        %1537 = vmatprep.subr.mxu0 0.0
        %1538 = vmatpush2.msra.mxu0 0.0
        %1539 = vmatprep.subr.mxu0 0.0
        %1540 = vmatpush2.msra.mxu0 0.0
        %1541 = vmatprep.subr.mxu0 0.0
        %1542 = vmatpush2.msra.mxu0 0.0
        %1543 = vmatprep.subr.mxu0 0.0
        %1544 = vmatpush2.msra.mxu0 0.0
        %1545 = vmatprep.subr.mxu0 0.0
        %1546 = vmatpush2.msra.mxu0 0.0
        %1547 = vmatprep.subr.mxu0 0.0
        %1548 = vmatpush2.msra.mxu0 0.0
        %1549 = vmatprep.subr.mxu0 0.0
        %1550 = vmatpush2.msra.mxu0 0.0
        %1551 = vmatprep.subr.mxu0 0.0
        %1552 = vmatpush2.msra.mxu0 0.0
        %1553 = vmatprep.subr.mxu0 0.0
        %1554 = vmatpush2.msra.mxu0 0.0
        %1555 = vmatprep.subr.mxu0 0.0
        %1556 = vmatpush2.msra.mxu0 0.0
        %1557 = vmatprep.subr.mxu0 0.0
        %1558 = vmatpush2.msra.mxu0 0.0
        %1559 = vmatprep.mubr.f32.mxu0 0.0
        %1560 = vmatmul.mubr.f32.gmra.mxu0 %v1472
        %v1561 = vpop.f32.mrf.mxu0
        %v1562 = vadd.f32 0.0, %v1561
        %v1563 = vpop.f32.mrf.mxu0
        %1564 = vmatprep.mubr.f32.mxu0 0.0
        %1565 = vmatmul.mubr.f32.gmra.mxu0 %v1475
        %v1566 = vpop.f32.mrf.mxu0
        %v1567 = vadd.f32 0.0, %v1566
        %v1568 = vpop.f32.mrf.mxu0
        %1569 = vmatprep.mubr.f32.mxu0 0.0
        %1570 = vmatmul.mubr.f32.gmra.mxu0 %v1478
        %v1571 = vpop.f32.mrf.mxu0
        %v1572 = vadd.f32 0.0, %v1571
        %v1573 = vpop.f32.mrf.mxu0
        %1574 = vmatprep.mubr.f32.mxu0 0.0
        %1575 = vmatmul.mubr.f32.gmra.mxu0 %v1481
        %v1576 = vpop.f32.mrf.mxu0
        %v1577 = vadd.f32 0.0, %v1576
        %v1578 = vpop.f32.mrf.mxu0
        %1579 = vmatprep.mubr.f32.mxu0 0.0
        %1580 = vmatmul.mubr.f32.gmra.mxu0 %v1484
        %v1581 = vpop.f32.mrf.mxu0
        %v1582 = vadd.f32 0.0, %v1581
        %v1583 = vpop.f32.mrf.mxu0
        %1584 = vmatprep.mubr.f32.mxu0 0.0
        %1585 = vmatmul.mubr.f32.gmra.mxu0 %v1487
        %v1586 = vpop.f32.mrf.mxu0
        %v1587 = vadd.f32 0.0, %v1586
        %v1588 = vpop.f32.mrf.mxu0
        %1589 = vmatprep.mubr.f32.mxu0 0.0
        %1590 = vmatmul.mubr.f32.gmra.mxu0 %v1490
        %v1591 = vpop.f32.mrf.mxu0
        %v1592 = vadd.f32 0.0, %v1591
        %v1593 = vpop.f32.mrf.mxu0
        %1594 = vmatprep.mubr.f32.mxu0 0.0
        %1595 = vmatmul.mubr.f32.gmra.mxu0 %v1493
        %v1596 = vpop.f32.mrf.mxu0
        %v1597 = vadd.f32 0.0, %v1596
        %v1598 = vpop.f32.mrf.mxu0
        %1599 = vdwg.mxu0
        %v1600 = vld [vmem:[%s15] sm:$0xff]
        %v1601 = vld [vmem:[%s15 + $0x8] sm:$0xff]
        %1602 = vmatprep.subr.mxu0 0.0
        %1603 = vmatpush1.msra.mxu0 0.0
        %1604 = vmatprep.subr.mxu0 0.0
        %1605 = vmatpush1.msra.mxu0 0.0
        %1606 = vmatprep.subr.mxu0 0.0
        %1607 = vmatpush1.msra.mxu0 0.0
        %1608 = vmatprep.subr.mxu0 0.0
        %1609 = vmatpush1.msra.mxu0 0.0
        %1610 = vmatprep.subr.mxu0 0.0
        %1611 = vmatpush1.msra.mxu0 0.0
        %1612 = vmatprep.subr.mxu0 0.0
        %1613 = vmatpush1.msra.mxu0 0.0
        %1614 = vmatprep.subr.mxu0 0.0
        %1615 = vmatpush1.msra.mxu0 0.0
        %1616 = vmatprep.subr.mxu0 0.0
        %1617 = vmatpush1.msra.mxu0 0.0
        %1618 = vmatprep.subr.mxu0 0.0
        %1619 = vmatpush1.msra.mxu0 0.0
        %1620 = vmatprep.subr.mxu0 0.0
        %1621 = vmatpush1.msra.mxu0 0.0
        %1622 = vmatprep.subr.mxu0 0.0
        %1623 = vmatpush1.msra.mxu0 0.0
        %1624 = vmatprep.subr.mxu0 0.0
        %1625 = vmatpush1.msra.mxu0 0.0
        %1626 = vmatprep.subr.mxu0 0.0
        %1627 = vmatpush1.msra.mxu0 0.0
        %1628 = vmatprep.subr.mxu0 0.0
        %1629 = vmatpush1.msra.mxu0 0.0
        %1630 = vmatprep.subr.mxu0 0.0
        %1631 = vmatpush1.msra.mxu0 %v1601
        %1632 = vmatprep.subr.mxu0 0.0
        %1633 = vmatpush1.msra.mxu0 %v1600
        %1634 = vmatprep.subr.mxu0 0.0
        %1635 = vmatpush2.msra.mxu0 0.0
        %1636 = vmatprep.subr.mxu0 0.0
        %1637 = vmatpush2.msra.mxu0 0.0
        %1638 = vmatprep.subr.mxu0 0.0
        %1639 = vmatpush2.msra.mxu0 0.0
        %1640 = vmatprep.subr.mxu0 0.0
        %1641 = vmatpush2.msra.mxu0 0.0
        %1642 = vmatprep.subr.mxu0 0.0
        %1643 = vmatpush2.msra.mxu0 0.0
        %1644 = vmatprep.subr.mxu0 0.0
        %1645 = vmatpush2.msra.mxu0 0.0
        %1646 = vmatprep.subr.mxu0 0.0
        %1647 = vmatpush2.msra.mxu0 0.0
        %1648 = vmatprep.subr.mxu0 0.0
        %1649 = vmatpush2.msra.mxu0 0.0
        %1650 = vmatprep.subr.mxu0 0.0
        %1651 = vmatpush2.msra.mxu0 0.0
        %1652 = vmatprep.subr.mxu0 0.0
        %1653 = vmatpush2.msra.mxu0 0.0
        %1654 = vmatprep.subr.mxu0 0.0
        %1655 = vmatpush2.msra.mxu0 0.0
        %1656 = vmatprep.subr.mxu0 0.0
        %1657 = vmatpush2.msra.mxu0 0.0
        %1658 = vmatprep.subr.mxu0 0.0
        %1659 = vmatpush2.msra.mxu0 0.0
        %1660 = vmatprep.subr.mxu0 0.0
        %1661 = vmatpush2.msra.mxu0 0.0
        %1662 = vmatprep.subr.mxu0 0.0
        %1663 = vmatpush2.msra.mxu0 0.0
        %1664 = vmatprep.subr.mxu0 0.0
        %1665 = vmatpush2.msra.mxu0 0.0
        %1666 = vmatprep.mubr.f32.mxu0 0.0
        %1667 = vmatmul.mubr.f32.gmra.mxu0 %v1472
        %v1668 = vpop.f32.mrf.mxu0
        %v1669 = vadd.f32 0.0, %v1668
        %v1670 = vpop.f32.mrf.mxu0
        %1671 = vmatprep.mubr.f32.mxu0 0.0
        %1672 = vmatmul.mubr.f32.gmra.mxu0 %v1475
        %v1673 = vpop.f32.mrf.mxu0
        %v1674 = vadd.f32 0.0, %v1673
        %v1675 = vpop.f32.mrf.mxu0
        %1676 = vmatprep.mubr.f32.mxu0 0.0
        %1677 = vmatmul.mubr.f32.gmra.mxu0 %v1478
        %v1678 = vpop.f32.mrf.mxu0
        %v1679 = vadd.f32 0.0, %v1678
        %v1680 = vpop.f32.mrf.mxu0
        %1681 = vmatprep.mubr.f32.mxu0 0.0
        %1682 = vmatmul.mubr.f32.gmra.mxu0 %v1481
        %v1683 = vpop.f32.mrf.mxu0
        %v1684 = vadd.f32 0.0, %v1683
        %v1685 = vpop.f32.mrf.mxu0
        %1686 = vmatprep.mubr.f32.mxu0 0.0
        %1687 = vmatmul.mubr.f32.gmra.mxu0 %v1484
        %v1688 = vpop.f32.mrf.mxu0
        %v1689 = vadd.f32 0.0, %v1688
        %v1690 = vpop.f32.mrf.mxu0
        %1691 = vmatprep.mubr.f32.mxu0 0.0
        %1692 = vmatmul.mubr.f32.gmra.mxu0 %v1487
        %v1693 = vpop.f32.mrf.mxu0
        %v1694 = vadd.f32 0.0, %v1693
        %v1695 = vpop.f32.mrf.mxu0
        %1696 = vmatprep.mubr.f32.mxu0 0.0
        %1697 = vmatmul.mubr.f32.gmra.mxu0 %v1490
        %v1698 = vpop.f32.mrf.mxu0
        %v1699 = vadd.f32 0.0, %v1698
        %v1700 = vpop.f32.mrf.mxu0
        %1701 = vmatprep.mubr.f32.mxu0 0.0
        %1702 = vmatmul.mubr.f32.gmra.mxu0 %v1493
        %v1703 = vpop.f32.mrf.mxu0
        %v1704 = vadd.f32 0.0, %v1703
        %v1705 = vpop.f32.mrf.mxu0
        %1706 = vdwg.mxu0
        %v1707 = vld [vmem:[%s17] sm:$0xff]
        %v1708 = vld [vmem:[%s17 + $0x8] sm:$0xff]
        %1709 = vmatprep.subr.mxu0 0.0
        %1710 = vmatpush1.msra.mxu0 0.0
        %1711 = vmatprep.subr.mxu0 0.0
        %1712 = vmatpush1.msra.mxu0 0.0
        %1713 = vmatprep.subr.mxu0 0.0
        %1714 = vmatpush1.msra.mxu0 0.0
        %1715 = vmatprep.subr.mxu0 0.0
        %1716 = vmatpush1.msra.mxu0 0.0
        %1717 = vmatprep.subr.mxu0 0.0
        %1718 = vmatpush1.msra.mxu0 0.0
        %1719 = vmatprep.subr.mxu0 0.0
        %1720 = vmatpush1.msra.mxu0 0.0
        %1721 = vmatprep.subr.mxu0 0.0
        %1722 = vmatpush1.msra.mxu0 0.0
        %1723 = vmatprep.subr.mxu0 0.0
        %1724 = vmatpush1.msra.mxu0 0.0
        %1725 = vmatprep.subr.mxu0 0.0
        %1726 = vmatpush1.msra.mxu0 0.0
        %1727 = vmatprep.subr.mxu0 0.0
        %1728 = vmatpush1.msra.mxu0 0.0
        %1729 = vmatprep.subr.mxu0 0.0
        %1730 = vmatpush1.msra.mxu0 0.0
        %1731 = vmatprep.subr.mxu0 0.0
        %1732 = vmatpush1.msra.mxu0 0.0
        %1733 = vmatprep.subr.mxu0 0.0
        %1734 = vmatpush1.msra.mxu0 0.0
        %1735 = vmatprep.subr.mxu0 0.0
        %1736 = vmatpush1.msra.mxu0 0.0
        %1737 = vmatprep.subr.mxu0 0.0
        %1738 = vmatpush1.msra.mxu0 %v1708
        %1739 = vmatprep.subr.mxu0 0.0
        %1740 = vmatpush1.msra.mxu0 %v1707
        %1741 = vmatprep.subr.mxu0 0.0
        %1742 = vmatpush2.msra.mxu0 0.0
        %1743 = vmatprep.subr.mxu0 0.0
        %1744 = vmatpush2.msra.mxu0 0.0
        %1745 = vmatprep.subr.mxu0 0.0
        %1746 = vmatpush2.msra.mxu0 0.0
        %1747 = vmatprep.subr.mxu0 0.0
        %1748 = vmatpush2.msra.mxu0 0.0
        %1749 = vmatprep.subr.mxu0 0.0
        %1750 = vmatpush2.msra.mxu0 0.0
        %1751 = vmatprep.subr.mxu0 0.0
        %1752 = vmatpush2.msra.mxu0 0.0
        %1753 = vmatprep.subr.mxu0 0.0
        %1754 = vmatpush2.msra.mxu0 0.0
        %1755 = vmatprep.subr.mxu0 0.0
        %1756 = vmatpush2.msra.mxu0 0.0
        %1757 = vmatprep.subr.mxu0 0.0
        %1758 = vmatpush2.msra.mxu0 0.0
        %1759 = vmatprep.subr.mxu0 0.0
        %1760 = vmatpush2.msra.mxu0 0.0
        %1761 = vmatprep.subr.mxu0 0.0
        %1762 = vmatpush2.msra.mxu0 0.0
        %1763 = vmatprep.subr.mxu0 0.0
        %1764 = vmatpush2.msra.mxu0 0.0
        %1765 = vmatprep.subr.mxu0 0.0
        %1766 = vmatpush2.msra.mxu0 0.0
        %1767 = vmatprep.subr.mxu0 0.0
        %1768 = vmatpush2.msra.mxu0 0.0
        %1769 = vmatprep.subr.mxu0 0.0
        %1770 = vmatpush2.msra.mxu0 0.0
        %1771 = vmatprep.subr.mxu0 0.0
        %1772 = vmatpush2.msra.mxu0 0.0
        %1773 = vmatprep.mubr.f32.mxu0 0.0
        %1774 = vmatmul.mubr.f32.gmra.mxu0 %v1472
        %v1775 = vpop.f32.mrf.mxu0
        %v1776 = vadd.f32 0.0, %v1775
        %v1777 = vpop.f32.mrf.mxu0
        %1778 = vmatprep.mubr.f32.mxu0 0.0
        %1779 = vmatmul.mubr.f32.gmra.mxu0 %v1475
        %v1780 = vpop.f32.mrf.mxu0
        %v1781 = vadd.f32 0.0, %v1780
        %v1782 = vpop.f32.mrf.mxu0
        %1783 = vmatprep.mubr.f32.mxu0 0.0
        %1784 = vmatmul.mubr.f32.gmra.mxu0 %v1478
        %v1785 = vpop.f32.mrf.mxu0
        %v1786 = vadd.f32 0.0, %v1785
        %v1787 = vpop.f32.mrf.mxu0
        %1788 = vmatprep.mubr.f32.mxu0 0.0
        %1789 = vmatmul.mubr.f32.gmra.mxu0 %v1481
        %v1790 = vpop.f32.mrf.mxu0
        %v1791 = vadd.f32 0.0, %v1790
        %v1792 = vpop.f32.mrf.mxu0
        %1793 = vmatprep.mubr.f32.mxu0 0.0
        %1794 = vmatmul.mubr.f32.gmra.mxu0 %v1484
        %v1795 = vpop.f32.mrf.mxu0
        %v1796 = vadd.f32 0.0, %v1795
        %v1797 = vpop.f32.mrf.mxu0
        %1798 = vmatprep.mubr.f32.mxu0 0.0
        %1799 = vmatmul.mubr.f32.gmra.mxu0 %v1487
        %v1800 = vpop.f32.mrf.mxu0
        %v1801 = vadd.f32 0.0, %v1800
        %v1802 = vpop.f32.mrf.mxu0
        %1803 = vmatprep.mubr.f32.mxu0 0.0
        %1804 = vmatmul.mubr.f32.gmra.mxu0 %v1490
        %v1805 = vpop.f32.mrf.mxu0
        %v1806 = vadd.f32 0.0, %v1805
        %v1807 = vpop.f32.mrf.mxu0
        %1808 = vmatprep.mubr.f32.mxu0 0.0
        %1809 = vmatmul.mubr.f32.gmra.mxu0 %v1493
        %v1810 = vpop.f32.mrf.mxu0
        %v1811 = vadd.f32 0.0, %v1810
        %v1812 = vpop.f32.mrf.mxu0
        %1813 = vdwg.mxu0
        %vm1814 = vcmask 64512
        %v1816 = vsel %vm1814, %v1562, 0
        %v1819 = vsel %vm1814, %v1567, 0
        %v1822 = vsel %vm1814, %v1572, 0
        %v1825 = vsel %vm1814, %v1577, 0
        %v1828 = vsel %vm1814, %v1582, 0
        %v1831 = vsel %vm1814, %v1587, 0
        %v1834 = vsel %vm1814, %v1592, 0
        %v1837 = vsel %vm1814, %v1597, 0
        %v1840 = vsel %vm1814, %v1669, 0
        %v1843 = vsel %vm1814, %v1674, 0
        %v1846 = vsel %vm1814, %v1679, 0
        %v1849 = vsel %vm1814, %v1684, 0
        %v1852 = vsel %vm1814, %v1689, 0
        %v1855 = vsel %vm1814, %v1694, 0
        %v1858 = vsel %vm1814, %v1699, 0
        %v1861 = vsel %vm1814, %v1704, 0
        %1863 = vmatprep.subr.mxu0 0.0
        %1864 = vmatpush1.xpose.msra.mxu0 0.0
        %1865 = vmatprep.subr.mxu0 0.0
        %1866 = vmatpush1.xpose.msra.mxu0 0.0
        %1867 = vmatprep.subr.mxu0 0.0
        %1868 = vmatpush1.xpose.msra.mxu0 0.0
        %1869 = vmatprep.subr.mxu0 0.0
        %1870 = vmatpush1.xpose.msra.mxu0 0.0
        %1871 = vmatprep.subr.mxu0 0.0
        %1872 = vmatpush1.xpose.msra.mxu0 0.0
        %1873 = vmatprep.subr.mxu0 0.0
        %1874 = vmatpush1.xpose.msra.mxu0 0.0
        %1875 = vmatprep.subr.mxu0 0.0
        %1876 = vmatpush1.xpose.msra.mxu0 0.0
        %1877 = vmatprep.subr.mxu0 0.0
        %1878 = vmatpush1.xpose.msra.mxu0 0.0
        %1879 = vmatprep.subr.mxu0 0.0
        %1880 = vmatpush1.xpose.msra.mxu0 %v1861
        %1881 = vmatprep.subr.mxu0 0.0
        %1882 = vmatpush1.xpose.msra.mxu0 %v1858
        %1883 = vmatprep.subr.mxu0 0.0
        %1884 = vmatpush1.xpose.msra.mxu0 %v1855
        %1885 = vmatprep.subr.mxu0 0.0
        %1886 = vmatpush1.xpose.msra.mxu0 %v1852
        %1887 = vmatprep.subr.mxu0 0.0
        %1888 = vmatpush1.xpose.msra.mxu0 %v1849
        %1889 = vmatprep.subr.mxu0 0.0
        %1890 = vmatpush1.xpose.msra.mxu0 %v1846
        %1891 = vmatprep.subr.mxu0 0.0
        %1892 = vmatpush1.xpose.msra.mxu0 %v1843
        %1893 = vmatprep.subr.mxu0 0.0
        %1894 = vmatpush1.xpose.msra.mxu0 %v1840
        %1895 = vmatprep.subr.mxu0 0.0
        %1896 = vmatpush2.xpose.msra.mxu0 0.0
        %1897 = vmatprep.subr.mxu0 0.0
        %1898 = vmatpush2.xpose.msra.mxu0 0.0
        %1899 = vmatprep.subr.mxu0 0.0
        %1900 = vmatpush2.xpose.msra.mxu0 0.0
        %1901 = vmatprep.subr.mxu0 0.0
        %1902 = vmatpush2.xpose.msra.mxu0 0.0
        %1903 = vmatprep.subr.mxu0 0.0
        %1904 = vmatpush2.xpose.msra.mxu0 0.0
        %1905 = vmatprep.subr.mxu0 0.0
        %1906 = vmatpush2.xpose.msra.mxu0 0.0
        %1907 = vmatprep.subr.mxu0 0.0
        %1908 = vmatpush2.xpose.msra.mxu0 0.0
        %1909 = vmatprep.subr.mxu0 0.0
        %1910 = vmatpush2.xpose.msra.mxu0 0.0
        %1911 = vmatprep.subr.mxu0 0.0
        %1912 = vmatpush2.xpose.msra.mxu0 0.0
        %1913 = vmatprep.subr.mxu0 0.0
        %1914 = vmatpush2.xpose.msra.mxu0 0.0
        %1915 = vmatprep.subr.mxu0 0.0
        %1916 = vmatpush2.xpose.msra.mxu0 0.0
        %1917 = vmatprep.subr.mxu0 0.0
        %1918 = vmatpush2.xpose.msra.mxu0 0.0
        %1919 = vmatprep.subr.mxu0 0.0
        %1920 = vmatpush2.xpose.msra.mxu0 0.0
        %1921 = vmatprep.subr.mxu0 0.0
        %1922 = vmatpush2.xpose.msra.mxu0 0.0
        %1923 = vmatprep.subr.mxu0 0.0
        %1924 = vmatpush2.xpose.msra.mxu0 0.0
        %1925 = vmatprep.subr.mxu0 0.0
        %1926 = vmatpush2.xpose.msra.mxu0 0.0
        %1927 = vmatprep.mubr.f32.mxu0 0.0
        %1928 = vmatmul.mubr.f32.gmra.mxu0 %v1816
        %v1929 = vpop.f32.mrf.mxu0
        %v1930 = vadd.f32 %v1461, %v1929
        %v1931 = vpop.f32.mrf.mxu0
        %1932 = vmatprep.mubr.f32.mxu0 0.0
        %1933 = vmatmul.mubr.f32.gmra.mxu0 %v1819
        %v1934 = vpop.f32.mrf.mxu0
        %v1935 = vadd.f32 %v1462, %v1934
        %v1936 = vpop.f32.mrf.mxu0
        %1937 = vmatprep.mubr.f32.mxu0 0.0
        %1938 = vmatmul.mubr.f32.gmra.mxu0 %v1822
        %v1939 = vpop.f32.mrf.mxu0
        %v1940 = vadd.f32 %v1463, %v1939
        %v1941 = vpop.f32.mrf.mxu0
        %1942 = vmatprep.mubr.f32.mxu0 0.0
        %1943 = vmatmul.mubr.f32.gmra.mxu0 %v1825
        %v1944 = vpop.f32.mrf.mxu0
        %v1945 = vadd.f32 %v1464, %v1944
        %v1946 = vpop.f32.mrf.mxu0
        %1947 = vmatprep.mubr.f32.mxu0 0.0
        %1948 = vmatmul.mubr.f32.gmra.mxu0 %v1828
        %v1949 = vpop.f32.mrf.mxu0
        %v1950 = vadd.f32 %v1465, %v1949
        %v1951 = vpop.f32.mrf.mxu0
        %1952 = vmatprep.mubr.f32.mxu0 0.0
        %1953 = vmatmul.mubr.f32.gmra.mxu0 %v1831
        %v1954 = vpop.f32.mrf.mxu0
        %v1955 = vadd.f32 %v1466, %v1954
        %v1956 = vpop.f32.mrf.mxu0
        %1957 = vmatprep.mubr.f32.mxu0 0.0
        %1958 = vmatmul.mubr.f32.gmra.mxu0 %v1834
        %v1959 = vpop.f32.mrf.mxu0
        %v1960 = vadd.f32 %v1467, %v1959
        %v1961 = vpop.f32.mrf.mxu0
        %1962 = vmatprep.mubr.f32.mxu0 0.0
        %1963 = vmatmul.mubr.f32.gmra.mxu0 %v1837
        %v1964 = vpop.f32.mrf.mxu0
        %v1965 = vadd.f32 %v1468, %v1964
        %v1966 = vpop.f32.mrf.mxu0
        %1967 = vdwg.mxu0
        %v1968 = vsel %vm1331, %v1930, -inf
        %1969 = vmax.xlane.f32.xlu0 %v1968
        %v1970 = vpop.xlane.xlu0 %1969
        %v1971 = vsel %vm1331, %v1935, -inf
        %1972 = vmax.xlane.f32.xlu0 %v1971
        %v1973 = vpop.xlane.xlu0 %1972
        %v1974 = vsel %vm1331, %v1940, -inf
        %1975 = vmax.xlane.f32.xlu0 %v1974
        %v1976 = vpop.xlane.xlu0 %1975
        %v1977 = vsel %vm1331, %v1945, -inf
        %1978 = vmax.xlane.f32.xlu0 %v1977
        %v1979 = vpop.xlane.xlu0 %1978
        %v1980 = vsel %vm1331, %v1950, -inf
        %1981 = vmax.xlane.f32.xlu0 %v1980
        %v1982 = vpop.xlane.xlu0 %1981
        %v1983 = vsel %vm1331, %v1955, -inf
        %1984 = vmax.xlane.f32.xlu0 %v1983
        %v1985 = vpop.xlane.xlu0 %1984
        %v1986 = vsel %vm1331, %v1960, -inf
        %1987 = vmax.xlane.f32.xlu0 %v1986
        %v1988 = vpop.xlane.xlu0 %1987
        %v1989 = vsel %vm1331, %v1965, -inf
        %1990 = vmax.xlane.f32.xlu0 %v1989
        %v1991 = vpop.xlane.xlu0 %1990
        %v1992 = vsub.f32 %v1930, %v1970
        %v1993 = vsub.f32 %v1935, %v1973
        %v1994 = vsub.f32 %v1940, %v1976
        %v1995 = vsub.f32 %v1945, %v1979
        %v1996 = vsub.f32 %v1950, %v1982
        %v1997 = vsub.f32 %v1955, %v1985
        %v1998 = vsub.f32 %v1960, %v1988
        %v1999 = vsub.f32 %v1965, %v1991
        %v2000 = vmul.f32 %v1992, 1.442695
        %v2001 = vpow.pop %v2000
        %v2002 = vmul.f32 %v1993, 1.442695
        %v2003 = vpow.pop %v2002
        %v2004 = vmul.f32 %v1994, 1.442695
        %v2005 = vpow.pop %v2004
        %v2006 = vmul.f32 %v1995, 1.442695
        %v2007 = vpow.pop %v2006
        %v2008 = vmul.f32 %v1996, 1.442695
        %v2009 = vpow.pop %v2008
        %v2010 = vmul.f32 %v1997, 1.442695
        %v2011 = vpow.pop %v2010
        %v2012 = vmul.f32 %v1998, 1.442695
        %v2013 = vpow.pop %v2012
        %v2014 = vmul.f32 %v1999, 1.442695
        %v2015 = vpow.pop %v2014
        %v2016 = vsel %vm1331, %v2001, 0.0
        %2017 = vadd.xlane.f32.xlu0 %v2016
        %v2018 = vpop.xlane.xlu0 %2017
        %v2019 = vsel %vm1331, %v2003, 0.0
        %2020 = vadd.xlane.f32.xlu0 %v2019
        %v2021 = vpop.xlane.xlu0 %2020
        %v2022 = vsel %vm1331, %v2005, 0.0
        %2023 = vadd.xlane.f32.xlu0 %v2022
        %v2024 = vpop.xlane.xlu0 %2023
        %v2025 = vsel %vm1331, %v2007, 0.0
        %2026 = vadd.xlane.f32.xlu0 %v2025
        %v2027 = vpop.xlane.xlu0 %2026
        %v2028 = vsel %vm1331, %v2009, 0.0
        %2029 = vadd.xlane.f32.xlu0 %v2028
        %v2030 = vpop.xlane.xlu0 %2029
        %v2031 = vsel %vm1331, %v2011, 0.0
        %2032 = vadd.xlane.f32.xlu0 %v2031
        %v2033 = vpop.xlane.xlu0 %2032
        %v2034 = vsel %vm1331, %v2013, 0.0
        %2035 = vadd.xlane.f32.xlu0 %v2034
        %v2036 = vpop.xlane.xlu0 %2035
        %v2037 = vsel %vm1331, %v2015, 0.0
        %2038 = vadd.xlane.f32.xlu0 %v2037
        %v2039 = vpop.xlane.xlu0 %2038
        %v2040 = vrcp.pop %v2018
        %v2041 = vrcp.pop %v2021
        %v2042 = vrcp.pop %v2024
        %v2043 = vrcp.pop %v2027
        %v2044 = vrcp.pop %v2030
        %v2045 = vrcp.pop %v2033
        %v2046 = vrcp.pop %v2036
        %v2047 = vrcp.pop %v2039
        %v2048 = vmul.f32 %v2001, %v2040
        %v2049 = vmul.f32 %v2003, %v2041
        %v2050 = vmul.f32 %v2005, %v2042
        %v2051 = vmul.f32 %v2007, %v2043
        %v2052 = vmul.f32 %v2009, %v2044
        %v2053 = vmul.f32 %v2011, %v2045
        %v2054 = vmul.f32 %v2013, %v2046
        %v2055 = vmul.f32 %v2015, %v2047
        %v2057 = vsel %vm1331, %v2048, 0
        %v2060 = vsel %vm1331, %v2049, 0
        %v2063 = vsel %vm1331, %v2050, 0
        %v2066 = vsel %vm1331, %v2051, 0
        %v2069 = vsel %vm1331, %v2052, 0
        %v2072 = vsel %vm1331, %v2053, 0
        %v2075 = vsel %vm1331, %v2054, 0
        %v2078 = vsel %vm1331, %v2055, 0
        %2080 = vmatprep.subr.mxu0 0.0
        %2081 = vmatpush1.msra.mxu0 0.0
        %2082 = vmatprep.subr.mxu0 0.0
        %2083 = vmatpush1.msra.mxu0 0.0
        %2084 = vmatprep.subr.mxu0 0.0
        %2085 = vmatpush1.msra.mxu0 0.0
        %2086 = vmatprep.subr.mxu0 0.0
        %2087 = vmatpush1.msra.mxu0 0.0
        %2088 = vmatprep.subr.mxu0 0.0
        %2089 = vmatpush1.msra.mxu0 0.0
        %2090 = vmatprep.subr.mxu0 0.0
        %2091 = vmatpush1.msra.mxu0 0.0
        %2092 = vmatprep.subr.mxu0 0.0
        %2093 = vmatpush1.msra.mxu0 0.0
        %2094 = vmatprep.subr.mxu0 0.0
        %2095 = vmatpush1.msra.mxu0 0.0
        %2096 = vmatprep.subr.mxu0 0.0
        %2097 = vmatpush1.msra.mxu0 %v1811
        %2098 = vmatprep.subr.mxu0 0.0
        %2099 = vmatpush1.msra.mxu0 %v1806
        %2100 = vmatprep.subr.mxu0 0.0
        %2101 = vmatpush1.msra.mxu0 %v1801
        %2102 = vmatprep.subr.mxu0 0.0
        %2103 = vmatpush1.msra.mxu0 %v1796
        %2104 = vmatprep.subr.mxu0 0.0
        %2105 = vmatpush1.msra.mxu0 %v1791
        %2106 = vmatprep.subr.mxu0 0.0
        %2107 = vmatpush1.msra.mxu0 %v1786
        %2108 = vmatprep.subr.mxu0 0.0
        %2109 = vmatpush1.msra.mxu0 %v1781
        %2110 = vmatprep.subr.mxu0 0.0
        %2111 = vmatpush1.msra.mxu0 %v1776
        %2112 = vmatprep.subr.mxu0 0.0
        %2113 = vmatpush2.msra.mxu0 0.0
        %2114 = vmatprep.subr.mxu0 0.0
        %2115 = vmatpush2.msra.mxu0 0.0
        %2116 = vmatprep.subr.mxu0 0.0
        %2117 = vmatpush2.msra.mxu0 0.0
        %2118 = vmatprep.subr.mxu0 0.0
        %2119 = vmatpush2.msra.mxu0 0.0
        %2120 = vmatprep.subr.mxu0 0.0
        %2121 = vmatpush2.msra.mxu0 0.0
        %2122 = vmatprep.subr.mxu0 0.0
        %2123 = vmatpush2.msra.mxu0 0.0
        %2124 = vmatprep.subr.mxu0 0.0
        %2125 = vmatpush2.msra.mxu0 0.0
        %2126 = vmatprep.subr.mxu0 0.0
        %2127 = vmatpush2.msra.mxu0 0.0
        %2128 = vmatprep.subr.mxu0 0.0
        %2129 = vmatpush2.msra.mxu0 0.0
        %2130 = vmatprep.subr.mxu0 0.0
        %2131 = vmatpush2.msra.mxu0 0.0
        %2132 = vmatprep.subr.mxu0 0.0
        %2133 = vmatpush2.msra.mxu0 0.0
        %2134 = vmatprep.subr.mxu0 0.0
        %2135 = vmatpush2.msra.mxu0 0.0
        %2136 = vmatprep.subr.mxu0 0.0
        %2137 = vmatpush2.msra.mxu0 0.0
        %2138 = vmatprep.subr.mxu0 0.0
        %2139 = vmatpush2.msra.mxu0 0.0
        %2140 = vmatprep.subr.mxu0 0.0
        %2141 = vmatpush2.msra.mxu0 0.0
        %2142 = vmatprep.subr.mxu0 0.0
        %2143 = vmatpush2.msra.mxu0 0.0
        %2144 = vmatprep.mubr.f32.mxu0 0.0
        %2145 = vmatmul.mubr.f32.gmra.mxu0 %v2057
        %v2146 = vpop.f32.mrf.mxu0
        %v2147 = vadd.f32 0.0, %v2146
        %v2148 = vpop.f32.mrf.mxu0
        %2149 = vmatprep.mubr.f32.mxu0 0.0
        %2150 = vmatmul.mubr.f32.gmra.mxu0 %v2060
        %v2151 = vpop.f32.mrf.mxu0
        %v2152 = vadd.f32 0.0, %v2151
        %v2153 = vpop.f32.mrf.mxu0
        %2154 = vmatprep.mubr.f32.mxu0 0.0
        %2155 = vmatmul.mubr.f32.gmra.mxu0 %v2063
        %v2156 = vpop.f32.mrf.mxu0
        %v2157 = vadd.f32 0.0, %v2156
        %v2158 = vpop.f32.mrf.mxu0
        %2159 = vmatprep.mubr.f32.mxu0 0.0
        %2160 = vmatmul.mubr.f32.gmra.mxu0 %v2066
        %v2161 = vpop.f32.mrf.mxu0
        %v2162 = vadd.f32 0.0, %v2161
        %v2163 = vpop.f32.mrf.mxu0
        %2164 = vmatprep.mubr.f32.mxu0 0.0
        %2165 = vmatmul.mubr.f32.gmra.mxu0 %v2069
        %v2166 = vpop.f32.mrf.mxu0
        %v2167 = vadd.f32 0.0, %v2166
        %v2168 = vpop.f32.mrf.mxu0
        %2169 = vmatprep.mubr.f32.mxu0 0.0
        %2170 = vmatmul.mubr.f32.gmra.mxu0 %v2072
        %v2171 = vpop.f32.mrf.mxu0
        %v2172 = vadd.f32 0.0, %v2171
        %v2173 = vpop.f32.mrf.mxu0
        %2174 = vmatprep.mubr.f32.mxu0 0.0
        %2175 = vmatmul.mubr.f32.gmra.mxu0 %v2075
        %v2176 = vpop.f32.mrf.mxu0
        %v2177 = vadd.f32 0.0, %v2176
        %v2178 = vpop.f32.mrf.mxu0
        %2179 = vmatprep.mubr.f32.mxu0 0.0
        %2180 = vmatmul.mubr.f32.gmra.mxu0 %v2078
        %v2181 = vpop.f32.mrf.mxu0
        %v2182 = vadd.f32 0.0, %v2181
        %v2183 = vpop.f32.mrf.mxu0
        %2184 = vdwg.mxu0
        %v2185 = vld [vmem:[%s19] sm:$0xff]
        %s2186 = scalar_lea.vmem %s13, 16
        %v2187 = vld [vmem:[%s2186] sm:$0xff]
        %v2188 = vld [vmem:[%s2186 + $0x8] sm:$0xff]
        %2189 = vmatprep.subr.mxu0 0.0
        %2190 = vmatpush1.msra.mxu0 0.0
        %2191 = vmatprep.subr.mxu0 0.0
        %2192 = vmatpush1.msra.mxu0 0.0
        %2193 = vmatprep.subr.mxu0 0.0
        %2194 = vmatpush1.msra.mxu0 0.0
        %2195 = vmatprep.subr.mxu0 0.0
        %2196 = vmatpush1.msra.mxu0 0.0
        %2197 = vmatprep.subr.mxu0 0.0
        %2198 = vmatpush1.msra.mxu0 0.0
        %2199 = vmatprep.subr.mxu0 0.0
        %2200 = vmatpush1.msra.mxu0 0.0
        %2201 = vmatprep.subr.mxu0 0.0
        %2202 = vmatpush1.msra.mxu0 0.0
        %2203 = vmatprep.subr.mxu0 0.0
        %2204 = vmatpush1.msra.mxu0 0.0
        %2205 = vmatprep.subr.mxu0 0.0
        %2206 = vmatpush1.msra.mxu0 0.0
        %2207 = vmatprep.subr.mxu0 0.0
        %2208 = vmatpush1.msra.mxu0 0.0
        %2209 = vmatprep.subr.mxu0 0.0
        %2210 = vmatpush1.msra.mxu0 0.0
        %2211 = vmatprep.subr.mxu0 0.0
        %2212 = vmatpush1.msra.mxu0 0.0
        %2213 = vmatprep.subr.mxu0 0.0
        %2214 = vmatpush1.msra.mxu0 0.0
        %2215 = vmatprep.subr.mxu0 0.0
        %2216 = vmatpush1.msra.mxu0 0.0
        %2217 = vmatprep.subr.mxu0 0.0
        %2218 = vmatpush1.msra.mxu0 %v2188
        %2219 = vmatprep.subr.mxu0 0.0
        %2220 = vmatpush1.msra.mxu0 %v2187
        %2221 = vmatprep.subr.mxu0 0.0
        %2222 = vmatpush2.msra.mxu0 0.0
        %2223 = vmatprep.subr.mxu0 0.0
        %2224 = vmatpush2.msra.mxu0 0.0
        %2225 = vmatprep.subr.mxu0 0.0
        %2226 = vmatpush2.msra.mxu0 0.0
        %2227 = vmatprep.subr.mxu0 0.0
        %2228 = vmatpush2.msra.mxu0 0.0
        %2229 = vmatprep.subr.mxu0 0.0
        %2230 = vmatpush2.msra.mxu0 0.0
        %2231 = vmatprep.subr.mxu0 0.0
        %2232 = vmatpush2.msra.mxu0 0.0
        %2233 = vmatprep.subr.mxu0 0.0
        %2234 = vmatpush2.msra.mxu0 0.0
        %2235 = vmatprep.subr.mxu0 0.0
        %2236 = vmatpush2.msra.mxu0 0.0
        %2237 = vmatprep.subr.mxu0 0.0
        %2238 = vmatpush2.msra.mxu0 0.0
        %2239 = vmatprep.subr.mxu0 0.0
        %2240 = vmatpush2.msra.mxu0 0.0
        %2241 = vmatprep.subr.mxu0 0.0
        %2242 = vmatpush2.msra.mxu0 0.0
        %2243 = vmatprep.subr.mxu0 0.0
        %2244 = vmatpush2.msra.mxu0 0.0
        %2245 = vmatprep.subr.mxu0 0.0
        %2246 = vmatpush2.msra.mxu0 0.0
        %2247 = vmatprep.subr.mxu0 0.0
        %2248 = vmatpush2.msra.mxu0 0.0
        %2249 = vmatprep.subr.mxu0 0.0
        %2250 = vmatpush2.msra.mxu0 0.0
        %2251 = vmatprep.subr.mxu0 0.0
        %2252 = vmatpush2.msra.mxu0 0.0
        %2253 = vmatprep.mubr.f32.mxu0 0.0
        %2254 = vmatmul.mubr.f32.gmra.mxu0 %v1472
        %v2255 = vpop.f32.mrf.mxu0
        %v2256 = vadd.f32 0.0, %v2255
        %v2257 = vpop.f32.mrf.mxu0
        %2258 = vmatprep.mubr.f32.mxu0 0.0
        %2259 = vmatmul.mubr.f32.gmra.mxu0 %v1475
        %v2260 = vpop.f32.mrf.mxu0
        %v2261 = vadd.f32 0.0, %v2260
        %v2262 = vpop.f32.mrf.mxu0
        %2263 = vmatprep.mubr.f32.mxu0 0.0
        %2264 = vmatmul.mubr.f32.gmra.mxu0 %v1478
        %v2265 = vpop.f32.mrf.mxu0
        %v2266 = vadd.f32 0.0, %v2265
        %v2267 = vpop.f32.mrf.mxu0
        %2268 = vmatprep.mubr.f32.mxu0 0.0
        %2269 = vmatmul.mubr.f32.gmra.mxu0 %v1481
        %v2270 = vpop.f32.mrf.mxu0
        %v2271 = vadd.f32 0.0, %v2270
        %v2272 = vpop.f32.mrf.mxu0
        %2273 = vmatprep.mubr.f32.mxu0 0.0
        %2274 = vmatmul.mubr.f32.gmra.mxu0 %v1484
        %v2275 = vpop.f32.mrf.mxu0
        %v2276 = vadd.f32 0.0, %v2275
        %v2277 = vpop.f32.mrf.mxu0
        %2278 = vmatprep.mubr.f32.mxu0 0.0
        %2279 = vmatmul.mubr.f32.gmra.mxu0 %v1487
        %v2280 = vpop.f32.mrf.mxu0
        %v2281 = vadd.f32 0.0, %v2280
        %v2282 = vpop.f32.mrf.mxu0
        %2283 = vmatprep.mubr.f32.mxu0 0.0
        %2284 = vmatmul.mubr.f32.gmra.mxu0 %v1490
        %v2285 = vpop.f32.mrf.mxu0
        %v2286 = vadd.f32 0.0, %v2285
        %v2287 = vpop.f32.mrf.mxu0
        %2288 = vmatprep.mubr.f32.mxu0 0.0
        %2289 = vmatmul.mubr.f32.gmra.mxu0 %v1493
        %v2290 = vpop.f32.mrf.mxu0
        %v2291 = vadd.f32 0.0, %v2290
        %v2292 = vpop.f32.mrf.mxu0
        %2293 = vdwg.mxu0
        %s2294 = scalar_lea.vmem %s15, 16
        %v2295 = vld [vmem:[%s2294] sm:$0xff]
        %v2296 = vld [vmem:[%s2294 + $0x8] sm:$0xff]
        %2297 = vmatprep.subr.mxu0 0.0
        %2298 = vmatpush1.msra.mxu0 0.0
        %2299 = vmatprep.subr.mxu0 0.0
        %2300 = vmatpush1.msra.mxu0 0.0
        %2301 = vmatprep.subr.mxu0 0.0
        %2302 = vmatpush1.msra.mxu0 0.0
        %2303 = vmatprep.subr.mxu0 0.0
        %2304 = vmatpush1.msra.mxu0 0.0
        %2305 = vmatprep.subr.mxu0 0.0
        %2306 = vmatpush1.msra.mxu0 0.0
        %2307 = vmatprep.subr.mxu0 0.0
        %2308 = vmatpush1.msra.mxu0 0.0
        %2309 = vmatprep.subr.mxu0 0.0
        %2310 = vmatpush1.msra.mxu0 0.0
        %2311 = vmatprep.subr.mxu0 0.0
        %2312 = vmatpush1.msra.mxu0 0.0
        %2313 = vmatprep.subr.mxu0 0.0
        %2314 = vmatpush1.msra.mxu0 0.0
        %2315 = vmatprep.subr.mxu0 0.0
        %2316 = vmatpush1.msra.mxu0 0.0
        %2317 = vmatprep.subr.mxu0 0.0
        %2318 = vmatpush1.msra.mxu0 0.0
        %2319 = vmatprep.subr.mxu0 0.0
        %2320 = vmatpush1.msra.mxu0 0.0
        %2321 = vmatprep.subr.mxu0 0.0
        %2322 = vmatpush1.msra.mxu0 0.0
        %2323 = vmatprep.subr.mxu0 0.0
        %2324 = vmatpush1.msra.mxu0 0.0
        %2325 = vmatprep.subr.mxu0 0.0
        %2326 = vmatpush1.msra.mxu0 %v2296
        %2327 = vmatprep.subr.mxu0 0.0
        %2328 = vmatpush1.msra.mxu0 %v2295
        %2329 = vmatprep.subr.mxu0 0.0
        %2330 = vmatpush2.msra.mxu0 0.0
        %2331 = vmatprep.subr.mxu0 0.0
        %2332 = vmatpush2.msra.mxu0 0.0
        %2333 = vmatprep.subr.mxu0 0.0
        %2334 = vmatpush2.msra.mxu0 0.0
        %2335 = vmatprep.subr.mxu0 0.0
        %2336 = vmatpush2.msra.mxu0 0.0
        %2337 = vmatprep.subr.mxu0 0.0
        %2338 = vmatpush2.msra.mxu0 0.0
        %2339 = vmatprep.subr.mxu0 0.0
        %2340 = vmatpush2.msra.mxu0 0.0
        %2341 = vmatprep.subr.mxu0 0.0
        %2342 = vmatpush2.msra.mxu0 0.0
        %2343 = vmatprep.subr.mxu0 0.0
        %2344 = vmatpush2.msra.mxu0 0.0
        %2345 = vmatprep.subr.mxu0 0.0
        %2346 = vmatpush2.msra.mxu0 0.0
        %2347 = vmatprep.subr.mxu0 0.0
        %2348 = vmatpush2.msra.mxu0 0.0
        %2349 = vmatprep.subr.mxu0 0.0
        %2350 = vmatpush2.msra.mxu0 0.0
        %2351 = vmatprep.subr.mxu0 0.0
        %2352 = vmatpush2.msra.mxu0 0.0
        %2353 = vmatprep.subr.mxu0 0.0
        %2354 = vmatpush2.msra.mxu0 0.0
        %2355 = vmatprep.subr.mxu0 0.0
        %2356 = vmatpush2.msra.mxu0 0.0
        %2357 = vmatprep.subr.mxu0 0.0
        %2358 = vmatpush2.msra.mxu0 0.0
        %2359 = vmatprep.subr.mxu0 0.0
        %2360 = vmatpush2.msra.mxu0 0.0
        %2361 = vmatprep.mubr.f32.mxu0 0.0
        %2362 = vmatmul.mubr.f32.gmra.mxu0 %v1472
        %v2363 = vpop.f32.mrf.mxu0
        %v2364 = vadd.f32 0.0, %v2363
        %v2365 = vpop.f32.mrf.mxu0
        %2366 = vmatprep.mubr.f32.mxu0 0.0
        %2367 = vmatmul.mubr.f32.gmra.mxu0 %v1475
        %v2368 = vpop.f32.mrf.mxu0
        %v2369 = vadd.f32 0.0, %v2368
        %v2370 = vpop.f32.mrf.mxu0
        %2371 = vmatprep.mubr.f32.mxu0 0.0
        %2372 = vmatmul.mubr.f32.gmra.mxu0 %v1478
        %v2373 = vpop.f32.mrf.mxu0
        %v2374 = vadd.f32 0.0, %v2373
        %v2375 = vpop.f32.mrf.mxu0
        %2376 = vmatprep.mubr.f32.mxu0 0.0
        %2377 = vmatmul.mubr.f32.gmra.mxu0 %v1481
        %v2378 = vpop.f32.mrf.mxu0
        %v2379 = vadd.f32 0.0, %v2378
        %v2380 = vpop.f32.mrf.mxu0
        %2381 = vmatprep.mubr.f32.mxu0 0.0
        %2382 = vmatmul.mubr.f32.gmra.mxu0 %v1484
        %v2383 = vpop.f32.mrf.mxu0
        %v2384 = vadd.f32 0.0, %v2383
        %v2385 = vpop.f32.mrf.mxu0
        %2386 = vmatprep.mubr.f32.mxu0 0.0
        %2387 = vmatmul.mubr.f32.gmra.mxu0 %v1487
        %v2388 = vpop.f32.mrf.mxu0
        %v2389 = vadd.f32 0.0, %v2388
        %v2390 = vpop.f32.mrf.mxu0
        %2391 = vmatprep.mubr.f32.mxu0 0.0
        %2392 = vmatmul.mubr.f32.gmra.mxu0 %v1490
        %v2393 = vpop.f32.mrf.mxu0
        %v2394 = vadd.f32 0.0, %v2393
        %v2395 = vpop.f32.mrf.mxu0
        %2396 = vmatprep.mubr.f32.mxu0 0.0
        %2397 = vmatmul.mubr.f32.gmra.mxu0 %v1493
        %v2398 = vpop.f32.mrf.mxu0
        %v2399 = vadd.f32 0.0, %v2398
        %v2400 = vpop.f32.mrf.mxu0
        %2401 = vdwg.mxu0
        %s2402 = scalar_lea.vmem %s17, 16
        %v2403 = vld [vmem:[%s2402] sm:$0xff]
        %v2404 = vld [vmem:[%s2402 + $0x8] sm:$0xff]
        %2405 = vmatprep.subr.mxu0 0.0
        %2406 = vmatpush1.msra.mxu0 0.0
        %2407 = vmatprep.subr.mxu0 0.0
        %2408 = vmatpush1.msra.mxu0 0.0
        %2409 = vmatprep.subr.mxu0 0.0
        %2410 = vmatpush1.msra.mxu0 0.0
        %2411 = vmatprep.subr.mxu0 0.0
        %2412 = vmatpush1.msra.mxu0 0.0
        %2413 = vmatprep.subr.mxu0 0.0
        %2414 = vmatpush1.msra.mxu0 0.0
        %2415 = vmatprep.subr.mxu0 0.0
        %2416 = vmatpush1.msra.mxu0 0.0
        %2417 = vmatprep.subr.mxu0 0.0
        %2418 = vmatpush1.msra.mxu0 0.0
        %2419 = vmatprep.subr.mxu0 0.0
        %2420 = vmatpush1.msra.mxu0 0.0
        %2421 = vmatprep.subr.mxu0 0.0
        %2422 = vmatpush1.msra.mxu0 0.0
        %2423 = vmatprep.subr.mxu0 0.0
        %2424 = vmatpush1.msra.mxu0 0.0
        %2425 = vmatprep.subr.mxu0 0.0
        %2426 = vmatpush1.msra.mxu0 0.0
        %2427 = vmatprep.subr.mxu0 0.0
        %2428 = vmatpush1.msra.mxu0 0.0
        %2429 = vmatprep.subr.mxu0 0.0
        %2430 = vmatpush1.msra.mxu0 0.0
        %2431 = vmatprep.subr.mxu0 0.0
        %2432 = vmatpush1.msra.mxu0 0.0
        %2433 = vmatprep.subr.mxu0 0.0
        %2434 = vmatpush1.msra.mxu0 %v2404
        %2435 = vmatprep.subr.mxu0 0.0
        %2436 = vmatpush1.msra.mxu0 %v2403
        %2437 = vmatprep.subr.mxu0 0.0
        %2438 = vmatpush2.msra.mxu0 0.0
        %2439 = vmatprep.subr.mxu0 0.0
        %2440 = vmatpush2.msra.mxu0 0.0
        %2441 = vmatprep.subr.mxu0 0.0
        %2442 = vmatpush2.msra.mxu0 0.0
        %2443 = vmatprep.subr.mxu0 0.0
        %2444 = vmatpush2.msra.mxu0 0.0
        %2445 = vmatprep.subr.mxu0 0.0
        %2446 = vmatpush2.msra.mxu0 0.0
        %2447 = vmatprep.subr.mxu0 0.0
        %2448 = vmatpush2.msra.mxu0 0.0
        %2449 = vmatprep.subr.mxu0 0.0
        %2450 = vmatpush2.msra.mxu0 0.0
        %2451 = vmatprep.subr.mxu0 0.0
        %2452 = vmatpush2.msra.mxu0 0.0
        %2453 = vmatprep.subr.mxu0 0.0
        %2454 = vmatpush2.msra.mxu0 0.0
        %2455 = vmatprep.subr.mxu0 0.0
        %2456 = vmatpush2.msra.mxu0 0.0
        %2457 = vmatprep.subr.mxu0 0.0
        %2458 = vmatpush2.msra.mxu0 0.0
        %2459 = vmatprep.subr.mxu0 0.0
        %2460 = vmatpush2.msra.mxu0 0.0
        %2461 = vmatprep.subr.mxu0 0.0
        %2462 = vmatpush2.msra.mxu0 0.0
        %2463 = vmatprep.subr.mxu0 0.0
        %2464 = vmatpush2.msra.mxu0 0.0
        %2465 = vmatprep.subr.mxu0 0.0
        %2466 = vmatpush2.msra.mxu0 0.0
        %2467 = vmatprep.subr.mxu0 0.0
        %2468 = vmatpush2.msra.mxu0 0.0
        %2469 = vmatprep.mubr.f32.mxu0 0.0
        %2470 = vmatmul.mubr.f32.gmra.mxu0 %v1472
        %v2471 = vpop.f32.mrf.mxu0
        %v2472 = vadd.f32 0.0, %v2471
        %v2473 = vpop.f32.mrf.mxu0
        %2474 = vmatprep.mubr.f32.mxu0 0.0
        %2475 = vmatmul.mubr.f32.gmra.mxu0 %v1475
        %v2476 = vpop.f32.mrf.mxu0
        %v2477 = vadd.f32 0.0, %v2476
        %v2478 = vpop.f32.mrf.mxu0
        %2479 = vmatprep.mubr.f32.mxu0 0.0
        %2480 = vmatmul.mubr.f32.gmra.mxu0 %v1478
        %v2481 = vpop.f32.mrf.mxu0
        %v2482 = vadd.f32 0.0, %v2481
        %v2483 = vpop.f32.mrf.mxu0
        %2484 = vmatprep.mubr.f32.mxu0 0.0
        %2485 = vmatmul.mubr.f32.gmra.mxu0 %v1481
        %v2486 = vpop.f32.mrf.mxu0
        %v2487 = vadd.f32 0.0, %v2486
        %v2488 = vpop.f32.mrf.mxu0
        %2489 = vmatprep.mubr.f32.mxu0 0.0
        %2490 = vmatmul.mubr.f32.gmra.mxu0 %v1484
        %v2491 = vpop.f32.mrf.mxu0
        %v2492 = vadd.f32 0.0, %v2491
        %v2493 = vpop.f32.mrf.mxu0
        %2494 = vmatprep.mubr.f32.mxu0 0.0
        %2495 = vmatmul.mubr.f32.gmra.mxu0 %v1487
        %v2496 = vpop.f32.mrf.mxu0
        %v2497 = vadd.f32 0.0, %v2496
        %v2498 = vpop.f32.mrf.mxu0
        %2499 = vmatprep.mubr.f32.mxu0 0.0
        %2500 = vmatmul.mubr.f32.gmra.mxu0 %v1490
        %v2501 = vpop.f32.mrf.mxu0
        %v2502 = vadd.f32 0.0, %v2501
        %v2503 = vpop.f32.mrf.mxu0
        %2504 = vmatprep.mubr.f32.mxu0 0.0
        %2505 = vmatmul.mubr.f32.gmra.mxu0 %v1493
        %v2506 = vpop.f32.mrf.mxu0
        %v2507 = vadd.f32 0.0, %v2506
        %v2508 = vpop.f32.mrf.mxu0
        %2509 = vdwg.mxu0
        %v2511 = vsel %vm1814, %v2256, 0
        %v2514 = vsel %vm1814, %v2261, 0
        %v2517 = vsel %vm1814, %v2266, 0
        %v2520 = vsel %vm1814, %v2271, 0
        %v2523 = vsel %vm1814, %v2276, 0
        %v2526 = vsel %vm1814, %v2281, 0
        %v2529 = vsel %vm1814, %v2286, 0
        %v2532 = vsel %vm1814, %v2291, 0
        %v2535 = vsel %vm1814, %v2364, 0
        %v2538 = vsel %vm1814, %v2369, 0
        %v2541 = vsel %vm1814, %v2374, 0
        %v2544 = vsel %vm1814, %v2379, 0
        %v2547 = vsel %vm1814, %v2384, 0
        %v2550 = vsel %vm1814, %v2389, 0
        %v2553 = vsel %vm1814, %v2394, 0
        %v2556 = vsel %vm1814, %v2399, 0
        %2558 = vmatprep.subr.mxu0 0.0
        %2559 = vmatpush1.xpose.msra.mxu0 0.0
        %2560 = vmatprep.subr.mxu0 0.0
        %2561 = vmatpush1.xpose.msra.mxu0 0.0
        %2562 = vmatprep.subr.mxu0 0.0
        %2563 = vmatpush1.xpose.msra.mxu0 0.0
        %2564 = vmatprep.subr.mxu0 0.0
        %2565 = vmatpush1.xpose.msra.mxu0 0.0
        %2566 = vmatprep.subr.mxu0 0.0
        %2567 = vmatpush1.xpose.msra.mxu0 0.0
        %2568 = vmatprep.subr.mxu0 0.0
        %2569 = vmatpush1.xpose.msra.mxu0 0.0
        %2570 = vmatprep.subr.mxu0 0.0
        %2571 = vmatpush1.xpose.msra.mxu0 0.0
        %2572 = vmatprep.subr.mxu0 0.0
        %2573 = vmatpush1.xpose.msra.mxu0 0.0
        %2574 = vmatprep.subr.mxu0 0.0
        %2575 = vmatpush1.xpose.msra.mxu0 %v2556
        %2576 = vmatprep.subr.mxu0 0.0
        %2577 = vmatpush1.xpose.msra.mxu0 %v2553
        %2578 = vmatprep.subr.mxu0 0.0
        %2579 = vmatpush1.xpose.msra.mxu0 %v2550
        %2580 = vmatprep.subr.mxu0 0.0
        %2581 = vmatpush1.xpose.msra.mxu0 %v2547
        %2582 = vmatprep.subr.mxu0 0.0
        %2583 = vmatpush1.xpose.msra.mxu0 %v2544
        %2584 = vmatprep.subr.mxu0 0.0
        %2585 = vmatpush1.xpose.msra.mxu0 %v2541
        %2586 = vmatprep.subr.mxu0 0.0
        %2587 = vmatpush1.xpose.msra.mxu0 %v2538
        %2588 = vmatprep.subr.mxu0 0.0
        %2589 = vmatpush1.xpose.msra.mxu0 %v2535
        %2590 = vmatprep.subr.mxu0 0.0
        %2591 = vmatpush2.xpose.msra.mxu0 0.0
        %2592 = vmatprep.subr.mxu0 0.0
        %2593 = vmatpush2.xpose.msra.mxu0 0.0
        %2594 = vmatprep.subr.mxu0 0.0
        %2595 = vmatpush2.xpose.msra.mxu0 0.0
        %2596 = vmatprep.subr.mxu0 0.0
        %2597 = vmatpush2.xpose.msra.mxu0 0.0
        %2598 = vmatprep.subr.mxu0 0.0
        %2599 = vmatpush2.xpose.msra.mxu0 0.0
        %2600 = vmatprep.subr.mxu0 0.0
        %2601 = vmatpush2.xpose.msra.mxu0 0.0
        %2602 = vmatprep.subr.mxu0 0.0
        %2603 = vmatpush2.xpose.msra.mxu0 0.0
        %2604 = vmatprep.subr.mxu0 0.0
        %2605 = vmatpush2.xpose.msra.mxu0 0.0
        %2606 = vmatprep.subr.mxu0 0.0
        %2607 = vmatpush2.xpose.msra.mxu0 0.0
        %2608 = vmatprep.subr.mxu0 0.0
        %2609 = vmatpush2.xpose.msra.mxu0 0.0
        %2610 = vmatprep.subr.mxu0 0.0
        %2611 = vmatpush2.xpose.msra.mxu0 0.0
        %2612 = vmatprep.subr.mxu0 0.0
        %2613 = vmatpush2.xpose.msra.mxu0 0.0
        %2614 = vmatprep.subr.mxu0 0.0
        %2615 = vmatpush2.xpose.msra.mxu0 0.0
        %2616 = vmatprep.subr.mxu0 0.0
        %2617 = vmatpush2.xpose.msra.mxu0 0.0
        %2618 = vmatprep.subr.mxu0 0.0
        %2619 = vmatpush2.xpose.msra.mxu0 0.0
        %2620 = vmatprep.subr.mxu0 0.0
        %2621 = vmatpush2.xpose.msra.mxu0 0.0
        %2622 = vmatprep.mubr.f32.mxu0 0.0
        %2623 = vmatmul.mubr.f32.gmra.mxu0 %v2511
        %v2624 = vpop.f32.mrf.mxu0
        %v2625 = vadd.f32 %v1461, %v2624
        %v2626 = vpop.f32.mrf.mxu0
        %2627 = vmatprep.mubr.f32.mxu0 0.0
        %2628 = vmatmul.mubr.f32.gmra.mxu0 %v2514
        %v2629 = vpop.f32.mrf.mxu0
        %v2630 = vadd.f32 %v1462, %v2629
        %v2631 = vpop.f32.mrf.mxu0
        %2632 = vmatprep.mubr.f32.mxu0 0.0
        %2633 = vmatmul.mubr.f32.gmra.mxu0 %v2517
        %v2634 = vpop.f32.mrf.mxu0
        %v2635 = vadd.f32 %v1463, %v2634
        %v2636 = vpop.f32.mrf.mxu0
        %2637 = vmatprep.mubr.f32.mxu0 0.0
        %2638 = vmatmul.mubr.f32.gmra.mxu0 %v2520
        %v2639 = vpop.f32.mrf.mxu0
        %v2640 = vadd.f32 %v1464, %v2639
        %v2641 = vpop.f32.mrf.mxu0
        %2642 = vmatprep.mubr.f32.mxu0 0.0
        %2643 = vmatmul.mubr.f32.gmra.mxu0 %v2523
        %v2644 = vpop.f32.mrf.mxu0
        %v2645 = vadd.f32 %v1465, %v2644
        %v2646 = vpop.f32.mrf.mxu0
        %2647 = vmatprep.mubr.f32.mxu0 0.0
        %2648 = vmatmul.mubr.f32.gmra.mxu0 %v2526
        %v2649 = vpop.f32.mrf.mxu0
        %v2650 = vadd.f32 %v1466, %v2649
        %v2651 = vpop.f32.mrf.mxu0
        %2652 = vmatprep.mubr.f32.mxu0 0.0
        %2653 = vmatmul.mubr.f32.gmra.mxu0 %v2529
        %v2654 = vpop.f32.mrf.mxu0
        %v2655 = vadd.f32 %v1467, %v2654
        %v2656 = vpop.f32.mrf.mxu0
        %2657 = vmatprep.mubr.f32.mxu0 0.0
        %2658 = vmatmul.mubr.f32.gmra.mxu0 %v2532
        %v2659 = vpop.f32.mrf.mxu0
        %v2660 = vadd.f32 %v1468, %v2659
        %v2661 = vpop.f32.mrf.mxu0
        %2662 = vdwg.mxu0
        %v2663 = vsel %vm1331, %v2625, -inf
        %2664 = vmax.xlane.f32.xlu0 %v2663
        %v2665 = vpop.xlane.xlu0 %2664
        %v2666 = vsel %vm1331, %v2630, -inf
        %2667 = vmax.xlane.f32.xlu0 %v2666
        %v2668 = vpop.xlane.xlu0 %2667
        %v2669 = vsel %vm1331, %v2635, -inf
        %2670 = vmax.xlane.f32.xlu0 %v2669
        %v2671 = vpop.xlane.xlu0 %2670
        %v2672 = vsel %vm1331, %v2640, -inf
        %2673 = vmax.xlane.f32.xlu0 %v2672
        %v2674 = vpop.xlane.xlu0 %2673
        %v2675 = vsel %vm1331, %v2645, -inf
        %2676 = vmax.xlane.f32.xlu0 %v2675
        %v2677 = vpop.xlane.xlu0 %2676
        %v2678 = vsel %vm1331, %v2650, -inf
        %2679 = vmax.xlane.f32.xlu0 %v2678
        %v2680 = vpop.xlane.xlu0 %2679
        %v2681 = vsel %vm1331, %v2655, -inf
        %2682 = vmax.xlane.f32.xlu0 %v2681
        %v2683 = vpop.xlane.xlu0 %2682
        %v2684 = vsel %vm1331, %v2660, -inf
        %2685 = vmax.xlane.f32.xlu0 %v2684
        %v2686 = vpop.xlane.xlu0 %2685
        %v2687 = vsub.f32 %v2625, %v2665
        %v2688 = vsub.f32 %v2630, %v2668
        %v2689 = vsub.f32 %v2635, %v2671
        %v2690 = vsub.f32 %v2640, %v2674
        %v2691 = vsub.f32 %v2645, %v2677
        %v2692 = vsub.f32 %v2650, %v2680
        %v2693 = vsub.f32 %v2655, %v2683
        %v2694 = vsub.f32 %v2660, %v2686
        %v2695 = vmul.f32 %v2687, 1.442695
        %v2696 = vpow.pop %v2695
        %v2697 = vmul.f32 %v2688, 1.442695
        %v2698 = vpow.pop %v2697
        %v2699 = vmul.f32 %v2689, 1.442695
        %v2700 = vpow.pop %v2699
        %v2701 = vmul.f32 %v2690, 1.442695
        %v2702 = vpow.pop %v2701
        %v2703 = vmul.f32 %v2691, 1.442695
        %v2704 = vpow.pop %v2703
        %v2705 = vmul.f32 %v2692, 1.442695
        %v2706 = vpow.pop %v2705
        %v2707 = vmul.f32 %v2693, 1.442695
        %v2708 = vpow.pop %v2707
        %v2709 = vmul.f32 %v2694, 1.442695
        %v2710 = vpow.pop %v2709
        %v2711 = vsel %vm1331, %v2696, 0.0
        %2712 = vadd.xlane.f32.xlu0 %v2711
        %v2713 = vpop.xlane.xlu0 %2712
        %v2714 = vsel %vm1331, %v2698, 0.0
        %2715 = vadd.xlane.f32.xlu0 %v2714
        %v2716 = vpop.xlane.xlu0 %2715
        %v2717 = vsel %vm1331, %v2700, 0.0
        %2718 = vadd.xlane.f32.xlu0 %v2717
        %v2719 = vpop.xlane.xlu0 %2718
        %v2720 = vsel %vm1331, %v2702, 0.0
        %2721 = vadd.xlane.f32.xlu0 %v2720
        %v2722 = vpop.xlane.xlu0 %2721
        %v2723 = vsel %vm1331, %v2704, 0.0
        %2724 = vadd.xlane.f32.xlu0 %v2723
        %v2725 = vpop.xlane.xlu0 %2724
        %v2726 = vsel %vm1331, %v2706, 0.0
        %2727 = vadd.xlane.f32.xlu0 %v2726
        %v2728 = vpop.xlane.xlu0 %2727
        %v2729 = vsel %vm1331, %v2708, 0.0
        %2730 = vadd.xlane.f32.xlu0 %v2729
        %v2731 = vpop.xlane.xlu0 %2730
        %v2732 = vsel %vm1331, %v2710, 0.0
        %2733 = vadd.xlane.f32.xlu0 %v2732
        %v2734 = vpop.xlane.xlu0 %2733
        %v2735 = vrcp.pop %v2713
        %v2736 = vrcp.pop %v2716
        %v2737 = vrcp.pop %v2719
        %v2738 = vrcp.pop %v2722
        %v2739 = vrcp.pop %v2725
        %v2740 = vrcp.pop %v2728
        %v2741 = vrcp.pop %v2731
        %v2742 = vrcp.pop %v2734
        %v2743 = vmul.f32 %v2696, %v2735
        %v2744 = vmul.f32 %v2698, %v2736
        %v2745 = vmul.f32 %v2700, %v2737
        %v2746 = vmul.f32 %v2702, %v2738
        %v2747 = vmul.f32 %v2704, %v2739
        %v2748 = vmul.f32 %v2706, %v2740
        %v2749 = vmul.f32 %v2708, %v2741
        %v2750 = vmul.f32 %v2710, %v2742
        %v2752 = vsel %vm1331, %v2743, 0
        %v2755 = vsel %vm1331, %v2744, 0
        %v2758 = vsel %vm1331, %v2745, 0
        %v2761 = vsel %vm1331, %v2746, 0
        %v2764 = vsel %vm1331, %v2747, 0
        %v2767 = vsel %vm1331, %v2748, 0
        %v2770 = vsel %vm1331, %v2749, 0
        %v2773 = vsel %vm1331, %v2750, 0
        %2775 = vmatprep.subr.mxu0 0.0
        %2776 = vmatpush1.msra.mxu0 0.0
        %2777 = vmatprep.subr.mxu0 0.0
        %2778 = vmatpush1.msra.mxu0 0.0
        %2779 = vmatprep.subr.mxu0 0.0
        %2780 = vmatpush1.msra.mxu0 0.0
        %2781 = vmatprep.subr.mxu0 0.0
        %2782 = vmatpush1.msra.mxu0 0.0
        %2783 = vmatprep.subr.mxu0 0.0
        %2784 = vmatpush1.msra.mxu0 0.0
        %2785 = vmatprep.subr.mxu0 0.0
        %2786 = vmatpush1.msra.mxu0 0.0
        %2787 = vmatprep.subr.mxu0 0.0
        %2788 = vmatpush1.msra.mxu0 0.0
        %2789 = vmatprep.subr.mxu0 0.0
        %2790 = vmatpush1.msra.mxu0 0.0
        %2791 = vmatprep.subr.mxu0 0.0
        %2792 = vmatpush1.msra.mxu0 %v2507
        %2793 = vmatprep.subr.mxu0 0.0
        %2794 = vmatpush1.msra.mxu0 %v2502
        %2795 = vmatprep.subr.mxu0 0.0
        %2796 = vmatpush1.msra.mxu0 %v2497
        %2797 = vmatprep.subr.mxu0 0.0
        %2798 = vmatpush1.msra.mxu0 %v2492
        %2799 = vmatprep.subr.mxu0 0.0
        %2800 = vmatpush1.msra.mxu0 %v2487
        %2801 = vmatprep.subr.mxu0 0.0
        %2802 = vmatpush1.msra.mxu0 %v2482
        %2803 = vmatprep.subr.mxu0 0.0
        %2804 = vmatpush1.msra.mxu0 %v2477
        %2805 = vmatprep.subr.mxu0 0.0
        %2806 = vmatpush1.msra.mxu0 %v2472
        %2807 = vmatprep.subr.mxu0 0.0
        %2808 = vmatpush2.msra.mxu0 0.0
        %2809 = vmatprep.subr.mxu0 0.0
        %2810 = vmatpush2.msra.mxu0 0.0
        %2811 = vmatprep.subr.mxu0 0.0
        %2812 = vmatpush2.msra.mxu0 0.0
        %2813 = vmatprep.subr.mxu0 0.0
        %2814 = vmatpush2.msra.mxu0 0.0
        %2815 = vmatprep.subr.mxu0 0.0
        %2816 = vmatpush2.msra.mxu0 0.0
        %2817 = vmatprep.subr.mxu0 0.0
        %2818 = vmatpush2.msra.mxu0 0.0
        %2819 = vmatprep.subr.mxu0 0.0
        %2820 = vmatpush2.msra.mxu0 0.0
        %2821 = vmatprep.subr.mxu0 0.0
        %2822 = vmatpush2.msra.mxu0 0.0
        %2823 = vmatprep.subr.mxu0 0.0
        %2824 = vmatpush2.msra.mxu0 0.0
        %2825 = vmatprep.subr.mxu0 0.0
        %2826 = vmatpush2.msra.mxu0 0.0
        %2827 = vmatprep.subr.mxu0 0.0
        %2828 = vmatpush2.msra.mxu0 0.0
        %2829 = vmatprep.subr.mxu0 0.0
        %2830 = vmatpush2.msra.mxu0 0.0
        %2831 = vmatprep.subr.mxu0 0.0
        %2832 = vmatpush2.msra.mxu0 0.0
        %2833 = vmatprep.subr.mxu0 0.0
        %2834 = vmatpush2.msra.mxu0 0.0
        %2835 = vmatprep.subr.mxu0 0.0
        %2836 = vmatpush2.msra.mxu0 0.0
        %2837 = vmatprep.subr.mxu0 0.0
        %2838 = vmatpush2.msra.mxu0 0.0
        %2839 = vmatprep.mubr.f32.mxu0 0.0
        %2840 = vmatmul.mubr.f32.gmra.mxu0 %v2752
        %v2841 = vpop.f32.mrf.mxu0
        %v2842 = vadd.f32 0.0, %v2841
        %v2843 = vpop.f32.mrf.mxu0
        %2844 = vmatprep.mubr.f32.mxu0 0.0
        %2845 = vmatmul.mubr.f32.gmra.mxu0 %v2755
        %v2846 = vpop.f32.mrf.mxu0
        %v2847 = vadd.f32 0.0, %v2846
        %v2848 = vpop.f32.mrf.mxu0
        %2849 = vmatprep.mubr.f32.mxu0 0.0
        %2850 = vmatmul.mubr.f32.gmra.mxu0 %v2758
        %v2851 = vpop.f32.mrf.mxu0
        %v2852 = vadd.f32 0.0, %v2851
        %v2853 = vpop.f32.mrf.mxu0
        %2854 = vmatprep.mubr.f32.mxu0 0.0
        %2855 = vmatmul.mubr.f32.gmra.mxu0 %v2761
        %v2856 = vpop.f32.mrf.mxu0
        %v2857 = vadd.f32 0.0, %v2856
        %v2858 = vpop.f32.mrf.mxu0
        %2859 = vmatprep.mubr.f32.mxu0 0.0
        %2860 = vmatmul.mubr.f32.gmra.mxu0 %v2764
        %v2861 = vpop.f32.mrf.mxu0
        %v2862 = vadd.f32 0.0, %v2861
        %v2863 = vpop.f32.mrf.mxu0
        %2864 = vmatprep.mubr.f32.mxu0 0.0
        %2865 = vmatmul.mubr.f32.gmra.mxu0 %v2767
        %v2866 = vpop.f32.mrf.mxu0
        %v2867 = vadd.f32 0.0, %v2866
        %v2868 = vpop.f32.mrf.mxu0
        %2869 = vmatprep.mubr.f32.mxu0 0.0
        %2870 = vmatmul.mubr.f32.gmra.mxu0 %v2770
        %v2871 = vpop.f32.mrf.mxu0
        %v2872 = vadd.f32 0.0, %v2871
        %v2873 = vpop.f32.mrf.mxu0
        %2874 = vmatprep.mubr.f32.mxu0 0.0
        %2875 = vmatmul.mubr.f32.gmra.mxu0 %v2773
        %v2876 = vpop.f32.mrf.mxu0
        %v2877 = vadd.f32 0.0, %v2876
        %v2878 = vpop.f32.mrf.mxu0
        %2879 = vdwg.mxu0
        %s2880 = scalar_lea.vmem %s19, 8
        %v2881 = vld [vmem:[%s2880] sm:$0xff]
        %v2883 = vsel %vm1814, %v2842, 0
        %v2886 = vsel %vm1814, %v2847, 0
        %v2889 = vsel %vm1814, %v2852, 0
        %v2892 = vsel %vm1814, %v2857, 0
        %v2895 = vsel %vm1814, %v2862, 0
        %v2898 = vsel %vm1814, %v2867, 0
        %v2901 = vsel %vm1814, %v2872, 0
        %v2904 = vsel %vm1814, %v2877, 0
        %2906 = vmatprep.subr.mxu0 0.0
        %2907 = vmatpush1.msra.mxu0 0.0
        %2908 = vmatprep.subr.mxu0 0.0
        %2909 = vmatpush1.msra.mxu0 0.0
        %2910 = vmatprep.subr.mxu0 0.0
        %2911 = vmatpush1.msra.mxu0 0.0
        %2912 = vmatprep.subr.mxu0 0.0
        %2913 = vmatpush1.msra.mxu0 0.0
        %2914 = vmatprep.subr.mxu0 0.0
        %2915 = vmatpush1.msra.mxu0 0.0
        %2916 = vmatprep.subr.mxu0 0.0
        %2917 = vmatpush1.msra.mxu0 0.0
        %2918 = vmatprep.subr.mxu0 0.0
        %2919 = vmatpush1.msra.mxu0 0.0
        %2920 = vmatprep.subr.mxu0 0.0
        %2921 = vmatpush1.msra.mxu0 0.0
        %2922 = vmatprep.subr.mxu0 0.0
        %2923 = vmatpush1.msra.mxu0 0.0
        %2924 = vmatprep.subr.mxu0 0.0
        %2925 = vmatpush1.msra.mxu0 0.0
        %2926 = vmatprep.subr.mxu0 0.0
        %2927 = vmatpush1.msra.mxu0 0.0
        %2928 = vmatprep.subr.mxu0 0.0
        %2929 = vmatpush1.msra.mxu0 0.0
        %2930 = vmatprep.subr.mxu0 0.0
        %2931 = vmatpush1.msra.mxu0 0.0
        %2932 = vmatprep.subr.mxu0 0.0
        %2933 = vmatpush1.msra.mxu0 0.0
        %2934 = vmatprep.subr.mxu0 0.0
        %2935 = vmatpush1.msra.mxu0 0.0
        %2936 = vmatprep.subr.mxu0 0.0
        %2937 = vmatpush1.msra.mxu0 %v2881
        %2938 = vmatprep.subr.mxu0 0.0
        %2939 = vmatpush2.msra.mxu0 0.0
        %2940 = vmatprep.subr.mxu0 0.0
        %2941 = vmatpush2.msra.mxu0 0.0
        %2942 = vmatprep.subr.mxu0 0.0
        %2943 = vmatpush2.msra.mxu0 0.0
        %2944 = vmatprep.subr.mxu0 0.0
        %2945 = vmatpush2.msra.mxu0 0.0
        %2946 = vmatprep.subr.mxu0 0.0
        %2947 = vmatpush2.msra.mxu0 0.0
        %2948 = vmatprep.subr.mxu0 0.0
        %2949 = vmatpush2.msra.mxu0 0.0
        %2950 = vmatprep.subr.mxu0 0.0
        %2951 = vmatpush2.msra.mxu0 0.0
        %2952 = vmatprep.subr.mxu0 0.0
        %2953 = vmatpush2.msra.mxu0 0.0
        %2954 = vmatprep.subr.mxu0 0.0
        %2955 = vmatpush2.msra.mxu0 0.0
        %2956 = vmatprep.subr.mxu0 0.0
        %2957 = vmatpush2.msra.mxu0 0.0
        %2958 = vmatprep.subr.mxu0 0.0
        %2959 = vmatpush2.msra.mxu0 0.0
        %2960 = vmatprep.subr.mxu0 0.0
        %2961 = vmatpush2.msra.mxu0 0.0
        %2962 = vmatprep.subr.mxu0 0.0
        %2963 = vmatpush2.msra.mxu0 0.0
        %2964 = vmatprep.subr.mxu0 0.0
        %2965 = vmatpush2.msra.mxu0 0.0
        %2966 = vmatprep.subr.mxu0 0.0
        %2967 = vmatpush2.msra.mxu0 0.0
        %2968 = vmatprep.subr.mxu0 0.0
        %2969 = vmatpush2.msra.mxu0 0.0
        %2970 = vmatprep.mubr.f32.mxu0 0.0
        %2971 = vmatmul.mubr.f32.gmra.mxu0 %v2883
        %v2972 = vpop.f32.mrf.mxu0
        %v2973 = vadd.f32 0.0, %v2972
        %v2974 = vpop.f32.mrf.mxu0
        %2975 = vmatprep.mubr.f32.mxu0 0.0
        %2976 = vmatmul.mubr.f32.gmra.mxu0 %v2886
        %v2977 = vpop.f32.mrf.mxu0
        %v2978 = vadd.f32 0.0, %v2977
        %v2979 = vpop.f32.mrf.mxu0
        %2980 = vmatprep.mubr.f32.mxu0 0.0
        %2981 = vmatmul.mubr.f32.gmra.mxu0 %v2889
        %v2982 = vpop.f32.mrf.mxu0
        %v2983 = vadd.f32 0.0, %v2982
        %v2984 = vpop.f32.mrf.mxu0
        %2985 = vmatprep.mubr.f32.mxu0 0.0
        %2986 = vmatmul.mubr.f32.gmra.mxu0 %v2892
        %v2987 = vpop.f32.mrf.mxu0
        %v2988 = vadd.f32 0.0, %v2987
        %v2989 = vpop.f32.mrf.mxu0
        %2990 = vmatprep.mubr.f32.mxu0 0.0
        %2991 = vmatmul.mubr.f32.gmra.mxu0 %v2895
        %v2992 = vpop.f32.mrf.mxu0
        %v2993 = vadd.f32 0.0, %v2992
        %v2994 = vpop.f32.mrf.mxu0
        %2995 = vmatprep.mubr.f32.mxu0 0.0
        %2996 = vmatmul.mubr.f32.gmra.mxu0 %v2898
        %v2997 = vpop.f32.mrf.mxu0
        %v2998 = vadd.f32 0.0, %v2997
        %v2999 = vpop.f32.mrf.mxu0
        %3000 = vmatprep.mubr.f32.mxu0 0.0
        %3001 = vmatmul.mubr.f32.gmra.mxu0 %v2901
        %v3002 = vpop.f32.mrf.mxu0
        %v3003 = vadd.f32 0.0, %v3002
        %v3004 = vpop.f32.mrf.mxu0
        %3005 = vmatprep.mubr.f32.mxu0 0.0
        %3006 = vmatmul.mubr.f32.gmra.mxu0 %v2904
        %v3007 = vpop.f32.mrf.mxu0
        %v3008 = vadd.f32 0.0, %v3007
        %v3009 = vpop.f32.mrf.mxu0
        %3010 = vdwg.mxu0
        %v3012 = vsel %vm1814, %v2147, 0
        %v3015 = vsel %vm1814, %v2152, 0
        %v3018 = vsel %vm1814, %v2157, 0
        %v3021 = vsel %vm1814, %v2162, 0
        %v3024 = vsel %vm1814, %v2167, 0
        %v3027 = vsel %vm1814, %v2172, 0
        %v3030 = vsel %vm1814, %v2177, 0
        %v3033 = vsel %vm1814, %v2182, 0
        %3035 = vmatprep.subr.mxu0 0.0
        %3036 = vmatpush1.msra.mxu0 0.0
        %3037 = vmatprep.subr.mxu0 0.0
        %3038 = vmatpush1.msra.mxu0 0.0
        %3039 = vmatprep.subr.mxu0 0.0
        %3040 = vmatpush1.msra.mxu0 0.0
        %3041 = vmatprep.subr.mxu0 0.0
        %3042 = vmatpush1.msra.mxu0 0.0
        %3043 = vmatprep.subr.mxu0 0.0
        %3044 = vmatpush1.msra.mxu0 0.0
        %3045 = vmatprep.subr.mxu0 0.0
        %3046 = vmatpush1.msra.mxu0 0.0
        %3047 = vmatprep.subr.mxu0 0.0
        %3048 = vmatpush1.msra.mxu0 0.0
        %3049 = vmatprep.subr.mxu0 0.0
        %3050 = vmatpush1.msra.mxu0 0.0
        %3051 = vmatprep.subr.mxu0 0.0
        %3052 = vmatpush1.msra.mxu0 0.0
        %3053 = vmatprep.subr.mxu0 0.0
        %3054 = vmatpush1.msra.mxu0 0.0
        %3055 = vmatprep.subr.mxu0 0.0
        %3056 = vmatpush1.msra.mxu0 0.0
        %3057 = vmatprep.subr.mxu0 0.0
        %3058 = vmatpush1.msra.mxu0 0.0
        %3059 = vmatprep.subr.mxu0 0.0
        %3060 = vmatpush1.msra.mxu0 0.0
        %3061 = vmatprep.subr.mxu0 0.0
        %3062 = vmatpush1.msra.mxu0 0.0
        %3063 = vmatprep.subr.mxu0 0.0
        %3064 = vmatpush1.msra.mxu0 0.0
        %3065 = vmatprep.subr.mxu0 0.0
        %3066 = vmatpush1.msra.mxu0 %v2185
        %3067 = vmatprep.subr.mxu0 0.0
        %3068 = vmatpush2.msra.mxu0 0.0
        %3069 = vmatprep.subr.mxu0 0.0
        %3070 = vmatpush2.msra.mxu0 0.0
        %3071 = vmatprep.subr.mxu0 0.0
        %3072 = vmatpush2.msra.mxu0 0.0
        %3073 = vmatprep.subr.mxu0 0.0
        %3074 = vmatpush2.msra.mxu0 0.0
        %3075 = vmatprep.subr.mxu0 0.0
        %3076 = vmatpush2.msra.mxu0 0.0
        %3077 = vmatprep.subr.mxu0 0.0
        %3078 = vmatpush2.msra.mxu0 0.0
        %3079 = vmatprep.subr.mxu0 0.0
        %3080 = vmatpush2.msra.mxu0 0.0
        %3081 = vmatprep.subr.mxu0 0.0
        %3082 = vmatpush2.msra.mxu0 0.0
        %3083 = vmatprep.subr.mxu0 0.0
        %3084 = vmatpush2.msra.mxu0 0.0
        %3085 = vmatprep.subr.mxu0 0.0
        %3086 = vmatpush2.msra.mxu0 0.0
        %3087 = vmatprep.subr.mxu0 0.0
        %3088 = vmatpush2.msra.mxu0 0.0
        %3089 = vmatprep.subr.mxu0 0.0
        %3090 = vmatpush2.msra.mxu0 0.0
        %3091 = vmatprep.subr.mxu0 0.0
        %3092 = vmatpush2.msra.mxu0 0.0
        %3093 = vmatprep.subr.mxu0 0.0
        %3094 = vmatpush2.msra.mxu0 0.0
        %3095 = vmatprep.subr.mxu0 0.0
        %3096 = vmatpush2.msra.mxu0 0.0
        %3097 = vmatprep.subr.mxu0 0.0
        %3098 = vmatpush2.msra.mxu0 0.0
        %3099 = vmatprep.mubr.f32.mxu0 0.0
        %3100 = vmatmul.mubr.f32.gmra.mxu0 %v3012
        %v3101 = vpop.f32.mrf.mxu0
        %v3102 = vadd.f32 %v2973, %v3101
        %v3103 = vpop.f32.mrf.mxu0
        %3104 = vmatprep.mubr.f32.mxu0 0.0
        %3105 = vmatmul.mubr.f32.gmra.mxu0 %v3015
        %v3106 = vpop.f32.mrf.mxu0
        %v3107 = vadd.f32 %v2978, %v3106
        %v3108 = vpop.f32.mrf.mxu0
        %3109 = vmatprep.mubr.f32.mxu0 0.0
        %3110 = vmatmul.mubr.f32.gmra.mxu0 %v3018
        %v3111 = vpop.f32.mrf.mxu0
        %v3112 = vadd.f32 %v2983, %v3111
        %v3113 = vpop.f32.mrf.mxu0
        %3114 = vmatprep.mubr.f32.mxu0 0.0
        %3115 = vmatmul.mubr.f32.gmra.mxu0 %v3021
        %v3116 = vpop.f32.mrf.mxu0
        %v3117 = vadd.f32 %v2988, %v3116
        %v3118 = vpop.f32.mrf.mxu0
        %3119 = vmatprep.mubr.f32.mxu0 0.0
        %3120 = vmatmul.mubr.f32.gmra.mxu0 %v3024
        %v3121 = vpop.f32.mrf.mxu0
        %v3122 = vadd.f32 %v2993, %v3121
        %v3123 = vpop.f32.mrf.mxu0
        %3124 = vmatprep.mubr.f32.mxu0 0.0
        %3125 = vmatmul.mubr.f32.gmra.mxu0 %v3027
        %v3126 = vpop.f32.mrf.mxu0
        %v3127 = vadd.f32 %v2998, %v3126
        %v3128 = vpop.f32.mrf.mxu0
        %3129 = vmatprep.mubr.f32.mxu0 0.0
        %3130 = vmatmul.mubr.f32.gmra.mxu0 %v3030
        %v3131 = vpop.f32.mrf.mxu0
        %v3132 = vadd.f32 %v3003, %v3131
        %v3133 = vpop.f32.mrf.mxu0
        %3134 = vmatprep.mubr.f32.mxu0 0.0
        %3135 = vmatmul.mubr.f32.gmra.mxu0 %v3033
        %v3136 = vpop.f32.mrf.mxu0
        %v3137 = vadd.f32 %v3008, %v3136
        %v3138 = vpop.f32.mrf.mxu0
        %3139 = vdwg.mxu0
        %v3140 = vld [vmem:[%s25] sm:$0xff]
        %v3141 = vld [vmem:[%s25 + $0x8] sm:$0xff]
        %v3142 = vld [vmem:[%s25 + $0x10] sm:$0xff]
        %v3143 = vld [vmem:[%s25 + $0x18] sm:$0xff]
        %v3144 = vld [vmem:[%s25 + $0x20] sm:$0xff]
        %v3145 = vld [vmem:[%s25 + $0x28] sm:$0xff]
        %v3146 = vld [vmem:[%s25 + $0x30] sm:$0xff]
        %v3147 = vld [vmem:[%s25 + $0x38] sm:$0xff]
        %v3148 = vld [vmem:[%s21] sm:$0x1]
        %v3150 = vlaneseq
        %v3151 = vshrl.u32 %v3150, 7
        %v3152 = vsub.s32 0, %v3151
        %v3153 = vrot.slane %v3148, %v3152
        %v3156 = vsel %vm1331, %v3140, 0
        %v3159 = vsel %vm1331, %v3141, 0
        %v3162 = vsel %vm1331, %v3142, 0
        %v3165 = vsel %vm1331, %v3143, 0
        %v3168 = vsel %vm1331, %v3144, 0
        %v3171 = vsel %vm1331, %v3145, 0
        %v3174 = vsel %vm1331, %v3146, 0
        %v3177 = vsel %vm1331, %v3147, 0
        %3179 = vmatprep.subr.mxu0 0.0
        %3180 = vmatpush1.msra.mxu0 0.0
        %3181 = vmatprep.subr.mxu0 0.0
        %3182 = vmatpush1.msra.mxu0 0.0
        %3183 = vmatprep.subr.mxu0 0.0
        %3184 = vmatpush1.msra.mxu0 0.0
        %3185 = vmatprep.subr.mxu0 0.0
        %3186 = vmatpush1.msra.mxu0 0.0
        %3187 = vmatprep.subr.mxu0 0.0
        %3188 = vmatpush1.msra.mxu0 0.0
        %3189 = vmatprep.subr.mxu0 0.0
        %3190 = vmatpush1.msra.mxu0 0.0
        %3191 = vmatprep.subr.mxu0 0.0
        %3192 = vmatpush1.msra.mxu0 0.0
        %3193 = vmatprep.subr.mxu0 0.0
        %3194 = vmatpush1.msra.mxu0 0.0
        %3195 = vmatprep.subr.mxu0 0.0
        %3196 = vmatpush1.msra.mxu0 %v3137
        %3197 = vmatprep.subr.mxu0 0.0
        %3198 = vmatpush1.msra.mxu0 %v3132
        %3199 = vmatprep.subr.mxu0 0.0
        %3200 = vmatpush1.msra.mxu0 %v3127
        %3201 = vmatprep.subr.mxu0 0.0
        %3202 = vmatpush1.msra.mxu0 %v3122
        %3203 = vmatprep.subr.mxu0 0.0
        %3204 = vmatpush1.msra.mxu0 %v3117
        %3205 = vmatprep.subr.mxu0 0.0
        %3206 = vmatpush1.msra.mxu0 %v3112
        %3207 = vmatprep.subr.mxu0 0.0
        %3208 = vmatpush1.msra.mxu0 %v3107
        %3209 = vmatprep.subr.mxu0 0.0
        %3210 = vmatpush1.msra.mxu0 %v3102
        %3211 = vmatprep.subr.mxu0 0.0
        %3212 = vmatpush2.msra.mxu0 0.0
        %3213 = vmatprep.subr.mxu0 0.0
        %3214 = vmatpush2.msra.mxu0 0.0
        %3215 = vmatprep.subr.mxu0 0.0
        %3216 = vmatpush2.msra.mxu0 0.0
        %3217 = vmatprep.subr.mxu0 0.0
        %3218 = vmatpush2.msra.mxu0 0.0
        %3219 = vmatprep.subr.mxu0 0.0
        %3220 = vmatpush2.msra.mxu0 0.0
        %3221 = vmatprep.subr.mxu0 0.0
        %3222 = vmatpush2.msra.mxu0 0.0
        %3223 = vmatprep.subr.mxu0 0.0
        %3224 = vmatpush2.msra.mxu0 0.0
        %3225 = vmatprep.subr.mxu0 0.0
        %3226 = vmatpush2.msra.mxu0 0.0
        %3227 = vmatprep.subr.mxu0 0.0
        %3228 = vmatpush2.msra.mxu0 0.0
        %3229 = vmatprep.subr.mxu0 0.0
        %3230 = vmatpush2.msra.mxu0 0.0
        %3231 = vmatprep.subr.mxu0 0.0
        %3232 = vmatpush2.msra.mxu0 0.0
        %3233 = vmatprep.subr.mxu0 0.0
        %3234 = vmatpush2.msra.mxu0 0.0
        %3235 = vmatprep.subr.mxu0 0.0
        %3236 = vmatpush2.msra.mxu0 0.0
        %3237 = vmatprep.subr.mxu0 0.0
        %3238 = vmatpush2.msra.mxu0 0.0
        %3239 = vmatprep.subr.mxu0 0.0
        %3240 = vmatpush2.msra.mxu0 0.0
        %3241 = vmatprep.subr.mxu0 0.0
        %3242 = vmatpush2.msra.mxu0 0.0
        %3243 = vmatprep.mubr.f32.mxu0 0.0
        %3244 = vmatmul.mubr.f32.gmra.mxu0 %v3156
        %v3245 = vpop.f32.mrf.mxu0
        %v3246 = vadd.f32 %v3153, %v3245
        %v3247 = vpop.f32.mrf.mxu0
        %3248 = vmatprep.mubr.f32.mxu0 0.0
        %3249 = vmatmul.mubr.f32.gmra.mxu0 %v3159
        %v3250 = vpop.f32.mrf.mxu0
        %v3251 = vadd.f32 %v3153, %v3250
        %v3252 = vpop.f32.mrf.mxu0
        %3253 = vmatprep.mubr.f32.mxu0 0.0
        %3254 = vmatmul.mubr.f32.gmra.mxu0 %v3162
        %v3255 = vpop.f32.mrf.mxu0
        %v3256 = vadd.f32 %v3153, %v3255
        %v3257 = vpop.f32.mrf.mxu0
        %3258 = vmatprep.mubr.f32.mxu0 0.0
        %3259 = vmatmul.mubr.f32.gmra.mxu0 %v3165
        %v3260 = vpop.f32.mrf.mxu0
        %v3261 = vadd.f32 %v3153, %v3260
        %v3262 = vpop.f32.mrf.mxu0
        %3263 = vmatprep.mubr.f32.mxu0 0.0
        %3264 = vmatmul.mubr.f32.gmra.mxu0 %v3168
        %v3265 = vpop.f32.mrf.mxu0
        %v3266 = vadd.f32 %v3153, %v3265
        %v3267 = vpop.f32.mrf.mxu0
        %3268 = vmatprep.mubr.f32.mxu0 0.0
        %3269 = vmatmul.mubr.f32.gmra.mxu0 %v3171
        %v3270 = vpop.f32.mrf.mxu0
        %v3271 = vadd.f32 %v3153, %v3270
        %v3272 = vpop.f32.mrf.mxu0
        %3273 = vmatprep.mubr.f32.mxu0 0.0
        %3274 = vmatmul.mubr.f32.gmra.mxu0 %v3174
        %v3275 = vpop.f32.mrf.mxu0
        %v3276 = vadd.f32 %v3153, %v3275
        %v3277 = vpop.f32.mrf.mxu0
        %3278 = vmatprep.mubr.f32.mxu0 0.0
        %3279 = vmatmul.mubr.f32.gmra.mxu0 %v3177
        %v3280 = vpop.f32.mrf.mxu0
        %v3281 = vadd.f32 %v3153, %v3280
        %v3282 = vpop.f32.mrf.mxu0
        %3283 = vdwg.mxu0
        %v3284 = vadd.f32 %v1150, %v3246
        %v3285 = vadd.f32 %v1155, %v3251
        %v3286 = vadd.f32 %v1160, %v3256
        %v3287 = vadd.f32 %v1165, %v3261
        %v3288 = vadd.f32 %v1170, %v3266
        %v3289 = vadd.f32 %v1175, %v3271
        %v3290 = vadd.f32 %v1180, %v3276
        %v3291 = vadd.f32 %v1185, %v3281
        %v3292 = vld [vmem:[%s27] sm:$0x1]
        %v3293 = vld [vmem:[%s29] sm:$0x1]
        %v3294 = vsel %vm1058, %v3284, 0.0
        %3295 = vadd.xlane.f32.xlu0 %v3294
        %v3296 = vpop.xlane.xlu0 %3295
        %v3297 = vsel %vm1058, %v3285, 0.0
        %3298 = vadd.xlane.f32.xlu0 %v3297
        %v3299 = vpop.xlane.xlu0 %3298
        %v3300 = vsel %vm1058, %v3286, 0.0
        %3301 = vadd.xlane.f32.xlu0 %v3300
        %v3302 = vpop.xlane.xlu0 %3301
        %v3303 = vsel %vm1058, %v3287, 0.0
        %3304 = vadd.xlane.f32.xlu0 %v3303
        %v3305 = vpop.xlane.xlu0 %3304
        %v3306 = vsel %vm1058, %v3288, 0.0
        %3307 = vadd.xlane.f32.xlu0 %v3306
        %v3308 = vpop.xlane.xlu0 %3307
        %v3309 = vsel %vm1058, %v3289, 0.0
        %3310 = vadd.xlane.f32.xlu0 %v3309
        %v3311 = vpop.xlane.xlu0 %3310
        %v3312 = vsel %vm1058, %v3290, 0.0
        %3313 = vadd.xlane.f32.xlu0 %v3312
        %v3314 = vpop.xlane.xlu0 %3313
        %v3315 = vsel %vm1058, %v3291, 0.0
        %3316 = vadd.xlane.f32.xlu0 %v3315
        %v3317 = vpop.xlane.xlu0 %3316
        %v3318 = vmul.f32 %v3296, %v1222
        %v3319 = vmul.f32 %v3299, %v1222
        %v3320 = vmul.f32 %v3302, %v1222
        %v3321 = vmul.f32 %v3305, %v1222
        %v3322 = vmul.f32 %v3308, %v1222
        %v3323 = vmul.f32 %v3311, %v1222
        %v3324 = vmul.f32 %v3314, %v1222
        %v3325 = vmul.f32 %v3317, %v1222
        %v3326 = vsub.f32 %v3284, %v3318
        %v3327 = vsub.f32 %v3285, %v3319
        %v3328 = vsub.f32 %v3286, %v3320
        %v3329 = vsub.f32 %v3287, %v3321
        %v3330 = vsub.f32 %v3288, %v3322
        %v3331 = vsub.f32 %v3289, %v3323
        %v3332 = vsub.f32 %v3290, %v3324
        %v3333 = vsub.f32 %v3291, %v3325
        %v3334 = vmul.f32 %v3326, %v3326
        %v3335 = vmul.f32 %v3327, %v3327
        %v3336 = vmul.f32 %v3328, %v3328
        %v3337 = vmul.f32 %v3329, %v3329
        %v3338 = vmul.f32 %v3330, %v3330
        %v3339 = vmul.f32 %v3331, %v3331
        %v3340 = vmul.f32 %v3332, %v3332
        %v3341 = vmul.f32 %v3333, %v3333
        %v3342 = vsel %vm1058, %v3334, 0.0
        %3343 = vadd.xlane.f32.xlu0 %v3342
        %v3344 = vpop.xlane.xlu0 %3343
        %v3345 = vsel %vm1058, %v3335, 0.0
        %3346 = vadd.xlane.f32.xlu0 %v3345
        %v3347 = vpop.xlane.xlu0 %3346
        %v3348 = vsel %vm1058, %v3336, 0.0
        %3349 = vadd.xlane.f32.xlu0 %v3348
        %v3350 = vpop.xlane.xlu0 %3349
        %v3351 = vsel %vm1058, %v3337, 0.0
        %3352 = vadd.xlane.f32.xlu0 %v3351
        %v3353 = vpop.xlane.xlu0 %3352
        %v3354 = vsel %vm1058, %v3338, 0.0
        %3355 = vadd.xlane.f32.xlu0 %v3354
        %v3356 = vpop.xlane.xlu0 %3355
        %v3357 = vsel %vm1058, %v3339, 0.0
        %3358 = vadd.xlane.f32.xlu0 %v3357
        %v3359 = vpop.xlane.xlu0 %3358
        %v3360 = vsel %vm1058, %v3340, 0.0
        %3361 = vadd.xlane.f32.xlu0 %v3360
        %v3362 = vpop.xlane.xlu0 %3361
        %v3363 = vsel %vm1058, %v3341, 0.0
        %3364 = vadd.xlane.f32.xlu0 %v3363
        %v3365 = vpop.xlane.xlu0 %3364
        %v3366 = vmul.f32 %v3344, %v1222
        %v3367 = vmul.f32 %v3347, %v1222
        %v3368 = vmul.f32 %v3350, %v1222
        %v3369 = vmul.f32 %v3353, %v1222
        %v3370 = vmul.f32 %v3356, %v1222
        %v3371 = vmul.f32 %v3359, %v1222
        %v3372 = vmul.f32 %v3362, %v1222
        %v3373 = vmul.f32 %v3365, %v1222
        %v3374 = vadd.f32 %v3366, 1e-05
        %v3375 = vadd.f32 %v3367, 1e-05
        %v3376 = vadd.f32 %v3368, 1e-05
        %v3377 = vadd.f32 %v3369, 1e-05
        %v3378 = vadd.f32 %v3370, 1e-05
        %v3379 = vadd.f32 %v3371, 1e-05
        %v3380 = vadd.f32 %v3372, 1e-05
        %v3381 = vadd.f32 %v3373, 1e-05
        %v3382 = vrsqrt.pop %v3374
        %v3383 = vrsqrt.pop %v3375
        %v3384 = vrsqrt.pop %v3376
        %v3385 = vrsqrt.pop %v3377
        %v3386 = vrsqrt.pop %v3378
        %v3387 = vrsqrt.pop %v3379
        %v3388 = vrsqrt.pop %v3380
        %v3389 = vrsqrt.pop %v3381
        %v3390 = vmul.f32 %v3326, %v3382
        %v3391 = vmul.f32 %v3327, %v3383
        %v3392 = vmul.f32 %v3328, %v3384
        %v3393 = vmul.f32 %v3329, %v3385
        %v3394 = vmul.f32 %v3330, %v3386
        %v3395 = vmul.f32 %v3331, %v3387
        %v3396 = vmul.f32 %v3332, %v3388
        %v3397 = vmul.f32 %v3333, %v3389
        %v3399 = vlaneseq
        %v3400 = vshrl.u32 %v3399, 7
        %v3401 = vsub.s32 0, %v3400
        %v3402 = vrot.slane %v3292, %v3401
        %v3404 = vmul.f32 %v3390, %v3402
        %v3405 = vmul.f32 %v3391, %v3402
        %v3406 = vmul.f32 %v3392, %v3402
        %v3407 = vmul.f32 %v3393, %v3402
        %v3408 = vmul.f32 %v3394, %v3402
        %v3409 = vmul.f32 %v3395, %v3402
        %v3410 = vmul.f32 %v3396, %v3402
        %v3411 = vmul.f32 %v3397, %v3402
        %v3413 = vlaneseq
        %v3414 = vshrl.u32 %v3413, 7
        %v3415 = vsub.s32 0, %v3414
        %v3416 = vrot.slane %v3293, %v3415
        %v3418 = vadd.f32 %v3404, %v3416
        %v3419 = vadd.f32 %v3405, %v3416
        %v3420 = vadd.f32 %v3406, %v3416
        %v3421 = vadd.f32 %v3407, %v3416
        %v3422 = vadd.f32 %v3408, %v3416
        %v3423 = vadd.f32 %v3409, %v3416
        %v3424 = vadd.f32 %v3410, %v3416
        %v3425 = vadd.f32 %v3411, %v3416
        %v3426 = vld [vmem:[%s31] sm:$0xff]
        %v3427 = vld [vmem:[%s31 + $0x8] sm:$0xff]
        %v3428 = vld [vmem:[%s33] sm:$0x1]
        %v3430 = vlaneseq
        %v3431 = vshrl.u32 %v3430, 7
        %v3432 = vsub.s32 0, %v3431
        %v3433 = vrot.slane %v3428, %v3432
        %v3436 = vsel %vm1058, %v3418, 0
        %v3439 = vsel %vm1058, %v3419, 0
        %v3442 = vsel %vm1058, %v3420, 0
        %v3445 = vsel %vm1058, %v3421, 0
        %v3448 = vsel %vm1058, %v3422, 0
        %v3451 = vsel %vm1058, %v3423, 0
        %v3454 = vsel %vm1058, %v3424, 0
        %v3457 = vsel %vm1058, %v3425, 0
        %3459 = vmatprep.subr.mxu0 0.0
        %3460 = vmatpush1.msra.mxu0 0.0
        %3461 = vmatprep.subr.mxu0 0.0
        %3462 = vmatpush1.msra.mxu0 0.0
        %3463 = vmatprep.subr.mxu0 0.0
        %3464 = vmatpush1.msra.mxu0 0.0
        %3465 = vmatprep.subr.mxu0 0.0
        %3466 = vmatpush1.msra.mxu0 0.0
        %3467 = vmatprep.subr.mxu0 0.0
        %3468 = vmatpush1.msra.mxu0 0.0
        %3469 = vmatprep.subr.mxu0 0.0
        %3470 = vmatpush1.msra.mxu0 0.0
        %3471 = vmatprep.subr.mxu0 0.0
        %3472 = vmatpush1.msra.mxu0 0.0
        %3473 = vmatprep.subr.mxu0 0.0
        %3474 = vmatpush1.msra.mxu0 0.0
        %3475 = vmatprep.subr.mxu0 0.0
        %3476 = vmatpush1.msra.mxu0 0.0
        %3477 = vmatprep.subr.mxu0 0.0
        %3478 = vmatpush1.msra.mxu0 0.0
        %3479 = vmatprep.subr.mxu0 0.0
        %3480 = vmatpush1.msra.mxu0 0.0
        %3481 = vmatprep.subr.mxu0 0.0
        %3482 = vmatpush1.msra.mxu0 0.0
        %3483 = vmatprep.subr.mxu0 0.0
        %3484 = vmatpush1.msra.mxu0 0.0
        %3485 = vmatprep.subr.mxu0 0.0
        %3486 = vmatpush1.msra.mxu0 0.0
        %3487 = vmatprep.subr.mxu0 0.0
        %3488 = vmatpush1.msra.mxu0 %v3427
        %3489 = vmatprep.subr.mxu0 0.0
        %3490 = vmatpush1.msra.mxu0 %v3426
        %3491 = vmatprep.subr.mxu0 0.0
        %3492 = vmatpush2.msra.mxu0 0.0
        %3493 = vmatprep.subr.mxu0 0.0
        %3494 = vmatpush2.msra.mxu0 0.0
        %3495 = vmatprep.subr.mxu0 0.0
        %3496 = vmatpush2.msra.mxu0 0.0
        %3497 = vmatprep.subr.mxu0 0.0
        %3498 = vmatpush2.msra.mxu0 0.0
        %3499 = vmatprep.subr.mxu0 0.0
        %3500 = vmatpush2.msra.mxu0 0.0
        %3501 = vmatprep.subr.mxu0 0.0
        %3502 = vmatpush2.msra.mxu0 0.0
        %3503 = vmatprep.subr.mxu0 0.0
        %3504 = vmatpush2.msra.mxu0 0.0
        %3505 = vmatprep.subr.mxu0 0.0
        %3506 = vmatpush2.msra.mxu0 0.0
        %3507 = vmatprep.subr.mxu0 0.0
        %3508 = vmatpush2.msra.mxu0 0.0
        %3509 = vmatprep.subr.mxu0 0.0
        %3510 = vmatpush2.msra.mxu0 0.0
        %3511 = vmatprep.subr.mxu0 0.0
        %3512 = vmatpush2.msra.mxu0 0.0
        %3513 = vmatprep.subr.mxu0 0.0
        %3514 = vmatpush2.msra.mxu0 0.0
        %3515 = vmatprep.subr.mxu0 0.0
        %3516 = vmatpush2.msra.mxu0 0.0
        %3517 = vmatprep.subr.mxu0 0.0
        %3518 = vmatpush2.msra.mxu0 0.0
        %3519 = vmatprep.subr.mxu0 0.0
        %3520 = vmatpush2.msra.mxu0 0.0
        %3521 = vmatprep.subr.mxu0 0.0
        %3522 = vmatpush2.msra.mxu0 0.0
        %3523 = vmatprep.mubr.f32.mxu0 0.0
        %3524 = vmatmul.mubr.f32.gmra.mxu0 %v3436
        %v3525 = vpop.f32.mrf.mxu0
        %v3526 = vadd.f32 %v3433, %v3525
        %v3527 = vpop.f32.mrf.mxu0
        %3528 = vmatprep.mubr.f32.mxu0 0.0
        %3529 = vmatmul.mubr.f32.gmra.mxu0 %v3439
        %v3530 = vpop.f32.mrf.mxu0
        %v3531 = vadd.f32 %v3433, %v3530
        %v3532 = vpop.f32.mrf.mxu0
        %3533 = vmatprep.mubr.f32.mxu0 0.0
        %3534 = vmatmul.mubr.f32.gmra.mxu0 %v3442
        %v3535 = vpop.f32.mrf.mxu0
        %v3536 = vadd.f32 %v3433, %v3535
        %v3537 = vpop.f32.mrf.mxu0
        %3538 = vmatprep.mubr.f32.mxu0 0.0
        %3539 = vmatmul.mubr.f32.gmra.mxu0 %v3445
        %v3540 = vpop.f32.mrf.mxu0
        %v3541 = vadd.f32 %v3433, %v3540
        %v3542 = vpop.f32.mrf.mxu0
        %3543 = vmatprep.mubr.f32.mxu0 0.0
        %3544 = vmatmul.mubr.f32.gmra.mxu0 %v3448
        %v3545 = vpop.f32.mrf.mxu0
        %v3546 = vadd.f32 %v3433, %v3545
        %v3547 = vpop.f32.mrf.mxu0
        %3548 = vmatprep.mubr.f32.mxu0 0.0
        %3549 = vmatmul.mubr.f32.gmra.mxu0 %v3451
        %v3550 = vpop.f32.mrf.mxu0
        %v3551 = vadd.f32 %v3433, %v3550
        %v3552 = vpop.f32.mrf.mxu0
        %3553 = vmatprep.mubr.f32.mxu0 0.0
        %3554 = vmatmul.mubr.f32.gmra.mxu0 %v3454
        %v3555 = vpop.f32.mrf.mxu0
        %v3556 = vadd.f32 %v3433, %v3555
        %v3557 = vpop.f32.mrf.mxu0
        %3558 = vmatprep.mubr.f32.mxu0 0.0
        %3559 = vmatmul.mubr.f32.gmra.mxu0 %v3457
        %v3560 = vpop.f32.mrf.mxu0
        %v3561 = vadd.f32 %v3433, %v3560
        %v3562 = vpop.f32.mrf.mxu0
        %3563 = vdwg.mxu0
        %v3564 = vmul.f32 %v3526, 0.5
        %v3565 = vmul.f32 %v3531, 0.5
        %v3566 = vmul.f32 %v3536, 0.5
        %v3567 = vmul.f32 %v3541, 0.5
        %v3568 = vmul.f32 %v3546, 0.5
        %v3569 = vmul.f32 %v3551, 0.5
        %v3570 = vmul.f32 %v3556, 0.5
        %v3571 = vmul.f32 %v3561, 0.5
        %v3572 = vmul.f32 %v3526, 0.70710677
        %v3573 = vmul.f32 %v3531, 0.70710677
        %v3574 = vmul.f32 %v3536, 0.70710677
        %v3575 = vmul.f32 %v3541, 0.70710677
        %v3576 = vmul.f32 %v3546, 0.70710677
        %v3577 = vmul.f32 %v3551, 0.70710677
        %v3578 = vmul.f32 %v3556, 0.70710677
        %v3579 = vmul.f32 %v3561, 0.70710677
        %v3580 = vand.u32 2147483647, %v3572
        %v3581 = vand.u32 2147483647, %v3573
        %v3582 = vand.u32 2147483647, %v3574
        %v3583 = vand.u32 2147483647, %v3575
        %v3584 = vand.u32 2147483647, %v3576
        %v3585 = vand.u32 2147483647, %v3577
        %v3586 = vand.u32 2147483647, %v3578
        %v3587 = vand.u32 2147483647, %v3579
        %v3588 = vmul.f32 %v3580, 0.3275911
        %v3589 = vmul.f32 %v3581, 0.3275911
        %v3590 = vmul.f32 %v3582, 0.3275911
        %v3591 = vmul.f32 %v3583, 0.3275911
        %v3592 = vmul.f32 %v3584, 0.3275911
        %v3593 = vmul.f32 %v3585, 0.3275911
        %v3594 = vmul.f32 %v3586, 0.3275911
        %v3595 = vmul.f32 %v3587, 0.3275911
        %v3596 = vadd.f32 %v3588, 1.0
        %v3597 = vadd.f32 %v3589, 1.0
        %v3598 = vadd.f32 %v3590, 1.0
        %v3599 = vadd.f32 %v3591, 1.0
        %v3600 = vadd.f32 %v3592, 1.0
        %v3601 = vadd.f32 %v3593, 1.0
        %v3602 = vadd.f32 %v3594, 1.0
        %v3603 = vadd.f32 %v3595, 1.0
        %v3604 = vrcp.pop %v3596
        %v3605 = vmul.f32 1.0, %v3604
        %v3606 = vrcp.pop %v3597
        %v3607 = vmul.f32 1.0, %v3606
        %v3608 = vrcp.pop %v3598
        %v3609 = vmul.f32 1.0, %v3608
        %v3610 = vrcp.pop %v3599
        %v3611 = vmul.f32 1.0, %v3610
        %v3612 = vrcp.pop %v3600
        %v3613 = vmul.f32 1.0, %v3612
        %v3614 = vrcp.pop %v3601
        %v3615 = vmul.f32 1.0, %v3614
        %v3616 = vrcp.pop %v3602
        %v3617 = vmul.f32 1.0, %v3616
        %v3618 = vrcp.pop %v3603
        %v3619 = vmul.f32 1.0, %v3618
        %v3620 = vmul.f32 %v3605, 1.0614054
        %v3621 = vmul.f32 %v3607, 1.0614054
        %v3622 = vmul.f32 %v3609, 1.0614054
        %v3623 = vmul.f32 %v3611, 1.0614054
        %v3624 = vmul.f32 %v3613, 1.0614054
        %v3625 = vmul.f32 %v3615, 1.0614054
        %v3626 = vmul.f32 %v3617, 1.0614054
        %v3627 = vmul.f32 %v3619, 1.0614054
        %v3628 = vadd.f32 %v3620, -1.4531521
        %v3629 = vadd.f32 %v3621, -1.4531521
        %v3630 = vadd.f32 %v3622, -1.4531521
        %v3631 = vadd.f32 %v3623, -1.4531521
        %v3632 = vadd.f32 %v3624, -1.4531521
        %v3633 = vadd.f32 %v3625, -1.4531521
        %v3634 = vadd.f32 %v3626, -1.4531521
        %v3635 = vadd.f32 %v3627, -1.4531521
        %v3636 = vmul.f32 %v3628, %v3605
        %v3637 = vmul.f32 %v3629, %v3607
        %v3638 = vmul.f32 %v3630, %v3609
        %v3639 = vmul.f32 %v3631, %v3611
        %v3640 = vmul.f32 %v3632, %v3613
        %v3641 = vmul.f32 %v3633, %v3615
        %v3642 = vmul.f32 %v3634, %v3617
        %v3643 = vmul.f32 %v3635, %v3619
        %v3644 = vadd.f32 %v3636, 1.4214138
        %v3645 = vadd.f32 %v3637, 1.4214138
        %v3646 = vadd.f32 %v3638, 1.4214138
        %v3647 = vadd.f32 %v3639, 1.4214138
        %v3648 = vadd.f32 %v3640, 1.4214138
        %v3649 = vadd.f32 %v3641, 1.4214138
        %v3650 = vadd.f32 %v3642, 1.4214138
        %v3651 = vadd.f32 %v3643, 1.4214138
        %v3652 = vmul.f32 %v3644, %v3605
        %v3653 = vmul.f32 %v3645, %v3607
        %v3654 = vmul.f32 %v3646, %v3609
        %v3655 = vmul.f32 %v3647, %v3611
        %v3656 = vmul.f32 %v3648, %v3613
        %v3657 = vmul.f32 %v3649, %v3615
        %v3658 = vmul.f32 %v3650, %v3617
        %v3659 = vmul.f32 %v3651, %v3619
        %v3660 = vadd.f32 %v3652, -0.28449672
        %v3661 = vadd.f32 %v3653, -0.28449672
        %v3662 = vadd.f32 %v3654, -0.28449672
        %v3663 = vadd.f32 %v3655, -0.28449672
        %v3664 = vadd.f32 %v3656, -0.28449672
        %v3665 = vadd.f32 %v3657, -0.28449672
        %v3666 = vadd.f32 %v3658, -0.28449672
        %v3667 = vadd.f32 %v3659, -0.28449672
        %v3668 = vmul.f32 %v3660, %v3605
        %v3669 = vmul.f32 %v3661, %v3607
        %v3670 = vmul.f32 %v3662, %v3609
        %v3671 = vmul.f32 %v3663, %v3611
        %v3672 = vmul.f32 %v3664, %v3613
        %v3673 = vmul.f32 %v3665, %v3615
        %v3674 = vmul.f32 %v3666, %v3617
        %v3675 = vmul.f32 %v3667, %v3619
        %v3676 = vadd.f32 %v3668, 0.2548296
        %v3677 = vadd.f32 %v3669, 0.2548296
        %v3678 = vadd.f32 %v3670, 0.2548296
        %v3679 = vadd.f32 %v3671, 0.2548296
        %v3680 = vadd.f32 %v3672, 0.2548296
        %v3681 = vadd.f32 %v3673, 0.2548296
        %v3682 = vadd.f32 %v3674, 0.2548296
        %v3683 = vadd.f32 %v3675, 0.2548296
        %v3684 = vmul.f32 %v3676, %v3605
        %v3685 = vmul.f32 %v3677, %v3607
        %v3686 = vmul.f32 %v3678, %v3609
        %v3687 = vmul.f32 %v3679, %v3611
        %v3688 = vmul.f32 %v3680, %v3613
        %v3689 = vmul.f32 %v3681, %v3615
        %v3690 = vmul.f32 %v3682, %v3617
        %v3691 = vmul.f32 %v3683, %v3619
        %v3692 = vsub.f32 0.0, %v3580
        %v3693 = vsub.f32 0.0, %v3581
        %v3694 = vsub.f32 0.0, %v3582
        %v3695 = vsub.f32 0.0, %v3583
        %v3696 = vsub.f32 0.0, %v3584
        %v3697 = vsub.f32 0.0, %v3585
        %v3698 = vsub.f32 0.0, %v3586
        %v3699 = vsub.f32 0.0, %v3587
        %v3700 = vmul.f32 %v3692, %v3580
        %v3701 = vmul.f32 %v3693, %v3581
        %v3702 = vmul.f32 %v3694, %v3582
        %v3703 = vmul.f32 %v3695, %v3583
        %v3704 = vmul.f32 %v3696, %v3584
        %v3705 = vmul.f32 %v3697, %v3585
        %v3706 = vmul.f32 %v3698, %v3586
        %v3707 = vmul.f32 %v3699, %v3587
        %v3708 = vmul.f32 %v3700, 1.442695
        %v3709 = vpow.pop %v3708
        %v3710 = vmul.f32 %v3701, 1.442695
        %v3711 = vpow.pop %v3710
        %v3712 = vmul.f32 %v3702, 1.442695
        %v3713 = vpow.pop %v3712
        %v3714 = vmul.f32 %v3703, 1.442695
        %v3715 = vpow.pop %v3714
        %v3716 = vmul.f32 %v3704, 1.442695
        %v3717 = vpow.pop %v3716
        %v3718 = vmul.f32 %v3705, 1.442695
        %v3719 = vpow.pop %v3718
        %v3720 = vmul.f32 %v3706, 1.442695
        %v3721 = vpow.pop %v3720
        %v3722 = vmul.f32 %v3707, 1.442695
        %v3723 = vpow.pop %v3722
        %v3724 = vmul.f32 %v3684, %v3709
        %v3725 = vmul.f32 %v3685, %v3711
        %v3726 = vmul.f32 %v3686, %v3713
        %v3727 = vmul.f32 %v3687, %v3715
        %v3728 = vmul.f32 %v3688, %v3717
        %v3729 = vmul.f32 %v3689, %v3719
        %v3730 = vmul.f32 %v3690, %v3721
        %v3731 = vmul.f32 %v3691, %v3723
        %v3732 = vsub.f32 1.0, %v3724
        %v3733 = vsub.f32 1.0, %v3725
        %v3734 = vsub.f32 1.0, %v3726
        %v3735 = vsub.f32 1.0, %v3727
        %v3736 = vsub.f32 1.0, %v3728
        %v3737 = vsub.f32 1.0, %v3729
        %v3738 = vsub.f32 1.0, %v3730
        %v3739 = vsub.f32 1.0, %v3731
        %vm3740 = vcmp.lt.f32.partialorder %v3572, 0.0
        %vm3741 = vcmp.lt.f32.partialorder %v3573, 0.0
        %vm3742 = vcmp.lt.f32.partialorder %v3574, 0.0
        %vm3743 = vcmp.lt.f32.partialorder %v3575, 0.0
        %vm3744 = vcmp.lt.f32.partialorder %v3576, 0.0
        %vm3745 = vcmp.lt.f32.partialorder %v3577, 0.0
        %vm3746 = vcmp.lt.f32.partialorder %v3578, 0.0
        %vm3747 = vcmp.lt.f32.partialorder %v3579, 0.0
        %v3748 = vsub.f32 0.0, %v3732
        %v3749 = vsub.f32 0.0, %v3733
        %v3750 = vsub.f32 0.0, %v3734
        %v3751 = vsub.f32 0.0, %v3735
        %v3752 = vsub.f32 0.0, %v3736
        %v3753 = vsub.f32 0.0, %v3737
        %v3754 = vsub.f32 0.0, %v3738
        %v3755 = vsub.f32 0.0, %v3739
        %v3756 = vsel %vm3740, %v3748, %v3732
        %v3757 = vsel %vm3741, %v3749, %v3733
        %v3758 = vsel %vm3742, %v3750, %v3734
        %v3759 = vsel %vm3743, %v3751, %v3735
        %v3760 = vsel %vm3744, %v3752, %v3736
        %v3761 = vsel %vm3745, %v3753, %v3737
        %v3762 = vsel %vm3746, %v3754, %v3738
        %v3763 = vsel %vm3747, %v3755, %v3739
        %v3764 = vadd.f32 %v3756, 1.0
        %v3765 = vadd.f32 %v3757, 1.0
        %v3766 = vadd.f32 %v3758, 1.0
        %v3767 = vadd.f32 %v3759, 1.0
        %v3768 = vadd.f32 %v3760, 1.0
        %v3769 = vadd.f32 %v3761, 1.0
        %v3770 = vadd.f32 %v3762, 1.0
        %v3771 = vadd.f32 %v3763, 1.0
        %v3772 = vmul.f32 %v3564, %v3764
        %v3773 = vmul.f32 %v3565, %v3765
        %v3774 = vmul.f32 %v3566, %v3766
        %v3775 = vmul.f32 %v3567, %v3767
        %v3776 = vmul.f32 %v3568, %v3768
        %v3777 = vmul.f32 %v3569, %v3769
        %v3778 = vmul.f32 %v3570, %v3770
        %v3779 = vmul.f32 %v3571, %v3771
        %v3780 = vld [vmem:[%s35] sm:$0xff]
        %v3781 = vld [vmem:[%s35 + $0x8] sm:$0xff]
        %v3782 = vld [vmem:[%s35 + $0x10] sm:$0xff]
        %v3783 = vld [vmem:[%s35 + $0x18] sm:$0xff]
        %vm3784 = vcmask 261120
        %v3786 = vsel %vm3784, %v3772, 0
        %v3789 = vsel %vm3784, %v3773, 0
        %v3792 = vsel %vm3784, %v3774, 0
        %v3795 = vsel %vm3784, %v3775, 0
        %v3798 = vsel %vm3784, %v3776, 0
        %v3801 = vsel %vm3784, %v3777, 0
        %v3804 = vsel %vm3784, %v3778, 0
        %v3807 = vsel %vm3784, %v3779, 0
        %3809 = vmatprep.subr.mxu0 0.0
        %3810 = vmatpush1.msra.mxu0 0.0
        %3811 = vmatprep.subr.mxu0 0.0
        %3812 = vmatpush1.msra.mxu0 0.0
        %3813 = vmatprep.subr.mxu0 0.0
        %3814 = vmatpush1.msra.mxu0 0.0
        %3815 = vmatprep.subr.mxu0 0.0
        %3816 = vmatpush1.msra.mxu0 0.0
        %3817 = vmatprep.subr.mxu0 0.0
        %3818 = vmatpush1.msra.mxu0 0.0
        %3819 = vmatprep.subr.mxu0 0.0
        %3820 = vmatpush1.msra.mxu0 0.0
        %3821 = vmatprep.subr.mxu0 0.0
        %3822 = vmatpush1.msra.mxu0 0.0
        %3823 = vmatprep.subr.mxu0 0.0
        %3824 = vmatpush1.msra.mxu0 0.0
        %3825 = vmatprep.subr.mxu0 0.0
        %3826 = vmatpush1.msra.mxu0 0.0
        %3827 = vmatprep.subr.mxu0 0.0
        %3828 = vmatpush1.msra.mxu0 0.0
        %3829 = vmatprep.subr.mxu0 0.0
        %3830 = vmatpush1.msra.mxu0 0.0
        %3831 = vmatprep.subr.mxu0 0.0
        %3832 = vmatpush1.msra.mxu0 0.0
        %3833 = vmatprep.subr.mxu0 0.0
        %3834 = vmatpush1.msra.mxu0 %v3783
        %3835 = vmatprep.subr.mxu0 0.0
        %3836 = vmatpush1.msra.mxu0 %v3782
        %3837 = vmatprep.subr.mxu0 0.0
        %3838 = vmatpush1.msra.mxu0 %v3781
        %3839 = vmatprep.subr.mxu0 0.0
        %3840 = vmatpush1.msra.mxu0 %v3780
        %3841 = vmatprep.subr.mxu0 0.0
        %3842 = vmatpush2.msra.mxu0 0.0
        %3843 = vmatprep.subr.mxu0 0.0
        %3844 = vmatpush2.msra.mxu0 0.0
        %3845 = vmatprep.subr.mxu0 0.0
        %3846 = vmatpush2.msra.mxu0 0.0
        %3847 = vmatprep.subr.mxu0 0.0
        %3848 = vmatpush2.msra.mxu0 0.0
        %3849 = vmatprep.subr.mxu0 0.0
        %3850 = vmatpush2.msra.mxu0 0.0
        %3851 = vmatprep.subr.mxu0 0.0
        %3852 = vmatpush2.msra.mxu0 0.0
        %3853 = vmatprep.subr.mxu0 0.0
        %3854 = vmatpush2.msra.mxu0 0.0
        %3855 = vmatprep.subr.mxu0 0.0
        %3856 = vmatpush2.msra.mxu0 0.0
        %3857 = vmatprep.subr.mxu0 0.0
        %3858 = vmatpush2.msra.mxu0 0.0
        %3859 = vmatprep.subr.mxu0 0.0
        %3860 = vmatpush2.msra.mxu0 0.0
        %3861 = vmatprep.subr.mxu0 0.0
        %3862 = vmatpush2.msra.mxu0 0.0
        %3863 = vmatprep.subr.mxu0 0.0
        %3864 = vmatpush2.msra.mxu0 0.0
        %3865 = vmatprep.subr.mxu0 0.0
        %3866 = vmatpush2.msra.mxu0 0.0
        %3867 = vmatprep.subr.mxu0 0.0
        %3868 = vmatpush2.msra.mxu0 0.0
        %3869 = vmatprep.subr.mxu0 0.0
        %3870 = vmatpush2.msra.mxu0 0.0
        %3871 = vmatprep.subr.mxu0 0.0
        %3872 = vmatpush2.msra.mxu0 0.0
        %3873 = vmatprep.mubr.f32.mxu0 0.0
        %3874 = vmatmul.mubr.f32.gmra.mxu0 %v3786
        %v3875 = vpop.f32.mrf.mxu0
        %v3876 = vadd.f32 0.0, %v3875
        %v3877 = vpop.f32.mrf.mxu0
        %3878 = vmatprep.mubr.f32.mxu0 0.0
        %3879 = vmatmul.mubr.f32.gmra.mxu0 %v3789
        %v3880 = vpop.f32.mrf.mxu0
        %v3881 = vadd.f32 0.0, %v3880
        %v3882 = vpop.f32.mrf.mxu0
        %3883 = vmatprep.mubr.f32.mxu0 0.0
        %3884 = vmatmul.mubr.f32.gmra.mxu0 %v3792
        %v3885 = vpop.f32.mrf.mxu0
        %v3886 = vadd.f32 0.0, %v3885
        %v3887 = vpop.f32.mrf.mxu0
        %3888 = vmatprep.mubr.f32.mxu0 0.0
        %3889 = vmatmul.mubr.f32.gmra.mxu0 %v3795
        %v3890 = vpop.f32.mrf.mxu0
        %v3891 = vadd.f32 0.0, %v3890
        %v3892 = vpop.f32.mrf.mxu0
        %3893 = vmatprep.mubr.f32.mxu0 0.0
        %3894 = vmatmul.mubr.f32.gmra.mxu0 %v3798
        %v3895 = vpop.f32.mrf.mxu0
        %v3896 = vadd.f32 0.0, %v3895
        %v3897 = vpop.f32.mrf.mxu0
        %3898 = vmatprep.mubr.f32.mxu0 0.0
        %3899 = vmatmul.mubr.f32.gmra.mxu0 %v3801
        %v3900 = vpop.f32.mrf.mxu0
        %v3901 = vadd.f32 0.0, %v3900
        %v3902 = vpop.f32.mrf.mxu0
        %3903 = vmatprep.mubr.f32.mxu0 0.0
        %3904 = vmatmul.mubr.f32.gmra.mxu0 %v3804
        %v3905 = vpop.f32.mrf.mxu0
        %v3906 = vadd.f32 0.0, %v3905
        %v3907 = vpop.f32.mrf.mxu0
        %3908 = vmatprep.mubr.f32.mxu0 0.0
        %3909 = vmatmul.mubr.f32.gmra.mxu0 %v3807
        %v3910 = vpop.f32.mrf.mxu0
        %v3911 = vadd.f32 0.0, %v3910
        %v3912 = vpop.f32.mrf.mxu0
        %3913 = vdwg.mxu0
        %v3914 = vadd.f32 %v3284, %v3876
        %v3915 = vadd.f32 %v3285, %v3881
        %v3916 = vadd.f32 %v3286, %v3886
        %v3917 = vadd.f32 %v3287, %v3891
        %v3918 = vadd.f32 %v3288, %v3896
        %v3919 = vadd.f32 %v3289, %v3901
        %v3920 = vadd.f32 %v3290, %v3906
        %v3921 = vadd.f32 %v3291, %v3911
        %v3922 = vld [vmem:[%s37] sm:$0x1]
        %v3924 = vlaneseq
        %v3925 = vshrl.u32 %v3924, 7
        %v3926 = vsub.s32 0, %v3925
        %v3927 = vrot.slane %v3922, %v3926
        %v3929 = vadd.f32 %v3914, %v3927
        %v3930 = vadd.f32 %v3915, %v3927
        %v3931 = vadd.f32 %v3916, %v3927
        %v3932 = vadd.f32 %v3917, %v3927
        %v3933 = vadd.f32 %v3918, %v3927
        %v3934 = vadd.f32 %v3919, %v3927
        %v3935 = vadd.f32 %v3920, %v3927
        %v3936 = vadd.f32 %v3921, %v3927
        %v3937 = vld [vmem:[%s39] sm:$0x1]
        %v3938 = vld [vmem:[%s41] sm:$0x1]
        %v3939 = vsel %vm1058, %v3929, 0.0
        %3940 = vadd.xlane.f32.xlu0 %v3939
        %v3941 = vpop.xlane.xlu0 %3940
        %v3942 = vsel %vm1058, %v3930, 0.0
        %3943 = vadd.xlane.f32.xlu0 %v3942
        %v3944 = vpop.xlane.xlu0 %3943
        %v3945 = vsel %vm1058, %v3931, 0.0
        %3946 = vadd.xlane.f32.xlu0 %v3945
        %v3947 = vpop.xlane.xlu0 %3946
        %v3948 = vsel %vm1058, %v3932, 0.0
        %3949 = vadd.xlane.f32.xlu0 %v3948
        %v3950 = vpop.xlane.xlu0 %3949
        %v3951 = vsel %vm1058, %v3933, 0.0
        %3952 = vadd.xlane.f32.xlu0 %v3951
        %v3953 = vpop.xlane.xlu0 %3952
        %v3954 = vsel %vm1058, %v3934, 0.0
        %3955 = vadd.xlane.f32.xlu0 %v3954
        %v3956 = vpop.xlane.xlu0 %3955
        %v3957 = vsel %vm1058, %v3935, 0.0
        %3958 = vadd.xlane.f32.xlu0 %v3957
        %v3959 = vpop.xlane.xlu0 %3958
        %v3960 = vsel %vm1058, %v3936, 0.0
        %3961 = vadd.xlane.f32.xlu0 %v3960
        %v3962 = vpop.xlane.xlu0 %3961
        %v3963 = vmul.f32 %v3941, %v1222
        %v3964 = vmul.f32 %v3944, %v1222
        %v3965 = vmul.f32 %v3947, %v1222
        %v3966 = vmul.f32 %v3950, %v1222
        %v3967 = vmul.f32 %v3953, %v1222
        %v3968 = vmul.f32 %v3956, %v1222
        %v3969 = vmul.f32 %v3959, %v1222
        %v3970 = vmul.f32 %v3962, %v1222
        %v3971 = vsub.f32 %v3929, %v3963
        %v3972 = vsub.f32 %v3930, %v3964
        %v3973 = vsub.f32 %v3931, %v3965
        %v3974 = vsub.f32 %v3932, %v3966
        %v3975 = vsub.f32 %v3933, %v3967
        %v3976 = vsub.f32 %v3934, %v3968
        %v3977 = vsub.f32 %v3935, %v3969
        %v3978 = vsub.f32 %v3936, %v3970
        %v3979 = vmul.f32 %v3971, %v3971
        %v3980 = vmul.f32 %v3972, %v3972
        %v3981 = vmul.f32 %v3973, %v3973
        %v3982 = vmul.f32 %v3974, %v3974
        %v3983 = vmul.f32 %v3975, %v3975
        %v3984 = vmul.f32 %v3976, %v3976
        %v3985 = vmul.f32 %v3977, %v3977
        %v3986 = vmul.f32 %v3978, %v3978
        %v3987 = vsel %vm1058, %v3979, 0.0
        %3988 = vadd.xlane.f32.xlu0 %v3987
        %v3989 = vpop.xlane.xlu0 %3988
        %v3990 = vsel %vm1058, %v3980, 0.0
        %3991 = vadd.xlane.f32.xlu0 %v3990
        %v3992 = vpop.xlane.xlu0 %3991
        %v3993 = vsel %vm1058, %v3981, 0.0
        %3994 = vadd.xlane.f32.xlu0 %v3993
        %v3995 = vpop.xlane.xlu0 %3994
        %v3996 = vsel %vm1058, %v3982, 0.0
        %3997 = vadd.xlane.f32.xlu0 %v3996
        %v3998 = vpop.xlane.xlu0 %3997
        %v3999 = vsel %vm1058, %v3983, 0.0
        %4000 = vadd.xlane.f32.xlu0 %v3999
        %v4001 = vpop.xlane.xlu0 %4000
        %v4002 = vsel %vm1058, %v3984, 0.0
        %4003 = vadd.xlane.f32.xlu0 %v4002
        %v4004 = vpop.xlane.xlu0 %4003
        %v4005 = vsel %vm1058, %v3985, 0.0
        %4006 = vadd.xlane.f32.xlu0 %v4005
        %v4007 = vpop.xlane.xlu0 %4006
        %v4008 = vsel %vm1058, %v3986, 0.0
        %4009 = vadd.xlane.f32.xlu0 %v4008
        %v4010 = vpop.xlane.xlu0 %4009
        %v4011 = vmul.f32 %v3989, %v1222
        %v4012 = vmul.f32 %v3992, %v1222
        %v4013 = vmul.f32 %v3995, %v1222
        %v4014 = vmul.f32 %v3998, %v1222
        %v4015 = vmul.f32 %v4001, %v1222
        %v4016 = vmul.f32 %v4004, %v1222
        %v4017 = vmul.f32 %v4007, %v1222
        %v4018 = vmul.f32 %v4010, %v1222
        %v4019 = vadd.f32 %v4011, 1e-05
        %v4020 = vadd.f32 %v4012, 1e-05
        %v4021 = vadd.f32 %v4013, 1e-05
        %v4022 = vadd.f32 %v4014, 1e-05
        %v4023 = vadd.f32 %v4015, 1e-05
        %v4024 = vadd.f32 %v4016, 1e-05
        %v4025 = vadd.f32 %v4017, 1e-05
        %v4026 = vadd.f32 %v4018, 1e-05
        %v4027 = vrsqrt.pop %v4019
        %v4028 = vrsqrt.pop %v4020
        %v4029 = vrsqrt.pop %v4021
        %v4030 = vrsqrt.pop %v4022
        %v4031 = vrsqrt.pop %v4023
        %v4032 = vrsqrt.pop %v4024
        %v4033 = vrsqrt.pop %v4025
        %v4034 = vrsqrt.pop %v4026
        %v4035 = vmul.f32 %v3971, %v4027
        %v4036 = vmul.f32 %v3972, %v4028
        %v4037 = vmul.f32 %v3973, %v4029
        %v4038 = vmul.f32 %v3974, %v4030
        %v4039 = vmul.f32 %v3975, %v4031
        %v4040 = vmul.f32 %v3976, %v4032
        %v4041 = vmul.f32 %v3977, %v4033
        %v4042 = vmul.f32 %v3978, %v4034
        %v4044 = vlaneseq
        %v4045 = vshrl.u32 %v4044, 7
        %v4046 = vsub.s32 0, %v4045
        %v4047 = vrot.slane %v3937, %v4046
        %v4049 = vmul.f32 %v4035, %v4047
        %v4050 = vmul.f32 %v4036, %v4047
        %v4051 = vmul.f32 %v4037, %v4047
        %v4052 = vmul.f32 %v4038, %v4047
        %v4053 = vmul.f32 %v4039, %v4047
        %v4054 = vmul.f32 %v4040, %v4047
        %v4055 = vmul.f32 %v4041, %v4047
        %v4056 = vmul.f32 %v4042, %v4047
        %v4058 = vlaneseq
        %v4059 = vshrl.u32 %v4058, 7
        %v4060 = vsub.s32 0, %v4059
        %v4061 = vrot.slane %v3938, %v4060
        %v4063 = vadd.f32 %v4049, %v4061
        %v4064 = vadd.f32 %v4050, %v4061
        %v4065 = vadd.f32 %v4051, %v4061
        %v4066 = vadd.f32 %v4052, %v4061
        %v4067 = vadd.f32 %v4053, %v4061
        %v4068 = vadd.f32 %v4054, %v4061
        %v4069 = vadd.f32 %v4055, %v4061
        %v4070 = vadd.f32 %v4056, %v4061
        %4071 = vmatprep.subr.mxu0 0.0
        %4072 = vmatpush1.msra.mxu0 0.0
        %4073 = vmatprep.subr.mxu0 0.0
        %4074 = vmatpush1.msra.mxu0 0.0
        %4075 = vmatprep.subr.mxu0 0.0
        %4076 = vmatpush1.msra.mxu0 0.0
        %4077 = vmatprep.subr.mxu0 0.0
        %4078 = vmatpush1.msra.mxu0 0.0
        %4079 = vmatprep.subr.mxu0 0.0
        %4080 = vmatpush1.msra.mxu0 0.0
        %4081 = vmatprep.subr.mxu0 0.0
        %4082 = vmatpush1.msra.mxu0 0.0
        %4083 = vmatprep.subr.mxu0 0.0
        %4084 = vmatpush1.msra.mxu0 0.0
        %4085 = vmatprep.subr.mxu0 0.0
        %4086 = vmatpush1.msra.mxu0 0.0
        %4087 = vmatprep.subr.mxu0 0.0
        %4088 = vmatpush1.msra.mxu0 %v4070
        %4089 = vmatprep.subr.mxu0 0.0
        %4090 = vmatpush1.msra.mxu0 %v4069
        %4091 = vmatprep.subr.mxu0 0.0
        %4092 = vmatpush1.msra.mxu0 %v4068
        %4093 = vmatprep.subr.mxu0 0.0
        %4094 = vmatpush1.msra.mxu0 %v4067
        %4095 = vmatprep.subr.mxu0 0.0
        %4096 = vmatpush1.msra.mxu0 %v4066
        %4097 = vmatprep.subr.mxu0 0.0
        %4098 = vmatpush1.msra.mxu0 %v4065
        %4099 = vmatprep.subr.mxu0 0.0
        %4100 = vmatpush1.msra.mxu0 %v4064
        %4101 = vmatprep.subr.mxu0 0.0
        %4102 = vmatpush1.msra.mxu0 %v4063
        %4103 = vmatprep.subr.mxu0 0.0
        %4104 = vmatpush2.msra.mxu0 0.0
        %4105 = vmatprep.subr.mxu0 0.0
        %4106 = vmatpush2.msra.mxu0 0.0
        %4107 = vmatprep.subr.mxu0 0.0
        %4108 = vmatpush2.msra.mxu0 0.0
        %4109 = vmatprep.subr.mxu0 0.0
        %4110 = vmatpush2.msra.mxu0 0.0
        %4111 = vmatprep.subr.mxu0 0.0
        %4112 = vmatpush2.msra.mxu0 0.0
        %4113 = vmatprep.subr.mxu0 0.0
        %4114 = vmatpush2.msra.mxu0 0.0
        %4115 = vmatprep.subr.mxu0 0.0
        %4116 = vmatpush2.msra.mxu0 0.0
        %4117 = vmatprep.subr.mxu0 0.0
        %4118 = vmatpush2.msra.mxu0 0.0
        %4119 = vmatprep.subr.mxu0 0.0
        %4120 = vmatpush2.msra.mxu0 0.0
        %4121 = vmatprep.subr.mxu0 0.0
        %4122 = vmatpush2.msra.mxu0 0.0
        %4123 = vmatprep.subr.mxu0 0.0
        %4124 = vmatpush2.msra.mxu0 0.0
        %4125 = vmatprep.subr.mxu0 0.0
        %4126 = vmatpush2.msra.mxu0 0.0
        %4127 = vmatprep.subr.mxu0 0.0
        %4128 = vmatpush2.msra.mxu0 0.0
        %4129 = vmatprep.subr.mxu0 0.0
        %4130 = vmatpush2.msra.mxu0 0.0
        %4131 = vmatprep.subr.mxu0 0.0
        %4132 = vmatpush2.msra.mxu0 0.0
        %4133 = vmatprep.subr.mxu0 0.0
        %4134 = vmatpush2.msra.mxu0 0.0
        %4135 = vmatprep.mubr.f32.mxu0 0.0
        %4136 = vmatmul.mubr.f32.gmra.mxu0 %v1333
        %v4137 = vpop.f32.mrf.mxu0
        %v4138 = vadd.f32 0.0, %v4137
        %v4139 = vpop.f32.mrf.mxu0
        %4140 = vmatprep.mubr.f32.mxu0 0.0
        %4141 = vmatmul.mubr.f32.gmra.mxu0 %v1336
        %v4142 = vpop.f32.mrf.mxu0
        %v4143 = vadd.f32 0.0, %v4142
        %v4144 = vpop.f32.mrf.mxu0
        %4145 = vmatprep.mubr.f32.mxu0 0.0
        %4146 = vmatmul.mubr.f32.gmra.mxu0 %v1339
        %v4147 = vpop.f32.mrf.mxu0
        %v4148 = vadd.f32 0.0, %v4147
        %v4149 = vpop.f32.mrf.mxu0
        %4150 = vmatprep.mubr.f32.mxu0 0.0
        %4151 = vmatmul.mubr.f32.gmra.mxu0 %v1342
        %v4152 = vpop.f32.mrf.mxu0
        %v4153 = vadd.f32 0.0, %v4152
        %v4154 = vpop.f32.mrf.mxu0
        %4155 = vmatprep.mubr.f32.mxu0 0.0
        %4156 = vmatmul.mubr.f32.gmra.mxu0 %v1345
        %v4157 = vpop.f32.mrf.mxu0
        %v4158 = vadd.f32 0.0, %v4157
        %v4159 = vpop.f32.mrf.mxu0
        %4160 = vmatprep.mubr.f32.mxu0 0.0
        %4161 = vmatmul.mubr.f32.gmra.mxu0 %v1348
        %v4162 = vpop.f32.mrf.mxu0
        %v4163 = vadd.f32 0.0, %v4162
        %v4164 = vpop.f32.mrf.mxu0
        %4165 = vmatprep.mubr.f32.mxu0 0.0
        %4166 = vmatmul.mubr.f32.gmra.mxu0 %v1351
        %v4167 = vpop.f32.mrf.mxu0
        %v4168 = vadd.f32 0.0, %v4167
        %v4169 = vpop.f32.mrf.mxu0
        %4170 = vmatprep.mubr.f32.mxu0 0.0
        %4171 = vmatmul.mubr.f32.gmra.mxu0 %v1354
        %v4172 = vpop.f32.mrf.mxu0
        %v4173 = vadd.f32 0.0, %v4172
        %v4174 = vpop.f32.mrf.mxu0
        %4175 = vdwg.mxu0
        %v4176 = vld [vmem:[%s53] sm:$0xff]
        %v4177 = vld [vmem:[%s53 + $0x8] sm:$0xff]
        %v4178 = vld [vmem:[%s53 + $0x10] sm:$0xff]
        %v4179 = vld [vmem:[%s53 + $0x18] sm:$0xff]
        %v4180 = vld [vmem:[%s53 + $0x20] sm:$0xff]
        %v4181 = vld [vmem:[%s53 + $0x28] sm:$0xff]
        %v4182 = vld [vmem:[%s53 + $0x30] sm:$0xff]
        %v4183 = vld [vmem:[%s53 + $0x38] sm:$0xff]
        %v4184 = vld [vmem:[%s43] sm:$0xff]
        %v4185 = vld [vmem:[%s43 + $0x8] sm:$0xff]
        %v4187 = vsel %vm1058, %v4138, 0
        %v4190 = vsel %vm1058, %v4143, 0
        %v4193 = vsel %vm1058, %v4148, 0
        %v4196 = vsel %vm1058, %v4153, 0
        %v4199 = vsel %vm1058, %v4158, 0
        %v4202 = vsel %vm1058, %v4163, 0
        %v4205 = vsel %vm1058, %v4168, 0
        %v4208 = vsel %vm1058, %v4173, 0
        %4210 = vmatprep.subr.mxu0 0.0
        %4211 = vmatpush1.msra.mxu0 0.0
        %4212 = vmatprep.subr.mxu0 0.0
        %4213 = vmatpush1.msra.mxu0 0.0
        %4214 = vmatprep.subr.mxu0 0.0
        %4215 = vmatpush1.msra.mxu0 0.0
        %4216 = vmatprep.subr.mxu0 0.0
        %4217 = vmatpush1.msra.mxu0 0.0
        %4218 = vmatprep.subr.mxu0 0.0
        %4219 = vmatpush1.msra.mxu0 0.0
        %4220 = vmatprep.subr.mxu0 0.0
        %4221 = vmatpush1.msra.mxu0 0.0
        %4222 = vmatprep.subr.mxu0 0.0
        %4223 = vmatpush1.msra.mxu0 0.0
        %4224 = vmatprep.subr.mxu0 0.0
        %4225 = vmatpush1.msra.mxu0 0.0
        %4226 = vmatprep.subr.mxu0 0.0
        %4227 = vmatpush1.msra.mxu0 0.0
        %4228 = vmatprep.subr.mxu0 0.0
        %4229 = vmatpush1.msra.mxu0 0.0
        %4230 = vmatprep.subr.mxu0 0.0
        %4231 = vmatpush1.msra.mxu0 0.0
        %4232 = vmatprep.subr.mxu0 0.0
        %4233 = vmatpush1.msra.mxu0 0.0
        %4234 = vmatprep.subr.mxu0 0.0
        %4235 = vmatpush1.msra.mxu0 0.0
        %4236 = vmatprep.subr.mxu0 0.0
        %4237 = vmatpush1.msra.mxu0 0.0
        %4238 = vmatprep.subr.mxu0 0.0
        %4239 = vmatpush1.msra.mxu0 %v4185
        %4240 = vmatprep.subr.mxu0 0.0
        %4241 = vmatpush1.msra.mxu0 %v4184
        %4242 = vmatprep.subr.mxu0 0.0
        %4243 = vmatpush2.msra.mxu0 0.0
        %4244 = vmatprep.subr.mxu0 0.0
        %4245 = vmatpush2.msra.mxu0 0.0
        %4246 = vmatprep.subr.mxu0 0.0
        %4247 = vmatpush2.msra.mxu0 0.0
        %4248 = vmatprep.subr.mxu0 0.0
        %4249 = vmatpush2.msra.mxu0 0.0
        %4250 = vmatprep.subr.mxu0 0.0
        %4251 = vmatpush2.msra.mxu0 0.0
        %4252 = vmatprep.subr.mxu0 0.0
        %4253 = vmatpush2.msra.mxu0 0.0
        %4254 = vmatprep.subr.mxu0 0.0
        %4255 = vmatpush2.msra.mxu0 0.0
        %4256 = vmatprep.subr.mxu0 0.0
        %4257 = vmatpush2.msra.mxu0 0.0
        %4258 = vmatprep.subr.mxu0 0.0
        %4259 = vmatpush2.msra.mxu0 0.0
        %4260 = vmatprep.subr.mxu0 0.0
        %4261 = vmatpush2.msra.mxu0 0.0
        %4262 = vmatprep.subr.mxu0 0.0
        %4263 = vmatpush2.msra.mxu0 0.0
        %4264 = vmatprep.subr.mxu0 0.0
        %4265 = vmatpush2.msra.mxu0 0.0
        %4266 = vmatprep.subr.mxu0 0.0
        %4267 = vmatpush2.msra.mxu0 0.0
        %4268 = vmatprep.subr.mxu0 0.0
        %4269 = vmatpush2.msra.mxu0 0.0
        %4270 = vmatprep.subr.mxu0 0.0
        %4271 = vmatpush2.msra.mxu0 0.0
        %4272 = vmatprep.subr.mxu0 0.0
        %4273 = vmatpush2.msra.mxu0 0.0
        %4274 = vmatprep.mubr.f32.mxu0 0.0
        %4275 = vmatmul.mubr.f32.gmra.mxu0 %v4187
        %v4276 = vpop.f32.mrf.mxu0
        %v4277 = vadd.f32 0.0, %v4276
        %v4278 = vpop.f32.mrf.mxu0
        %4279 = vmatprep.mubr.f32.mxu0 0.0
        %4280 = vmatmul.mubr.f32.gmra.mxu0 %v4190
        %v4281 = vpop.f32.mrf.mxu0
        %v4282 = vadd.f32 0.0, %v4281
        %v4283 = vpop.f32.mrf.mxu0
        %4284 = vmatprep.mubr.f32.mxu0 0.0
        %4285 = vmatmul.mubr.f32.gmra.mxu0 %v4193
        %v4286 = vpop.f32.mrf.mxu0
        %v4287 = vadd.f32 0.0, %v4286
        %v4288 = vpop.f32.mrf.mxu0
        %4289 = vmatprep.mubr.f32.mxu0 0.0
        %4290 = vmatmul.mubr.f32.gmra.mxu0 %v4196
        %v4291 = vpop.f32.mrf.mxu0
        %v4292 = vadd.f32 0.0, %v4291
        %v4293 = vpop.f32.mrf.mxu0
        %4294 = vmatprep.mubr.f32.mxu0 0.0
        %4295 = vmatmul.mubr.f32.gmra.mxu0 %v4199
        %v4296 = vpop.f32.mrf.mxu0
        %v4297 = vadd.f32 0.0, %v4296
        %v4298 = vpop.f32.mrf.mxu0
        %4299 = vmatprep.mubr.f32.mxu0 0.0
        %4300 = vmatmul.mubr.f32.gmra.mxu0 %v4202
        %v4301 = vpop.f32.mrf.mxu0
        %v4302 = vadd.f32 0.0, %v4301
        %v4303 = vpop.f32.mrf.mxu0
        %4304 = vmatprep.mubr.f32.mxu0 0.0
        %4305 = vmatmul.mubr.f32.gmra.mxu0 %v4205
        %v4306 = vpop.f32.mrf.mxu0
        %v4307 = vadd.f32 0.0, %v4306
        %v4308 = vpop.f32.mrf.mxu0
        %4309 = vmatprep.mubr.f32.mxu0 0.0
        %4310 = vmatmul.mubr.f32.gmra.mxu0 %v4208
        %v4311 = vpop.f32.mrf.mxu0
        %v4312 = vadd.f32 0.0, %v4311
        %v4313 = vpop.f32.mrf.mxu0
        %4314 = vdwg.mxu0
        %v4315 = vld [vmem:[%s45] sm:$0xff]
        %v4316 = vld [vmem:[%s45 + $0x8] sm:$0xff]
        %4317 = vmatprep.subr.mxu0 0.0
        %4318 = vmatpush1.msra.mxu0 0.0
        %4319 = vmatprep.subr.mxu0 0.0
        %4320 = vmatpush1.msra.mxu0 0.0
        %4321 = vmatprep.subr.mxu0 0.0
        %4322 = vmatpush1.msra.mxu0 0.0
        %4323 = vmatprep.subr.mxu0 0.0
        %4324 = vmatpush1.msra.mxu0 0.0
        %4325 = vmatprep.subr.mxu0 0.0
        %4326 = vmatpush1.msra.mxu0 0.0
        %4327 = vmatprep.subr.mxu0 0.0
        %4328 = vmatpush1.msra.mxu0 0.0
        %4329 = vmatprep.subr.mxu0 0.0
        %4330 = vmatpush1.msra.mxu0 0.0
        %4331 = vmatprep.subr.mxu0 0.0
        %4332 = vmatpush1.msra.mxu0 0.0
        %4333 = vmatprep.subr.mxu0 0.0
        %4334 = vmatpush1.msra.mxu0 0.0
        %4335 = vmatprep.subr.mxu0 0.0
        %4336 = vmatpush1.msra.mxu0 0.0
        %4337 = vmatprep.subr.mxu0 0.0
        %4338 = vmatpush1.msra.mxu0 0.0
        %4339 = vmatprep.subr.mxu0 0.0
        %4340 = vmatpush1.msra.mxu0 0.0
        %4341 = vmatprep.subr.mxu0 0.0
        %4342 = vmatpush1.msra.mxu0 0.0
        %4343 = vmatprep.subr.mxu0 0.0
        %4344 = vmatpush1.msra.mxu0 0.0
        %4345 = vmatprep.subr.mxu0 0.0
        %4346 = vmatpush1.msra.mxu0 %v4316
        %4347 = vmatprep.subr.mxu0 0.0
        %4348 = vmatpush1.msra.mxu0 %v4315
        %4349 = vmatprep.subr.mxu0 0.0
        %4350 = vmatpush2.msra.mxu0 0.0
        %4351 = vmatprep.subr.mxu0 0.0
        %4352 = vmatpush2.msra.mxu0 0.0
        %4353 = vmatprep.subr.mxu0 0.0
        %4354 = vmatpush2.msra.mxu0 0.0
        %4355 = vmatprep.subr.mxu0 0.0
        %4356 = vmatpush2.msra.mxu0 0.0
        %4357 = vmatprep.subr.mxu0 0.0
        %4358 = vmatpush2.msra.mxu0 0.0
        %4359 = vmatprep.subr.mxu0 0.0
        %4360 = vmatpush2.msra.mxu0 0.0
        %4361 = vmatprep.subr.mxu0 0.0
        %4362 = vmatpush2.msra.mxu0 0.0
        %4363 = vmatprep.subr.mxu0 0.0
        %4364 = vmatpush2.msra.mxu0 0.0
        %4365 = vmatprep.subr.mxu0 0.0
        %4366 = vmatpush2.msra.mxu0 0.0
        %4367 = vmatprep.subr.mxu0 0.0
        %4368 = vmatpush2.msra.mxu0 0.0
        %4369 = vmatprep.subr.mxu0 0.0
        %4370 = vmatpush2.msra.mxu0 0.0
        %4371 = vmatprep.subr.mxu0 0.0
        %4372 = vmatpush2.msra.mxu0 0.0
        %4373 = vmatprep.subr.mxu0 0.0
        %4374 = vmatpush2.msra.mxu0 0.0
        %4375 = vmatprep.subr.mxu0 0.0
        %4376 = vmatpush2.msra.mxu0 0.0
        %4377 = vmatprep.subr.mxu0 0.0
        %4378 = vmatpush2.msra.mxu0 0.0
        %4379 = vmatprep.subr.mxu0 0.0
        %4380 = vmatpush2.msra.mxu0 0.0
        %4381 = vmatprep.mubr.f32.mxu0 0.0
        %4382 = vmatmul.mubr.f32.gmra.mxu0 %v4187
        %v4383 = vpop.f32.mrf.mxu0
        %v4384 = vadd.f32 0.0, %v4383
        %v4385 = vpop.f32.mrf.mxu0
        %4386 = vmatprep.mubr.f32.mxu0 0.0
        %4387 = vmatmul.mubr.f32.gmra.mxu0 %v4190
        %v4388 = vpop.f32.mrf.mxu0
        %v4389 = vadd.f32 0.0, %v4388
        %v4390 = vpop.f32.mrf.mxu0
        %4391 = vmatprep.mubr.f32.mxu0 0.0
        %4392 = vmatmul.mubr.f32.gmra.mxu0 %v4193
        %v4393 = vpop.f32.mrf.mxu0
        %v4394 = vadd.f32 0.0, %v4393
        %v4395 = vpop.f32.mrf.mxu0
        %4396 = vmatprep.mubr.f32.mxu0 0.0
        %4397 = vmatmul.mubr.f32.gmra.mxu0 %v4196
        %v4398 = vpop.f32.mrf.mxu0
        %v4399 = vadd.f32 0.0, %v4398
        %v4400 = vpop.f32.mrf.mxu0
        %4401 = vmatprep.mubr.f32.mxu0 0.0
        %4402 = vmatmul.mubr.f32.gmra.mxu0 %v4199
        %v4403 = vpop.f32.mrf.mxu0
        %v4404 = vadd.f32 0.0, %v4403
        %v4405 = vpop.f32.mrf.mxu0
        %4406 = vmatprep.mubr.f32.mxu0 0.0
        %4407 = vmatmul.mubr.f32.gmra.mxu0 %v4202
        %v4408 = vpop.f32.mrf.mxu0
        %v4409 = vadd.f32 0.0, %v4408
        %v4410 = vpop.f32.mrf.mxu0
        %4411 = vmatprep.mubr.f32.mxu0 0.0
        %4412 = vmatmul.mubr.f32.gmra.mxu0 %v4205
        %v4413 = vpop.f32.mrf.mxu0
        %v4414 = vadd.f32 0.0, %v4413
        %v4415 = vpop.f32.mrf.mxu0
        %4416 = vmatprep.mubr.f32.mxu0 0.0
        %4417 = vmatmul.mubr.f32.gmra.mxu0 %v4208
        %v4418 = vpop.f32.mrf.mxu0
        %v4419 = vadd.f32 0.0, %v4418
        %v4420 = vpop.f32.mrf.mxu0
        %4421 = vdwg.mxu0
        %v4422 = vld [vmem:[%s47] sm:$0xff]
        %v4423 = vld [vmem:[%s47 + $0x8] sm:$0xff]
        %4424 = vmatprep.subr.mxu0 0.0
        %4425 = vmatpush1.msra.mxu0 0.0
        %4426 = vmatprep.subr.mxu0 0.0
        %4427 = vmatpush1.msra.mxu0 0.0
        %4428 = vmatprep.subr.mxu0 0.0
        %4429 = vmatpush1.msra.mxu0 0.0
        %4430 = vmatprep.subr.mxu0 0.0
        %4431 = vmatpush1.msra.mxu0 0.0
        %4432 = vmatprep.subr.mxu0 0.0
        %4433 = vmatpush1.msra.mxu0 0.0
        %4434 = vmatprep.subr.mxu0 0.0
        %4435 = vmatpush1.msra.mxu0 0.0
        %4436 = vmatprep.subr.mxu0 0.0
        %4437 = vmatpush1.msra.mxu0 0.0
        %4438 = vmatprep.subr.mxu0 0.0
        %4439 = vmatpush1.msra.mxu0 0.0
        %4440 = vmatprep.subr.mxu0 0.0
        %4441 = vmatpush1.msra.mxu0 0.0
        %4442 = vmatprep.subr.mxu0 0.0
        %4443 = vmatpush1.msra.mxu0 0.0
        %4444 = vmatprep.subr.mxu0 0.0
        %4445 = vmatpush1.msra.mxu0 0.0
        %4446 = vmatprep.subr.mxu0 0.0
        %4447 = vmatpush1.msra.mxu0 0.0
        %4448 = vmatprep.subr.mxu0 0.0
        %4449 = vmatpush1.msra.mxu0 0.0
        %4450 = vmatprep.subr.mxu0 0.0
        %4451 = vmatpush1.msra.mxu0 0.0
        %4452 = vmatprep.subr.mxu0 0.0
        %4453 = vmatpush1.msra.mxu0 %v4423
        %4454 = vmatprep.subr.mxu0 0.0
        %4455 = vmatpush1.msra.mxu0 %v4422
        %4456 = vmatprep.subr.mxu0 0.0
        %4457 = vmatpush2.msra.mxu0 0.0
        %4458 = vmatprep.subr.mxu0 0.0
        %4459 = vmatpush2.msra.mxu0 0.0
        %4460 = vmatprep.subr.mxu0 0.0
        %4461 = vmatpush2.msra.mxu0 0.0
        %4462 = vmatprep.subr.mxu0 0.0
        %4463 = vmatpush2.msra.mxu0 0.0
        %4464 = vmatprep.subr.mxu0 0.0
        %4465 = vmatpush2.msra.mxu0 0.0
        %4466 = vmatprep.subr.mxu0 0.0
        %4467 = vmatpush2.msra.mxu0 0.0
        %4468 = vmatprep.subr.mxu0 0.0
        %4469 = vmatpush2.msra.mxu0 0.0
        %4470 = vmatprep.subr.mxu0 0.0
        %4471 = vmatpush2.msra.mxu0 0.0
        %4472 = vmatprep.subr.mxu0 0.0
        %4473 = vmatpush2.msra.mxu0 0.0
        %4474 = vmatprep.subr.mxu0 0.0
        %4475 = vmatpush2.msra.mxu0 0.0
        %4476 = vmatprep.subr.mxu0 0.0
        %4477 = vmatpush2.msra.mxu0 0.0
        %4478 = vmatprep.subr.mxu0 0.0
        %4479 = vmatpush2.msra.mxu0 0.0
        %4480 = vmatprep.subr.mxu0 0.0
        %4481 = vmatpush2.msra.mxu0 0.0
        %4482 = vmatprep.subr.mxu0 0.0
        %4483 = vmatpush2.msra.mxu0 0.0
        %4484 = vmatprep.subr.mxu0 0.0
        %4485 = vmatpush2.msra.mxu0 0.0
        %4486 = vmatprep.subr.mxu0 0.0
        %4487 = vmatpush2.msra.mxu0 0.0
        %4488 = vmatprep.mubr.f32.mxu0 0.0
        %4489 = vmatmul.mubr.f32.gmra.mxu0 %v4187
        %v4490 = vpop.f32.mrf.mxu0
        %v4491 = vadd.f32 0.0, %v4490
        %v4492 = vpop.f32.mrf.mxu0
        %4493 = vmatprep.mubr.f32.mxu0 0.0
        %4494 = vmatmul.mubr.f32.gmra.mxu0 %v4190
        %v4495 = vpop.f32.mrf.mxu0
        %v4496 = vadd.f32 0.0, %v4495
        %v4497 = vpop.f32.mrf.mxu0
        %4498 = vmatprep.mubr.f32.mxu0 0.0
        %4499 = vmatmul.mubr.f32.gmra.mxu0 %v4193
        %v4500 = vpop.f32.mrf.mxu0
        %v4501 = vadd.f32 0.0, %v4500
        %v4502 = vpop.f32.mrf.mxu0
        %4503 = vmatprep.mubr.f32.mxu0 0.0
        %4504 = vmatmul.mubr.f32.gmra.mxu0 %v4196
        %v4505 = vpop.f32.mrf.mxu0
        %v4506 = vadd.f32 0.0, %v4505
        %v4507 = vpop.f32.mrf.mxu0
        %4508 = vmatprep.mubr.f32.mxu0 0.0
        %4509 = vmatmul.mubr.f32.gmra.mxu0 %v4199
        %v4510 = vpop.f32.mrf.mxu0
        %v4511 = vadd.f32 0.0, %v4510
        %v4512 = vpop.f32.mrf.mxu0
        %4513 = vmatprep.mubr.f32.mxu0 0.0
        %4514 = vmatmul.mubr.f32.gmra.mxu0 %v4202
        %v4515 = vpop.f32.mrf.mxu0
        %v4516 = vadd.f32 0.0, %v4515
        %v4517 = vpop.f32.mrf.mxu0
        %4518 = vmatprep.mubr.f32.mxu0 0.0
        %4519 = vmatmul.mubr.f32.gmra.mxu0 %v4205
        %v4520 = vpop.f32.mrf.mxu0
        %v4521 = vadd.f32 0.0, %v4520
        %v4522 = vpop.f32.mrf.mxu0
        %4523 = vmatprep.mubr.f32.mxu0 0.0
        %4524 = vmatmul.mubr.f32.gmra.mxu0 %v4208
        %v4525 = vpop.f32.mrf.mxu0
        %v4526 = vadd.f32 0.0, %v4525
        %v4527 = vpop.f32.mrf.mxu0
        %4528 = vdwg.mxu0
        %v4530 = vsel %vm1814, %v4277, 0
        %v4533 = vsel %vm1814, %v4282, 0
        %v4536 = vsel %vm1814, %v4287, 0
        %v4539 = vsel %vm1814, %v4292, 0
        %v4542 = vsel %vm1814, %v4297, 0
        %v4545 = vsel %vm1814, %v4302, 0
        %v4548 = vsel %vm1814, %v4307, 0
        %v4551 = vsel %vm1814, %v4312, 0
        %v4554 = vsel %vm1814, %v4384, 0
        %v4557 = vsel %vm1814, %v4389, 0
        %v4560 = vsel %vm1814, %v4394, 0
        %v4563 = vsel %vm1814, %v4399, 0
        %v4566 = vsel %vm1814, %v4404, 0
        %v4569 = vsel %vm1814, %v4409, 0
        %v4572 = vsel %vm1814, %v4414, 0
        %v4575 = vsel %vm1814, %v4419, 0
        %4577 = vmatprep.subr.mxu0 0.0
        %4578 = vmatpush1.xpose.msra.mxu0 0.0
        %4579 = vmatprep.subr.mxu0 0.0
        %4580 = vmatpush1.xpose.msra.mxu0 0.0
        %4581 = vmatprep.subr.mxu0 0.0
        %4582 = vmatpush1.xpose.msra.mxu0 0.0
        %4583 = vmatprep.subr.mxu0 0.0
        %4584 = vmatpush1.xpose.msra.mxu0 0.0
        %4585 = vmatprep.subr.mxu0 0.0
        %4586 = vmatpush1.xpose.msra.mxu0 0.0
        %4587 = vmatprep.subr.mxu0 0.0
        %4588 = vmatpush1.xpose.msra.mxu0 0.0
        %4589 = vmatprep.subr.mxu0 0.0
        %4590 = vmatpush1.xpose.msra.mxu0 0.0
        %4591 = vmatprep.subr.mxu0 0.0
        %4592 = vmatpush1.xpose.msra.mxu0 0.0
        %4593 = vmatprep.subr.mxu0 0.0
        %4594 = vmatpush1.xpose.msra.mxu0 %v4575
        %4595 = vmatprep.subr.mxu0 0.0
        %4596 = vmatpush1.xpose.msra.mxu0 %v4572
        %4597 = vmatprep.subr.mxu0 0.0
        %4598 = vmatpush1.xpose.msra.mxu0 %v4569
        %4599 = vmatprep.subr.mxu0 0.0
        %4600 = vmatpush1.xpose.msra.mxu0 %v4566
        %4601 = vmatprep.subr.mxu0 0.0
        %4602 = vmatpush1.xpose.msra.mxu0 %v4563
        %4603 = vmatprep.subr.mxu0 0.0
        %4604 = vmatpush1.xpose.msra.mxu0 %v4560
        %4605 = vmatprep.subr.mxu0 0.0
        %4606 = vmatpush1.xpose.msra.mxu0 %v4557
        %4607 = vmatprep.subr.mxu0 0.0
        %4608 = vmatpush1.xpose.msra.mxu0 %v4554
        %4609 = vmatprep.subr.mxu0 0.0
        %4610 = vmatpush2.xpose.msra.mxu0 0.0
        %4611 = vmatprep.subr.mxu0 0.0
        %4612 = vmatpush2.xpose.msra.mxu0 0.0
        %4613 = vmatprep.subr.mxu0 0.0
        %4614 = vmatpush2.xpose.msra.mxu0 0.0
        %4615 = vmatprep.subr.mxu0 0.0
        %4616 = vmatpush2.xpose.msra.mxu0 0.0
        %4617 = vmatprep.subr.mxu0 0.0
        %4618 = vmatpush2.xpose.msra.mxu0 0.0
        %4619 = vmatprep.subr.mxu0 0.0
        %4620 = vmatpush2.xpose.msra.mxu0 0.0
        %4621 = vmatprep.subr.mxu0 0.0
        %4622 = vmatpush2.xpose.msra.mxu0 0.0
        %4623 = vmatprep.subr.mxu0 0.0
        %4624 = vmatpush2.xpose.msra.mxu0 0.0
        %4625 = vmatprep.subr.mxu0 0.0
        %4626 = vmatpush2.xpose.msra.mxu0 0.0
        %4627 = vmatprep.subr.mxu0 0.0
        %4628 = vmatpush2.xpose.msra.mxu0 0.0
        %4629 = vmatprep.subr.mxu0 0.0
        %4630 = vmatpush2.xpose.msra.mxu0 0.0
        %4631 = vmatprep.subr.mxu0 0.0
        %4632 = vmatpush2.xpose.msra.mxu0 0.0
        %4633 = vmatprep.subr.mxu0 0.0
        %4634 = vmatpush2.xpose.msra.mxu0 0.0
        %4635 = vmatprep.subr.mxu0 0.0
        %4636 = vmatpush2.xpose.msra.mxu0 0.0
        %4637 = vmatprep.subr.mxu0 0.0
        %4638 = vmatpush2.xpose.msra.mxu0 0.0
        %4639 = vmatprep.subr.mxu0 0.0
        %4640 = vmatpush2.xpose.msra.mxu0 0.0
        %4641 = vmatprep.mubr.f32.mxu0 0.0
        %4642 = vmatmul.mubr.f32.gmra.mxu0 %v4530
        %v4643 = vpop.f32.mrf.mxu0
        %v4644 = vadd.f32 %v4176, %v4643
        %v4645 = vpop.f32.mrf.mxu0
        %4646 = vmatprep.mubr.f32.mxu0 0.0
        %4647 = vmatmul.mubr.f32.gmra.mxu0 %v4533
        %v4648 = vpop.f32.mrf.mxu0
        %v4649 = vadd.f32 %v4177, %v4648
        %v4650 = vpop.f32.mrf.mxu0
        %4651 = vmatprep.mubr.f32.mxu0 0.0
        %4652 = vmatmul.mubr.f32.gmra.mxu0 %v4536
        %v4653 = vpop.f32.mrf.mxu0
        %v4654 = vadd.f32 %v4178, %v4653
        %v4655 = vpop.f32.mrf.mxu0
        %4656 = vmatprep.mubr.f32.mxu0 0.0
        %4657 = vmatmul.mubr.f32.gmra.mxu0 %v4539
        %v4658 = vpop.f32.mrf.mxu0
        %v4659 = vadd.f32 %v4179, %v4658
        %v4660 = vpop.f32.mrf.mxu0
        %4661 = vmatprep.mubr.f32.mxu0 0.0
        %4662 = vmatmul.mubr.f32.gmra.mxu0 %v4542
        %v4663 = vpop.f32.mrf.mxu0
        %v4664 = vadd.f32 %v4180, %v4663
        %v4665 = vpop.f32.mrf.mxu0
        %4666 = vmatprep.mubr.f32.mxu0 0.0
        %4667 = vmatmul.mubr.f32.gmra.mxu0 %v4545
        %v4668 = vpop.f32.mrf.mxu0
        %v4669 = vadd.f32 %v4181, %v4668
        %v4670 = vpop.f32.mrf.mxu0
        %4671 = vmatprep.mubr.f32.mxu0 0.0
        %4672 = vmatmul.mubr.f32.gmra.mxu0 %v4548
        %v4673 = vpop.f32.mrf.mxu0
        %v4674 = vadd.f32 %v4182, %v4673
        %v4675 = vpop.f32.mrf.mxu0
        %4676 = vmatprep.mubr.f32.mxu0 0.0
        %4677 = vmatmul.mubr.f32.gmra.mxu0 %v4551
        %v4678 = vpop.f32.mrf.mxu0
        %v4679 = vadd.f32 %v4183, %v4678
        %v4680 = vpop.f32.mrf.mxu0
        %4681 = vdwg.mxu0
        %v4682 = vsel %vm1331, %v4644, -inf
        %4683 = vmax.xlane.f32.xlu0 %v4682
        %v4684 = vpop.xlane.xlu0 %4683
        %v4685 = vsel %vm1331, %v4649, -inf
        %4686 = vmax.xlane.f32.xlu0 %v4685
        %v4687 = vpop.xlane.xlu0 %4686
        %v4688 = vsel %vm1331, %v4654, -inf
        %4689 = vmax.xlane.f32.xlu0 %v4688
        %v4690 = vpop.xlane.xlu0 %4689
        %v4691 = vsel %vm1331, %v4659, -inf
        %4692 = vmax.xlane.f32.xlu0 %v4691
        %v4693 = vpop.xlane.xlu0 %4692
        %v4694 = vsel %vm1331, %v4664, -inf
        %4695 = vmax.xlane.f32.xlu0 %v4694
        %v4696 = vpop.xlane.xlu0 %4695
        %v4697 = vsel %vm1331, %v4669, -inf
        %4698 = vmax.xlane.f32.xlu0 %v4697
        %v4699 = vpop.xlane.xlu0 %4698
        %v4700 = vsel %vm1331, %v4674, -inf
        %4701 = vmax.xlane.f32.xlu0 %v4700
        %v4702 = vpop.xlane.xlu0 %4701
        %v4703 = vsel %vm1331, %v4679, -inf
        %4704 = vmax.xlane.f32.xlu0 %v4703
        %v4705 = vpop.xlane.xlu0 %4704
        %v4706 = vsub.f32 %v4644, %v4684
        %v4707 = vsub.f32 %v4649, %v4687
        %v4708 = vsub.f32 %v4654, %v4690
        %v4709 = vsub.f32 %v4659, %v4693
        %v4710 = vsub.f32 %v4664, %v4696
        %v4711 = vsub.f32 %v4669, %v4699
        %v4712 = vsub.f32 %v4674, %v4702
        %v4713 = vsub.f32 %v4679, %v4705
        %v4714 = vmul.f32 %v4706, 1.442695
        %v4715 = vpow.pop %v4714
        %v4716 = vmul.f32 %v4707, 1.442695
        %v4717 = vpow.pop %v4716
        %v4718 = vmul.f32 %v4708, 1.442695
        %v4719 = vpow.pop %v4718
        %v4720 = vmul.f32 %v4709, 1.442695
        %v4721 = vpow.pop %v4720
        %v4722 = vmul.f32 %v4710, 1.442695
        %v4723 = vpow.pop %v4722
        %v4724 = vmul.f32 %v4711, 1.442695
        %v4725 = vpow.pop %v4724
        %v4726 = vmul.f32 %v4712, 1.442695
        %v4727 = vpow.pop %v4726
        %v4728 = vmul.f32 %v4713, 1.442695
        %v4729 = vpow.pop %v4728
        %v4730 = vsel %vm1331, %v4715, 0.0
        %4731 = vadd.xlane.f32.xlu0 %v4730
        %v4732 = vpop.xlane.xlu0 %4731
        %v4733 = vsel %vm1331, %v4717, 0.0
        %4734 = vadd.xlane.f32.xlu0 %v4733
        %v4735 = vpop.xlane.xlu0 %4734
        %v4736 = vsel %vm1331, %v4719, 0.0
        %4737 = vadd.xlane.f32.xlu0 %v4736
        %v4738 = vpop.xlane.xlu0 %4737
        %v4739 = vsel %vm1331, %v4721, 0.0
        %4740 = vadd.xlane.f32.xlu0 %v4739
        %v4741 = vpop.xlane.xlu0 %4740
        %v4742 = vsel %vm1331, %v4723, 0.0
        %4743 = vadd.xlane.f32.xlu0 %v4742
        %v4744 = vpop.xlane.xlu0 %4743
        %v4745 = vsel %vm1331, %v4725, 0.0
        %4746 = vadd.xlane.f32.xlu0 %v4745
        %v4747 = vpop.xlane.xlu0 %4746
        %v4748 = vsel %vm1331, %v4727, 0.0
        %4749 = vadd.xlane.f32.xlu0 %v4748
        %v4750 = vpop.xlane.xlu0 %4749
        %v4751 = vsel %vm1331, %v4729, 0.0
        %4752 = vadd.xlane.f32.xlu0 %v4751
        %v4753 = vpop.xlane.xlu0 %4752
        %v4754 = vrcp.pop %v4732
        %v4755 = vrcp.pop %v4735
        %v4756 = vrcp.pop %v4738
        %v4757 = vrcp.pop %v4741
        %v4758 = vrcp.pop %v4744
        %v4759 = vrcp.pop %v4747
        %v4760 = vrcp.pop %v4750
        %v4761 = vrcp.pop %v4753
        %v4762 = vmul.f32 %v4715, %v4754
        %v4763 = vmul.f32 %v4717, %v4755
        %v4764 = vmul.f32 %v4719, %v4756
        %v4765 = vmul.f32 %v4721, %v4757
        %v4766 = vmul.f32 %v4723, %v4758
        %v4767 = vmul.f32 %v4725, %v4759
        %v4768 = vmul.f32 %v4727, %v4760
        %v4769 = vmul.f32 %v4729, %v4761
        %v4771 = vsel %vm1331, %v4762, 0
        %v4774 = vsel %vm1331, %v4763, 0
        %v4777 = vsel %vm1331, %v4764, 0
        %v4780 = vsel %vm1331, %v4765, 0
        %v4783 = vsel %vm1331, %v4766, 0
        %v4786 = vsel %vm1331, %v4767, 0
        %v4789 = vsel %vm1331, %v4768, 0
        %v4792 = vsel %vm1331, %v4769, 0
        %4794 = vmatprep.subr.mxu0 0.0
        %4795 = vmatpush1.msra.mxu0 0.0
        %4796 = vmatprep.subr.mxu0 0.0
        %4797 = vmatpush1.msra.mxu0 0.0
        %4798 = vmatprep.subr.mxu0 0.0
        %4799 = vmatpush1.msra.mxu0 0.0
        %4800 = vmatprep.subr.mxu0 0.0
        %4801 = vmatpush1.msra.mxu0 0.0
        %4802 = vmatprep.subr.mxu0 0.0
        %4803 = vmatpush1.msra.mxu0 0.0
        %4804 = vmatprep.subr.mxu0 0.0
        %4805 = vmatpush1.msra.mxu0 0.0
        %4806 = vmatprep.subr.mxu0 0.0
        %4807 = vmatpush1.msra.mxu0 0.0
        %4808 = vmatprep.subr.mxu0 0.0
        %4809 = vmatpush1.msra.mxu0 0.0
        %4810 = vmatprep.subr.mxu0 0.0
        %4811 = vmatpush1.msra.mxu0 %v4526
        %4812 = vmatprep.subr.mxu0 0.0
        %4813 = vmatpush1.msra.mxu0 %v4521
        %4814 = vmatprep.subr.mxu0 0.0
        %4815 = vmatpush1.msra.mxu0 %v4516
        %4816 = vmatprep.subr.mxu0 0.0
        %4817 = vmatpush1.msra.mxu0 %v4511
        %4818 = vmatprep.subr.mxu0 0.0
        %4819 = vmatpush1.msra.mxu0 %v4506
        %4820 = vmatprep.subr.mxu0 0.0
        %4821 = vmatpush1.msra.mxu0 %v4501
        %4822 = vmatprep.subr.mxu0 0.0
        %4823 = vmatpush1.msra.mxu0 %v4496
        %4824 = vmatprep.subr.mxu0 0.0
        %4825 = vmatpush1.msra.mxu0 %v4491
        %4826 = vmatprep.subr.mxu0 0.0
        %4827 = vmatpush2.msra.mxu0 0.0
        %4828 = vmatprep.subr.mxu0 0.0
        %4829 = vmatpush2.msra.mxu0 0.0
        %4830 = vmatprep.subr.mxu0 0.0
        %4831 = vmatpush2.msra.mxu0 0.0
        %4832 = vmatprep.subr.mxu0 0.0
        %4833 = vmatpush2.msra.mxu0 0.0
        %4834 = vmatprep.subr.mxu0 0.0
        %4835 = vmatpush2.msra.mxu0 0.0
        %4836 = vmatprep.subr.mxu0 0.0
        %4837 = vmatpush2.msra.mxu0 0.0
        %4838 = vmatprep.subr.mxu0 0.0
        %4839 = vmatpush2.msra.mxu0 0.0
        %4840 = vmatprep.subr.mxu0 0.0
        %4841 = vmatpush2.msra.mxu0 0.0
        %4842 = vmatprep.subr.mxu0 0.0
        %4843 = vmatpush2.msra.mxu0 0.0
        %4844 = vmatprep.subr.mxu0 0.0
        %4845 = vmatpush2.msra.mxu0 0.0
        %4846 = vmatprep.subr.mxu0 0.0
        %4847 = vmatpush2.msra.mxu0 0.0
        %4848 = vmatprep.subr.mxu0 0.0
        %4849 = vmatpush2.msra.mxu0 0.0
        %4850 = vmatprep.subr.mxu0 0.0
        %4851 = vmatpush2.msra.mxu0 0.0
        %4852 = vmatprep.subr.mxu0 0.0
        %4853 = vmatpush2.msra.mxu0 0.0
        %4854 = vmatprep.subr.mxu0 0.0
        %4855 = vmatpush2.msra.mxu0 0.0
        %4856 = vmatprep.subr.mxu0 0.0
        %4857 = vmatpush2.msra.mxu0 0.0
        %4858 = vmatprep.mubr.f32.mxu0 0.0
        %4859 = vmatmul.mubr.f32.gmra.mxu0 %v4771
        %v4860 = vpop.f32.mrf.mxu0
        %v4861 = vadd.f32 0.0, %v4860
        %v4862 = vpop.f32.mrf.mxu0
        %4863 = vmatprep.mubr.f32.mxu0 0.0
        %4864 = vmatmul.mubr.f32.gmra.mxu0 %v4774
        %v4865 = vpop.f32.mrf.mxu0
        %v4866 = vadd.f32 0.0, %v4865
        %v4867 = vpop.f32.mrf.mxu0
        %4868 = vmatprep.mubr.f32.mxu0 0.0
        %4869 = vmatmul.mubr.f32.gmra.mxu0 %v4777
        %v4870 = vpop.f32.mrf.mxu0
        %v4871 = vadd.f32 0.0, %v4870
        %v4872 = vpop.f32.mrf.mxu0
        %4873 = vmatprep.mubr.f32.mxu0 0.0
        %4874 = vmatmul.mubr.f32.gmra.mxu0 %v4780
        %v4875 = vpop.f32.mrf.mxu0
        %v4876 = vadd.f32 0.0, %v4875
        %v4877 = vpop.f32.mrf.mxu0
        %4878 = vmatprep.mubr.f32.mxu0 0.0
        %4879 = vmatmul.mubr.f32.gmra.mxu0 %v4783
        %v4880 = vpop.f32.mrf.mxu0
        %v4881 = vadd.f32 0.0, %v4880
        %v4882 = vpop.f32.mrf.mxu0
        %4883 = vmatprep.mubr.f32.mxu0 0.0
        %4884 = vmatmul.mubr.f32.gmra.mxu0 %v4786
        %v4885 = vpop.f32.mrf.mxu0
        %v4886 = vadd.f32 0.0, %v4885
        %v4887 = vpop.f32.mrf.mxu0
        %4888 = vmatprep.mubr.f32.mxu0 0.0
        %4889 = vmatmul.mubr.f32.gmra.mxu0 %v4789
        %v4890 = vpop.f32.mrf.mxu0
        %v4891 = vadd.f32 0.0, %v4890
        %v4892 = vpop.f32.mrf.mxu0
        %4893 = vmatprep.mubr.f32.mxu0 0.0
        %4894 = vmatmul.mubr.f32.gmra.mxu0 %v4792
        %v4895 = vpop.f32.mrf.mxu0
        %v4896 = vadd.f32 0.0, %v4895
        %v4897 = vpop.f32.mrf.mxu0
        %4898 = vdwg.mxu0
        %v4899 = vld [vmem:[%s49] sm:$0xff]
        %s4900 = scalar_lea.vmem %s43, 16
        %v4901 = vld [vmem:[%s4900] sm:$0xff]
        %v4902 = vld [vmem:[%s4900 + $0x8] sm:$0xff]
        %4903 = vmatprep.subr.mxu0 0.0
        %4904 = vmatpush1.msra.mxu0 0.0
        %4905 = vmatprep.subr.mxu0 0.0
        %4906 = vmatpush1.msra.mxu0 0.0
        %4907 = vmatprep.subr.mxu0 0.0
        %4908 = vmatpush1.msra.mxu0 0.0
        %4909 = vmatprep.subr.mxu0 0.0
        %4910 = vmatpush1.msra.mxu0 0.0
        %4911 = vmatprep.subr.mxu0 0.0
        %4912 = vmatpush1.msra.mxu0 0.0
        %4913 = vmatprep.subr.mxu0 0.0
        %4914 = vmatpush1.msra.mxu0 0.0
        %4915 = vmatprep.subr.mxu0 0.0
        %4916 = vmatpush1.msra.mxu0 0.0
        %4917 = vmatprep.subr.mxu0 0.0
        %4918 = vmatpush1.msra.mxu0 0.0
        %4919 = vmatprep.subr.mxu0 0.0
        %4920 = vmatpush1.msra.mxu0 0.0
        %4921 = vmatprep.subr.mxu0 0.0
        %4922 = vmatpush1.msra.mxu0 0.0
        %4923 = vmatprep.subr.mxu0 0.0
        %4924 = vmatpush1.msra.mxu0 0.0
        %4925 = vmatprep.subr.mxu0 0.0
        %4926 = vmatpush1.msra.mxu0 0.0
        %4927 = vmatprep.subr.mxu0 0.0
        %4928 = vmatpush1.msra.mxu0 0.0
        %4929 = vmatprep.subr.mxu0 0.0
        %4930 = vmatpush1.msra.mxu0 0.0
        %4931 = vmatprep.subr.mxu0 0.0
        %4932 = vmatpush1.msra.mxu0 %v4902
        %4933 = vmatprep.subr.mxu0 0.0
        %4934 = vmatpush1.msra.mxu0 %v4901
        %4935 = vmatprep.subr.mxu0 0.0
        %4936 = vmatpush2.msra.mxu0 0.0
        %4937 = vmatprep.subr.mxu0 0.0
        %4938 = vmatpush2.msra.mxu0 0.0
        %4939 = vmatprep.subr.mxu0 0.0
        %4940 = vmatpush2.msra.mxu0 0.0
        %4941 = vmatprep.subr.mxu0 0.0
        %4942 = vmatpush2.msra.mxu0 0.0
        %4943 = vmatprep.subr.mxu0 0.0
        %4944 = vmatpush2.msra.mxu0 0.0
        %4945 = vmatprep.subr.mxu0 0.0
        %4946 = vmatpush2.msra.mxu0 0.0
        %4947 = vmatprep.subr.mxu0 0.0
        %4948 = vmatpush2.msra.mxu0 0.0
        %4949 = vmatprep.subr.mxu0 0.0
        %4950 = vmatpush2.msra.mxu0 0.0
        %4951 = vmatprep.subr.mxu0 0.0
        %4952 = vmatpush2.msra.mxu0 0.0
        %4953 = vmatprep.subr.mxu0 0.0
        %4954 = vmatpush2.msra.mxu0 0.0
        %4955 = vmatprep.subr.mxu0 0.0
        %4956 = vmatpush2.msra.mxu0 0.0
        %4957 = vmatprep.subr.mxu0 0.0
        %4958 = vmatpush2.msra.mxu0 0.0
        %4959 = vmatprep.subr.mxu0 0.0
        %4960 = vmatpush2.msra.mxu0 0.0
        %4961 = vmatprep.subr.mxu0 0.0
        %4962 = vmatpush2.msra.mxu0 0.0
        %4963 = vmatprep.subr.mxu0 0.0
        %4964 = vmatpush2.msra.mxu0 0.0
        %4965 = vmatprep.subr.mxu0 0.0
        %4966 = vmatpush2.msra.mxu0 0.0
        %4967 = vmatprep.mubr.f32.mxu0 0.0
        %4968 = vmatmul.mubr.f32.gmra.mxu0 %v4187
        %v4969 = vpop.f32.mrf.mxu0
        %v4970 = vadd.f32 0.0, %v4969
        %v4971 = vpop.f32.mrf.mxu0
        %4972 = vmatprep.mubr.f32.mxu0 0.0
        %4973 = vmatmul.mubr.f32.gmra.mxu0 %v4190
        %v4974 = vpop.f32.mrf.mxu0
        %v4975 = vadd.f32 0.0, %v4974
        %v4976 = vpop.f32.mrf.mxu0
        %4977 = vmatprep.mubr.f32.mxu0 0.0
        %4978 = vmatmul.mubr.f32.gmra.mxu0 %v4193
        %v4979 = vpop.f32.mrf.mxu0
        %v4980 = vadd.f32 0.0, %v4979
        %v4981 = vpop.f32.mrf.mxu0
        %4982 = vmatprep.mubr.f32.mxu0 0.0
        %4983 = vmatmul.mubr.f32.gmra.mxu0 %v4196
        %v4984 = vpop.f32.mrf.mxu0
        %v4985 = vadd.f32 0.0, %v4984
        %v4986 = vpop.f32.mrf.mxu0
        %4987 = vmatprep.mubr.f32.mxu0 0.0
        %4988 = vmatmul.mubr.f32.gmra.mxu0 %v4199
        %v4989 = vpop.f32.mrf.mxu0
        %v4990 = vadd.f32 0.0, %v4989
        %v4991 = vpop.f32.mrf.mxu0
        %4992 = vmatprep.mubr.f32.mxu0 0.0
        %4993 = vmatmul.mubr.f32.gmra.mxu0 %v4202
        %v4994 = vpop.f32.mrf.mxu0
        %v4995 = vadd.f32 0.0, %v4994
        %v4996 = vpop.f32.mrf.mxu0
        %4997 = vmatprep.mubr.f32.mxu0 0.0
        %4998 = vmatmul.mubr.f32.gmra.mxu0 %v4205
        %v4999 = vpop.f32.mrf.mxu0
        %v5000 = vadd.f32 0.0, %v4999
        %v5001 = vpop.f32.mrf.mxu0
        %5002 = vmatprep.mubr.f32.mxu0 0.0
        %5003 = vmatmul.mubr.f32.gmra.mxu0 %v4208
        %v5004 = vpop.f32.mrf.mxu0
        %v5005 = vadd.f32 0.0, %v5004
        %v5006 = vpop.f32.mrf.mxu0
        %5007 = vdwg.mxu0
        %s5008 = scalar_lea.vmem %s45, 16
        %v5009 = vld [vmem:[%s5008] sm:$0xff]
        %v5010 = vld [vmem:[%s5008 + $0x8] sm:$0xff]
        %5011 = vmatprep.subr.mxu0 0.0
        %5012 = vmatpush1.msra.mxu0 0.0
        %5013 = vmatprep.subr.mxu0 0.0
        %5014 = vmatpush1.msra.mxu0 0.0
        %5015 = vmatprep.subr.mxu0 0.0
        %5016 = vmatpush1.msra.mxu0 0.0
        %5017 = vmatprep.subr.mxu0 0.0
        %5018 = vmatpush1.msra.mxu0 0.0
        %5019 = vmatprep.subr.mxu0 0.0
        %5020 = vmatpush1.msra.mxu0 0.0
        %5021 = vmatprep.subr.mxu0 0.0
        %5022 = vmatpush1.msra.mxu0 0.0
        %5023 = vmatprep.subr.mxu0 0.0
        %5024 = vmatpush1.msra.mxu0 0.0
        %5025 = vmatprep.subr.mxu0 0.0
        %5026 = vmatpush1.msra.mxu0 0.0
        %5027 = vmatprep.subr.mxu0 0.0
        %5028 = vmatpush1.msra.mxu0 0.0
        %5029 = vmatprep.subr.mxu0 0.0
        %5030 = vmatpush1.msra.mxu0 0.0
        %5031 = vmatprep.subr.mxu0 0.0
        %5032 = vmatpush1.msra.mxu0 0.0
        %5033 = vmatprep.subr.mxu0 0.0
        %5034 = vmatpush1.msra.mxu0 0.0
        %5035 = vmatprep.subr.mxu0 0.0
        %5036 = vmatpush1.msra.mxu0 0.0
        %5037 = vmatprep.subr.mxu0 0.0
        %5038 = vmatpush1.msra.mxu0 0.0
        %5039 = vmatprep.subr.mxu0 0.0
        %5040 = vmatpush1.msra.mxu0 %v5010
        %5041 = vmatprep.subr.mxu0 0.0
        %5042 = vmatpush1.msra.mxu0 %v5009
        %5043 = vmatprep.subr.mxu0 0.0
        %5044 = vmatpush2.msra.mxu0 0.0
        %5045 = vmatprep.subr.mxu0 0.0
        %5046 = vmatpush2.msra.mxu0 0.0
        %5047 = vmatprep.subr.mxu0 0.0
        %5048 = vmatpush2.msra.mxu0 0.0
        %5049 = vmatprep.subr.mxu0 0.0
        %5050 = vmatpush2.msra.mxu0 0.0
        %5051 = vmatprep.subr.mxu0 0.0
        %5052 = vmatpush2.msra.mxu0 0.0
        %5053 = vmatprep.subr.mxu0 0.0
        %5054 = vmatpush2.msra.mxu0 0.0
        %5055 = vmatprep.subr.mxu0 0.0
        %5056 = vmatpush2.msra.mxu0 0.0
        %5057 = vmatprep.subr.mxu0 0.0
        %5058 = vmatpush2.msra.mxu0 0.0
        %5059 = vmatprep.subr.mxu0 0.0
        %5060 = vmatpush2.msra.mxu0 0.0
        %5061 = vmatprep.subr.mxu0 0.0
        %5062 = vmatpush2.msra.mxu0 0.0
        %5063 = vmatprep.subr.mxu0 0.0
        %5064 = vmatpush2.msra.mxu0 0.0
        %5065 = vmatprep.subr.mxu0 0.0
        %5066 = vmatpush2.msra.mxu0 0.0
        %5067 = vmatprep.subr.mxu0 0.0
        %5068 = vmatpush2.msra.mxu0 0.0
        %5069 = vmatprep.subr.mxu0 0.0
        %5070 = vmatpush2.msra.mxu0 0.0
        %5071 = vmatprep.subr.mxu0 0.0
        %5072 = vmatpush2.msra.mxu0 0.0
        %5073 = vmatprep.subr.mxu0 0.0
        %5074 = vmatpush2.msra.mxu0 0.0
        %5075 = vmatprep.mubr.f32.mxu0 0.0
        %5076 = vmatmul.mubr.f32.gmra.mxu0 %v4187
        %v5077 = vpop.f32.mrf.mxu0
        %v5078 = vadd.f32 0.0, %v5077
        %v5079 = vpop.f32.mrf.mxu0
        %5080 = vmatprep.mubr.f32.mxu0 0.0
        %5081 = vmatmul.mubr.f32.gmra.mxu0 %v4190
        %v5082 = vpop.f32.mrf.mxu0
        %v5083 = vadd.f32 0.0, %v5082
        %v5084 = vpop.f32.mrf.mxu0
        %5085 = vmatprep.mubr.f32.mxu0 0.0
        %5086 = vmatmul.mubr.f32.gmra.mxu0 %v4193
        %v5087 = vpop.f32.mrf.mxu0
        %v5088 = vadd.f32 0.0, %v5087
        %v5089 = vpop.f32.mrf.mxu0
        %5090 = vmatprep.mubr.f32.mxu0 0.0
        %5091 = vmatmul.mubr.f32.gmra.mxu0 %v4196
        %v5092 = vpop.f32.mrf.mxu0
        %v5093 = vadd.f32 0.0, %v5092
        %v5094 = vpop.f32.mrf.mxu0
        %5095 = vmatprep.mubr.f32.mxu0 0.0
        %5096 = vmatmul.mubr.f32.gmra.mxu0 %v4199
        %v5097 = vpop.f32.mrf.mxu0
        %v5098 = vadd.f32 0.0, %v5097
        %v5099 = vpop.f32.mrf.mxu0
        %5100 = vmatprep.mubr.f32.mxu0 0.0
        %5101 = vmatmul.mubr.f32.gmra.mxu0 %v4202
        %v5102 = vpop.f32.mrf.mxu0
        %v5103 = vadd.f32 0.0, %v5102
        %v5104 = vpop.f32.mrf.mxu0
        %5105 = vmatprep.mubr.f32.mxu0 0.0
        %5106 = vmatmul.mubr.f32.gmra.mxu0 %v4205
        %v5107 = vpop.f32.mrf.mxu0
        %v5108 = vadd.f32 0.0, %v5107
        %v5109 = vpop.f32.mrf.mxu0
        %5110 = vmatprep.mubr.f32.mxu0 0.0
        %5111 = vmatmul.mubr.f32.gmra.mxu0 %v4208
        %v5112 = vpop.f32.mrf.mxu0
        %v5113 = vadd.f32 0.0, %v5112
        %v5114 = vpop.f32.mrf.mxu0
        %5115 = vdwg.mxu0
        %s5116 = scalar_lea.vmem %s47, 16
        %v5117 = vld [vmem:[%s5116] sm:$0xff]
        %v5118 = vld [vmem:[%s5116 + $0x8] sm:$0xff]
        %5119 = vmatprep.subr.mxu0 0.0
        %5120 = vmatpush1.msra.mxu0 0.0
        %5121 = vmatprep.subr.mxu0 0.0
        %5122 = vmatpush1.msra.mxu0 0.0
        %5123 = vmatprep.subr.mxu0 0.0
        %5124 = vmatpush1.msra.mxu0 0.0
        %5125 = vmatprep.subr.mxu0 0.0
        %5126 = vmatpush1.msra.mxu0 0.0
        %5127 = vmatprep.subr.mxu0 0.0
        %5128 = vmatpush1.msra.mxu0 0.0
        %5129 = vmatprep.subr.mxu0 0.0
        %5130 = vmatpush1.msra.mxu0 0.0
        %5131 = vmatprep.subr.mxu0 0.0
        %5132 = vmatpush1.msra.mxu0 0.0
        %5133 = vmatprep.subr.mxu0 0.0
        %5134 = vmatpush1.msra.mxu0 0.0
        %5135 = vmatprep.subr.mxu0 0.0
        %5136 = vmatpush1.msra.mxu0 0.0
        %5137 = vmatprep.subr.mxu0 0.0
        %5138 = vmatpush1.msra.mxu0 0.0
        %5139 = vmatprep.subr.mxu0 0.0
        %5140 = vmatpush1.msra.mxu0 0.0
        %5141 = vmatprep.subr.mxu0 0.0
        %5142 = vmatpush1.msra.mxu0 0.0
        %5143 = vmatprep.subr.mxu0 0.0
        %5144 = vmatpush1.msra.mxu0 0.0
        %5145 = vmatprep.subr.mxu0 0.0
        %5146 = vmatpush1.msra.mxu0 0.0
        %5147 = vmatprep.subr.mxu0 0.0
        %5148 = vmatpush1.msra.mxu0 %v5118
        %5149 = vmatprep.subr.mxu0 0.0
        %5150 = vmatpush1.msra.mxu0 %v5117
        %5151 = vmatprep.subr.mxu0 0.0
        %5152 = vmatpush2.msra.mxu0 0.0
        %5153 = vmatprep.subr.mxu0 0.0
        %5154 = vmatpush2.msra.mxu0 0.0
        %5155 = vmatprep.subr.mxu0 0.0
        %5156 = vmatpush2.msra.mxu0 0.0
        %5157 = vmatprep.subr.mxu0 0.0
        %5158 = vmatpush2.msra.mxu0 0.0
        %5159 = vmatprep.subr.mxu0 0.0
        %5160 = vmatpush2.msra.mxu0 0.0
        %5161 = vmatprep.subr.mxu0 0.0
        %5162 = vmatpush2.msra.mxu0 0.0
        %5163 = vmatprep.subr.mxu0 0.0
        %5164 = vmatpush2.msra.mxu0 0.0
        %5165 = vmatprep.subr.mxu0 0.0
        %5166 = vmatpush2.msra.mxu0 0.0
        %5167 = vmatprep.subr.mxu0 0.0
        %5168 = vmatpush2.msra.mxu0 0.0
        %5169 = vmatprep.subr.mxu0 0.0
        %5170 = vmatpush2.msra.mxu0 0.0
        %5171 = vmatprep.subr.mxu0 0.0
        %5172 = vmatpush2.msra.mxu0 0.0
        %5173 = vmatprep.subr.mxu0 0.0
        %5174 = vmatpush2.msra.mxu0 0.0
        %5175 = vmatprep.subr.mxu0 0.0
        %5176 = vmatpush2.msra.mxu0 0.0
        %5177 = vmatprep.subr.mxu0 0.0
        %5178 = vmatpush2.msra.mxu0 0.0
        %5179 = vmatprep.subr.mxu0 0.0
        %5180 = vmatpush2.msra.mxu0 0.0
        %5181 = vmatprep.subr.mxu0 0.0
        %5182 = vmatpush2.msra.mxu0 0.0
        %5183 = vmatprep.mubr.f32.mxu0 0.0
        %5184 = vmatmul.mubr.f32.gmra.mxu0 %v4187
        %v5185 = vpop.f32.mrf.mxu0
        %v5186 = vadd.f32 0.0, %v5185
        %v5187 = vpop.f32.mrf.mxu0
        %5188 = vmatprep.mubr.f32.mxu0 0.0
        %5189 = vmatmul.mubr.f32.gmra.mxu0 %v4190
        %v5190 = vpop.f32.mrf.mxu0
        %v5191 = vadd.f32 0.0, %v5190
        %v5192 = vpop.f32.mrf.mxu0
        %5193 = vmatprep.mubr.f32.mxu0 0.0
        %5194 = vmatmul.mubr.f32.gmra.mxu0 %v4193
        %v5195 = vpop.f32.mrf.mxu0
        %v5196 = vadd.f32 0.0, %v5195
        %v5197 = vpop.f32.mrf.mxu0
        %5198 = vmatprep.mubr.f32.mxu0 0.0
        %5199 = vmatmul.mubr.f32.gmra.mxu0 %v4196
        %v5200 = vpop.f32.mrf.mxu0
        %v5201 = vadd.f32 0.0, %v5200
        %v5202 = vpop.f32.mrf.mxu0
        %5203 = vmatprep.mubr.f32.mxu0 0.0
        %5204 = vmatmul.mubr.f32.gmra.mxu0 %v4199
        %v5205 = vpop.f32.mrf.mxu0
        %v5206 = vadd.f32 0.0, %v5205
        %v5207 = vpop.f32.mrf.mxu0
        %5208 = vmatprep.mubr.f32.mxu0 0.0
        %5209 = vmatmul.mubr.f32.gmra.mxu0 %v4202
        %v5210 = vpop.f32.mrf.mxu0
        %v5211 = vadd.f32 0.0, %v5210
        %v5212 = vpop.f32.mrf.mxu0
        %5213 = vmatprep.mubr.f32.mxu0 0.0
        %5214 = vmatmul.mubr.f32.gmra.mxu0 %v4205
        %v5215 = vpop.f32.mrf.mxu0
        %v5216 = vadd.f32 0.0, %v5215
        %v5217 = vpop.f32.mrf.mxu0
        %5218 = vmatprep.mubr.f32.mxu0 0.0
        %5219 = vmatmul.mubr.f32.gmra.mxu0 %v4208
        %v5220 = vpop.f32.mrf.mxu0
        %v5221 = vadd.f32 0.0, %v5220
        %v5222 = vpop.f32.mrf.mxu0
        %5223 = vdwg.mxu0
        %v5225 = vsel %vm1814, %v4970, 0
        %v5228 = vsel %vm1814, %v4975, 0
        %v5231 = vsel %vm1814, %v4980, 0
        %v5234 = vsel %vm1814, %v4985, 0
        %v5237 = vsel %vm1814, %v4990, 0
        %v5240 = vsel %vm1814, %v4995, 0
        %v5243 = vsel %vm1814, %v5000, 0
        %v5246 = vsel %vm1814, %v5005, 0
        %v5249 = vsel %vm1814, %v5078, 0
        %v5252 = vsel %vm1814, %v5083, 0
        %v5255 = vsel %vm1814, %v5088, 0
        %v5258 = vsel %vm1814, %v5093, 0
        %v5261 = vsel %vm1814, %v5098, 0
        %v5264 = vsel %vm1814, %v5103, 0
        %v5267 = vsel %vm1814, %v5108, 0
        %v5270 = vsel %vm1814, %v5113, 0
        %5272 = vmatprep.subr.mxu0 0.0
        %5273 = vmatpush1.xpose.msra.mxu0 0.0
        %5274 = vmatprep.subr.mxu0 0.0
        %5275 = vmatpush1.xpose.msra.mxu0 0.0
        %5276 = vmatprep.subr.mxu0 0.0
        %5277 = vmatpush1.xpose.msra.mxu0 0.0
        %5278 = vmatprep.subr.mxu0 0.0
        %5279 = vmatpush1.xpose.msra.mxu0 0.0
        %5280 = vmatprep.subr.mxu0 0.0
        %5281 = vmatpush1.xpose.msra.mxu0 0.0
        %5282 = vmatprep.subr.mxu0 0.0
        %5283 = vmatpush1.xpose.msra.mxu0 0.0
        %5284 = vmatprep.subr.mxu0 0.0
        %5285 = vmatpush1.xpose.msra.mxu0 0.0
        %5286 = vmatprep.subr.mxu0 0.0
        %5287 = vmatpush1.xpose.msra.mxu0 0.0
        %5288 = vmatprep.subr.mxu0 0.0
        %5289 = vmatpush1.xpose.msra.mxu0 %v5270
        %5290 = vmatprep.subr.mxu0 0.0
        %5291 = vmatpush1.xpose.msra.mxu0 %v5267
        %5292 = vmatprep.subr.mxu0 0.0
        %5293 = vmatpush1.xpose.msra.mxu0 %v5264
        %5294 = vmatprep.subr.mxu0 0.0
        %5295 = vmatpush1.xpose.msra.mxu0 %v5261
        %5296 = vmatprep.subr.mxu0 0.0
        %5297 = vmatpush1.xpose.msra.mxu0 %v5258
        %5298 = vmatprep.subr.mxu0 0.0
        %5299 = vmatpush1.xpose.msra.mxu0 %v5255
        %5300 = vmatprep.subr.mxu0 0.0
        %5301 = vmatpush1.xpose.msra.mxu0 %v5252
        %5302 = vmatprep.subr.mxu0 0.0
        %5303 = vmatpush1.xpose.msra.mxu0 %v5249
        %5304 = vmatprep.subr.mxu0 0.0
        %5305 = vmatpush2.xpose.msra.mxu0 0.0
        %5306 = vmatprep.subr.mxu0 0.0
        %5307 = vmatpush2.xpose.msra.mxu0 0.0
        %5308 = vmatprep.subr.mxu0 0.0
        %5309 = vmatpush2.xpose.msra.mxu0 0.0
        %5310 = vmatprep.subr.mxu0 0.0
        %5311 = vmatpush2.xpose.msra.mxu0 0.0
        %5312 = vmatprep.subr.mxu0 0.0
        %5313 = vmatpush2.xpose.msra.mxu0 0.0
        %5314 = vmatprep.subr.mxu0 0.0
        %5315 = vmatpush2.xpose.msra.mxu0 0.0
        %5316 = vmatprep.subr.mxu0 0.0
        %5317 = vmatpush2.xpose.msra.mxu0 0.0
        %5318 = vmatprep.subr.mxu0 0.0
        %5319 = vmatpush2.xpose.msra.mxu0 0.0
        %5320 = vmatprep.subr.mxu0 0.0
        %5321 = vmatpush2.xpose.msra.mxu0 0.0
        %5322 = vmatprep.subr.mxu0 0.0
        %5323 = vmatpush2.xpose.msra.mxu0 0.0
        %5324 = vmatprep.subr.mxu0 0.0
        %5325 = vmatpush2.xpose.msra.mxu0 0.0
        %5326 = vmatprep.subr.mxu0 0.0
        %5327 = vmatpush2.xpose.msra.mxu0 0.0
        %5328 = vmatprep.subr.mxu0 0.0
        %5329 = vmatpush2.xpose.msra.mxu0 0.0
        %5330 = vmatprep.subr.mxu0 0.0
        %5331 = vmatpush2.xpose.msra.mxu0 0.0
        %5332 = vmatprep.subr.mxu0 0.0
        %5333 = vmatpush2.xpose.msra.mxu0 0.0
        %5334 = vmatprep.subr.mxu0 0.0
        %5335 = vmatpush2.xpose.msra.mxu0 0.0
        %5336 = vmatprep.mubr.f32.mxu0 0.0
        %5337 = vmatmul.mubr.f32.gmra.mxu0 %v5225
        %v5338 = vpop.f32.mrf.mxu0
        %v5339 = vadd.f32 %v4176, %v5338
        %v5340 = vpop.f32.mrf.mxu0
        %5341 = vmatprep.mubr.f32.mxu0 0.0
        %5342 = vmatmul.mubr.f32.gmra.mxu0 %v5228
        %v5343 = vpop.f32.mrf.mxu0
        %v5344 = vadd.f32 %v4177, %v5343
        %v5345 = vpop.f32.mrf.mxu0
        %5346 = vmatprep.mubr.f32.mxu0 0.0
        %5347 = vmatmul.mubr.f32.gmra.mxu0 %v5231
        %v5348 = vpop.f32.mrf.mxu0
        %v5349 = vadd.f32 %v4178, %v5348
        %v5350 = vpop.f32.mrf.mxu0
        %5351 = vmatprep.mubr.f32.mxu0 0.0
        %5352 = vmatmul.mubr.f32.gmra.mxu0 %v5234
        %v5353 = vpop.f32.mrf.mxu0
        %v5354 = vadd.f32 %v4179, %v5353
        %v5355 = vpop.f32.mrf.mxu0
        %5356 = vmatprep.mubr.f32.mxu0 0.0
        %5357 = vmatmul.mubr.f32.gmra.mxu0 %v5237
        %v5358 = vpop.f32.mrf.mxu0
        %v5359 = vadd.f32 %v4180, %v5358
        %v5360 = vpop.f32.mrf.mxu0
        %5361 = vmatprep.mubr.f32.mxu0 0.0
        %5362 = vmatmul.mubr.f32.gmra.mxu0 %v5240
        %v5363 = vpop.f32.mrf.mxu0
        %v5364 = vadd.f32 %v4181, %v5363
        %v5365 = vpop.f32.mrf.mxu0
        %5366 = vmatprep.mubr.f32.mxu0 0.0
        %5367 = vmatmul.mubr.f32.gmra.mxu0 %v5243
        %v5368 = vpop.f32.mrf.mxu0
        %v5369 = vadd.f32 %v4182, %v5368
        %v5370 = vpop.f32.mrf.mxu0
        %5371 = vmatprep.mubr.f32.mxu0 0.0
        %5372 = vmatmul.mubr.f32.gmra.mxu0 %v5246
        %v5373 = vpop.f32.mrf.mxu0
        %v5374 = vadd.f32 %v4183, %v5373
        %v5375 = vpop.f32.mrf.mxu0
        %5376 = vdwg.mxu0
        %v5377 = vsel %vm1331, %v5339, -inf
        %5378 = vmax.xlane.f32.xlu0 %v5377
        %v5379 = vpop.xlane.xlu0 %5378
        %v5380 = vsel %vm1331, %v5344, -inf
        %5381 = vmax.xlane.f32.xlu0 %v5380
        %v5382 = vpop.xlane.xlu0 %5381
        %v5383 = vsel %vm1331, %v5349, -inf
        %5384 = vmax.xlane.f32.xlu0 %v5383
        %v5385 = vpop.xlane.xlu0 %5384
        %v5386 = vsel %vm1331, %v5354, -inf
        %5387 = vmax.xlane.f32.xlu0 %v5386
        %v5388 = vpop.xlane.xlu0 %5387
        %v5389 = vsel %vm1331, %v5359, -inf
        %5390 = vmax.xlane.f32.xlu0 %v5389
        %v5391 = vpop.xlane.xlu0 %5390
        %v5392 = vsel %vm1331, %v5364, -inf
        %5393 = vmax.xlane.f32.xlu0 %v5392
        %v5394 = vpop.xlane.xlu0 %5393
        %v5395 = vsel %vm1331, %v5369, -inf
        %5396 = vmax.xlane.f32.xlu0 %v5395
        %v5397 = vpop.xlane.xlu0 %5396
        %v5398 = vsel %vm1331, %v5374, -inf
        %5399 = vmax.xlane.f32.xlu0 %v5398
        %v5400 = vpop.xlane.xlu0 %5399
        %v5401 = vsub.f32 %v5339, %v5379
        %v5402 = vsub.f32 %v5344, %v5382
        %v5403 = vsub.f32 %v5349, %v5385
        %v5404 = vsub.f32 %v5354, %v5388
        %v5405 = vsub.f32 %v5359, %v5391
        %v5406 = vsub.f32 %v5364, %v5394
        %v5407 = vsub.f32 %v5369, %v5397
        %v5408 = vsub.f32 %v5374, %v5400
        %v5409 = vmul.f32 %v5401, 1.442695
        %v5410 = vpow.pop %v5409
        %v5411 = vmul.f32 %v5402, 1.442695
        %v5412 = vpow.pop %v5411
        %v5413 = vmul.f32 %v5403, 1.442695
        %v5414 = vpow.pop %v5413
        %v5415 = vmul.f32 %v5404, 1.442695
        %v5416 = vpow.pop %v5415
        %v5417 = vmul.f32 %v5405, 1.442695
        %v5418 = vpow.pop %v5417
        %v5419 = vmul.f32 %v5406, 1.442695
        %v5420 = vpow.pop %v5419
        %v5421 = vmul.f32 %v5407, 1.442695
        %v5422 = vpow.pop %v5421
        %v5423 = vmul.f32 %v5408, 1.442695
        %v5424 = vpow.pop %v5423
        %v5425 = vsel %vm1331, %v5410, 0.0
        %5426 = vadd.xlane.f32.xlu0 %v5425
        %v5427 = vpop.xlane.xlu0 %5426
        %v5428 = vsel %vm1331, %v5412, 0.0
        %5429 = vadd.xlane.f32.xlu0 %v5428
        %v5430 = vpop.xlane.xlu0 %5429
        %v5431 = vsel %vm1331, %v5414, 0.0
        %5432 = vadd.xlane.f32.xlu0 %v5431
        %v5433 = vpop.xlane.xlu0 %5432
        %v5434 = vsel %vm1331, %v5416, 0.0
        %5435 = vadd.xlane.f32.xlu0 %v5434
        %v5436 = vpop.xlane.xlu0 %5435
        %v5437 = vsel %vm1331, %v5418, 0.0
        %5438 = vadd.xlane.f32.xlu0 %v5437
        %v5439 = vpop.xlane.xlu0 %5438
        %v5440 = vsel %vm1331, %v5420, 0.0
        %5441 = vadd.xlane.f32.xlu0 %v5440
        %v5442 = vpop.xlane.xlu0 %5441
        %v5443 = vsel %vm1331, %v5422, 0.0
        %5444 = vadd.xlane.f32.xlu0 %v5443
        %v5445 = vpop.xlane.xlu0 %5444
        %v5446 = vsel %vm1331, %v5424, 0.0
        %5447 = vadd.xlane.f32.xlu0 %v5446
        %v5448 = vpop.xlane.xlu0 %5447
        %v5449 = vrcp.pop %v5427
        %v5450 = vrcp.pop %v5430
        %v5451 = vrcp.pop %v5433
        %v5452 = vrcp.pop %v5436
        %v5453 = vrcp.pop %v5439
        %v5454 = vrcp.pop %v5442
        %v5455 = vrcp.pop %v5445
        %v5456 = vrcp.pop %v5448
        %v5457 = vmul.f32 %v5410, %v5449
        %v5458 = vmul.f32 %v5412, %v5450
        %v5459 = vmul.f32 %v5414, %v5451
        %v5460 = vmul.f32 %v5416, %v5452
        %v5461 = vmul.f32 %v5418, %v5453
        %v5462 = vmul.f32 %v5420, %v5454
        %v5463 = vmul.f32 %v5422, %v5455
        %v5464 = vmul.f32 %v5424, %v5456
        %v5466 = vsel %vm1331, %v5457, 0
        %v5469 = vsel %vm1331, %v5458, 0
        %v5472 = vsel %vm1331, %v5459, 0
        %v5475 = vsel %vm1331, %v5460, 0
        %v5478 = vsel %vm1331, %v5461, 0
        %v5481 = vsel %vm1331, %v5462, 0
        %v5484 = vsel %vm1331, %v5463, 0
        %v5487 = vsel %vm1331, %v5464, 0
        %5489 = vmatprep.subr.mxu0 0.0
        %5490 = vmatpush1.msra.mxu0 0.0
        %5491 = vmatprep.subr.mxu0 0.0
        %5492 = vmatpush1.msra.mxu0 0.0
        %5493 = vmatprep.subr.mxu0 0.0
        %5494 = vmatpush1.msra.mxu0 0.0
        %5495 = vmatprep.subr.mxu0 0.0
        %5496 = vmatpush1.msra.mxu0 0.0
        %5497 = vmatprep.subr.mxu0 0.0
        %5498 = vmatpush1.msra.mxu0 0.0
        %5499 = vmatprep.subr.mxu0 0.0
        %5500 = vmatpush1.msra.mxu0 0.0
        %5501 = vmatprep.subr.mxu0 0.0
        %5502 = vmatpush1.msra.mxu0 0.0
        %5503 = vmatprep.subr.mxu0 0.0
        %5504 = vmatpush1.msra.mxu0 0.0
        %5505 = vmatprep.subr.mxu0 0.0
        %5506 = vmatpush1.msra.mxu0 %v5221
        %5507 = vmatprep.subr.mxu0 0.0
        %5508 = vmatpush1.msra.mxu0 %v5216
        %5509 = vmatprep.subr.mxu0 0.0
        %5510 = vmatpush1.msra.mxu0 %v5211
        %5511 = vmatprep.subr.mxu0 0.0
        %5512 = vmatpush1.msra.mxu0 %v5206
        %5513 = vmatprep.subr.mxu0 0.0
        %5514 = vmatpush1.msra.mxu0 %v5201
        %5515 = vmatprep.subr.mxu0 0.0
        %5516 = vmatpush1.msra.mxu0 %v5196
        %5517 = vmatprep.subr.mxu0 0.0
        %5518 = vmatpush1.msra.mxu0 %v5191
        %5519 = vmatprep.subr.mxu0 0.0
        %5520 = vmatpush1.msra.mxu0 %v5186
        %5521 = vmatprep.subr.mxu0 0.0
        %5522 = vmatpush2.msra.mxu0 0.0
        %5523 = vmatprep.subr.mxu0 0.0
        %5524 = vmatpush2.msra.mxu0 0.0
        %5525 = vmatprep.subr.mxu0 0.0
        %5526 = vmatpush2.msra.mxu0 0.0
        %5527 = vmatprep.subr.mxu0 0.0
        %5528 = vmatpush2.msra.mxu0 0.0
        %5529 = vmatprep.subr.mxu0 0.0
        %5530 = vmatpush2.msra.mxu0 0.0
        %5531 = vmatprep.subr.mxu0 0.0
        %5532 = vmatpush2.msra.mxu0 0.0
        %5533 = vmatprep.subr.mxu0 0.0
        %5534 = vmatpush2.msra.mxu0 0.0
        %5535 = vmatprep.subr.mxu0 0.0
        %5536 = vmatpush2.msra.mxu0 0.0
        %5537 = vmatprep.subr.mxu0 0.0
        %5538 = vmatpush2.msra.mxu0 0.0
        %5539 = vmatprep.subr.mxu0 0.0
        %5540 = vmatpush2.msra.mxu0 0.0
        %5541 = vmatprep.subr.mxu0 0.0
        %5542 = vmatpush2.msra.mxu0 0.0
        %5543 = vmatprep.subr.mxu0 0.0
        %5544 = vmatpush2.msra.mxu0 0.0
        %5545 = vmatprep.subr.mxu0 0.0
        %5546 = vmatpush2.msra.mxu0 0.0
        %5547 = vmatprep.subr.mxu0 0.0
        %5548 = vmatpush2.msra.mxu0 0.0
        %5549 = vmatprep.subr.mxu0 0.0
        %5550 = vmatpush2.msra.mxu0 0.0
        %5551 = vmatprep.subr.mxu0 0.0
        %5552 = vmatpush2.msra.mxu0 0.0
        %5553 = vmatprep.mubr.f32.mxu0 0.0
        %5554 = vmatmul.mubr.f32.gmra.mxu0 %v5466
        %v5555 = vpop.f32.mrf.mxu0
        %v5556 = vadd.f32 0.0, %v5555
        %v5557 = vpop.f32.mrf.mxu0
        %5558 = vmatprep.mubr.f32.mxu0 0.0
        %5559 = vmatmul.mubr.f32.gmra.mxu0 %v5469
        %v5560 = vpop.f32.mrf.mxu0
        %v5561 = vadd.f32 0.0, %v5560
        %v5562 = vpop.f32.mrf.mxu0
        %5563 = vmatprep.mubr.f32.mxu0 0.0
        %5564 = vmatmul.mubr.f32.gmra.mxu0 %v5472
        %v5565 = vpop.f32.mrf.mxu0
        %v5566 = vadd.f32 0.0, %v5565
        %v5567 = vpop.f32.mrf.mxu0
        %5568 = vmatprep.mubr.f32.mxu0 0.0
        %5569 = vmatmul.mubr.f32.gmra.mxu0 %v5475
        %v5570 = vpop.f32.mrf.mxu0
        %v5571 = vadd.f32 0.0, %v5570
        %v5572 = vpop.f32.mrf.mxu0
        %5573 = vmatprep.mubr.f32.mxu0 0.0
        %5574 = vmatmul.mubr.f32.gmra.mxu0 %v5478
        %v5575 = vpop.f32.mrf.mxu0
        %v5576 = vadd.f32 0.0, %v5575
        %v5577 = vpop.f32.mrf.mxu0
        %5578 = vmatprep.mubr.f32.mxu0 0.0
        %5579 = vmatmul.mubr.f32.gmra.mxu0 %v5481
        %v5580 = vpop.f32.mrf.mxu0
        %v5581 = vadd.f32 0.0, %v5580
        %v5582 = vpop.f32.mrf.mxu0
        %5583 = vmatprep.mubr.f32.mxu0 0.0
        %5584 = vmatmul.mubr.f32.gmra.mxu0 %v5484
        %v5585 = vpop.f32.mrf.mxu0
        %v5586 = vadd.f32 0.0, %v5585
        %v5587 = vpop.f32.mrf.mxu0
        %5588 = vmatprep.mubr.f32.mxu0 0.0
        %5589 = vmatmul.mubr.f32.gmra.mxu0 %v5487
        %v5590 = vpop.f32.mrf.mxu0
        %v5591 = vadd.f32 0.0, %v5590
        %v5592 = vpop.f32.mrf.mxu0
        %5593 = vdwg.mxu0
        %s5594 = scalar_lea.vmem %s49, 8
        %v5595 = vld [vmem:[%s5594] sm:$0xff]
        %v5597 = vsel %vm1814, %v5556, 0
        %v5600 = vsel %vm1814, %v5561, 0
        %v5603 = vsel %vm1814, %v5566, 0
        %v5606 = vsel %vm1814, %v5571, 0
        %v5609 = vsel %vm1814, %v5576, 0
        %v5612 = vsel %vm1814, %v5581, 0
        %v5615 = vsel %vm1814, %v5586, 0
        %v5618 = vsel %vm1814, %v5591, 0
        %5620 = vmatprep.subr.mxu0 0.0
        %5621 = vmatpush1.msra.mxu0 0.0
        %5622 = vmatprep.subr.mxu0 0.0
        %5623 = vmatpush1.msra.mxu0 0.0
        %5624 = vmatprep.subr.mxu0 0.0
        %5625 = vmatpush1.msra.mxu0 0.0
        %5626 = vmatprep.subr.mxu0 0.0
        %5627 = vmatpush1.msra.mxu0 0.0
        %5628 = vmatprep.subr.mxu0 0.0
        %5629 = vmatpush1.msra.mxu0 0.0
        %5630 = vmatprep.subr.mxu0 0.0
        %5631 = vmatpush1.msra.mxu0 0.0
        %5632 = vmatprep.subr.mxu0 0.0
        %5633 = vmatpush1.msra.mxu0 0.0
        %5634 = vmatprep.subr.mxu0 0.0
        %5635 = vmatpush1.msra.mxu0 0.0
        %5636 = vmatprep.subr.mxu0 0.0
        %5637 = vmatpush1.msra.mxu0 0.0
        %5638 = vmatprep.subr.mxu0 0.0
        %5639 = vmatpush1.msra.mxu0 0.0
        %5640 = vmatprep.subr.mxu0 0.0
        %5641 = vmatpush1.msra.mxu0 0.0
        %5642 = vmatprep.subr.mxu0 0.0
        %5643 = vmatpush1.msra.mxu0 0.0
        %5644 = vmatprep.subr.mxu0 0.0
        %5645 = vmatpush1.msra.mxu0 0.0
        %5646 = vmatprep.subr.mxu0 0.0
        %5647 = vmatpush1.msra.mxu0 0.0
        %5648 = vmatprep.subr.mxu0 0.0
        %5649 = vmatpush1.msra.mxu0 0.0
        %5650 = vmatprep.subr.mxu0 0.0
        %5651 = vmatpush1.msra.mxu0 %v5595
        %5652 = vmatprep.subr.mxu0 0.0
        %5653 = vmatpush2.msra.mxu0 0.0
        %5654 = vmatprep.subr.mxu0 0.0
        %5655 = vmatpush2.msra.mxu0 0.0
        %5656 = vmatprep.subr.mxu0 0.0
        %5657 = vmatpush2.msra.mxu0 0.0
        %5658 = vmatprep.subr.mxu0 0.0
        %5659 = vmatpush2.msra.mxu0 0.0
        %5660 = vmatprep.subr.mxu0 0.0
        %5661 = vmatpush2.msra.mxu0 0.0
        %5662 = vmatprep.subr.mxu0 0.0
        %5663 = vmatpush2.msra.mxu0 0.0
        %5664 = vmatprep.subr.mxu0 0.0
        %5665 = vmatpush2.msra.mxu0 0.0
        %5666 = vmatprep.subr.mxu0 0.0
        %5667 = vmatpush2.msra.mxu0 0.0
        %5668 = vmatprep.subr.mxu0 0.0
        %5669 = vmatpush2.msra.mxu0 0.0
        %5670 = vmatprep.subr.mxu0 0.0
        %5671 = vmatpush2.msra.mxu0 0.0
        %5672 = vmatprep.subr.mxu0 0.0
        %5673 = vmatpush2.msra.mxu0 0.0
        %5674 = vmatprep.subr.mxu0 0.0
        %5675 = vmatpush2.msra.mxu0 0.0
        %5676 = vmatprep.subr.mxu0 0.0
        %5677 = vmatpush2.msra.mxu0 0.0
        %5678 = vmatprep.subr.mxu0 0.0
        %5679 = vmatpush2.msra.mxu0 0.0
        %5680 = vmatprep.subr.mxu0 0.0
        %5681 = vmatpush2.msra.mxu0 0.0
        %5682 = vmatprep.subr.mxu0 0.0
        %5683 = vmatpush2.msra.mxu0 0.0
        %5684 = vmatprep.mubr.f32.mxu0 0.0
        %5685 = vmatmul.mubr.f32.gmra.mxu0 %v5597
        %v5686 = vpop.f32.mrf.mxu0
        %v5687 = vadd.f32 0.0, %v5686
        %v5688 = vpop.f32.mrf.mxu0
        %5689 = vmatprep.mubr.f32.mxu0 0.0
        %5690 = vmatmul.mubr.f32.gmra.mxu0 %v5600
        %v5691 = vpop.f32.mrf.mxu0
        %v5692 = vadd.f32 0.0, %v5691
        %v5693 = vpop.f32.mrf.mxu0
        %5694 = vmatprep.mubr.f32.mxu0 0.0
        %5695 = vmatmul.mubr.f32.gmra.mxu0 %v5603
        %v5696 = vpop.f32.mrf.mxu0
        %v5697 = vadd.f32 0.0, %v5696
        %v5698 = vpop.f32.mrf.mxu0
        %5699 = vmatprep.mubr.f32.mxu0 0.0
        %5700 = vmatmul.mubr.f32.gmra.mxu0 %v5606
        %v5701 = vpop.f32.mrf.mxu0
        %v5702 = vadd.f32 0.0, %v5701
        %v5703 = vpop.f32.mrf.mxu0
        %5704 = vmatprep.mubr.f32.mxu0 0.0
        %5705 = vmatmul.mubr.f32.gmra.mxu0 %v5609
        %v5706 = vpop.f32.mrf.mxu0
        %v5707 = vadd.f32 0.0, %v5706
        %v5708 = vpop.f32.mrf.mxu0
        %5709 = vmatprep.mubr.f32.mxu0 0.0
        %5710 = vmatmul.mubr.f32.gmra.mxu0 %v5612
        %v5711 = vpop.f32.mrf.mxu0
        %v5712 = vadd.f32 0.0, %v5711
        %v5713 = vpop.f32.mrf.mxu0
        %5714 = vmatprep.mubr.f32.mxu0 0.0
        %5715 = vmatmul.mubr.f32.gmra.mxu0 %v5615
        %v5716 = vpop.f32.mrf.mxu0
        %v5717 = vadd.f32 0.0, %v5716
        %v5718 = vpop.f32.mrf.mxu0
        %5719 = vmatprep.mubr.f32.mxu0 0.0
        %5720 = vmatmul.mubr.f32.gmra.mxu0 %v5618
        %v5721 = vpop.f32.mrf.mxu0
        %v5722 = vadd.f32 0.0, %v5721
        %v5723 = vpop.f32.mrf.mxu0
        %5724 = vdwg.mxu0
        %v5726 = vsel %vm1814, %v4861, 0
        %v5729 = vsel %vm1814, %v4866, 0
        %v5732 = vsel %vm1814, %v4871, 0
        %v5735 = vsel %vm1814, %v4876, 0
        %v5738 = vsel %vm1814, %v4881, 0
        %v5741 = vsel %vm1814, %v4886, 0
        %v5744 = vsel %vm1814, %v4891, 0
        %v5747 = vsel %vm1814, %v4896, 0
        %5749 = vmatprep.subr.mxu0 0.0
        %5750 = vmatpush1.msra.mxu0 0.0
        %5751 = vmatprep.subr.mxu0 0.0
        %5752 = vmatpush1.msra.mxu0 0.0
        %5753 = vmatprep.subr.mxu0 0.0
        %5754 = vmatpush1.msra.mxu0 0.0
        %5755 = vmatprep.subr.mxu0 0.0
        %5756 = vmatpush1.msra.mxu0 0.0
        %5757 = vmatprep.subr.mxu0 0.0
        %5758 = vmatpush1.msra.mxu0 0.0
        %5759 = vmatprep.subr.mxu0 0.0
        %5760 = vmatpush1.msra.mxu0 0.0
        %5761 = vmatprep.subr.mxu0 0.0
        %5762 = vmatpush1.msra.mxu0 0.0
        %5763 = vmatprep.subr.mxu0 0.0
        %5764 = vmatpush1.msra.mxu0 0.0
        %5765 = vmatprep.subr.mxu0 0.0
        %5766 = vmatpush1.msra.mxu0 0.0
        %5767 = vmatprep.subr.mxu0 0.0
        %5768 = vmatpush1.msra.mxu0 0.0
        %5769 = vmatprep.subr.mxu0 0.0
        %5770 = vmatpush1.msra.mxu0 0.0
        %5771 = vmatprep.subr.mxu0 0.0
        %5772 = vmatpush1.msra.mxu0 0.0
        %5773 = vmatprep.subr.mxu0 0.0
        %5774 = vmatpush1.msra.mxu0 0.0
        %5775 = vmatprep.subr.mxu0 0.0
        %5776 = vmatpush1.msra.mxu0 0.0
        %5777 = vmatprep.subr.mxu0 0.0
        %5778 = vmatpush1.msra.mxu0 0.0
        %5779 = vmatprep.subr.mxu0 0.0
        %5780 = vmatpush1.msra.mxu0 %v4899
        %5781 = vmatprep.subr.mxu0 0.0
        %5782 = vmatpush2.msra.mxu0 0.0
        %5783 = vmatprep.subr.mxu0 0.0
        %5784 = vmatpush2.msra.mxu0 0.0
        %5785 = vmatprep.subr.mxu0 0.0
        %5786 = vmatpush2.msra.mxu0 0.0
        %5787 = vmatprep.subr.mxu0 0.0
        %5788 = vmatpush2.msra.mxu0 0.0
        %5789 = vmatprep.subr.mxu0 0.0
        %5790 = vmatpush2.msra.mxu0 0.0
        %5791 = vmatprep.subr.mxu0 0.0
        %5792 = vmatpush2.msra.mxu0 0.0
        %5793 = vmatprep.subr.mxu0 0.0
        %5794 = vmatpush2.msra.mxu0 0.0
        %5795 = vmatprep.subr.mxu0 0.0
        %5796 = vmatpush2.msra.mxu0 0.0
        %5797 = vmatprep.subr.mxu0 0.0
        %5798 = vmatpush2.msra.mxu0 0.0
        %5799 = vmatprep.subr.mxu0 0.0
        %5800 = vmatpush2.msra.mxu0 0.0
        %5801 = vmatprep.subr.mxu0 0.0
        %5802 = vmatpush2.msra.mxu0 0.0
        %5803 = vmatprep.subr.mxu0 0.0
        %5804 = vmatpush2.msra.mxu0 0.0
        %5805 = vmatprep.subr.mxu0 0.0
        %5806 = vmatpush2.msra.mxu0 0.0
        %5807 = vmatprep.subr.mxu0 0.0
        %5808 = vmatpush2.msra.mxu0 0.0
        %5809 = vmatprep.subr.mxu0 0.0
        %5810 = vmatpush2.msra.mxu0 0.0
        %5811 = vmatprep.subr.mxu0 0.0
        %5812 = vmatpush2.msra.mxu0 0.0
        %5813 = vmatprep.mubr.f32.mxu0 0.0
        %5814 = vmatmul.mubr.f32.gmra.mxu0 %v5726
        %v5815 = vpop.f32.mrf.mxu0
        %v5816 = vadd.f32 %v5687, %v5815
        %v5817 = vpop.f32.mrf.mxu0
        %5818 = vmatprep.mubr.f32.mxu0 0.0
        %5819 = vmatmul.mubr.f32.gmra.mxu0 %v5729
        %v5820 = vpop.f32.mrf.mxu0
        %v5821 = vadd.f32 %v5692, %v5820
        %v5822 = vpop.f32.mrf.mxu0
        %5823 = vmatprep.mubr.f32.mxu0 0.0
        %5824 = vmatmul.mubr.f32.gmra.mxu0 %v5732
        %v5825 = vpop.f32.mrf.mxu0
        %v5826 = vadd.f32 %v5697, %v5825
        %v5827 = vpop.f32.mrf.mxu0
        %5828 = vmatprep.mubr.f32.mxu0 0.0
        %5829 = vmatmul.mubr.f32.gmra.mxu0 %v5735
        %v5830 = vpop.f32.mrf.mxu0
        %v5831 = vadd.f32 %v5702, %v5830
        %v5832 = vpop.f32.mrf.mxu0
        %5833 = vmatprep.mubr.f32.mxu0 0.0
        %5834 = vmatmul.mubr.f32.gmra.mxu0 %v5738
        %v5835 = vpop.f32.mrf.mxu0
        %v5836 = vadd.f32 %v5707, %v5835
        %v5837 = vpop.f32.mrf.mxu0
        %5838 = vmatprep.mubr.f32.mxu0 0.0
        %5839 = vmatmul.mubr.f32.gmra.mxu0 %v5741
        %v5840 = vpop.f32.mrf.mxu0
        %v5841 = vadd.f32 %v5712, %v5840
        %v5842 = vpop.f32.mrf.mxu0
        %5843 = vmatprep.mubr.f32.mxu0 0.0
        %5844 = vmatmul.mubr.f32.gmra.mxu0 %v5744
        %v5845 = vpop.f32.mrf.mxu0
        %v5846 = vadd.f32 %v5717, %v5845
        %v5847 = vpop.f32.mrf.mxu0
        %5848 = vmatprep.mubr.f32.mxu0 0.0
        %5849 = vmatmul.mubr.f32.gmra.mxu0 %v5747
        %v5850 = vpop.f32.mrf.mxu0
        %v5851 = vadd.f32 %v5722, %v5850
        %v5852 = vpop.f32.mrf.mxu0
        %5853 = vdwg.mxu0
        %v5854 = vld [vmem:[%s55] sm:$0xff]
        %v5855 = vld [vmem:[%s55 + $0x8] sm:$0xff]
        %v5856 = vld [vmem:[%s55 + $0x10] sm:$0xff]
        %v5857 = vld [vmem:[%s55 + $0x18] sm:$0xff]
        %v5858 = vld [vmem:[%s55 + $0x20] sm:$0xff]
        %v5859 = vld [vmem:[%s55 + $0x28] sm:$0xff]
        %v5860 = vld [vmem:[%s55 + $0x30] sm:$0xff]
        %v5861 = vld [vmem:[%s55 + $0x38] sm:$0xff]
        %v5862 = vld [vmem:[%s51] sm:$0x1]
        %v5864 = vlaneseq
        %v5865 = vshrl.u32 %v5864, 7
        %v5866 = vsub.s32 0, %v5865
        %v5867 = vrot.slane %v5862, %v5866
        %v5870 = vsel %vm1331, %v5854, 0
        %v5873 = vsel %vm1331, %v5855, 0
        %v5876 = vsel %vm1331, %v5856, 0
        %v5879 = vsel %vm1331, %v5857, 0
        %v5882 = vsel %vm1331, %v5858, 0
        %v5885 = vsel %vm1331, %v5859, 0
        %v5888 = vsel %vm1331, %v5860, 0
        %v5891 = vsel %vm1331, %v5861, 0
        %5893 = vmatprep.subr.mxu0 0.0
        %5894 = vmatpush1.msra.mxu0 0.0
        %5895 = vmatprep.subr.mxu0 0.0
        %5896 = vmatpush1.msra.mxu0 0.0
        %5897 = vmatprep.subr.mxu0 0.0
        %5898 = vmatpush1.msra.mxu0 0.0
        %5899 = vmatprep.subr.mxu0 0.0
        %5900 = vmatpush1.msra.mxu0 0.0
        %5901 = vmatprep.subr.mxu0 0.0
        %5902 = vmatpush1.msra.mxu0 0.0
        %5903 = vmatprep.subr.mxu0 0.0
        %5904 = vmatpush1.msra.mxu0 0.0
        %5905 = vmatprep.subr.mxu0 0.0
        %5906 = vmatpush1.msra.mxu0 0.0
        %5907 = vmatprep.subr.mxu0 0.0
        %5908 = vmatpush1.msra.mxu0 0.0
        %5909 = vmatprep.subr.mxu0 0.0
        %5910 = vmatpush1.msra.mxu0 %v5851
        %5911 = vmatprep.subr.mxu0 0.0
        %5912 = vmatpush1.msra.mxu0 %v5846
        %5913 = vmatprep.subr.mxu0 0.0
        %5914 = vmatpush1.msra.mxu0 %v5841
        %5915 = vmatprep.subr.mxu0 0.0
        %5916 = vmatpush1.msra.mxu0 %v5836
        %5917 = vmatprep.subr.mxu0 0.0
        %5918 = vmatpush1.msra.mxu0 %v5831
        %5919 = vmatprep.subr.mxu0 0.0
        %5920 = vmatpush1.msra.mxu0 %v5826
        %5921 = vmatprep.subr.mxu0 0.0
        %5922 = vmatpush1.msra.mxu0 %v5821
        %5923 = vmatprep.subr.mxu0 0.0
        %5924 = vmatpush1.msra.mxu0 %v5816
        %5925 = vmatprep.subr.mxu0 0.0
        %5926 = vmatpush2.msra.mxu0 0.0
        %5927 = vmatprep.subr.mxu0 0.0
        %5928 = vmatpush2.msra.mxu0 0.0
        %5929 = vmatprep.subr.mxu0 0.0
        %5930 = vmatpush2.msra.mxu0 0.0
        %5931 = vmatprep.subr.mxu0 0.0
        %5932 = vmatpush2.msra.mxu0 0.0
        %5933 = vmatprep.subr.mxu0 0.0
        %5934 = vmatpush2.msra.mxu0 0.0
        %5935 = vmatprep.subr.mxu0 0.0
        %5936 = vmatpush2.msra.mxu0 0.0
        %5937 = vmatprep.subr.mxu0 0.0
        %5938 = vmatpush2.msra.mxu0 0.0
        %5939 = vmatprep.subr.mxu0 0.0
        %5940 = vmatpush2.msra.mxu0 0.0
        %5941 = vmatprep.subr.mxu0 0.0
        %5942 = vmatpush2.msra.mxu0 0.0
        %5943 = vmatprep.subr.mxu0 0.0
        %5944 = vmatpush2.msra.mxu0 0.0
        %5945 = vmatprep.subr.mxu0 0.0
        %5946 = vmatpush2.msra.mxu0 0.0
        %5947 = vmatprep.subr.mxu0 0.0
        %5948 = vmatpush2.msra.mxu0 0.0
        %5949 = vmatprep.subr.mxu0 0.0
        %5950 = vmatpush2.msra.mxu0 0.0
        %5951 = vmatprep.subr.mxu0 0.0
        %5952 = vmatpush2.msra.mxu0 0.0
        %5953 = vmatprep.subr.mxu0 0.0
        %5954 = vmatpush2.msra.mxu0 0.0
        %5955 = vmatprep.subr.mxu0 0.0
        %5956 = vmatpush2.msra.mxu0 0.0
        %5957 = vmatprep.mubr.f32.mxu0 0.0
        %5958 = vmatmul.mubr.f32.gmra.mxu0 %v5870
        %v5959 = vpop.f32.mrf.mxu0
        %v5960 = vadd.f32 %v5867, %v5959
        %v5961 = vpop.f32.mrf.mxu0
        %5962 = vmatprep.mubr.f32.mxu0 0.0
        %5963 = vmatmul.mubr.f32.gmra.mxu0 %v5873
        %v5964 = vpop.f32.mrf.mxu0
        %v5965 = vadd.f32 %v5867, %v5964
        %v5966 = vpop.f32.mrf.mxu0
        %5967 = vmatprep.mubr.f32.mxu0 0.0
        %5968 = vmatmul.mubr.f32.gmra.mxu0 %v5876
        %v5969 = vpop.f32.mrf.mxu0
        %v5970 = vadd.f32 %v5867, %v5969
        %v5971 = vpop.f32.mrf.mxu0
        %5972 = vmatprep.mubr.f32.mxu0 0.0
        %5973 = vmatmul.mubr.f32.gmra.mxu0 %v5879
        %v5974 = vpop.f32.mrf.mxu0
        %v5975 = vadd.f32 %v5867, %v5974
        %v5976 = vpop.f32.mrf.mxu0
        %5977 = vmatprep.mubr.f32.mxu0 0.0
        %5978 = vmatmul.mubr.f32.gmra.mxu0 %v5882
        %v5979 = vpop.f32.mrf.mxu0
        %v5980 = vadd.f32 %v5867, %v5979
        %v5981 = vpop.f32.mrf.mxu0
        %5982 = vmatprep.mubr.f32.mxu0 0.0
        %5983 = vmatmul.mubr.f32.gmra.mxu0 %v5885
        %v5984 = vpop.f32.mrf.mxu0
        %v5985 = vadd.f32 %v5867, %v5984
        %v5986 = vpop.f32.mrf.mxu0
        %5987 = vmatprep.mubr.f32.mxu0 0.0
        %5988 = vmatmul.mubr.f32.gmra.mxu0 %v5888
        %v5989 = vpop.f32.mrf.mxu0
        %v5990 = vadd.f32 %v5867, %v5989
        %v5991 = vpop.f32.mrf.mxu0
        %5992 = vmatprep.mubr.f32.mxu0 0.0
        %5993 = vmatmul.mubr.f32.gmra.mxu0 %v5891
        %v5994 = vpop.f32.mrf.mxu0
        %v5995 = vadd.f32 %v5867, %v5994
        %v5996 = vpop.f32.mrf.mxu0
        %5997 = vdwg.mxu0
        %v5998 = vadd.f32 %v3929, %v5960
        %v5999 = vadd.f32 %v3930, %v5965
        %v6000 = vadd.f32 %v3931, %v5970
        %v6001 = vadd.f32 %v3932, %v5975
        %v6002 = vadd.f32 %v3933, %v5980
        %v6003 = vadd.f32 %v3934, %v5985
        %v6004 = vadd.f32 %v3935, %v5990
        %v6005 = vadd.f32 %v3936, %v5995
        %v6006 = vld [vmem:[%s57] sm:$0x1]
        %v6007 = vld [vmem:[%s59] sm:$0x1]
        %v6008 = vsel %vm1058, %v5998, 0.0
        %6009 = vadd.xlane.f32.xlu0 %v6008
        %v6010 = vpop.xlane.xlu0 %6009
        %v6011 = vsel %vm1058, %v5999, 0.0
        %6012 = vadd.xlane.f32.xlu0 %v6011
        %v6013 = vpop.xlane.xlu0 %6012
        %v6014 = vsel %vm1058, %v6000, 0.0
        %6015 = vadd.xlane.f32.xlu0 %v6014
        %v6016 = vpop.xlane.xlu0 %6015
        %v6017 = vsel %vm1058, %v6001, 0.0
        %6018 = vadd.xlane.f32.xlu0 %v6017
        %v6019 = vpop.xlane.xlu0 %6018
        %v6020 = vsel %vm1058, %v6002, 0.0
        %6021 = vadd.xlane.f32.xlu0 %v6020
        %v6022 = vpop.xlane.xlu0 %6021
        %v6023 = vsel %vm1058, %v6003, 0.0
        %6024 = vadd.xlane.f32.xlu0 %v6023
        %v6025 = vpop.xlane.xlu0 %6024
        %v6026 = vsel %vm1058, %v6004, 0.0
        %6027 = vadd.xlane.f32.xlu0 %v6026
        %v6028 = vpop.xlane.xlu0 %6027
        %v6029 = vsel %vm1058, %v6005, 0.0
        %6030 = vadd.xlane.f32.xlu0 %v6029
        %v6031 = vpop.xlane.xlu0 %6030
        %v6032 = vmul.f32 %v6010, %v1222
        %v6033 = vmul.f32 %v6013, %v1222
        %v6034 = vmul.f32 %v6016, %v1222
        %v6035 = vmul.f32 %v6019, %v1222
        %v6036 = vmul.f32 %v6022, %v1222
        %v6037 = vmul.f32 %v6025, %v1222
        %v6038 = vmul.f32 %v6028, %v1222
        %v6039 = vmul.f32 %v6031, %v1222
        %v6040 = vsub.f32 %v5998, %v6032
        %v6041 = vsub.f32 %v5999, %v6033
        %v6042 = vsub.f32 %v6000, %v6034
        %v6043 = vsub.f32 %v6001, %v6035
        %v6044 = vsub.f32 %v6002, %v6036
        %v6045 = vsub.f32 %v6003, %v6037
        %v6046 = vsub.f32 %v6004, %v6038
        %v6047 = vsub.f32 %v6005, %v6039
        %v6048 = vmul.f32 %v6040, %v6040
        %v6049 = vmul.f32 %v6041, %v6041
        %v6050 = vmul.f32 %v6042, %v6042
        %v6051 = vmul.f32 %v6043, %v6043
        %v6052 = vmul.f32 %v6044, %v6044
        %v6053 = vmul.f32 %v6045, %v6045
        %v6054 = vmul.f32 %v6046, %v6046
        %v6055 = vmul.f32 %v6047, %v6047
        %v6056 = vsel %vm1058, %v6048, 0.0
        %6057 = vadd.xlane.f32.xlu0 %v6056
        %v6058 = vpop.xlane.xlu0 %6057
        %v6059 = vsel %vm1058, %v6049, 0.0
        %6060 = vadd.xlane.f32.xlu0 %v6059
        %v6061 = vpop.xlane.xlu0 %6060
        %v6062 = vsel %vm1058, %v6050, 0.0
        %6063 = vadd.xlane.f32.xlu0 %v6062
        %v6064 = vpop.xlane.xlu0 %6063
        %v6065 = vsel %vm1058, %v6051, 0.0
        %6066 = vadd.xlane.f32.xlu0 %v6065
        %v6067 = vpop.xlane.xlu0 %6066
        %v6068 = vsel %vm1058, %v6052, 0.0
        %6069 = vadd.xlane.f32.xlu0 %v6068
        %v6070 = vpop.xlane.xlu0 %6069
        %v6071 = vsel %vm1058, %v6053, 0.0
        %6072 = vadd.xlane.f32.xlu0 %v6071
        %v6073 = vpop.xlane.xlu0 %6072
        %v6074 = vsel %vm1058, %v6054, 0.0
        %6075 = vadd.xlane.f32.xlu0 %v6074
        %v6076 = vpop.xlane.xlu0 %6075
        %v6077 = vsel %vm1058, %v6055, 0.0
        %6078 = vadd.xlane.f32.xlu0 %v6077
        %v6079 = vpop.xlane.xlu0 %6078
        %v6080 = vmul.f32 %v6058, %v1222
        %v6081 = vmul.f32 %v6061, %v1222
        %v6082 = vmul.f32 %v6064, %v1222
        %v6083 = vmul.f32 %v6067, %v1222
        %v6084 = vmul.f32 %v6070, %v1222
        %v6085 = vmul.f32 %v6073, %v1222
        %v6086 = vmul.f32 %v6076, %v1222
        %v6087 = vmul.f32 %v6079, %v1222
        %v6088 = vadd.f32 %v6080, 1e-05
        %v6089 = vadd.f32 %v6081, 1e-05
        %v6090 = vadd.f32 %v6082, 1e-05
        %v6091 = vadd.f32 %v6083, 1e-05
        %v6092 = vadd.f32 %v6084, 1e-05
        %v6093 = vadd.f32 %v6085, 1e-05
        %v6094 = vadd.f32 %v6086, 1e-05
        %v6095 = vadd.f32 %v6087, 1e-05
        %v6096 = vrsqrt.pop %v6088
        %v6097 = vrsqrt.pop %v6089
        %v6098 = vrsqrt.pop %v6090
        %v6099 = vrsqrt.pop %v6091
        %v6100 = vrsqrt.pop %v6092
        %v6101 = vrsqrt.pop %v6093
        %v6102 = vrsqrt.pop %v6094
        %v6103 = vrsqrt.pop %v6095
        %v6104 = vmul.f32 %v6040, %v6096
        %v6105 = vmul.f32 %v6041, %v6097
        %v6106 = vmul.f32 %v6042, %v6098
        %v6107 = vmul.f32 %v6043, %v6099
        %v6108 = vmul.f32 %v6044, %v6100
        %v6109 = vmul.f32 %v6045, %v6101
        %v6110 = vmul.f32 %v6046, %v6102
        %v6111 = vmul.f32 %v6047, %v6103
        %v6113 = vlaneseq
        %v6114 = vshrl.u32 %v6113, 7
        %v6115 = vsub.s32 0, %v6114
        %v6116 = vrot.slane %v6006, %v6115
        %v6118 = vmul.f32 %v6104, %v6116
        %v6119 = vmul.f32 %v6105, %v6116
        %v6120 = vmul.f32 %v6106, %v6116
        %v6121 = vmul.f32 %v6107, %v6116
        %v6122 = vmul.f32 %v6108, %v6116
        %v6123 = vmul.f32 %v6109, %v6116
        %v6124 = vmul.f32 %v6110, %v6116
        %v6125 = vmul.f32 %v6111, %v6116
        %v6127 = vlaneseq
        %v6128 = vshrl.u32 %v6127, 7
        %v6129 = vsub.s32 0, %v6128
        %v6130 = vrot.slane %v6007, %v6129
        %v6132 = vadd.f32 %v6118, %v6130
        %v6133 = vadd.f32 %v6119, %v6130
        %v6134 = vadd.f32 %v6120, %v6130
        %v6135 = vadd.f32 %v6121, %v6130
        %v6136 = vadd.f32 %v6122, %v6130
        %v6137 = vadd.f32 %v6123, %v6130
        %v6138 = vadd.f32 %v6124, %v6130
        %v6139 = vadd.f32 %v6125, %v6130
        %v6140 = vld [vmem:[%s61] sm:$0xff]
        %v6141 = vld [vmem:[%s61 + $0x8] sm:$0xff]
        %v6142 = vld [vmem:[%s63] sm:$0x1]
        %v6144 = vlaneseq
        %v6145 = vshrl.u32 %v6144, 7
        %v6146 = vsub.s32 0, %v6145
        %v6147 = vrot.slane %v6142, %v6146
        %v6150 = vsel %vm1058, %v6132, 0
        %v6153 = vsel %vm1058, %v6133, 0
        %v6156 = vsel %vm1058, %v6134, 0
        %v6159 = vsel %vm1058, %v6135, 0
        %v6162 = vsel %vm1058, %v6136, 0
        %v6165 = vsel %vm1058, %v6137, 0
        %v6168 = vsel %vm1058, %v6138, 0
        %v6171 = vsel %vm1058, %v6139, 0
        %6173 = vmatprep.subr.mxu0 0.0
        %6174 = vmatpush1.msra.mxu0 0.0
        %6175 = vmatprep.subr.mxu0 0.0
        %6176 = vmatpush1.msra.mxu0 0.0
        %6177 = vmatprep.subr.mxu0 0.0
        %6178 = vmatpush1.msra.mxu0 0.0
        %6179 = vmatprep.subr.mxu0 0.0
        %6180 = vmatpush1.msra.mxu0 0.0
        %6181 = vmatprep.subr.mxu0 0.0
        %6182 = vmatpush1.msra.mxu0 0.0
        %6183 = vmatprep.subr.mxu0 0.0
        %6184 = vmatpush1.msra.mxu0 0.0
        %6185 = vmatprep.subr.mxu0 0.0
        %6186 = vmatpush1.msra.mxu0 0.0
        %6187 = vmatprep.subr.mxu0 0.0
        %6188 = vmatpush1.msra.mxu0 0.0
        %6189 = vmatprep.subr.mxu0 0.0
        %6190 = vmatpush1.msra.mxu0 0.0
        %6191 = vmatprep.subr.mxu0 0.0
        %6192 = vmatpush1.msra.mxu0 0.0
        %6193 = vmatprep.subr.mxu0 0.0
        %6194 = vmatpush1.msra.mxu0 0.0
        %6195 = vmatprep.subr.mxu0 0.0
        %6196 = vmatpush1.msra.mxu0 0.0
        %6197 = vmatprep.subr.mxu0 0.0
        %6198 = vmatpush1.msra.mxu0 0.0
        %6199 = vmatprep.subr.mxu0 0.0
        %6200 = vmatpush1.msra.mxu0 0.0
        %6201 = vmatprep.subr.mxu0 0.0
        %6202 = vmatpush1.msra.mxu0 %v6141
        %6203 = vmatprep.subr.mxu0 0.0
        %6204 = vmatpush1.msra.mxu0 %v6140
        %6205 = vmatprep.subr.mxu0 0.0
        %6206 = vmatpush2.msra.mxu0 0.0
        %6207 = vmatprep.subr.mxu0 0.0
        %6208 = vmatpush2.msra.mxu0 0.0
        %6209 = vmatprep.subr.mxu0 0.0
        %6210 = vmatpush2.msra.mxu0 0.0
        %6211 = vmatprep.subr.mxu0 0.0
        %6212 = vmatpush2.msra.mxu0 0.0
        %6213 = vmatprep.subr.mxu0 0.0
        %6214 = vmatpush2.msra.mxu0 0.0
        %6215 = vmatprep.subr.mxu0 0.0
        %6216 = vmatpush2.msra.mxu0 0.0
        %6217 = vmatprep.subr.mxu0 0.0
        %6218 = vmatpush2.msra.mxu0 0.0
        %6219 = vmatprep.subr.mxu0 0.0
        %6220 = vmatpush2.msra.mxu0 0.0
        %6221 = vmatprep.subr.mxu0 0.0
        %6222 = vmatpush2.msra.mxu0 0.0
        %6223 = vmatprep.subr.mxu0 0.0
        %6224 = vmatpush2.msra.mxu0 0.0
        %6225 = vmatprep.subr.mxu0 0.0
        %6226 = vmatpush2.msra.mxu0 0.0
        %6227 = vmatprep.subr.mxu0 0.0
        %6228 = vmatpush2.msra.mxu0 0.0
        %6229 = vmatprep.subr.mxu0 0.0
        %6230 = vmatpush2.msra.mxu0 0.0
        %6231 = vmatprep.subr.mxu0 0.0
        %6232 = vmatpush2.msra.mxu0 0.0
        %6233 = vmatprep.subr.mxu0 0.0
        %6234 = vmatpush2.msra.mxu0 0.0
        %6235 = vmatprep.subr.mxu0 0.0
        %6236 = vmatpush2.msra.mxu0 0.0
        %6237 = vmatprep.mubr.f32.mxu0 0.0
        %6238 = vmatmul.mubr.f32.gmra.mxu0 %v6150
        %v6239 = vpop.f32.mrf.mxu0
        %v6240 = vadd.f32 %v6147, %v6239
        %v6241 = vpop.f32.mrf.mxu0
        %6242 = vmatprep.mubr.f32.mxu0 0.0
        %6243 = vmatmul.mubr.f32.gmra.mxu0 %v6153
        %v6244 = vpop.f32.mrf.mxu0
        %v6245 = vadd.f32 %v6147, %v6244
        %v6246 = vpop.f32.mrf.mxu0
        %6247 = vmatprep.mubr.f32.mxu0 0.0
        %6248 = vmatmul.mubr.f32.gmra.mxu0 %v6156
        %v6249 = vpop.f32.mrf.mxu0
        %v6250 = vadd.f32 %v6147, %v6249
        %v6251 = vpop.f32.mrf.mxu0
        %6252 = vmatprep.mubr.f32.mxu0 0.0
        %6253 = vmatmul.mubr.f32.gmra.mxu0 %v6159
        %v6254 = vpop.f32.mrf.mxu0
        %v6255 = vadd.f32 %v6147, %v6254
        %v6256 = vpop.f32.mrf.mxu0
        %6257 = vmatprep.mubr.f32.mxu0 0.0
        %6258 = vmatmul.mubr.f32.gmra.mxu0 %v6162
        %v6259 = vpop.f32.mrf.mxu0
        %v6260 = vadd.f32 %v6147, %v6259
        %v6261 = vpop.f32.mrf.mxu0
        %6262 = vmatprep.mubr.f32.mxu0 0.0
        %6263 = vmatmul.mubr.f32.gmra.mxu0 %v6165
        %v6264 = vpop.f32.mrf.mxu0
        %v6265 = vadd.f32 %v6147, %v6264
        %v6266 = vpop.f32.mrf.mxu0
        %6267 = vmatprep.mubr.f32.mxu0 0.0
        %6268 = vmatmul.mubr.f32.gmra.mxu0 %v6168
        %v6269 = vpop.f32.mrf.mxu0
        %v6270 = vadd.f32 %v6147, %v6269
        %v6271 = vpop.f32.mrf.mxu0
        %6272 = vmatprep.mubr.f32.mxu0 0.0
        %6273 = vmatmul.mubr.f32.gmra.mxu0 %v6171
        %v6274 = vpop.f32.mrf.mxu0
        %v6275 = vadd.f32 %v6147, %v6274
        %v6276 = vpop.f32.mrf.mxu0
        %6277 = vdwg.mxu0
        %v6278 = vmul.f32 %v6240, 0.5
        %v6279 = vmul.f32 %v6245, 0.5
        %v6280 = vmul.f32 %v6250, 0.5
        %v6281 = vmul.f32 %v6255, 0.5
        %v6282 = vmul.f32 %v6260, 0.5
        %v6283 = vmul.f32 %v6265, 0.5
        %v6284 = vmul.f32 %v6270, 0.5
        %v6285 = vmul.f32 %v6275, 0.5
        %v6286 = vmul.f32 %v6240, 0.70710677
        %v6287 = vmul.f32 %v6245, 0.70710677
        %v6288 = vmul.f32 %v6250, 0.70710677
        %v6289 = vmul.f32 %v6255, 0.70710677
        %v6290 = vmul.f32 %v6260, 0.70710677
        %v6291 = vmul.f32 %v6265, 0.70710677
        %v6292 = vmul.f32 %v6270, 0.70710677
        %v6293 = vmul.f32 %v6275, 0.70710677
        %v6294 = vand.u32 2147483647, %v6286
        %v6295 = vand.u32 2147483647, %v6287
        %v6296 = vand.u32 2147483647, %v6288
        %v6297 = vand.u32 2147483647, %v6289
        %v6298 = vand.u32 2147483647, %v6290
        %v6299 = vand.u32 2147483647, %v6291
        %v6300 = vand.u32 2147483647, %v6292
        %v6301 = vand.u32 2147483647, %v6293
        %v6302 = vmul.f32 %v6294, 0.3275911
        %v6303 = vmul.f32 %v6295, 0.3275911
        %v6304 = vmul.f32 %v6296, 0.3275911
        %v6305 = vmul.f32 %v6297, 0.3275911
        %v6306 = vmul.f32 %v6298, 0.3275911
        %v6307 = vmul.f32 %v6299, 0.3275911
        %v6308 = vmul.f32 %v6300, 0.3275911
        %v6309 = vmul.f32 %v6301, 0.3275911
        %v6310 = vadd.f32 %v6302, 1.0
        %v6311 = vadd.f32 %v6303, 1.0
        %v6312 = vadd.f32 %v6304, 1.0
        %v6313 = vadd.f32 %v6305, 1.0
        %v6314 = vadd.f32 %v6306, 1.0
        %v6315 = vadd.f32 %v6307, 1.0
        %v6316 = vadd.f32 %v6308, 1.0
        %v6317 = vadd.f32 %v6309, 1.0
        %v6318 = vrcp.pop %v6310
        %v6319 = vmul.f32 1.0, %v6318
        %v6320 = vrcp.pop %v6311
        %v6321 = vmul.f32 1.0, %v6320
        %v6322 = vrcp.pop %v6312
        %v6323 = vmul.f32 1.0, %v6322
        %v6324 = vrcp.pop %v6313
        %v6325 = vmul.f32 1.0, %v6324
        %v6326 = vrcp.pop %v6314
        %v6327 = vmul.f32 1.0, %v6326
        %v6328 = vrcp.pop %v6315
        %v6329 = vmul.f32 1.0, %v6328
        %v6330 = vrcp.pop %v6316
        %v6331 = vmul.f32 1.0, %v6330
        %v6332 = vrcp.pop %v6317
        %v6333 = vmul.f32 1.0, %v6332
        %v6334 = vmul.f32 %v6319, 1.0614054
        %v6335 = vmul.f32 %v6321, 1.0614054
        %v6336 = vmul.f32 %v6323, 1.0614054
        %v6337 = vmul.f32 %v6325, 1.0614054
        %v6338 = vmul.f32 %v6327, 1.0614054
        %v6339 = vmul.f32 %v6329, 1.0614054
        %v6340 = vmul.f32 %v6331, 1.0614054
        %v6341 = vmul.f32 %v6333, 1.0614054
        %v6342 = vadd.f32 %v6334, -1.4531521
        %v6343 = vadd.f32 %v6335, -1.4531521
        %v6344 = vadd.f32 %v6336, -1.4531521
        %v6345 = vadd.f32 %v6337, -1.4531521
        %v6346 = vadd.f32 %v6338, -1.4531521
        %v6347 = vadd.f32 %v6339, -1.4531521
        %v6348 = vadd.f32 %v6340, -1.4531521
        %v6349 = vadd.f32 %v6341, -1.4531521
        %v6350 = vmul.f32 %v6342, %v6319
        %v6351 = vmul.f32 %v6343, %v6321
        %v6352 = vmul.f32 %v6344, %v6323
        %v6353 = vmul.f32 %v6345, %v6325
        %v6354 = vmul.f32 %v6346, %v6327
        %v6355 = vmul.f32 %v6347, %v6329
        %v6356 = vmul.f32 %v6348, %v6331
        %v6357 = vmul.f32 %v6349, %v6333
        %v6358 = vadd.f32 %v6350, 1.4214138
        %v6359 = vadd.f32 %v6351, 1.4214138
        %v6360 = vadd.f32 %v6352, 1.4214138
        %v6361 = vadd.f32 %v6353, 1.4214138
        %v6362 = vadd.f32 %v6354, 1.4214138
        %v6363 = vadd.f32 %v6355, 1.4214138
        %v6364 = vadd.f32 %v6356, 1.4214138
        %v6365 = vadd.f32 %v6357, 1.4214138
        %v6366 = vmul.f32 %v6358, %v6319
        %v6367 = vmul.f32 %v6359, %v6321
        %v6368 = vmul.f32 %v6360, %v6323
        %v6369 = vmul.f32 %v6361, %v6325
        %v6370 = vmul.f32 %v6362, %v6327
        %v6371 = vmul.f32 %v6363, %v6329
        %v6372 = vmul.f32 %v6364, %v6331
        %v6373 = vmul.f32 %v6365, %v6333
        %v6374 = vadd.f32 %v6366, -0.28449672
        %v6375 = vadd.f32 %v6367, -0.28449672
        %v6376 = vadd.f32 %v6368, -0.28449672
        %v6377 = vadd.f32 %v6369, -0.28449672
        %v6378 = vadd.f32 %v6370, -0.28449672
        %v6379 = vadd.f32 %v6371, -0.28449672
        %v6380 = vadd.f32 %v6372, -0.28449672
        %v6381 = vadd.f32 %v6373, -0.28449672
        %v6382 = vmul.f32 %v6374, %v6319
        %v6383 = vmul.f32 %v6375, %v6321
        %v6384 = vmul.f32 %v6376, %v6323
        %v6385 = vmul.f32 %v6377, %v6325
        %v6386 = vmul.f32 %v6378, %v6327
        %v6387 = vmul.f32 %v6379, %v6329
        %v6388 = vmul.f32 %v6380, %v6331
        %v6389 = vmul.f32 %v6381, %v6333
        %v6390 = vadd.f32 %v6382, 0.2548296
        %v6391 = vadd.f32 %v6383, 0.2548296
        %v6392 = vadd.f32 %v6384, 0.2548296
        %v6393 = vadd.f32 %v6385, 0.2548296
        %v6394 = vadd.f32 %v6386, 0.2548296
        %v6395 = vadd.f32 %v6387, 0.2548296
        %v6396 = vadd.f32 %v6388, 0.2548296
        %v6397 = vadd.f32 %v6389, 0.2548296
        %v6398 = vmul.f32 %v6390, %v6319
        %v6399 = vmul.f32 %v6391, %v6321
        %v6400 = vmul.f32 %v6392, %v6323
        %v6401 = vmul.f32 %v6393, %v6325
        %v6402 = vmul.f32 %v6394, %v6327
        %v6403 = vmul.f32 %v6395, %v6329
        %v6404 = vmul.f32 %v6396, %v6331
        %v6405 = vmul.f32 %v6397, %v6333
        %v6406 = vsub.f32 0.0, %v6294
        %v6407 = vsub.f32 0.0, %v6295
        %v6408 = vsub.f32 0.0, %v6296
        %v6409 = vsub.f32 0.0, %v6297
        %v6410 = vsub.f32 0.0, %v6298
        %v6411 = vsub.f32 0.0, %v6299
        %v6412 = vsub.f32 0.0, %v6300
        %v6413 = vsub.f32 0.0, %v6301
        %v6414 = vmul.f32 %v6406, %v6294
        %v6415 = vmul.f32 %v6407, %v6295
        %v6416 = vmul.f32 %v6408, %v6296
        %v6417 = vmul.f32 %v6409, %v6297
        %v6418 = vmul.f32 %v6410, %v6298
        %v6419 = vmul.f32 %v6411, %v6299
        %v6420 = vmul.f32 %v6412, %v6300
        %v6421 = vmul.f32 %v6413, %v6301
        %v6422 = vmul.f32 %v6414, 1.442695
        %v6423 = vpow.pop %v6422
        %v6424 = vmul.f32 %v6415, 1.442695
        %v6425 = vpow.pop %v6424
        %v6426 = vmul.f32 %v6416, 1.442695
        %v6427 = vpow.pop %v6426
        %v6428 = vmul.f32 %v6417, 1.442695
        %v6429 = vpow.pop %v6428
        %v6430 = vmul.f32 %v6418, 1.442695
        %v6431 = vpow.pop %v6430
        %v6432 = vmul.f32 %v6419, 1.442695
        %v6433 = vpow.pop %v6432
        %v6434 = vmul.f32 %v6420, 1.442695
        %v6435 = vpow.pop %v6434
        %v6436 = vmul.f32 %v6421, 1.442695
        %v6437 = vpow.pop %v6436
        %v6438 = vmul.f32 %v6398, %v6423
        %v6439 = vmul.f32 %v6399, %v6425
        %v6440 = vmul.f32 %v6400, %v6427
        %v6441 = vmul.f32 %v6401, %v6429
        %v6442 = vmul.f32 %v6402, %v6431
        %v6443 = vmul.f32 %v6403, %v6433
        %v6444 = vmul.f32 %v6404, %v6435
        %v6445 = vmul.f32 %v6405, %v6437
        %v6446 = vsub.f32 1.0, %v6438
        %v6447 = vsub.f32 1.0, %v6439
        %v6448 = vsub.f32 1.0, %v6440
        %v6449 = vsub.f32 1.0, %v6441
        %v6450 = vsub.f32 1.0, %v6442
        %v6451 = vsub.f32 1.0, %v6443
        %v6452 = vsub.f32 1.0, %v6444
        %v6453 = vsub.f32 1.0, %v6445
        %vm6454 = vcmp.lt.f32.partialorder %v6286, 0.0
        %vm6455 = vcmp.lt.f32.partialorder %v6287, 0.0
        %vm6456 = vcmp.lt.f32.partialorder %v6288, 0.0
        %vm6457 = vcmp.lt.f32.partialorder %v6289, 0.0
        %vm6458 = vcmp.lt.f32.partialorder %v6290, 0.0
        %vm6459 = vcmp.lt.f32.partialorder %v6291, 0.0
        %vm6460 = vcmp.lt.f32.partialorder %v6292, 0.0
        %vm6461 = vcmp.lt.f32.partialorder %v6293, 0.0
        %v6462 = vsub.f32 0.0, %v6446
        %v6463 = vsub.f32 0.0, %v6447
        %v6464 = vsub.f32 0.0, %v6448
        %v6465 = vsub.f32 0.0, %v6449
        %v6466 = vsub.f32 0.0, %v6450
        %v6467 = vsub.f32 0.0, %v6451
        %v6468 = vsub.f32 0.0, %v6452
        %v6469 = vsub.f32 0.0, %v6453
        %v6470 = vsel %vm6454, %v6462, %v6446
        %v6471 = vsel %vm6455, %v6463, %v6447
        %v6472 = vsel %vm6456, %v6464, %v6448
        %v6473 = vsel %vm6457, %v6465, %v6449
        %v6474 = vsel %vm6458, %v6466, %v6450
        %v6475 = vsel %vm6459, %v6467, %v6451
        %v6476 = vsel %vm6460, %v6468, %v6452
        %v6477 = vsel %vm6461, %v6469, %v6453
        %v6478 = vadd.f32 %v6470, 1.0
        %v6479 = vadd.f32 %v6471, 1.0
        %v6480 = vadd.f32 %v6472, 1.0
        %v6481 = vadd.f32 %v6473, 1.0
        %v6482 = vadd.f32 %v6474, 1.0
        %v6483 = vadd.f32 %v6475, 1.0
        %v6484 = vadd.f32 %v6476, 1.0
        %v6485 = vadd.f32 %v6477, 1.0
        %v6486 = vmul.f32 %v6278, %v6478
        %v6487 = vmul.f32 %v6279, %v6479
        %v6488 = vmul.f32 %v6280, %v6480
        %v6489 = vmul.f32 %v6281, %v6481
        %v6490 = vmul.f32 %v6282, %v6482
        %v6491 = vmul.f32 %v6283, %v6483
        %v6492 = vmul.f32 %v6284, %v6484
        %v6493 = vmul.f32 %v6285, %v6485
        %v6494 = vld [vmem:[%s65] sm:$0xff]
        %v6495 = vld [vmem:[%s65 + $0x8] sm:$0xff]
        %v6496 = vld [vmem:[%s65 + $0x10] sm:$0xff]
        %v6497 = vld [vmem:[%s65 + $0x18] sm:$0xff]
        %v6499 = vsel %vm3784, %v6486, 0
        %v6502 = vsel %vm3784, %v6487, 0
        %v6505 = vsel %vm3784, %v6488, 0
        %v6508 = vsel %vm3784, %v6489, 0
        %v6511 = vsel %vm3784, %v6490, 0
        %v6514 = vsel %vm3784, %v6491, 0
        %v6517 = vsel %vm3784, %v6492, 0
        %v6520 = vsel %vm3784, %v6493, 0
        %6522 = vmatprep.subr.mxu0 0.0
        %6523 = vmatpush1.msra.mxu0 0.0
        %6524 = vmatprep.subr.mxu0 0.0
        %6525 = vmatpush1.msra.mxu0 0.0
        %6526 = vmatprep.subr.mxu0 0.0
        %6527 = vmatpush1.msra.mxu0 0.0
        %6528 = vmatprep.subr.mxu0 0.0
        %6529 = vmatpush1.msra.mxu0 0.0
        %6530 = vmatprep.subr.mxu0 0.0
        %6531 = vmatpush1.msra.mxu0 0.0
        %6532 = vmatprep.subr.mxu0 0.0
        %6533 = vmatpush1.msra.mxu0 0.0
        %6534 = vmatprep.subr.mxu0 0.0
        %6535 = vmatpush1.msra.mxu0 0.0
        %6536 = vmatprep.subr.mxu0 0.0
        %6537 = vmatpush1.msra.mxu0 0.0
        %6538 = vmatprep.subr.mxu0 0.0
        %6539 = vmatpush1.msra.mxu0 0.0
        %6540 = vmatprep.subr.mxu0 0.0
        %6541 = vmatpush1.msra.mxu0 0.0
        %6542 = vmatprep.subr.mxu0 0.0
        %6543 = vmatpush1.msra.mxu0 0.0
        %6544 = vmatprep.subr.mxu0 0.0
        %6545 = vmatpush1.msra.mxu0 0.0
        %6546 = vmatprep.subr.mxu0 0.0
        %6547 = vmatpush1.msra.mxu0 %v6497
        %6548 = vmatprep.subr.mxu0 0.0
        %6549 = vmatpush1.msra.mxu0 %v6496
        %6550 = vmatprep.subr.mxu0 0.0
        %6551 = vmatpush1.msra.mxu0 %v6495
        %6552 = vmatprep.subr.mxu0 0.0
        %6553 = vmatpush1.msra.mxu0 %v6494
        %6554 = vmatprep.subr.mxu0 0.0
        %6555 = vmatpush2.msra.mxu0 0.0
        %6556 = vmatprep.subr.mxu0 0.0
        %6557 = vmatpush2.msra.mxu0 0.0
        %6558 = vmatprep.subr.mxu0 0.0
        %6559 = vmatpush2.msra.mxu0 0.0
        %6560 = vmatprep.subr.mxu0 0.0
        %6561 = vmatpush2.msra.mxu0 0.0
        %6562 = vmatprep.subr.mxu0 0.0
        %6563 = vmatpush2.msra.mxu0 0.0
        %6564 = vmatprep.subr.mxu0 0.0
        %6565 = vmatpush2.msra.mxu0 0.0
        %6566 = vmatprep.subr.mxu0 0.0
        %6567 = vmatpush2.msra.mxu0 0.0
        %6568 = vmatprep.subr.mxu0 0.0
        %6569 = vmatpush2.msra.mxu0 0.0
        %6570 = vmatprep.subr.mxu0 0.0
        %6571 = vmatpush2.msra.mxu0 0.0
        %6572 = vmatprep.subr.mxu0 0.0
        %6573 = vmatpush2.msra.mxu0 0.0
        %6574 = vmatprep.subr.mxu0 0.0
        %6575 = vmatpush2.msra.mxu0 0.0
        %6576 = vmatprep.subr.mxu0 0.0
        %6577 = vmatpush2.msra.mxu0 0.0
        %6578 = vmatprep.subr.mxu0 0.0
        %6579 = vmatpush2.msra.mxu0 0.0
        %6580 = vmatprep.subr.mxu0 0.0
        %6581 = vmatpush2.msra.mxu0 0.0
        %6582 = vmatprep.subr.mxu0 0.0
        %6583 = vmatpush2.msra.mxu0 0.0
        %6584 = vmatprep.subr.mxu0 0.0
        %6585 = vmatpush2.msra.mxu0 0.0
        %6586 = vmatprep.mubr.f32.mxu0 0.0
        %6587 = vmatmul.mubr.f32.gmra.mxu0 %v6499
        %v6588 = vpop.f32.mrf.mxu0
        %v6589 = vadd.f32 0.0, %v6588
        %v6590 = vpop.f32.mrf.mxu0
        %6591 = vmatprep.mubr.f32.mxu0 0.0
        %6592 = vmatmul.mubr.f32.gmra.mxu0 %v6502
        %v6593 = vpop.f32.mrf.mxu0
        %v6594 = vadd.f32 0.0, %v6593
        %v6595 = vpop.f32.mrf.mxu0
        %6596 = vmatprep.mubr.f32.mxu0 0.0
        %6597 = vmatmul.mubr.f32.gmra.mxu0 %v6505
        %v6598 = vpop.f32.mrf.mxu0
        %v6599 = vadd.f32 0.0, %v6598
        %v6600 = vpop.f32.mrf.mxu0
        %6601 = vmatprep.mubr.f32.mxu0 0.0
        %6602 = vmatmul.mubr.f32.gmra.mxu0 %v6508
        %v6603 = vpop.f32.mrf.mxu0
        %v6604 = vadd.f32 0.0, %v6603
        %v6605 = vpop.f32.mrf.mxu0
        %6606 = vmatprep.mubr.f32.mxu0 0.0
        %6607 = vmatmul.mubr.f32.gmra.mxu0 %v6511
        %v6608 = vpop.f32.mrf.mxu0
        %v6609 = vadd.f32 0.0, %v6608
        %v6610 = vpop.f32.mrf.mxu0
        %6611 = vmatprep.mubr.f32.mxu0 0.0
        %6612 = vmatmul.mubr.f32.gmra.mxu0 %v6514
        %v6613 = vpop.f32.mrf.mxu0
        %v6614 = vadd.f32 0.0, %v6613
        %v6615 = vpop.f32.mrf.mxu0
        %6616 = vmatprep.mubr.f32.mxu0 0.0
        %6617 = vmatmul.mubr.f32.gmra.mxu0 %v6517
        %v6618 = vpop.f32.mrf.mxu0
        %v6619 = vadd.f32 0.0, %v6618
        %v6620 = vpop.f32.mrf.mxu0
        %6621 = vmatprep.mubr.f32.mxu0 0.0
        %6622 = vmatmul.mubr.f32.gmra.mxu0 %v6520
        %v6623 = vpop.f32.mrf.mxu0
        %v6624 = vadd.f32 0.0, %v6623
        %v6625 = vpop.f32.mrf.mxu0
        %6626 = vdwg.mxu0
        %v6627 = vadd.f32 %v5998, %v6589
        %v6628 = vadd.f32 %v5999, %v6594
        %v6629 = vadd.f32 %v6000, %v6599
        %v6630 = vadd.f32 %v6001, %v6604
        %v6631 = vadd.f32 %v6002, %v6609
        %v6632 = vadd.f32 %v6003, %v6614
        %v6633 = vadd.f32 %v6004, %v6619
        %v6634 = vadd.f32 %v6005, %v6624
        %v6635 = vld [vmem:[%s67] sm:$0x1]
        %v6637 = vlaneseq
        %v6638 = vshrl.u32 %v6637, 7
        %v6639 = vsub.s32 0, %v6638
        %v6640 = vrot.slane %v6635, %v6639
        %v6642 = vadd.f32 %v6627, %v6640
        %v6643 = vadd.f32 %v6628, %v6640
        %v6644 = vadd.f32 %v6629, %v6640
        %v6645 = vadd.f32 %v6630, %v6640
        %v6646 = vadd.f32 %v6631, %v6640
        %v6647 = vadd.f32 %v6632, %v6640
        %v6648 = vadd.f32 %v6633, %v6640
        %v6649 = vadd.f32 %v6634, %v6640
        %6650 = vst.msk [vmem:[%s1035] sm:$0xff] %vm1058, %v6642
        %6651 = vst.msk [vmem:[%s1035 + $0x8] sm:$0xff] %vm1058, %v6643
        %6652 = vst.msk [vmem:[%s1035 + $0x10] sm:$0xff] %vm1058, %v6644
        %6653 = vst.msk [vmem:[%s1035 + $0x18] sm:$0xff] %vm1058, %v6645
        %6654 = vst.msk [vmem:[%s1035 + $0x20] sm:$0xff] %vm1058, %v6646
        %6655 = vst.msk [vmem:[%s1035 + $0x28] sm:$0xff] %vm1058, %v6647
        %6656 = vst.msk [vmem:[%s1035 + $0x30] sm:$0xff] %vm1058, %v6648
        %6657 = vst.msk [vmem:[%s1035 + $0x38] sm:$0xff] %vm1058, %v6649
        %s6658 = sand.u32 %s810, 1
        %s6659 = scalar_lea.sflag [#allocation3], %s6658
        %s6660 = sand.u32 %s810, 1
        %s6661 = smul.addr %s6660, 64
        %s6662 = scalar_lea.vmem [#allocation2], %s6661
        // Predicated region
        $region157: #{local_transformer_forward.1} parent=155 // pred_check
          %p6663 = pneg %p820
        $region158: #{local_transformer_forward.1} parent=155 // pred_check_branch
          %6665 = sbr.rel (%p6663) target = $region160
        $region159: #{local_transformer_forward.1} parent=155 // pred_region
          %s6667 = ssub.s32 1024, 1024
          %6668 = vsyncadd %s6659, %s6667
          %s6669 = smul.addr %s83, 8
          %s6670 = smul.addr %s6669, 128
          %s6671 = scalar_lea.hbm %s69, %s6670
          %s6672 = sshll.u32 %s6662, 4
          %s6673 = int_to_ptr.vmem [resolvable:$true] %s6672
          %6678 = dma.vmem_to_hbm [thread:$0]  %s6673, 1024, %s6671, %s6659, 128, 128, 8
        $region160: #{local_transformer_forward.1} parent=155 // pred_fallthru
          _
      $region156: #{local_transformer_forward.1} parent=5 // pred_fallthru
        _
      %p6679 = scmp.le.s32.totalorder 2, %s78
      // Predicated region
      $region161: #{local_transformer_forward.1} parent=5 // pred_check
        %p6680 = pneg %p6679
      $region162: #{local_transformer_forward.1} parent=5 // pred_check_branch
        %6682 = sbr.rel (%p6680) target = $region164
      $region163: #{local_transformer_forward.1} parent=5 // pred_region
        %s6683 = ssub.s32 %s78, 2
        // Predicated region
        $region165: #{local_transformer_forward.1} parent=163 // pred_check
          %p6684 = pneg %p826
        $region166: #{local_transformer_forward.1} parent=163 // pred_check_branch
          %6686 = sbr.rel (%p6684) target = $region168
        $region167: #{local_transformer_forward.1} parent=163 // pred_region
          %s6687 = sand.u32 %s811, 1
          %s6688 = scalar_lea.sflag [#allocation3], %s6687
          %s6689 = sand.u32 %s811, 1
          %s6690 = smul.addr %s6689, 64
          %s6691 = scalar_lea.vmem [#allocation2], %s6690
          %6692 = dma.done %s6688, 1024
        $region168: #{local_transformer_forward.1} parent=163 // pred_fallthru
          _
      $region164: #{local_transformer_forward.1} parent=5 // pred_fallthru
        _
    $region6: #{local_transformer_forward.1} parent=1 // loop_footer
      %s82 = sadd.s32 1, %s78
    $region7: #{local_transformer_forward.1} parent=1 // loop_footer_branch
      %77 = sbr.rel target = $region3
    $region8: #{local_transformer_forward.1} parent=1 // loop_exit
      _
    %6693 = vsyncpa [#allocation3], 1
    %s6694 = scalar_lea.sflag [#allocation3], 1
    %6695 = vsyncpa %s6694, 1

</llo_original>
